<compile_context>
chip_gen: v7x
topology: tpu7x:2x2x1
jax: 0.10.0
libtpu: 0.0.40
codegen_flags: <defaults>
</compile_context>

<pallas_src>
import jax
import jax.numpy as jnp
from jax.experimental import pallas as pl
from jax.experimental.pallas import tpu as pltpu


# ------------------------- network geometry (from the spec) -------------------------
NUM_CHANNELS = 4                     # Conv2d(num_channels, 2*num_channels, 5)
C_IN = NUM_CHANNELS
C1 = 2 * NUM_CHANNELS                # 8
C2 = 16
IMG = 50                             # implied by fc1 = Linear(16*10*10): 50->46->23->20->10
K1, K2 = 5, 4
HW = IMG * IMG                                           # 2500 flat positions
L1 = HW - ((K1 - 1) * IMG + (K1 - 1))                    # 2296 conv1 positions kept
L1M = L1 - (IMG + 1)                                     # 2245 pool1 positions kept
L2 = L1M - ((K2 - 1) * 2 * IMG + (K2 - 1) * 2)           # 1939 conv2 positions kept
L2M = L2 - (2 * IMG + 2)                                 # 1837 pool2 positions kept
P_OUT = 10                                               # final 10x10 spatial grid
KC1 = C_IN * K1 * K1                                     # 100 = conv1 contraction depth
KC2 = C1 * K2 * K2                                       # 128 = conv2 contraction depth
FC1, FC2, N_CLS = 256, 128, 4


# ----------------------------- conv/pool/compaction kernel ---------------------------
def _conv_kernel(x_ref, w1_ref, scale1_ref, shift1_ref, w2_ref, b2_ref, sel_ref,
                 feat_ref, rhs1_scr, m1_scr, rhs2_scr):
    """conv1+BN+ReLU+pool, conv2+ReLU+pool, lattice compaction for ONE image (VMEM only)."""
    f32, bf16 = jnp.float32, jnp.bfloat16

    # ---- pack conv1 taps onto the contraction dim:
    #      rhs1[(dh*K1+dw)*C_IN + ci, q] = x[ci, q + IMG*dh + dw]
    for dh in range(K1):
        for dw in range(K1):
            t = dh * K1 + dw
            rhs1_scr[t * C_IN:(t + 1) * C_IN, :] = x_ref[0, :, pl.ds(dh * IMG + dw, L1)]

    # ---- layer1: Conv2d(C_IN, C1, 5) as ONE K=100 matmul + folded BN + ReLU
    acc1 = jnp.dot(w1_ref[...], rhs1_scr[...], preferred_element_type=f32)   # (C1, L1)
    h1 = jnp.maximum(acc1 * scale1_ref[...] + shift1_ref[...], 0.0)

    # ---- MaxPool2d(2,2): max of 4 shifted views (valid samples at q = 100*i + 2*j)
    m1 = jnp.maximum(
        jnp.maximum(h1[:, 0:L1M], h1[:, 1:1 + L1M]),
        jnp.maximum(h1[:, IMG:IMG + L1M], h1[:, IMG + 1:IMG + 1 + L1M]))
    m1_scr[...] = m1.astype(bf16)

    # ---- pack conv2 taps (stride-2 lattice) onto the contraction dim:
    #      rhs2[(dh*K2+dw)*C1 + ci, q] = m1[ci, q + 2*IMG*dh + 2*dw]
    # TODO(synk): Dropout2d is inference-mode identity here (no channel masking).
    for dh in range(K2):
        for dw in range(K2):
            t = dh * K2 + dw
            rhs2_scr[t * C1:(t + 1) * C1, :] = m1_scr[:, pl.ds(2 * IMG * dh + 2 * dw, L2)]

    # ---- layer2: Conv2d(C1, C2, 4) as ONE K=128 matmul + bias + ReLU
    acc2 = jnp.dot(w2_ref[...], rhs2_scr[...], preferred_element_type=f32)   # (C2, L2)
    h2 = jnp.maximum(acc2 + b2_ref[...], 0.0)

    # ---- MaxPool2d(2,2) on the stride-2 lattice (tap offsets 0, 2, 100, 102)
    m2 = jnp.maximum(
        jnp.maximum(h2[:, 0:L2M], h2[:, 2:2 + L2M]),
        jnp.maximum(h2[:, 2 * IMG:2 * IMG + L2M],
                    h2[:, 2 * IMG + 2:2 * IMG + 2 + L2M]))

    # ---- compact the scattered 10x10 lattice with ONE block-diagonal one-hot matmul
    feat = jnp.dot(m2.astype(bf16), sel_ref[...], preferred_element_type=f32)  # (C2, 100)
    feat_ref[0] = feat.astype(feat_ref.dtype)


# -------------------------------- batched FC tail kernel -----------------------------
def _fc_kernel(feat_ref, wfc1_ref, bfc1_ref, wfc2_ref, bfc2_ref, wfc3_ref, bfc3_ref,
               o_ref):
    """fc1+ReLU, fc2+ReLU, fc3+Softmax for the WHOLE batch (M = batch on the MXU)."""
    f32, bf16 = jnp.float32, jnp.bfloat16
    y1 = jnp.dot(feat_ref[...], wfc1_ref[...], preferred_element_type=f32) + bfc1_ref[...]
    y1 = jnp.maximum(y1, 0.0).astype(bf16)
    y2 = jnp.dot(y1, wfc2_ref[...], preferred_element_type=f32) + bfc2_ref[...]
    y2 = jnp.maximum(y2, 0.0).astype(bf16)
    logits = jnp.dot(y2, wfc3_ref[...], preferred_element_type=f32) + bfc3_ref[...]
    z = logits - jnp.max(logits, axis=1, keepdims=True)
    e = jnp.exp(z)
    o_ref[...] = (e / jnp.sum(e, axis=1, keepdims=True)).astype(o_ref.dtype)


# --------------------------------- host-side wrapper --------------------------------
def _full_spec(shape):
    zeros = (0,) * len(shape)
    return pl.BlockSpec(shape, lambda *_: zeros)


def net_forward(x, prep):
    """Fused inference forward.  x: (N, C_IN, 50, 50) f32 -> (N, 4) f32 probabilities."""
    n = x.shape[0]
    # host-side bf16 cast: halves the input DMA and removes in-kernel cast passes
    x_flat = x.reshape(n, C_IN, HW).astype(jnp.bfloat16)

    feat = pl.pallas_call(
        _conv_kernel,
        out_shape=jax.ShapeDtypeStruct((n, C2, P_OUT * P_OUT), jnp.bfloat16),
        grid=(n,),
        in_specs=[
            pl.BlockSpec((1, C_IN, HW), lambda i: (i, 0, 0)),
            _full_spec((C1, KC1)),
            _full_spec((C1, 1)),
            _full_spec((C1, 1)),
            _full_spec((C2, KC2)),
            _full_spec((C2, 1)),
            _full_spec((L2M, P_OUT * P_OUT)),
        ],
        out_specs=pl.BlockSpec((1, C2, P_OUT * P_OUT), lambda i: (i, 0, 0)),
        scratch_shapes=[
            pltpu.VMEM((KC1, L1), jnp.bfloat16),     # packed conv1 RHS (K on sublanes)
            pltpu.VMEM((C1, L1M), jnp.bfloat16),     # pooled layer-1 activations
            pltpu.VMEM((KC2, L2), jnp.bfloat16),     # packed conv2 RHS (K on sublanes)
        ],
        compiler_params=pltpu.CompilerParams(
            dimension_semantics=("parallel",),       # shard batch over TCs (v7x)
            vmem_limit_bytes=32 * 1024 * 1024,       # ~2-3 MB footprint: ample headroom
        ),
    )(x_flat, prep["w1_mat"], prep["scale1"], prep["shift1"],
      prep["w2_mat"], prep["b2"], prep["sel_big"])

    # (N, 16, 100) -> (N, 1600): exactly PyTorch's NCHW flatten order
    feat2d = feat.reshape(n, C2 * P_OUT * P_OUT)

    out = pl.pallas_call(
        _fc_kernel,
        out_shape=jax.ShapeDtypeStruct((n, N_CLS), jnp.float32),
        grid=(1,),                                   # whole batch in one step: M = N
        in_specs=[
            _full_spec((n, C2 * P_OUT * P_OUT)),
            _full_spec((C2 * P_OUT * P_OUT, FC1)),
            _full_spec((1, FC1)),
            _full_spec((FC1, FC2)),
            _full_spec((1, FC2)),
            _full_spec((FC2, N_CLS)),
            _full_spec((1, N_CLS)),
        ],
        out_specs=_full_spec((n, N_CLS)),
        compiler_params=pltpu.CompilerParams(
            dimension_semantics=("arbitrary",),
            vmem_limit_bytes=32 * 1024 * 1024,
        ),
    )(feat2d, prep["w_fc1"], prep["b_fc1"], prep["w_fc2"], prep["b_fc2"],
      prep["w_fc3"], prep["b_fc3"])
    return out


# ---------------------------- parameters (PyTorch-equivalent) ------------------------
def _uniform(key, shape, fan_in):
    bound = 1.0 / jnp.sqrt(jnp.float32(fan_in))
    return jax.random.uniform(key, shape, jnp.float32, -bound, bound)


def init_params(key, num_channels):
    c2 = 2 * num_channels
    ks = jax.random.split(key, 10)
    p = {}
    p["w1"] = _uniform(ks[0], (c2, num_channels, K1, K1), num_channels * K1 * K1)
    p["b1"] = _uniform(ks[1], (c2,), num_channels * K1 * K1)
    p["bn_gamma"] = jnp.ones((c2,), jnp.float32)
    p["bn_beta"] = jnp.zeros((c2,), jnp.float32)
    p["bn_mean"] = jnp.zeros((c2,), jnp.float32)
    p["bn_var"] = jnp.ones((c2,), jnp.float32)
    p["w2"] = _uniform(ks[2], (C2, c2, K2, K2), c2 * K2 * K2)
    p["b2"] = _uniform(ks[3], (C2,), c2 * K2 * K2)
    p["w_fc1"] = _uniform(ks[4], (FC1, C2 * P_OUT * P_OUT), C2 * P_OUT * P_OUT)
    p["b_fc1"] = _uniform(ks[5], (FC1,), C2 * P_OUT * P_OUT)
    p["w_fc2"] = _uniform(ks[6], (FC2, FC1), FC1)
    p["b_fc2"] = _uniform(ks[7], (FC2,), FC1)
    p["w_fc3"] = _uniform(ks[8], (N_CLS, FC2), FC2)
    p["b_fc3"] = _uniform(ks[9], (N_CLS,), FC2)
    return p


def prepare_params(p, eps=1e-5):
    """One-time (outside the jitted forward) BN folding + kernel weight layout."""
    f32, bf16 = jnp.float32, jnp.bfloat16
    scale = p["bn_gamma"] / jnp.sqrt(p["bn_var"] + eps)                  # (C1,)
    shift = p["bn_beta"] + (p["b1"] - p["bn_mean"]) * scale              # folds conv bias
    # conv weights laid out so taps sit on the MXU contraction dim:
    #   w_mat[o, (dh*K+dw)*Cin + ci] = w[o, ci, dh, dw]
    w1_mat = jnp.transpose(p["w1"], (0, 2, 3, 1)).reshape(C1, KC1)
    w2_mat = jnp.transpose(p["w2"], (0, 2, 3, 1)).reshape(C2, KC2)
    # block-diagonal one-hot: m2 lane 200*i + 4*j  ->  feature position 10*i + j
    rows = (4 * IMG * jnp.arange(P_OUT)[:, None]
            + 4 * jnp.arange(P_OUT)[None, :]).reshape(-1)                # (100,)
    cols = (P_OUT * jnp.arange(P_OUT)[:, None]
            + jnp.arange(P_OUT)[None, :]).reshape(-1)                    # (100,)
    sel_big = jnp.zeros((L2M, P_OUT * P_OUT), f32).at[rows, cols].set(1.0)
    return dict(
        w1_mat=w1_mat.astype(bf16),
        scale1=scale.reshape(C1, 1).astype(f32),
        shift1=shift.reshape(C1, 1).astype(f32),
        w2_mat=w2_mat.astype(bf16),
        b2=p["b2"].reshape(C2, 1).astype(f32),
        sel_big=sel_big.astype(bf16),
        w_fc1=p["w_fc1"].T.astype(bf16),
        b_fc1=p["b_fc1"].reshape(1, FC1).astype(f32),
        w_fc2=p["w_fc2"].T.astype(bf16),
        b_fc2=p["b_fc2"].reshape(1, FC2).astype(f32),
        w_fc3=p["w_fc3"].T.astype(bf16),
        b_fc3=p["b_fc3"].reshape(1, N_CLS).astype(f32),
    )


# --------------------------- pure-JAX reference (for checking) -----------------------
def _pool_ref(y):
    n, c, h, w = y.shape
    return y.reshape(n, c, h // 2, 2, w // 2, 2).max(axis=(3, 5))


def net_forward_reference(x, p, eps=1e-5):
    dn = ("NCHW", "OIHW", "NCHW")
    y = jax.lax.conv_general_dilated(x, p["w1"], (1, 1), "VALID", dimension_numbers=dn)
    y = y + p["b1"][None, :, None, None]
    y = ((y - p["bn_mean"][None, :, None, None])
         / jnp.sqrt(p["bn_var"][None, :, None, None] + eps)
         * p["bn_gamma"][None, :, None, None] + p["bn_beta"][None, :, None, None])
    y = _pool_ref(jnp.maximum(y, 0.0))
    y = jax.lax.conv_general_dilated(y, p["w2"], (1, 1), "VALID", dimension_numbers=dn)
    y = _pool_ref(jnp.maximum(y + p["b2"][None, :, None, None], 0.0))
    y = y.reshape(y.shape[0], -1)
    y = jnp.maximum(y @ p["w_fc1"].T + p["b_fc1"], 0.0)
    y = jnp.maximum(y @ p["w_fc2"].T + p["b_fc2"], 0.0)
    y = y @ p["w_fc3"].T + p["b_fc3"]
    return jax.nn.softmax(y, axis=1)


# ---------------------------------------- main ---------------------------------------
if __name__ == "__main__":
    key = jax.random.PRNGKey(0)
    k_x, k_p = jax.random.split(key)

    # spatial 50 is implied by fc1 = Linear(16*10*10, .): 50 -conv5-> 46 -pool-> 23 -conv4-> 20 -pool-> 10
    x = jax.random.normal(k_x, (2, NUM_CHANNELS, IMG, IMG), jnp.float32)
    params = init_params(k_p, NUM_CHANNELS)
    prep = prepare_params(params)                   # one-time layout / BN folding

    fwd = jax.jit(net_forward)
    out = jax.block_until_ready(fwd(x, prep))

    assert out.shape == (2, N_CLS)
    assert bool(jnp.all(jnp.isfinite(out)))
    assert bool(jnp.all(jnp.abs(jnp.sum(out, axis=1) - 1.0) < 1e-3))

    ref = jax.block_until_ready(jax.jit(net_forward_reference)(x, params))
    max_err = float(jnp.max(jnp.abs(out - ref)))
    assert max_err < 2e-2, f"mismatch vs reference: {max_err}"

    print("KERNEL_OK")
</pallas_src>

<mosaic_0001>
module attributes {stable_mosaic.version = 11 : i64} {
  func.func @_fc_kernel(%arg0: i32, %arg1: memref<2x1600xbf16, #tpu.memory_space<vmem>>, %arg2: memref<1600x256xbf16, #tpu.memory_space<vmem>>, %arg3: memref<1x256xf32, #tpu.memory_space<vmem>>, %arg4: memref<256x128xbf16, #tpu.memory_space<vmem>>, %arg5: memref<1x128xf32, #tpu.memory_space<vmem>>, %arg6: memref<128x4xbf16, #tpu.memory_space<vmem>>, %arg7: memref<1x4xf32, #tpu.memory_space<vmem>>, %arg8: memref<2x4xf32, #tpu.memory_space<vmem>>) attributes {dimension_semantics = [#tpu.dimension_semantics<arbitrary>], iteration_bounds = array<i64: 1>, scalar_prefetch = 0 : i64, scratch_operands = 0 : i64, tpu.core_type = #tpu.core_type<tc>, window_params = [{pipeline_mode = #tpu.pipeline_mode<synchronous>, transform_indices = @transform_0, window_bounds = array<i64: 2, 1600>}, {pipeline_mode = #tpu.pipeline_mode<synchronous>, transform_indices = @transform_1, window_bounds = array<i64: 1600, 256>}, {pipeline_mode = #tpu.pipeline_mode<synchronous>, transform_indices = @transform_2, window_bounds = array<i64: 1, 256>}, {pipeline_mode = #tpu.pipeline_mode<synchronous>, transform_indices = @transform_3, window_bounds = array<i64: 256, 128>}, {pipeline_mode = #tpu.pipeline_mode<synchronous>, transform_indices = @transform_4, window_bounds = array<i64: 1, 128>}, {pipeline_mode = #tpu.pipeline_mode<synchronous>, transform_indices = @transform_5, window_bounds = array<i64: 128, 4>}, {pipeline_mode = #tpu.pipeline_mode<synchronous>, transform_indices = @transform_6, window_bounds = array<i64: 1, 4>}, {pipeline_mode = #tpu.pipeline_mode<synchronous>, transform_indices = @transform_7, window_bounds = array<i64: 2, 4>}]} {
    %c0 = arith.constant 0 : index
    %c0_0 = arith.constant 0 : index
    %0 = vector.load %arg1[%c0, %c0_0] : memref<2x1600xbf16, #tpu.memory_space<vmem>>, vector<2x1600xbf16>
    %c0_1 = arith.constant 0 : index
    %c0_2 = arith.constant 0 : index
    %1 = vector.load %arg2[%c0_1, %c0_2] : memref<1600x256xbf16, #tpu.memory_space<vmem>>, vector<1600x256xbf16>
    %cst = arith.constant dense<0.000000e+00> : vector<2x256xf32>
    %2 = tpu.matmul %0, %1, %cst {dimension_numbers = #tpu.dot_dimension_numbers<[1], [0], [0], [1], [0, 0, 1, 1], [], []>} : vector<2x1600xbf16>, vector<1600x256xbf16>, vector<2x256xf32> -> vector<2x256xf32>
    %c0_3 = arith.constant 0 : index
    %c0_4 = arith.constant 0 : index
    %3 = vector.load %arg3[%c0_3, %c0_4] : memref<1x256xf32, #tpu.memory_space<vmem>>, vector<1x256xf32>
    %4 = vector.broadcast %3 : vector<1x256xf32> to vector<2x256xf32>
    %5 = arith.addf %2, %4 : vector<2x256xf32>
    %cst_5 = arith.constant 0.000000e+00 : f32
    %6 = vector.broadcast %cst_5 : f32 to vector<2x256xf32>
    %7 = arith.maximumf %5, %6 : vector<2x256xf32>
    %8 = arith.truncf %7 : vector<2x256xf32> to vector<2x256xbf16>
    %c0_6 = arith.constant 0 : index
    %c0_7 = arith.constant 0 : index
    %9 = vector.load %arg4[%c0_6, %c0_7] : memref<256x128xbf16, #tpu.memory_space<vmem>>, vector<256x128xbf16>
    %cst_8 = arith.constant dense<0.000000e+00> : vector<2x128xf32>
    %10 = tpu.matmul %8, %9, %cst_8 {dimension_numbers = #tpu.dot_dimension_numbers<[1], [0], [0], [1], [0, 0, 1, 1], [], []>} : vector<2x256xbf16>, vector<256x128xbf16>, vector<2x128xf32> -> vector<2x128xf32>
    %c0_9 = arith.constant 0 : index
    %c0_10 = arith.constant 0 : index
    %11 = vector.load %arg5[%c0_9, %c0_10] : memref<1x128xf32, #tpu.memory_space<vmem>>, vector<1x128xf32>
    %12 = vector.broadcast %11 : vector<1x128xf32> to vector<2x128xf32>
    %13 = arith.addf %10, %12 : vector<2x128xf32>
    %cst_11 = arith.constant 0.000000e+00 : f32
    %14 = vector.broadcast %cst_11 : f32 to vector<2x128xf32>
    %15 = arith.maximumf %13, %14 : vector<2x128xf32>
    %16 = arith.truncf %15 : vector<2x128xf32> to vector<2x128xbf16>
    %c0_12 = arith.constant 0 : index
    %c0_13 = arith.constant 0 : index
    %17 = vector.load %arg6[%c0_12, %c0_13] : memref<128x4xbf16, #tpu.memory_space<vmem>>, vector<128x4xbf16>
    %cst_14 = arith.constant dense<0.000000e+00> : vector<2x4xf32>
    %18 = tpu.matmul %16, %17, %cst_14 {dimension_numbers = #tpu.dot_dimension_numbers<[1], [0], [0], [1], [0, 0, 1, 1], [], []>} : vector<2x128xbf16>, vector<128x4xbf16>, vector<2x4xf32> -> vector<2x4xf32>
    %c0_15 = arith.constant 0 : index
    %c0_16 = arith.constant 0 : index
    %19 = vector.load %arg7[%c0_15, %c0_16] : memref<1x4xf32, #tpu.memory_space<vmem>>, vector<1x4xf32>
    %20 = vector.broadcast %19 : vector<1x4xf32> to vector<2x4xf32>
    %21 = arith.addf %18, %20 : vector<2x4xf32>
    %cst_17 = arith.constant dense<0xFF800000> : vector<2xf32>
    %22 = vector.multi_reduction <maximumf>, %21, %cst_17 [1] : vector<2x4xf32> to vector<2xf32>
    %23 = vector.shape_cast %22 : vector<2xf32> to vector<2x1xf32>
    %24 = vector.broadcast %23 : vector<2x1xf32> to vector<2x4xf32>
    %25 = arith.subf %21, %24 : vector<2x4xf32>
    %26 = math.exp %25 : vector<2x4xf32>
    %cst_18 = arith.constant dense<0.000000e+00> : vector<2xf32>
    %27 = vector.multi_reduction <add>, %26, %cst_18 [1] : vector<2x4xf32> to vector<2xf32>
    %28 = vector.shape_cast %27 : vector<2xf32> to vector<2x1xf32>
    %29 = vector.broadcast %28 : vector<2x1xf32> to vector<2x4xf32>
    %30 = arith.divf %26, %29 : vector<2x4xf32>
    %c0_19 = arith.constant 0 : index
    %c0_20 = arith.constant 0 : index
    %31 = vector.load %arg8[%c0_19, %c0_20] : memref<2x4xf32, #tpu.memory_space<vmem>>, vector<2x4xf32>
    tpu.vector_store %arg8[%c0_19, %c0_20], %30 {strides = array<i32>} : memref<2x4xf32, #tpu.memory_space<vmem>>, vector<2x4xf32>,
    return
  }
  func.func @transform_0(%arg0: i32) -> (i32, i32) {
    %c0_i32 = arith.constant 0 : i32
    %c0_i32_0 = arith.constant 0 : i32
    %c0_i32_1 = arith.constant 0 : i32
    return %c0_i32, %c0_i32_0 : i32, i32
  }
  func.func @transform_1(%arg0: i32) -> (i32, i32) {
    %c0_i32 = arith.constant 0 : i32
    %c0_i32_0 = arith.constant 0 : i32
    %c0_i32_1 = arith.constant 0 : i32
    return %c0_i32, %c0_i32_0 : i32, i32
  }
  func.func @transform_2(%arg0: i32) -> (i32, i32) {
    %c0_i32 = arith.constant 0 : i32
    %c0_i32_0 = arith.constant 0 : i32
    %c0_i32_1 = arith.constant 0 : i32
    return %c0_i32, %c0_i32_0 : i32, i32
  }
  func.func @transform_3(%arg0: i32) -> (i32, i32) {
    %c0_i32 = arith.constant 0 : i32
    %c0_i32_0 = arith.constant 0 : i32
    %c0_i32_1 = arith.constant 0 : i32
    return %c0_i32, %c0_i32_0 : i32, i32
  }
  func.func @transform_4(%arg0: i32) -> (i32, i32) {
    %c0_i32 = arith.constant 0 : i32
    %c0_i32_0 = arith.constant 0 : i32
    %c0_i32_1 = arith.constant 0 : i32
    return %c0_i32, %c0_i32_0 : i32, i32
  }
  func.func @transform_5(%arg0: i32) -> (i32, i32) {
    %c0_i32 = arith.constant 0 : i32
    %c0_i32_0 = arith.constant 0 : i32
    %c0_i32_1 = arith.constant 0 : i32
    return %c0_i32, %c0_i32_0 : i32, i32
  }
  func.func @transform_6(%arg0: i32) -> (i32, i32) {
    %c0_i32 = arith.constant 0 : i32
    %c0_i32_0 = arith.constant 0 : i32
    %c0_i32_1 = arith.constant 0 : i32
    return %c0_i32, %c0_i32_0 : i32, i32
  }
  func.func @transform_7(%arg0: i32) -> (i32, i32) {
    %c0_i32 = arith.constant 0 : i32
    %c0_i32_0 = arith.constant 0 : i32
    %c0_i32_1 = arith.constant 0 : i32
    return %c0_i32, %c0_i32_0 : i32, i32
  }
}

module attributes {stable_mosaic.version = 11 : i64} {
  func.func @_conv_kernel(%arg0: i32, %arg1: memref<1x4x2500xbf16, #tpu.memory_space<vmem>>, %arg2: memref<8x100xbf16, #tpu.memory_space<vmem>>, %arg3: memref<8x1xf32, #tpu.memory_space<vmem>>, %arg4: memref<8x1xf32, #tpu.memory_space<vmem>>, %arg5: memref<16x128xbf16, #tpu.memory_space<vmem>>, %arg6: memref<16x1xf32, #tpu.memory_space<vmem>>, %arg7: memref<1837x100xbf16, #tpu.memory_space<vmem>>, %arg8: memref<1x16x100xbf16, #tpu.memory_space<vmem>>, %arg9: memref<100x2296xbf16, #tpu.memory_space<vmem>>, %arg10: memref<8x2245xbf16, #tpu.memory_space<vmem>>, %arg11: memref<128x1939xbf16, #tpu.memory_space<vmem>>) attributes {dimension_semantics = [#tpu.dimension_semantics<parallel>], iteration_bounds = array<i64: 2>, scalar_prefetch = 0 : i64, scratch_operands = 3 : i64, tpu.core_type = #tpu.core_type<tc>, window_params = [{transform_indices = @transform_0, window_bounds = array<i64: 1, 4, 2500>}, {pipeline_mode = #tpu.pipeline_mode<synchronous>, transform_indices = @transform_1, window_bounds = array<i64: 8, 100>}, {pipeline_mode = #tpu.pipeline_mode<synchronous>, transform_indices = @transform_2, window_bounds = array<i64: 8, 1>}, {pipeline_mode = #tpu.pipeline_mode<synchronous>, transform_indices = @transform_3, window_bounds = array<i64: 8, 1>}, {pipeline_mode = #tpu.pipeline_mode<synchronous>, transform_indices = @transform_4, window_bounds = array<i64: 16, 128>}, {pipeline_mode = #tpu.pipeline_mode<synchronous>, transform_indices = @transform_5, window_bounds = array<i64: 16, 1>}, {pipeline_mode = #tpu.pipeline_mode<synchronous>, transform_indices = @transform_6, window_bounds = array<i64: 1837, 100>}, {transform_indices = @transform_7, window_bounds = array<i64: 1, 16, 100>}]} {
    %c0 = arith.constant 0 : index
    %c0_0 = arith.constant 0 : index
    %c0_1 = arith.constant 0 : index
    %0 = vector.load %arg1[%c0, %c0_0, %c0_1] : memref<1x4x2500xbf16, #tpu.memory_space<vmem>>, vector<1x4x2296xbf16>
    %1 = vector.shape_cast %0 : vector<1x4x2296xbf16> to vector<4x2296xbf16>
    %c0_2 = arith.constant 0 : index
    %c0_3 = arith.constant 0 : index
    %2 = vector.load %arg9[%c0_2, %c0_3] : memref<100x2296xbf16, #tpu.memory_space<vmem>>, vector<4x2296xbf16>
    tpu.vector_store %arg9[%c0_2, %c0_3], %1 {strides = array<i32>} : memref<100x2296xbf16, #tpu.memory_space<vmem>>, vector<4x2296xbf16>,
    %c0_4 = arith.constant 0 : index
    %c0_5 = arith.constant 0 : index
    %c1 = arith.constant 1 : index
    %3 = vector.load %arg1[%c0_4, %c0_5, %c1] : memref<1x4x2500xbf16, #tpu.memory_space<vmem>>, vector<1x4x2296xbf16>
    %4 = vector.shape_cast %3 : vector<1x4x2296xbf16> to vector<4x2296xbf16>
    %c4 = arith.constant 4 : index
    %c0_6 = arith.constant 0 : index
    %5 = vector.load %arg9[%c4, %c0_6] : memref<100x2296xbf16, #tpu.memory_space<vmem>>, vector<4x2296xbf16>
    tpu.vector_store %arg9[%c4, %c0_6], %4 {strides = array<i32>} : memref<100x2296xbf16, #tpu.memory_space<vmem>>, vector<4x2296xbf16>,
    %c0_7 = arith.constant 0 : index
    %c0_8 = arith.constant 0 : index
    %c2 = arith.constant 2 : index
    %6 = vector.load %arg1[%c0_7, %c0_8, %c2] : memref<1x4x2500xbf16, #tpu.memory_space<vmem>>, vector<1x4x2296xbf16>
    %7 = vector.shape_cast %6 : vector<1x4x2296xbf16> to vector<4x2296xbf16>
    %c8 = arith.constant 8 : index
    %c0_9 = arith.constant 0 : index
    %8 = vector.load %arg9[%c8, %c0_9] : memref<100x2296xbf16, #tpu.memory_space<vmem>>, vector<4x2296xbf16>
    tpu.vector_store %arg9[%c8, %c0_9], %7 {strides = array<i32>} : memref<100x2296xbf16, #tpu.memory_space<vmem>>, vector<4x2296xbf16>,
    %c0_10 = arith.constant 0 : index
    %c0_11 = arith.constant 0 : index
    %c3 = arith.constant 3 : index
    %9 = vector.load %arg1[%c0_10, %c0_11, %c3] : memref<1x4x2500xbf16, #tpu.memory_space<vmem>>, vector<1x4x2296xbf16>
    %10 = vector.shape_cast %9 : vector<1x4x2296xbf16> to vector<4x2296xbf16>
    %c12 = arith.constant 12 : index
    %c0_12 = arith.constant 0 : index
    %11 = vector.load %arg9[%c12, %c0_12] : memref<100x2296xbf16, #tpu.memory_space<vmem>>, vector<4x2296xbf16>
    tpu.vector_store %arg9[%c12, %c0_12], %10 {strides = array<i32>} : memref<100x2296xbf16, #tpu.memory_space<vmem>>, vector<4x2296xbf16>,
    %c0_13 = arith.constant 0 : index
    %c0_14 = arith.constant 0 : index
    %c4_15 = arith.constant 4 : index
    %12 = vector.load %arg1[%c0_13, %c0_14, %c4_15] : memref<1x4x2500xbf16, #tpu.memory_space<vmem>>, vector<1x4x2296xbf16>
    %13 = vector.shape_cast %12 : vector<1x4x2296xbf16> to vector<4x2296xbf16>
    %c16 = arith.constant 16 : index
    %c0_16 = arith.constant 0 : index
    %14 = vector.load %arg9[%c16, %c0_16] : memref<100x2296xbf16, #tpu.memory_space<vmem>>, vector<4x2296xbf16>
    tpu.vector_store %arg9[%c16, %c0_16], %13 {strides = array<i32>} : memref<100x2296xbf16, #tpu.memory_space<vmem>>, vector<4x2296xbf16>,
    %c0_17 = arith.constant 0 : index
    %c0_18 = arith.constant 0 : index
    %c50 = arith.constant 50 : index
    %15 = vector.load %arg1[%c0_17, %c0_18, %c50] : memref<1x4x2500xbf16, #tpu.memory_space<vmem>>, vector<1x4x2296xbf16>
    %16 = vector.shape_cast %15 : vector<1x4x2296xbf16> to vector<4x2296xbf16>
    %c20 = arith.constant 20 : index
    %c0_19 = arith.constant 0 : index
    %17 = vector.load %arg9[%c20, %c0_19] : memref<100x2296xbf16, #tpu.memory_space<vmem>>, vector<4x2296xbf16>
    tpu.vector_store %arg9[%c20, %c0_19], %16 {strides = array<i32>} : memref<100x2296xbf16, #tpu.memory_space<vmem>>, vector<4x2296xbf16>,
    %c0_20 = arith.constant 0 : index
    %c0_21 = arith.constant 0 : index
    %c51 = arith.constant 51 : index
    %18 = vector.load %arg1[%c0_20, %c0_21, %c51] : memref<1x4x2500xbf16, #tpu.memory_space<vmem>>, vector<1x4x2296xbf16>
    %19 = vector.shape_cast %18 : vector<1x4x2296xbf16> to vector<4x2296xbf16>
    %c24 = arith.constant 24 : index
    %c0_22 = arith.constant 0 : index
    %20 = vector.load %arg9[%c24, %c0_22] : memref<100x2296xbf16, #tpu.memory_space<vmem>>, vector<4x2296xbf16>
    tpu.vector_store %arg9[%c24, %c0_22], %19 {strides = array<i32>} : memref<100x2296xbf16, #tpu.memory_space<vmem>>, vector<4x2296xbf16>,
    %c0_23 = arith.constant 0 : index
    %c0_24 = arith.constant 0 : index
    %c52 = arith.constant 52 : index
    %21 = vector.load %arg1[%c0_23, %c0_24, %c52] : memref<1x4x2500xbf16, #tpu.memory_space<vmem>>, vector<1x4x2296xbf16>
    %22 = vector.shape_cast %21 : vector<1x4x2296xbf16> to vector<4x2296xbf16>
    %c28 = arith.constant 28 : index
    %c0_25 = arith.constant 0 : index
    %23 = vector.load %arg9[%c28, %c0_25] : memref<100x2296xbf16, #tpu.memory_space<vmem>>, vector<4x2296xbf16>
    tpu.vector_store %arg9[%c28, %c0_25], %22 {strides = array<i32>} : memref<100x2296xbf16, #tpu.memory_space<vmem>>, vector<4x2296xbf16>,
    %c0_26 = arith.constant 0 : index
    %c0_27 = arith.constant 0 : index
    %c53 = arith.constant 53 : index
    %24 = vector.load %arg1[%c0_26, %c0_27, %c53] : memref<1x4x2500xbf16, #tpu.memory_space<vmem>>, vector<1x4x2296xbf16>
    %25 = vector.shape_cast %24 : vector<1x4x2296xbf16> to vector<4x2296xbf16>
    %c32 = arith.constant 32 : index
    %c0_28 = arith.constant 0 : index
    %26 = vector.load %arg9[%c32, %c0_28] : memref<100x2296xbf16, #tpu.memory_space<vmem>>, vector<4x2296xbf16>
    tpu.vector_store %arg9[%c32, %c0_28], %25 {strides = array<i32>} : memref<100x2296xbf16, #tpu.memory_space<vmem>>, vector<4x2296xbf16>,
    %c0_29 = arith.constant 0 : index
    %c0_30 = arith.constant 0 : index
    %c54 = arith.constant 54 : index
    %27 = vector.load %arg1[%c0_29, %c0_30, %c54] : memref<1x4x2500xbf16, #tpu.memory_space<vmem>>, vector<1x4x2296xbf16>
    %28 = vector.shape_cast %27 : vector<1x4x2296xbf16> to vector<4x2296xbf16>
    %c36 = arith.constant 36 : index
    %c0_31 = arith.constant 0 : index
    %29 = vector.load %arg9[%c36, %c0_31] : memref<100x2296xbf16, #tpu.memory_space<vmem>>, vector<4x2296xbf16>
    tpu.vector_store %arg9[%c36, %c0_31], %28 {strides = array<i32>} : memref<100x2296xbf16, #tpu.memory_space<vmem>>, vector<4x2296xbf16>,
    %c0_32 = arith.constant 0 : index
    %c0_33 = arith.constant 0 : index
    %c100 = arith.constant 100 : index
    %30 = vector.load %arg1[%c0_32, %c0_33, %c100] : memref<1x4x2500xbf16, #tpu.memory_space<vmem>>, vector<1x4x2296xbf16>
    %31 = vector.shape_cast %30 : vector<1x4x2296xbf16> to vector<4x2296xbf16>
    %c40 = arith.constant 40 : index
    %c0_34 = arith.constant 0 : index
    %32 = vector.load %arg9[%c40, %c0_34] : memref<100x2296xbf16, #tpu.memory_space<vmem>>, vector<4x2296xbf16>
    tpu.vector_store %arg9[%c40, %c0_34], %31 {strides = array<i32>} : memref<100x2296xbf16, #tpu.memory_space<vmem>>, vector<4x2296xbf16>,
    %c0_35 = arith.constant 0 : index
    %c0_36 = arith.constant 0 : index
    %c101 = arith.constant 101 : index
    %33 = vector.load %arg1[%c0_35, %c0_36, %c101] : memref<1x4x2500xbf16, #tpu.memory_space<vmem>>, vector<1x4x2296xbf16>
    %34 = vector.shape_cast %33 : vector<1x4x2296xbf16> to vector<4x2296xbf16>
    %c44 = arith.constant 44 : index
    %c0_37 = arith.constant 0 : index
    %35 = vector.load %arg9[%c44, %c0_37] : memref<100x2296xbf16, #tpu.memory_space<vmem>>, vector<4x2296xbf16>
    tpu.vector_store %arg9[%c44, %c0_37], %34 {strides = array<i32>} : memref<100x2296xbf16, #tpu.memory_space<vmem>>, vector<4x2296xbf16>,
    %c0_38 = arith.constant 0 : index
    %c0_39 = arith.constant 0 : index
    %c102 = arith.constant 102 : index
    %36 = vector.load %arg1[%c0_38, %c0_39, %c102] : memref<1x4x2500xbf16, #tpu.memory_space<vmem>>, vector<1x4x2296xbf16>
    %37 = vector.shape_cast %36 : vector<1x4x2296xbf16> to vector<4x2296xbf16>
    %c48 = arith.constant 48 : index
    %c0_40 = arith.constant 0 : index
    %38 = vector.load %arg9[%c48, %c0_40] : memref<100x2296xbf16, #tpu.memory_space<vmem>>, vector<4x2296xbf16>
    tpu.vector_store %arg9[%c48, %c0_40], %37 {strides = array<i32>} : memref<100x2296xbf16, #tpu.memory_space<vmem>>, vector<4x2296xbf16>,
    %c0_41 = arith.constant 0 : index
    %c0_42 = arith.constant 0 : index
    %c103 = arith.constant 103 : index
    %39 = vector.load %arg1[%c0_41, %c0_42, %c103] : memref<1x4x2500xbf16, #tpu.memory_space<vmem>>, vector<1x4x2296xbf16>
    %40 = vector.shape_cast %39 : vector<1x4x2296xbf16> to vector<4x2296xbf16>
    %c52_43 = arith.constant 52 : index
    %c0_44 = arith.constant 0 : index
    %41 = vector.load %arg9[%c52_43, %c0_44] : memref<100x2296xbf16, #tpu.memory_space<vmem>>, vector<4x2296xbf16>
    tpu.vector_store %arg9[%c52_43, %c0_44], %40 {strides = array<i32>} : memref<100x2296xbf16, #tpu.memory_space<vmem>>, vector<4x2296xbf16>,
    %c0_45 = arith.constant 0 : index
    %c0_46 = arith.constant 0 : index
    %c104 = arith.constant 104 : index
    %42 = vector.load %arg1[%c0_45, %c0_46, %c104] : memref<1x4x2500xbf16, #tpu.memory_space<vmem>>, vector<1x4x2296xbf16>
    %43 = vector.shape_cast %42 : vector<1x4x2296xbf16> to vector<4x2296xbf16>
    %c56 = arith.constant 56 : index
    %c0_47 = arith.constant 0 : index
    %44 = vector.load %arg9[%c56, %c0_47] : memref<100x2296xbf16, #tpu.memory_space<vmem>>, vector<4x2296xbf16>
    tpu.vector_store %arg9[%c56, %c0_47], %43 {strides = array<i32>} : memref<100x2296xbf16, #tpu.memory_space<vmem>>, vector<4x2296xbf16>,
    %c0_48 = arith.constant 0 : index
    %c0_49 = arith.constant 0 : index
    %c150 = arith.constant 150 : index
    %45 = vector.load %arg1[%c0_48, %c0_49, %c150] : memref<1x4x2500xbf16, #tpu.memory_space<vmem>>, vector<1x4x2296xbf16>
    %46 = vector.shape_cast %45 : vector<1x4x2296xbf16> to vector<4x2296xbf16>
    %c60 = arith.constant 60 : index
    %c0_50 = arith.constant 0 : index
    %47 = vector.load %arg9[%c60, %c0_50] : memref<100x2296xbf16, #tpu.memory_space<vmem>>, vector<4x2296xbf16>
    tpu.vector_store %arg9[%c60, %c0_50], %46 {strides = array<i32>} : memref<100x2296xbf16, #tpu.memory_space<vmem>>, vector<4x2296xbf16>,
    %c0_51 = arith.constant 0 : index
    %c0_52 = arith.constant 0 : index
    %c151 = arith.constant 151 : index
    %48 = vector.load %arg1[%c0_51, %c0_52, %c151] : memref<1x4x2500xbf16, #tpu.memory_space<vmem>>, vector<1x4x2296xbf16>
    %49 = vector.shape_cast %48 : vector<1x4x2296xbf16> to vector<4x2296xbf16>
    %c64 = arith.constant 64 : index
    %c0_53 = arith.constant 0 : index
    %50 = vector.load %arg9[%c64, %c0_53] : memref<100x2296xbf16, #tpu.memory_space<vmem>>, vector<4x2296xbf16>
    tpu.vector_store %arg9[%c64, %c0_53], %49 {strides = array<i32>} : memref<100x2296xbf16, #tpu.memory_space<vmem>>, vector<4x2296xbf16>,
    %c0_54 = arith.constant 0 : index
    %c0_55 = arith.constant 0 : index
    %c152 = arith.constant 152 : index
    %51 = vector.load %arg1[%c0_54, %c0_55, %c152] : memref<1x4x2500xbf16, #tpu.memory_space<vmem>>, vector<1x4x2296xbf16>
    %52 = vector.shape_cast %51 : vector<1x4x2296xbf16> to vector<4x2296xbf16>
    %c68 = arith.constant 68 : index
    %c0_56 = arith.constant 0 : index
    %53 = vector.load %arg9[%c68, %c0_56] : memref<100x2296xbf16, #tpu.memory_space<vmem>>, vector<4x2296xbf16>
    tpu.vector_store %arg9[%c68, %c0_56], %52 {strides = array<i32>} : memref<100x2296xbf16, #tpu.memory_space<vmem>>, vector<4x2296xbf16>,
    %c0_57 = arith.constant 0 : index
    %c0_58 = arith.constant 0 : index
    %c153 = arith.constant 153 : index
    %54 = vector.load %arg1[%c0_57, %c0_58, %c153] : memref<1x4x2500xbf16, #tpu.memory_space<vmem>>, vector<1x4x2296xbf16>
    %55 = vector.shape_cast %54 : vector<1x4x2296xbf16> to vector<4x2296xbf16>
    %c72 = arith.constant 72 : index
    %c0_59 = arith.constant 0 : index
    %56 = vector.load %arg9[%c72, %c0_59] : memref<100x2296xbf16, #tpu.memory_space<vmem>>, vector<4x2296xbf16>
    tpu.vector_store %arg9[%c72, %c0_59], %55 {strides = array<i32>} : memref<100x2296xbf16, #tpu.memory_space<vmem>>, vector<4x2296xbf16>,
    %c0_60 = arith.constant 0 : index
    %c0_61 = arith.constant 0 : index
    %c154 = arith.constant 154 : index
    %57 = vector.load %arg1[%c0_60, %c0_61, %c154] : memref<1x4x2500xbf16, #tpu.memory_space<vmem>>, vector<1x4x2296xbf16>
    %58 = vector.shape_cast %57 : vector<1x4x2296xbf16> to vector<4x2296xbf16>
    %c76 = arith.constant 76 : index
    %c0_62 = arith.constant 0 : index
    %59 = vector.load %arg9[%c76, %c0_62] : memref<100x2296xbf16, #tpu.memory_space<vmem>>, vector<4x2296xbf16>
    tpu.vector_store %arg9[%c76, %c0_62], %58 {strides = array<i32>} : memref<100x2296xbf16, #tpu.memory_space<vmem>>, vector<4x2296xbf16>,
    %c0_63 = arith.constant 0 : index
    %c0_64 = arith.constant 0 : index
    %c200 = arith.constant 200 : index
    %60 = vector.load %arg1[%c0_63, %c0_64, %c200] : memref<1x4x2500xbf16, #tpu.memory_space<vmem>>, vector<1x4x2296xbf16>
    %61 = vector.shape_cast %60 : vector<1x4x2296xbf16> to vector<4x2296xbf16>
    %c80 = arith.constant 80 : index
    %c0_65 = arith.constant 0 : index
    %62 = vector.load %arg9[%c80, %c0_65] : memref<100x2296xbf16, #tpu.memory_space<vmem>>, vector<4x2296xbf16>
    tpu.vector_store %arg9[%c80, %c0_65], %61 {strides = array<i32>} : memref<100x2296xbf16, #tpu.memory_space<vmem>>, vector<4x2296xbf16>,
    %c0_66 = arith.constant 0 : index
    %c0_67 = arith.constant 0 : index
    %c201 = arith.constant 201 : index
    %63 = vector.load %arg1[%c0_66, %c0_67, %c201] : memref<1x4x2500xbf16, #tpu.memory_space<vmem>>, vector<1x4x2296xbf16>
    %64 = vector.shape_cast %63 : vector<1x4x2296xbf16> to vector<4x2296xbf16>
    %c84 = arith.constant 84 : index
    %c0_68 = arith.constant 0 : index
    %65 = vector.load %arg9[%c84, %c0_68] : memref<100x2296xbf16, #tpu.memory_space<vmem>>, vector<4x2296xbf16>
    tpu.vector_store %arg9[%c84, %c0_68], %64 {strides = array<i32>} : memref<100x2296xbf16, #tpu.memory_space<vmem>>, vector<4x2296xbf16>,
    %c0_69 = arith.constant 0 : index
    %c0_70 = arith.constant 0 : index
    %c202 = arith.constant 202 : index
    %66 = vector.load %arg1[%c0_69, %c0_70, %c202] : memref<1x4x2500xbf16, #tpu.memory_space<vmem>>, vector<1x4x2296xbf16>
    %67 = vector.shape_cast %66 : vector<1x4x2296xbf16> to vector<4x2296xbf16>
    %c88 = arith.constant 88 : index
    %c0_71 = arith.constant 0 : index
    %68 = vector.load %arg9[%c88, %c0_71] : memref<100x2296xbf16, #tpu.memory_space<vmem>>, vector<4x2296xbf16>
    tpu.vector_store %arg9[%c88, %c0_71], %67 {strides = array<i32>} : memref<100x2296xbf16, #tpu.memory_space<vmem>>, vector<4x2296xbf16>,
    %c0_72 = arith.constant 0 : index
    %c0_73 = arith.constant 0 : index
    %c203 = arith.constant 203 : index
    %69 = vector.load %arg1[%c0_72, %c0_73, %c203] : memref<1x4x2500xbf16, #tpu.memory_space<vmem>>, vector<1x4x2296xbf16>
    %70 = vector.shape_cast %69 : vector<1x4x2296xbf16> to vector<4x2296xbf16>
    %c92 = arith.constant 92 : index
    %c0_74 = arith.constant 0 : index
    %71 = vector.load %arg9[%c92, %c0_74] : memref<100x2296xbf16, #tpu.memory_space<vmem>>, vector<4x2296xbf16>
    tpu.vector_store %arg9[%c92, %c0_74], %70 {strides = array<i32>} : memref<100x2296xbf16, #tpu.memory_space<vmem>>, vector<4x2296xbf16>,
    %c0_75 = arith.constant 0 : index
    %c0_76 = arith.constant 0 : index
    %c204 = arith.constant 204 : index
    %72 = vector.load %arg1[%c0_75, %c0_76, %c204] : memref<1x4x2500xbf16, #tpu.memory_space<vmem>>, vector<1x4x2296xbf16>
    %73 = vector.shape_cast %72 : vector<1x4x2296xbf16> to vector<4x2296xbf16>
    %c96 = arith.constant 96 : index
    %c0_77 = arith.constant 0 : index
    %74 = vector.load %arg9[%c96, %c0_77] : memref<100x2296xbf16, #tpu.memory_space<vmem>>, vector<4x2296xbf16>
    tpu.vector_store %arg9[%c96, %c0_77], %73 {strides = array<i32>} : memref<100x2296xbf16, #tpu.memory_space<vmem>>, vector<4x2296xbf16>,
    %c0_78 = arith.constant 0 : index
    %c0_79 = arith.constant 0 : index
    %75 = vector.load %arg2[%c0_78, %c0_79] : memref<8x100xbf16, #tpu.memory_space<vmem>>, vector<8x100xbf16>
    %c0_80 = arith.constant 0 : index
    %c0_81 = arith.constant 0 : index
    %76 = vector.load %arg9[%c0_80, %c0_81] : memref<100x2296xbf16, #tpu.memory_space<vmem>>, vector<100x2296xbf16>
    %cst = arith.constant dense<0.000000e+00> : vector<8x2296xf32>
    %77 = tpu.matmul %75, %76, %cst {dimension_numbers = #tpu.dot_dimension_numbers<[1], [0], [0], [1], [0, 0, 1, 1], [], []>} : vector<8x100xbf16>, vector<100x2296xbf16>, vector<8x2296xf32> -> vector<8x2296xf32>
    %c0_82 = arith.constant 0 : index
    %c0_83 = arith.constant 0 : index
    %78 = vector.load %arg3[%c0_82, %c0_83] : memref<8x1xf32, #tpu.memory_space<vmem>>, vector<8x1xf32>
    %79 = vector.broadcast %78 : vector<8x1xf32> to vector<8x2296xf32>
    %80 = arith.mulf %77, %79 : vector<8x2296xf32>
    %c0_84 = arith.constant 0 : index
    %c0_85 = arith.constant 0 : index
    %81 = vector.load %arg4[%c0_84, %c0_85] : memref<8x1xf32, #tpu.memory_space<vmem>>, vector<8x1xf32>
    %82 = vector.broadcast %81 : vector<8x1xf32> to vector<8x2296xf32>
    %83 = arith.addf %80, %82 : vector<8x2296xf32>
    %cst_86 = arith.constant 0.000000e+00 : f32
    %84 = vector.broadcast %cst_86 : f32 to vector<8x2296xf32>
    %85 = arith.maximumf %83, %84 : vector<8x2296xf32>
    %86 = vector.extract_strided_slice %85 {offsets = [0, 0], sizes = [8, 2245], strides = [1, 1]} : vector<8x2296xf32> to vector<8x2245xf32>
    %87 = vector.extract_strided_slice %85 {offsets = [0, 1], sizes = [8, 2245], strides = [1, 1]} : vector<8x2296xf32> to vector<8x2245xf32>
    %88 = arith.maximumf %86, %87 : vector<8x2245xf32>
    %89 = vector.extract_strided_slice %85 {offsets = [0, 50], sizes = [8, 2245], strides = [1, 1]} : vector<8x2296xf32> to vector<8x2245xf32>
    %90 = vector.extract_strided_slice %85 {offsets = [0, 51], sizes = [8, 2245], strides = [1, 1]} : vector<8x2296xf32> to vector<8x2245xf32>
    %91 = arith.maximumf %89, %90 : vector<8x2245xf32>
    %92 = arith.maximumf %88, %91 : vector<8x2245xf32>
    %93 = arith.truncf %92 : vector<8x2245xf32> to vector<8x2245xbf16>
    %c0_87 = arith.constant 0 : index
    %c0_88 = arith.constant 0 : index
    %94 = vector.load %arg10[%c0_87, %c0_88] : memref<8x2245xbf16, #tpu.memory_space<vmem>>, vector<8x2245xbf16>
    tpu.vector_store %arg10[%c0_87, %c0_88], %93 {strides = array<i32>} : memref<8x2245xbf16, #tpu.memory_space<vmem>>, vector<8x2245xbf16>,
    %c0_89 = arith.constant 0 : index
    %c0_90 = arith.constant 0 : index
    %95 = vector.load %arg10[%c0_89, %c0_90] : memref<8x2245xbf16, #tpu.memory_space<vmem>>, vector<8x1939xbf16>
    %c0_91 = arith.constant 0 : index
    %c0_92 = arith.constant 0 : index
    %96 = vector.load %arg11[%c0_91, %c0_92] : memref<128x1939xbf16, #tpu.memory_space<vmem>>, vector<8x1939xbf16>
    tpu.vector_store %arg11[%c0_91, %c0_92], %95 {strides = array<i32>} : memref<128x1939xbf16, #tpu.memory_space<vmem>>, vector<8x1939xbf16>,
    %c0_93 = arith.constant 0 : index
    %c2_94 = arith.constant 2 : index
    %97 = vector.load %arg10[%c0_93, %c2_94] : memref<8x2245xbf16, #tpu.memory_space<vmem>>, vector<8x1939xbf16>
    %c8_95 = arith.constant 8 : index
    %c0_96 = arith.constant 0 : index
    %98 = vector.load %arg11[%c8_95, %c0_96] : memref<128x1939xbf16, #tpu.memory_space<vmem>>, vector<8x1939xbf16>
    tpu.vector_store %arg11[%c8_95, %c0_96], %97 {strides = array<i32>} : memref<128x1939xbf16, #tpu.memory_space<vmem>>, vector<8x1939xbf16>,
    %c0_97 = arith.constant 0 : index
    %c4_98 = arith.constant 4 : index
    %99 = vector.load %arg10[%c0_97, %c4_98] : memref<8x2245xbf16, #tpu.memory_space<vmem>>, vector<8x1939xbf16>
    %c16_99 = arith.constant 16 : index
    %c0_100 = arith.constant 0 : index
    %100 = vector.load %arg11[%c16_99, %c0_100] : memref<128x1939xbf16, #tpu.memory_space<vmem>>, vector<8x1939xbf16>
    tpu.vector_store %arg11[%c16_99, %c0_100], %99 {strides = array<i32>} : memref<128x1939xbf16, #tpu.memory_space<vmem>>, vector<8x1939xbf16>,
    %c0_101 = arith.constant 0 : index
    %c6 = arith.constant 6 : index
    %101 = vector.load %arg10[%c0_101, %c6] : memref<8x2245xbf16, #tpu.memory_space<vmem>>, vector<8x1939xbf16>
    %c24_102 = arith.constant 24 : index
    %c0_103 = arith.constant 0 : index
    %102 = vector.load %arg11[%c24_102, %c0_103] : memref<128x1939xbf16, #tpu.memory_space<vmem>>, vector<8x1939xbf16>
    tpu.vector_store %arg11[%c24_102, %c0_103], %101 {strides = array<i32>} : memref<128x1939xbf16, #tpu.memory_space<vmem>>, vector<8x1939xbf16>,
    %c0_104 = arith.constant 0 : index
    %c100_105 = arith.constant 100 : index
    %103 = vector.load %arg10[%c0_104, %c100_105] : memref<8x2245xbf16, #tpu.memory_space<vmem>>, vector<8x1939xbf16>
    %c32_106 = arith.constant 32 : index
    %c0_107 = arith.constant 0 : index
    %104 = vector.load %arg11[%c32_106, %c0_107] : memref<128x1939xbf16, #tpu.memory_space<vmem>>, vector<8x1939xbf16>
    tpu.vector_store %arg11[%c32_106, %c0_107], %103 {strides = array<i32>} : memref<128x1939xbf16, #tpu.memory_space<vmem>>, vector<8x1939xbf16>,
    %c0_108 = arith.constant 0 : index
    %c102_109 = arith.constant 102 : index
    %105 = vector.load %arg10[%c0_108, %c102_109] : memref<8x2245xbf16, #tpu.memory_space<vmem>>, vector<8x1939xbf16>
    %c40_110 = arith.constant 40 : index
    %c0_111 = arith.constant 0 : index
    %106 = vector.load %arg11[%c40_110, %c0_111] : memref<128x1939xbf16, #tpu.memory_space<vmem>>, vector<8x1939xbf16>
    tpu.vector_store %arg11[%c40_110, %c0_111], %105 {strides = array<i32>} : memref<128x1939xbf16, #tpu.memory_space<vmem>>, vector<8x1939xbf16>,
    %c0_112 = arith.constant 0 : index
    %c104_113 = arith.constant 104 : index
    %107 = vector.load %arg10[%c0_112, %c104_113] : memref<8x2245xbf16, #tpu.memory_space<vmem>>, vector<8x1939xbf16>
    %c48_114 = arith.constant 48 : index
    %c0_115 = arith.constant 0 : index
    %108 = vector.load %arg11[%c48_114, %c0_115] : memref<128x1939xbf16, #tpu.memory_space<vmem>>, vector<8x1939xbf16>
    tpu.vector_store %arg11[%c48_114, %c0_115], %107 {strides = array<i32>} : memref<128x1939xbf16, #tpu.memory_space<vmem>>, vector<8x1939xbf16>,
    %c0_116 = arith.constant 0 : index
    %c106 = arith.constant 106 : index
    %109 = vector.load %arg10[%c0_116, %c106] : memref<8x2245xbf16, #tpu.memory_space<vmem>>, vector<8x1939xbf16>
    %c56_117 = arith.constant 56 : index
    %c0_118 = arith.constant 0 : index
    %110 = vector.load %arg11[%c56_117, %c0_118] : memref<128x1939xbf16, #tpu.memory_space<vmem>>, vector<8x1939xbf16>
    tpu.vector_store %arg11[%c56_117, %c0_118], %109 {strides = array<i32>} : memref<128x1939xbf16, #tpu.memory_space<vmem>>, vector<8x1939xbf16>,
    %c0_119 = arith.constant 0 : index
    %c200_120 = arith.constant 200 : index
    %111 = vector.load %arg10[%c0_119, %c200_120] : memref<8x2245xbf16, #tpu.memory_space<vmem>>, vector<8x1939xbf16>
    %c64_121 = arith.constant 64 : index
    %c0_122 = arith.constant 0 : index
    %112 = vector.load %arg11[%c64_121, %c0_122] : memref<128x1939xbf16, #tpu.memory_space<vmem>>, vector<8x1939xbf16>
    tpu.vector_store %arg11[%c64_121, %c0_122], %111 {strides = array<i32>} : memref<128x1939xbf16, #tpu.memory_space<vmem>>, vector<8x1939xbf16>,
    %c0_123 = arith.constant 0 : index
    %c202_124 = arith.constant 202 : index
    %113 = vector.load %arg10[%c0_123, %c202_124] : memref<8x2245xbf16, #tpu.memory_space<vmem>>, vector<8x1939xbf16>
    %c72_125 = arith.constant 72 : index
    %c0_126 = arith.constant 0 : index
    %114 = vector.load %arg11[%c72_125, %c0_126] : memref<128x1939xbf16, #tpu.memory_space<vmem>>, vector<8x1939xbf16>
    tpu.vector_store %arg11[%c72_125, %c0_126], %113 {strides = array<i32>} : memref<128x1939xbf16, #tpu.memory_space<vmem>>, vector<8x1939xbf16>,
    %c0_127 = arith.constant 0 : index
    %c204_128 = arith.constant 204 : index
    %115 = vector.load %arg10[%c0_127, %c204_128] : memref<8x2245xbf16, #tpu.memory_space<vmem>>, vector<8x1939xbf16>
    %c80_129 = arith.constant 80 : index
    %c0_130 = arith.constant 0 : index
    %116 = vector.load %arg11[%c80_129, %c0_130] : memref<128x1939xbf16, #tpu.memory_space<vmem>>, vector<8x1939xbf16>
    tpu.vector_store %arg11[%c80_129, %c0_130], %115 {strides = array<i32>} : memref<128x1939xbf16, #tpu.memory_space<vmem>>, vector<8x1939xbf16>,
    %c0_131 = arith.constant 0 : index
    %c206 = arith.constant 206 : index
    %117 = vector.load %arg10[%c0_131, %c206] : memref<8x2245xbf16, #tpu.memory_space<vmem>>, vector<8x1939xbf16>
    %c88_132 = arith.constant 88 : index
    %c0_133 = arith.constant 0 : index
    %118 = vector.load %arg11[%c88_132, %c0_133] : memref<128x1939xbf16, #tpu.memory_space<vmem>>, vector<8x1939xbf16>
    tpu.vector_store %arg11[%c88_132, %c0_133], %117 {strides = array<i32>} : memref<128x1939xbf16, #tpu.memory_space<vmem>>, vector<8x1939xbf16>,
    %c0_134 = arith.constant 0 : index
    %c300 = arith.constant 300 : index
    %119 = vector.load %arg10[%c0_134, %c300] : memref<8x2245xbf16, #tpu.memory_space<vmem>>, vector<8x1939xbf16>
    %c96_135 = arith.constant 96 : index
    %c0_136 = arith.constant 0 : index
    %120 = vector.load %arg11[%c96_135, %c0_136] : memref<128x1939xbf16, #tpu.memory_space<vmem>>, vector<8x1939xbf16>
    tpu.vector_store %arg11[%c96_135, %c0_136], %119 {strides = array<i32>} : memref<128x1939xbf16, #tpu.memory_space<vmem>>, vector<8x1939xbf16>,
    %c0_137 = arith.constant 0 : index
    %c302 = arith.constant 302 : index
    %121 = vector.load %arg10[%c0_137, %c302] : memref<8x2245xbf16, #tpu.memory_space<vmem>>, vector<8x1939xbf16>
    %c104_138 = arith.constant 104 : index
    %c0_139 = arith.constant 0 : index
    %122 = vector.load %arg11[%c104_138, %c0_139] : memref<128x1939xbf16, #tpu.memory_space<vmem>>, vector<8x1939xbf16>
    tpu.vector_store %arg11[%c104_138, %c0_139], %121 {strides = array<i32>} : memref<128x1939xbf16, #tpu.memory_space<vmem>>, vector<8x1939xbf16>,
    %c0_140 = arith.constant 0 : index
    %c304 = arith.constant 304 : index
    %123 = vector.load %arg10[%c0_140, %c304] : memref<8x2245xbf16, #tpu.memory_space<vmem>>, vector<8x1939xbf16>
    %c112 = arith.constant 112 : index
    %c0_141 = arith.constant 0 : index
    %124 = vector.load %arg11[%c112, %c0_141] : memref<128x1939xbf16, #tpu.memory_space<vmem>>, vector<8x1939xbf16>
    tpu.vector_store %arg11[%c112, %c0_141], %123 {strides = array<i32>} : memref<128x1939xbf16, #tpu.memory_space<vmem>>, vector<8x1939xbf16>,
    %c0_142 = arith.constant 0 : index
    %c306 = arith.constant 306 : index
    %125 = vector.load %arg10[%c0_142, %c306] : memref<8x2245xbf16, #tpu.memory_space<vmem>>, vector<8x1939xbf16>
    %c120 = arith.constant 120 : index
    %c0_143 = arith.constant 0 : index
    %126 = vector.load %arg11[%c120, %c0_143] : memref<128x1939xbf16, #tpu.memory_space<vmem>>, vector<8x1939xbf16>
    tpu.vector_store %arg11[%c120, %c0_143], %125 {strides = array<i32>} : memref<128x1939xbf16, #tpu.memory_space<vmem>>, vector<8x1939xbf16>,
    %c0_144 = arith.constant 0 : index
    %c0_145 = arith.constant 0 : index
    %127 = vector.load %arg5[%c0_144, %c0_145] : memref<16x128xbf16, #tpu.memory_space<vmem>>, vector<16x128xbf16>
    %c0_146 = arith.constant 0 : index
    %c0_147 = arith.constant 0 : index
    %128 = vector.load %arg11[%c0_146, %c0_147] : memref<128x1939xbf16, #tpu.memory_space<vmem>>, vector<128x1939xbf16>
    %cst_148 = arith.constant dense<0.000000e+00> : vector<16x1939xf32>
    %129 = tpu.matmul %127, %128, %cst_148 {dimension_numbers = #tpu.dot_dimension_numbers<[1], [0], [0], [1], [0, 0, 1, 1], [], []>} : vector<16x128xbf16>, vector<128x1939xbf16>, vector<16x1939xf32> -> vector<16x1939xf32>
    %c0_149 = arith.constant 0 : index
    %c0_150 = arith.constant 0 : index
    %130 = vector.load %arg6[%c0_149, %c0_150] : memref<16x1xf32, #tpu.memory_space<vmem>>, vector<16x1xf32>
    %131 = vector.broadcast %130 : vector<16x1xf32> to vector<16x1939xf32>
    %132 = arith.addf %129, %131 : vector<16x1939xf32>
    %cst_151 = arith.constant 0.000000e+00 : f32
    %133 = vector.broadcast %cst_151 : f32 to vector<16x1939xf32>
    %134 = arith.maximumf %132, %133 : vector<16x1939xf32>
    %135 = vector.extract_strided_slice %134 {offsets = [0, 0], sizes = [16, 1837], strides = [1, 1]} : vector<16x1939xf32> to vector<16x1837xf32>
    %136 = vector.extract_strided_slice %134 {offsets = [0, 2], sizes = [16, 1837], strides = [1, 1]} : vector<16x1939xf32> to vector<16x1837xf32>
    %137 = arith.maximumf %135, %136 : vector<16x1837xf32>
    %138 = vector.extract_strided_slice %134 {offsets = [0, 100], sizes = [16, 1837], strides = [1, 1]} : vector<16x1939xf32> to vector<16x1837xf32>
    %139 = vector.extract_strided_slice %134 {offsets = [0, 102], sizes = [16, 1837], strides = [1, 1]} : vector<16x1939xf32> to vector<16x1837xf32>
    %140 = arith.maximumf %138, %139 : vector<16x1837xf32>
    %141 = arith.maximumf %137, %140 : vector<16x1837xf32>
    %142 = arith.truncf %141 : vector<16x1837xf32> to vector<16x1837xbf16>
    %c0_152 = arith.constant 0 : index
    %c0_153 = arith.constant 0 : index
    %143 = vector.load %arg7[%c0_152, %c0_153] : memref<1837x100xbf16, #tpu.memory_space<vmem>>, vector<1837x100xbf16>
    %cst_154 = arith.constant dense<0.000000e+00> : vector<16x100xf32>
    %144 = tpu.matmul %142, %143, %cst_154 {dimension_numbers = #tpu.dot_dimension_numbers<[1], [0], [0], [1], [0, 0, 1, 1], [], []>} : vector<16x1837xbf16>, vector<1837x100xbf16>, vector<16x100xf32> -> vector<16x100xf32>
    %145 = arith.truncf %144 : vector<16x100xf32> to vector<16x100xbf16>
    %c0_155 = arith.constant 0 : index
    %c0_156 = arith.constant 0 : index
    %c0_157 = arith.constant 0 : index
    %146 = vector.load %arg8[%c0_155, %c0_156, %c0_157] : memref<1x16x100xbf16, #tpu.memory_space<vmem>>, vector<1x16x100xbf16>
    %147 = vector.shape_cast %146 : vector<1x16x100xbf16> to vector<16x100xbf16>
    %148 = vector.shape_cast %145 : vector<16x100xbf16> to vector<1x16x100xbf16>
    tpu.vector_store %arg8[%c0_155, %c0_156, %c0_157], %148 {strides = array<i32>} : memref<1x16x100xbf16, #tpu.memory_space<vmem>>, vector<1x16x100xbf16>,
    return
  }
  func.func @transform_0(%arg0: i32) -> (i32, i32, i32) {
    %c0_i32 = arith.constant 0 : i32
    %c0_i32_0 = arith.constant 0 : i32
    %c0_i32_1 = arith.constant 0 : i32
    return %arg0, %c0_i32, %c0_i32_0 : i32, i32, i32
  }
  func.func @transform_1(%arg0: i32) -> (i32, i32) {
    %c0_i32 = arith.constant 0 : i32
    %c0_i32_0 = arith.constant 0 : i32
    %c0_i32_1 = arith.constant 0 : i32
    return %c0_i32, %c0_i32_0 : i32, i32
  }
  func.func @transform_2(%arg0: i32) -> (i32, i32) {
    %c0_i32 = arith.constant 0 : i32
    %c0_i32_0 = arith.constant 0 : i32
    %c0_i32_1 = arith.constant 0 : i32
    return %c0_i32, %c0_i32_0 : i32, i32
  }
  func.func @transform_3(%arg0: i32) -> (i32, i32) {
    %c0_i32 = arith.constant 0 : i32
    %c0_i32_0 = arith.constant 0 : i32
    %c0_i32_1 = arith.constant 0 : i32
    return %c0_i32, %c0_i32_0 : i32, i32
  }
  func.func @transform_4(%arg0: i32) -> (i32, i32) {
    %c0_i32 = arith.constant 0 : i32
    %c0_i32_0 = arith.constant 0 : i32
    %c0_i32_1 = arith.constant 0 : i32
    return %c0_i32, %c0_i32_0 : i32, i32
  }
  func.func @transform_5(%arg0: i32) -> (i32, i32) {
    %c0_i32 = arith.constant 0 : i32
    %c0_i32_0 = arith.constant 0 : i32
    %c0_i32_1 = arith.constant 0 : i32
    return %c0_i32, %c0_i32_0 : i32, i32
  }
  func.func @transform_6(%arg0: i32) -> (i32, i32) {
    %c0_i32 = arith.constant 0 : i32
    %c0_i32_0 = arith.constant 0 : i32
    %c0_i32_1 = arith.constant 0 : i32
    return %c0_i32, %c0_i32_0 : i32, i32
  }
  func.func @transform_7(%arg0: i32) -> (i32, i32, i32) {
    %c0_i32 = arith.constant 0 : i32
    %c0_i32_0 = arith.constant 0 : i32
    %c0_i32_1 = arith.constant 0 : i32
    return %arg0, %c0_i32, %c0_i32_0 : i32, i32, i32
  }
}

</mosaic_0001>

<llo_original>
// kernel: net_forward.3
$region0: #{net_forward.3}
  #allocation0 [shape = 'u32[]', space=smem, size = 0x4, offset = 0x4, fixed_abs, tag = 'smem constant byte address 0x4 - core index']
  #allocation1 [shape = 'u32[144,128]{1,0:T(1,128)}', space=vmem, size = 0x12000, scoped, tag = 'internal scratch']
  %s0 = inlined_call_operand.vmem [shape: bf16[2,1600], index: 0, kind: input, shape index: {}]
  %s1 = inlined_call_operand.vmem [shape: bf16[1600,256], index: 1, kind: input, shape index: {}]
  %s2 = inlined_call_operand.vmem [shape: f32[1,256], index: 2, kind: input, shape index: {}]
  %s3 = inlined_call_operand.vmem [shape: bf16[256,128], index: 3, kind: input, shape index: {}]
  %s4 = inlined_call_operand.vmem [shape: f32[1,128], index: 4, kind: input, shape index: {}]
  %s5 = inlined_call_operand.vmem [shape: bf16[128,4], index: 5, kind: input, shape index: {}]
  %s6 = inlined_call_operand.vmem [shape: f32[1,4], index: 6, kind: input, shape index: {}]
  %s7 = inlined_call_operand.hbm [shape: f32[2,4], index: 7, kind: output, shape index: {}]
  %s8 = sld [smem:[#allocation0]]
  $region38: #{net_forward.3} parent=0
    _
  %s10 = ssub.s32 1, %s8
  %s11 = scalar_select 0, %s10, %s8
  $region1: #{net_forward.3} parent=0
    #allocation2 [shape = 'u8[1024]{0}', space=vmem, size = 0x400, scoped, tag = 'output window, operand 0, single buffered']
    #allocation3 [shape = 's32[1]{0}', space=sflag, size = 0x4, scoped, tag = 'scoped memory for net_forward.3']
    %12 = vsyncpa [#allocation3], 0
    // Predicated region
    $region2: #{net_forward.3} parent=1 // pred_check
      _
    $region3: #{net_forward.3} parent=1 // pred_check_branch
      %14 = sbr.rel (0) target = $region5
    $region4: #{net_forward.3} parent=1 // pred_region
      _
    $region5: #{net_forward.3} parent=1 // pred_fallthru
      _
    // Predicated region
    $region6: #{net_forward.3} parent=1 // pred_check
      _
    $region7: #{net_forward.3} parent=1 // pred_check_branch
      %16 = sbr.rel (0) target = $region9
    $region8: #{net_forward.3} parent=1 // pred_region
      _
    $region9: #{net_forward.3} parent=1 // pred_fallthru
      _
    // Predicated region
    $region10: #{net_forward.3} parent=1 // pred_check
      _
    $region11: #{net_forward.3} parent=1 // pred_check_branch
      %18 = sbr.rel (0) target = $region13
    $region12: #{net_forward.3} parent=1 // pred_region
      _
    $region13: #{net_forward.3} parent=1 // pred_fallthru
      _
    // Predicated region
    $region14: #{net_forward.3} parent=1 // pred_check
      _
    $region15: #{net_forward.3} parent=1 // pred_check_branch
      %20 = sbr.rel (0) target = $region17
    $region16: #{net_forward.3} parent=1 // pred_region
      _
    $region17: #{net_forward.3} parent=1 // pred_fallthru
      _
    // Predicated region
    $region18: #{net_forward.3} parent=1 // pred_check
      _
    $region19: #{net_forward.3} parent=1 // pred_check_branch
      %22 = sbr.rel (0) target = $region21
    $region20: #{net_forward.3} parent=1 // pred_region
      _
    $region21: #{net_forward.3} parent=1 // pred_fallthru
      _
    // Predicated region
    $region22: #{net_forward.3} parent=1 // pred_check
      _
    $region23: #{net_forward.3} parent=1 // pred_check_branch
      %24 = sbr.rel (0) target = $region25
    $region24: #{net_forward.3} parent=1 // pred_region
      _
    $region25: #{net_forward.3} parent=1 // pred_fallthru
      _
    // Predicated region
    $region26: #{net_forward.3} parent=1 // pred_check
      _
    $region27: #{net_forward.3} parent=1 // pred_check_branch
      %26 = sbr.rel (0) target = $region29
    $region28: #{net_forward.3} parent=1 // pred_region
      _
    $region29: #{net_forward.3} parent=1 // pred_fallthru
      _
    %v28 = vld [vmem:[%s0] sm:$0xff]
    %v29 = vld [vmem:[%s0 + $0x8] sm:$0x1f]
    %v30 = vld [vmem:[%s1] sm:$0xff]
    %v31 = vld [vmem:[%s1 + $0x8] sm:$0xff]
    %v32 = vld [vmem:[%s1 + $0x10] sm:$0xff]
    %v33 = vld [vmem:[%s1 + $0x18] sm:$0xff]
    %v34 = vld [vmem:[%s1 + $0x20] sm:$0xff]
    %v35 = vld [vmem:[%s1 + $0x28] sm:$0xff]
    %v36 = vld [vmem:[%s1 + $0x30] sm:$0xff]
    %v37 = vld [vmem:[%s1 + $0x38] sm:$0xff]
    %v38 = vld [vmem:[%s1 + $0x40] sm:$0xff]
    %v39 = vld [vmem:[%s1 + $0x48] sm:$0xff]
    %v40 = vld [vmem:[%s1 + $0x50] sm:$0xff]
    %v41 = vld [vmem:[%s1 + $0x58] sm:$0xff]
    %v42 = vld [vmem:[%s1 + $0x60] sm:$0xff]
    %v43 = vld [vmem:[%s1 + $0x68] sm:$0xff]
    %v44 = vld [vmem:[%s1 + $0x70] sm:$0xff]
    %v45 = vld [vmem:[%s1 + $0x78] sm:$0xff]
    %v46 = vld [vmem:[%s1 + $0x80] sm:$0xff]
    %v47 = vld [vmem:[%s1 + $0x88] sm:$0xff]
    %v48 = vld [vmem:[%s1 + $0x90] sm:$0xff]
    %v49 = vld [vmem:[%s1 + $0x98] sm:$0xff]
    %v50 = vld [vmem:[%s1 + $0xa0] sm:$0xff]
    %v51 = vld [vmem:[%s1 + $0xa8] sm:$0xff]
    %v52 = vld [vmem:[%s1 + $0xb0] sm:$0xff]
    %v53 = vld [vmem:[%s1 + $0xb8] sm:$0xff]
    %v54 = vld [vmem:[%s1 + $0xc0] sm:$0xff]
    %v55 = vld [vmem:[%s1 + $0xc8] sm:$0xff]
    %v56 = vld [vmem:[%s1 + $0xd0] sm:$0xff]
    %v57 = vld [vmem:[%s1 + $0xd8] sm:$0xff]
    %v58 = vld [vmem:[%s1 + $0xe0] sm:$0xff]
    %v59 = vld [vmem:[%s1 + $0xe8] sm:$0xff]
    %v60 = vld [vmem:[%s1 + $0xf0] sm:$0xff]
    %v61 = vld [vmem:[%s1 + $0xf8] sm:$0xff]
    %v62 = vld [vmem:[%s1 + $0x100] sm:$0xff]
    %v63 = vld [vmem:[%s1 + $0x108] sm:$0xff]
    %v64 = vld [vmem:[%s1 + $0x110] sm:$0xff]
    %v65 = vld [vmem:[%s1 + $0x118] sm:$0xff]
    %v66 = vld [vmem:[%s1 + $0x120] sm:$0xff]
    %v67 = vld [vmem:[%s1 + $0x128] sm:$0xff]
    %v68 = vld [vmem:[%s1 + $0x130] sm:$0xff]
    %v69 = vld [vmem:[%s1 + $0x138] sm:$0xff]
    %v70 = vld [vmem:[%s1 + $0x140] sm:$0xff]
    %v71 = vld [vmem:[%s1 + $0x148] sm:$0xff]
    %v72 = vld [vmem:[%s1 + $0x150] sm:$0xff]
    %v73 = vld [vmem:[%s1 + $0x158] sm:$0xff]
    %v74 = vld [vmem:[%s1 + $0x160] sm:$0xff]
    %v75 = vld [vmem:[%s1 + $0x168] sm:$0xff]
    %v76 = vld [vmem:[%s1 + $0x170] sm:$0xff]
    %v77 = vld [vmem:[%s1 + $0x178] sm:$0xff]
    %v78 = vld [vmem:[%s1 + $0x180] sm:$0xff]
    %v79 = vld [vmem:[%s1 + $0x188] sm:$0xff]
    %v80 = vld [vmem:[%s1 + $0x190] sm:$0xff]
    %v81 = vld [vmem:[%s1 + $0x198] sm:$0xff]
    %v82 = vld [vmem:[%s1 + $0x1a0] sm:$0xff]
    %v83 = vld [vmem:[%s1 + $0x1a8] sm:$0xff]
    %v84 = vld [vmem:[%s1 + $0x1b0] sm:$0xff]
    %v85 = vld [vmem:[%s1 + $0x1b8] sm:$0xff]
    %v86 = vld [vmem:[%s1 + $0x1c0] sm:$0xff]
    %v87 = vld [vmem:[%s1 + $0x1c8] sm:$0xff]
    %v88 = vld [vmem:[%s1 + $0x1d0] sm:$0xff]
    %v89 = vld [vmem:[%s1 + $0x1d8] sm:$0xff]
    %v90 = vld [vmem:[%s1 + $0x1e0] sm:$0xff]
    %v91 = vld [vmem:[%s1 + $0x1e8] sm:$0xff]
    %v92 = vld [vmem:[%s1 + $0x1f0] sm:$0xff]
    %v93 = vld [vmem:[%s1 + $0x1f8] sm:$0xff]
    %v94 = vld [vmem:[%s1 + $0x200] sm:$0xff]
    %v95 = vld [vmem:[%s1 + $0x208] sm:$0xff]
    %v96 = vld [vmem:[%s1 + $0x210] sm:$0xff]
    %v97 = vld [vmem:[%s1 + $0x218] sm:$0xff]
    %v98 = vld [vmem:[%s1 + $0x220] sm:$0xff]
    %v99 = vld [vmem:[%s1 + $0x228] sm:$0xff]
    %v100 = vld [vmem:[%s1 + $0x230] sm:$0xff]
    %v101 = vld [vmem:[%s1 + $0x238] sm:$0xff]
    %v102 = vld [vmem:[%s1 + $0x240] sm:$0xff]
    %v103 = vld [vmem:[%s1 + $0x248] sm:$0xff]
    %v104 = vld [vmem:[%s1 + $0x250] sm:$0xff]
    %v105 = vld [vmem:[%s1 + $0x258] sm:$0xff]
    %v106 = vld [vmem:[%s1 + $0x260] sm:$0xff]
    %v107 = vld [vmem:[%s1 + $0x268] sm:$0xff]
    %v108 = vld [vmem:[%s1 + $0x270] sm:$0xff]
    %v109 = vld [vmem:[%s1 + $0x278] sm:$0xff]
    %v110 = vld [vmem:[%s1 + $0x280] sm:$0xff]
    %v111 = vld [vmem:[%s1 + $0x288] sm:$0xff]
    %v112 = vld [vmem:[%s1 + $0x290] sm:$0xff]
    %v113 = vld [vmem:[%s1 + $0x298] sm:$0xff]
    %v114 = vld [vmem:[%s1 + $0x2a0] sm:$0xff]
    %v115 = vld [vmem:[%s1 + $0x2a8] sm:$0xff]
    %v116 = vld [vmem:[%s1 + $0x2b0] sm:$0xff]
    %v117 = vld [vmem:[%s1 + $0x2b8] sm:$0xff]
    %v118 = vld [vmem:[%s1 + $0x2c0] sm:$0xff]
    %v119 = vld [vmem:[%s1 + $0x2c8] sm:$0xff]
    %v120 = vld [vmem:[%s1 + $0x2d0] sm:$0xff]
    %v121 = vld [vmem:[%s1 + $0x2d8] sm:$0xff]
    %v122 = vld [vmem:[%s1 + $0x2e0] sm:$0xff]
    %v123 = vld [vmem:[%s1 + $0x2e8] sm:$0xff]
    %v124 = vld [vmem:[%s1 + $0x2f0] sm:$0xff]
    %v125 = vld [vmem:[%s1 + $0x2f8] sm:$0xff]
    %v126 = vld [vmem:[%s1 + $0x300] sm:$0xff]
    %v127 = vld [vmem:[%s1 + $0x308] sm:$0xff]
    %v128 = vld [vmem:[%s1 + $0x310] sm:$0xff]
    %v129 = vld [vmem:[%s1 + $0x318] sm:$0xff]
    %v130 = vld [vmem:[%s1 + $0x320] sm:$0xff]
    %v131 = vld [vmem:[%s1 + $0x328] sm:$0xff]
    %v132 = vld [vmem:[%s1 + $0x330] sm:$0xff]
    %v133 = vld [vmem:[%s1 + $0x338] sm:$0xff]
    %v134 = vld [vmem:[%s1 + $0x340] sm:$0xff]
    %v135 = vld [vmem:[%s1 + $0x348] sm:$0xff]
    %v136 = vld [vmem:[%s1 + $0x350] sm:$0xff]
    %v137 = vld [vmem:[%s1 + $0x358] sm:$0xff]
    %v138 = vld [vmem:[%s1 + $0x360] sm:$0xff]
    %v139 = vld [vmem:[%s1 + $0x368] sm:$0xff]
    %v140 = vld [vmem:[%s1 + $0x370] sm:$0xff]
    %v141 = vld [vmem:[%s1 + $0x378] sm:$0xff]
    %v142 = vld [vmem:[%s1 + $0x380] sm:$0xff]
    %v143 = vld [vmem:[%s1 + $0x388] sm:$0xff]
    %v144 = vld [vmem:[%s1 + $0x390] sm:$0xff]
    %v145 = vld [vmem:[%s1 + $0x398] sm:$0xff]
    %v146 = vld [vmem:[%s1 + $0x3a0] sm:$0xff]
    %v147 = vld [vmem:[%s1 + $0x3a8] sm:$0xff]
    %v148 = vld [vmem:[%s1 + $0x3b0] sm:$0xff]
    %v149 = vld [vmem:[%s1 + $0x3b8] sm:$0xff]
    %v150 = vld [vmem:[%s1 + $0x3c0] sm:$0xff]
    %v151 = vld [vmem:[%s1 + $0x3c8] sm:$0xff]
    %v152 = vld [vmem:[%s1 + $0x3d0] sm:$0xff]
    %v153 = vld [vmem:[%s1 + $0x3d8] sm:$0xff]
    %v154 = vld [vmem:[%s1 + $0x3e0] sm:$0xff]
    %v155 = vld [vmem:[%s1 + $0x3e8] sm:$0xff]
    %v156 = vld [vmem:[%s1 + $0x3f0] sm:$0xff]
    %v157 = vld [vmem:[%s1 + $0x3f8] sm:$0xff]
    %v158 = vld [vmem:[%s1 + $0x400] sm:$0xff]
    %v159 = vld [vmem:[%s1 + $0x408] sm:$0xff]
    %v160 = vld [vmem:[%s1 + $0x410] sm:$0xff]
    %v161 = vld [vmem:[%s1 + $0x418] sm:$0xff]
    %v162 = vld [vmem:[%s1 + $0x420] sm:$0xff]
    %v163 = vld [vmem:[%s1 + $0x428] sm:$0xff]
    %v164 = vld [vmem:[%s1 + $0x430] sm:$0xff]
    %v165 = vld [vmem:[%s1 + $0x438] sm:$0xff]
    %v166 = vld [vmem:[%s1 + $0x440] sm:$0xff]
    %v167 = vld [vmem:[%s1 + $0x448] sm:$0xff]
    %v168 = vld [vmem:[%s1 + $0x450] sm:$0xff]
    %v169 = vld [vmem:[%s1 + $0x458] sm:$0xff]
    %v170 = vld [vmem:[%s1 + $0x460] sm:$0xff]
    %v171 = vld [vmem:[%s1 + $0x468] sm:$0xff]
    %v172 = vld [vmem:[%s1 + $0x470] sm:$0xff]
    %v173 = vld [vmem:[%s1 + $0x478] sm:$0xff]
    %v174 = vld [vmem:[%s1 + $0x480] sm:$0xff]
    %v175 = vld [vmem:[%s1 + $0x488] sm:$0xff]
    %v176 = vld [vmem:[%s1 + $0x490] sm:$0xff]
    %v177 = vld [vmem:[%s1 + $0x498] sm:$0xff]
    %v178 = vld [vmem:[%s1 + $0x4a0] sm:$0xff]
    %v179 = vld [vmem:[%s1 + $0x4a8] sm:$0xff]
    %v180 = vld [vmem:[%s1 + $0x4b0] sm:$0xff]
    %v181 = vld [vmem:[%s1 + $0x4b8] sm:$0xff]
    %v182 = vld [vmem:[%s1 + $0x4c0] sm:$0xff]
    %v183 = vld [vmem:[%s1 + $0x4c8] sm:$0xff]
    %v184 = vld [vmem:[%s1 + $0x4d0] sm:$0xff]
    %v185 = vld [vmem:[%s1 + $0x4d8] sm:$0xff]
    %v186 = vld [vmem:[%s1 + $0x4e0] sm:$0xff]
    %v187 = vld [vmem:[%s1 + $0x4e8] sm:$0xff]
    %v188 = vld [vmem:[%s1 + $0x4f0] sm:$0xff]
    %v189 = vld [vmem:[%s1 + $0x4f8] sm:$0xff]
    %v190 = vld [vmem:[%s1 + $0x500] sm:$0xff]
    %v191 = vld [vmem:[%s1 + $0x508] sm:$0xff]
    %v192 = vld [vmem:[%s1 + $0x510] sm:$0xff]
    %v193 = vld [vmem:[%s1 + $0x518] sm:$0xff]
    %v194 = vld [vmem:[%s1 + $0x520] sm:$0xff]
    %v195 = vld [vmem:[%s1 + $0x528] sm:$0xff]
    %v196 = vld [vmem:[%s1 + $0x530] sm:$0xff]
    %v197 = vld [vmem:[%s1 + $0x538] sm:$0xff]
    %v198 = vld [vmem:[%s1 + $0x540] sm:$0xff]
    %v199 = vld [vmem:[%s1 + $0x548] sm:$0xff]
    %v200 = vld [vmem:[%s1 + $0x550] sm:$0xff]
    %v201 = vld [vmem:[%s1 + $0x558] sm:$0xff]
    %v202 = vld [vmem:[%s1 + $0x560] sm:$0xff]
    %v203 = vld [vmem:[%s1 + $0x568] sm:$0xff]
    %v204 = vld [vmem:[%s1 + $0x570] sm:$0xff]
    %v205 = vld [vmem:[%s1 + $0x578] sm:$0xff]
    %v206 = vld [vmem:[%s1 + $0x580] sm:$0xff]
    %v207 = vld [vmem:[%s1 + $0x588] sm:$0xff]
    %v208 = vld [vmem:[%s1 + $0x590] sm:$0xff]
    %v209 = vld [vmem:[%s1 + $0x598] sm:$0xff]
    %v210 = vld [vmem:[%s1 + $0x5a0] sm:$0xff]
    %v211 = vld [vmem:[%s1 + $0x5a8] sm:$0xff]
    %v212 = vld [vmem:[%s1 + $0x5b0] sm:$0xff]
    %v213 = vld [vmem:[%s1 + $0x5b8] sm:$0xff]
    %v214 = vld [vmem:[%s1 + $0x5c0] sm:$0xff]
    %v215 = vld [vmem:[%s1 + $0x5c8] sm:$0xff]
    %v216 = vld [vmem:[%s1 + $0x5d0] sm:$0xff]
    %v217 = vld [vmem:[%s1 + $0x5d8] sm:$0xff]
    %v218 = vld [vmem:[%s1 + $0x5e0] sm:$0xff]
    %v219 = vld [vmem:[%s1 + $0x5e8] sm:$0xff]
    %v220 = vld [vmem:[%s1 + $0x5f0] sm:$0xff]
    %v221 = vld [vmem:[%s1 + $0x5f8] sm:$0xff]
    %v222 = vld [vmem:[%s1 + $0x600] sm:$0xff]
    %v223 = vld [vmem:[%s1 + $0x608] sm:$0xff]
    %v224 = vld [vmem:[%s1 + $0x610] sm:$0xff]
    %v225 = vld [vmem:[%s1 + $0x618] sm:$0xff]
    %v226 = vld [vmem:[%s1 + $0x620] sm:$0xff]
    %v227 = vld [vmem:[%s1 + $0x628] sm:$0xff]
    %v228 = vld [vmem:[%s1 + $0x630] sm:$0xff]
    %v229 = vld [vmem:[%s1 + $0x638] sm:$0xff]
    %v230 = vld [vmem:[%s2] sm:$0x3]
    %v232 = vlaneseq
    %v233 = vshrl.u32 %v232, 7
    %v234 = vsub.s32 0, %v233
    %v235 = vrot.slane %v230, %v234
    %v236 = vlaneseq
    %v237 = vshrl.u32 %v236, 7
    %v238 = vsub.s32 1, %v237
    %v239 = vrot.slane %v230, %v238
    %v244 = vcombine.high %v28, %v28
    %v246 = vunpack.c.l.s4 1966171168
    %v247 = vunpack.c.0.s8 %v246
    %v248 = vlaneseq
    %v249 = vshrl.u32 %v248, 7
    %v250 = vsub.s32 %v247, %v249
    %v251 = vrot.slane %v28, %v250
    %v253 = vunpack.c.l.s4 1966171168
    %v254 = vunpack.c.0.s8 %v253
    %v255 = vlaneseq
    %v256 = vshrl.u32 %v255, 7
    %v257 = vsub.s32 %v254, %v256
    %v258 = vrot.slane %v244, %v257
    %v259 = vcombine.high %v251, %v251
    %v260 = vcombine.high %v258, %v258
    %v262 = vunpack.c.l.s4 1966171168
    %v263 = vunpack.c.0.s8 %v262
    %v264 = vlaneseq
    %v265 = vshrl.u32 %v264, 7
    %v266 = vsub.s32 %v263, %v265
    %v267 = vrot.slane %v251, %v266
    %v269 = vunpack.c.l.s4 1966171168
    %v270 = vunpack.c.0.s8 %v269
    %v271 = vlaneseq
    %v272 = vshrl.u32 %v271, 7
    %v273 = vsub.s32 %v270, %v272
    %v274 = vrot.slane %v258, %v273
    %v276 = vunpack.c.l.s4 1966171168
    %v277 = vunpack.c.0.s8 %v276
    %v278 = vlaneseq
    %v279 = vshrl.u32 %v278, 7
    %v280 = vsub.s32 %v277, %v279
    %v281 = vrot.slane %v259, %v280
    %v283 = vunpack.c.l.s4 1966171168
    %v284 = vunpack.c.0.s8 %v283
    %v285 = vlaneseq
    %v286 = vshrl.u32 %v285, 7
    %v287 = vsub.s32 %v284, %v286
    %v288 = vrot.slane %v260, %v287
    %v289 = vcombine.high %v267, %v267
    %v290 = vcombine.high %v274, %v274
    %v291 = vcombine.high %v281, %v281
    %v292 = vcombine.high %v288, %v288
    %v293 = vcombine.high %v29, %v29
    %v295 = vunpack.c.l.s4 1966171168
    %v296 = vunpack.c.0.s8 %v295
    %v297 = vlaneseq
    %v298 = vshrl.u32 %v297, 7
    %v299 = vsub.s32 %v296, %v298
    %v300 = vrot.slane %v29, %v299
    %v302 = vunpack.c.l.s4 1966171168
    %v303 = vunpack.c.0.s8 %v302
    %v304 = vlaneseq
    %v305 = vshrl.u32 %v304, 7
    %v306 = vsub.s32 %v303, %v305
    %v307 = vrot.slane %v293, %v306
    %v308 = vcombine.high %v300, %v300
    %v310 = vunpack.c.l.s4 1966171168
    %v311 = vunpack.c.0.s8 %v310
    %v312 = vlaneseq
    %v313 = vshrl.u32 %v312, 7
    %v314 = vsub.s32 %v311, %v313
    %v315 = vrot.slane %v300, %v314
    %v317 = vunpack.c.l.s4 1966171168
    %v318 = vunpack.c.0.s8 %v317
    %v319 = vlaneseq
    %v320 = vshrl.u32 %v319, 7
    %v321 = vsub.s32 %v318, %v320
    %v322 = vrot.slane %v307, %v321
    %v324 = vunpack.c.l.s4 1966171168
    %v325 = vunpack.c.0.s8 %v324
    %v326 = vlaneseq
    %v327 = vshrl.u32 %v326, 7
    %v328 = vsub.s32 %v325, %v327
    %v329 = vrot.slane %v308, %v328
    %v330 = vcombine.high %v315, %v315
    %v331 = vcombine.high %v329, %v329
    %v544 = vunpack.c.l.b16 %v30
    %v545 = vunpack.c.h.b16 %v30
    %v546 = vunpack.c.l.b16 %v31
    %v547 = vunpack.c.h.b16 %v31
    %v548 = vunpack.c.l.b16 %v32
    %v549 = vunpack.c.h.b16 %v32
    %v550 = vunpack.c.l.b16 %v33
    %v551 = vunpack.c.h.b16 %v33
    %v552 = vunpack.c.l.b16 %v34
    %v553 = vunpack.c.h.b16 %v34
    %v554 = vunpack.c.l.b16 %v35
    %v555 = vunpack.c.h.b16 %v35
    %v556 = vunpack.c.l.b16 %v36
    %v557 = vunpack.c.h.b16 %v36
    %v558 = vunpack.c.l.b16 %v37
    %v559 = vunpack.c.h.b16 %v37
    %v560 = vunpack.c.l.b16 %v38
    %v561 = vunpack.c.h.b16 %v38
    %v562 = vunpack.c.l.b16 %v39
    %v563 = vunpack.c.h.b16 %v39
    %v564 = vunpack.c.l.b16 %v40
    %v565 = vunpack.c.h.b16 %v40
    %v566 = vunpack.c.l.b16 %v41
    %v567 = vunpack.c.h.b16 %v41
    %v568 = vunpack.c.l.b16 %v42
    %v569 = vunpack.c.h.b16 %v42
    %v570 = vunpack.c.l.b16 %v43
    %v571 = vunpack.c.h.b16 %v43
    %v572 = vunpack.c.l.b16 %v44
    %v573 = vunpack.c.h.b16 %v44
    %v574 = vunpack.c.l.b16 %v45
    %v575 = vunpack.c.h.b16 %v45
    %v576 = vunpack.c.l.b16 %v46
    %v577 = vunpack.c.h.b16 %v46
    %v578 = vunpack.c.l.b16 %v47
    %v579 = vunpack.c.h.b16 %v47
    %v580 = vunpack.c.l.b16 %v48
    %v581 = vunpack.c.h.b16 %v48
    %v582 = vunpack.c.l.b16 %v49
    %v583 = vunpack.c.h.b16 %v49
    %v584 = vunpack.c.l.b16 %v50
    %v585 = vunpack.c.h.b16 %v50
    %v586 = vunpack.c.l.b16 %v51
    %v587 = vunpack.c.h.b16 %v51
    %v588 = vunpack.c.l.b16 %v52
    %v589 = vunpack.c.h.b16 %v52
    %v590 = vunpack.c.l.b16 %v53
    %v591 = vunpack.c.h.b16 %v53
    %v592 = vunpack.c.l.b16 %v54
    %v593 = vunpack.c.h.b16 %v54
    %v594 = vunpack.c.l.b16 %v55
    %v595 = vunpack.c.h.b16 %v55
    %v596 = vunpack.c.l.b16 %v56
    %v597 = vunpack.c.h.b16 %v56
    %v598 = vunpack.c.l.b16 %v57
    %v599 = vunpack.c.h.b16 %v57
    %v600 = vunpack.c.l.b16 %v58
    %v601 = vunpack.c.h.b16 %v58
    %v602 = vunpack.c.l.b16 %v59
    %v603 = vunpack.c.h.b16 %v59
    %v604 = vunpack.c.l.b16 %v60
    %v605 = vunpack.c.h.b16 %v60
    %v606 = vunpack.c.l.b16 %v61
    %v607 = vunpack.c.h.b16 %v61
    %v608 = vunpack.c.l.b16 %v62
    %v609 = vunpack.c.h.b16 %v62
    %v610 = vunpack.c.l.b16 %v63
    %v611 = vunpack.c.h.b16 %v63
    %v612 = vunpack.c.l.b16 %v64
    %v613 = vunpack.c.h.b16 %v64
    %v614 = vunpack.c.l.b16 %v65
    %v615 = vunpack.c.h.b16 %v65
    %v616 = vunpack.c.l.b16 %v66
    %v617 = vunpack.c.h.b16 %v66
    %v618 = vunpack.c.l.b16 %v67
    %v619 = vunpack.c.h.b16 %v67
    %v620 = vunpack.c.l.b16 %v68
    %v621 = vunpack.c.h.b16 %v68
    %v622 = vunpack.c.l.b16 %v69
    %v623 = vunpack.c.h.b16 %v69
    %v624 = vunpack.c.l.b16 %v70
    %v625 = vunpack.c.h.b16 %v70
    %v626 = vunpack.c.l.b16 %v71
    %v627 = vunpack.c.h.b16 %v71
    %v628 = vunpack.c.l.b16 %v72
    %v629 = vunpack.c.h.b16 %v72
    %v630 = vunpack.c.l.b16 %v73
    %v631 = vunpack.c.h.b16 %v73
    %v632 = vunpack.c.l.b16 %v74
    %v633 = vunpack.c.h.b16 %v74
    %v634 = vunpack.c.l.b16 %v75
    %v635 = vunpack.c.h.b16 %v75
    %v636 = vunpack.c.l.b16 %v76
    %v637 = vunpack.c.h.b16 %v76
    %v638 = vunpack.c.l.b16 %v77
    %v639 = vunpack.c.h.b16 %v77
    %v640 = vunpack.c.l.b16 %v78
    %v641 = vunpack.c.h.b16 %v78
    %v642 = vunpack.c.l.b16 %v79
    %v643 = vunpack.c.h.b16 %v79
    %v644 = vunpack.c.l.b16 %v80
    %v645 = vunpack.c.h.b16 %v80
    %v646 = vunpack.c.l.b16 %v81
    %v647 = vunpack.c.h.b16 %v81
    %v648 = vunpack.c.l.b16 %v82
    %v649 = vunpack.c.h.b16 %v82
    %v650 = vunpack.c.l.b16 %v83
    %v651 = vunpack.c.h.b16 %v83
    %v652 = vunpack.c.l.b16 %v84
    %v653 = vunpack.c.h.b16 %v84
    %v654 = vunpack.c.l.b16 %v85
    %v655 = vunpack.c.h.b16 %v85
    %v656 = vunpack.c.l.b16 %v86
    %v657 = vunpack.c.h.b16 %v86
    %v658 = vunpack.c.l.b16 %v87
    %v659 = vunpack.c.h.b16 %v87
    %v660 = vunpack.c.l.b16 %v88
    %v661 = vunpack.c.h.b16 %v88
    %v662 = vunpack.c.l.b16 %v89
    %v663 = vunpack.c.h.b16 %v89
    %v664 = vunpack.c.l.b16 %v90
    %v665 = vunpack.c.h.b16 %v90
    %v666 = vunpack.c.l.b16 %v91
    %v667 = vunpack.c.h.b16 %v91
    %v668 = vunpack.c.l.b16 %v92
    %v669 = vunpack.c.h.b16 %v92
    %v670 = vunpack.c.l.b16 %v93
    %v671 = vunpack.c.h.b16 %v93
    %v672 = vunpack.c.l.b16 %v94
    %v673 = vunpack.c.h.b16 %v94
    %v674 = vunpack.c.l.b16 %v95
    %v675 = vunpack.c.h.b16 %v95
    %v676 = vunpack.c.l.b16 %v96
    %v677 = vunpack.c.h.b16 %v96
    %v678 = vunpack.c.l.b16 %v97
    %v679 = vunpack.c.h.b16 %v97
    %v680 = vunpack.c.l.b16 %v98
    %v681 = vunpack.c.h.b16 %v98
    %v682 = vunpack.c.l.b16 %v99
    %v683 = vunpack.c.h.b16 %v99
    %v684 = vunpack.c.l.b16 %v100
    %v685 = vunpack.c.h.b16 %v100
    %v686 = vunpack.c.l.b16 %v101
    %v687 = vunpack.c.h.b16 %v101
    %v688 = vunpack.c.l.b16 %v102
    %v689 = vunpack.c.h.b16 %v102
    %v690 = vunpack.c.l.b16 %v103
    %v691 = vunpack.c.h.b16 %v103
    %v692 = vunpack.c.l.b16 %v104
    %v693 = vunpack.c.h.b16 %v104
    %v694 = vunpack.c.l.b16 %v105
    %v695 = vunpack.c.h.b16 %v105
    %v696 = vunpack.c.l.b16 %v106
    %v697 = vunpack.c.h.b16 %v106
    %v698 = vunpack.c.l.b16 %v107
    %v699 = vunpack.c.h.b16 %v107
    %v700 = vunpack.c.l.b16 %v108
    %v701 = vunpack.c.h.b16 %v108
    %v702 = vunpack.c.l.b16 %v109
    %v703 = vunpack.c.h.b16 %v109
    %v704 = vunpack.c.l.b16 %v110
    %v705 = vunpack.c.h.b16 %v110
    %v706 = vunpack.c.l.b16 %v111
    %v707 = vunpack.c.h.b16 %v111
    %v708 = vunpack.c.l.b16 %v112
    %v709 = vunpack.c.h.b16 %v112
    %v710 = vunpack.c.l.b16 %v113
    %v711 = vunpack.c.h.b16 %v113
    %v712 = vunpack.c.l.b16 %v114
    %v713 = vunpack.c.h.b16 %v114
    %v714 = vunpack.c.l.b16 %v115
    %v715 = vunpack.c.h.b16 %v115
    %v716 = vunpack.c.l.b16 %v116
    %v717 = vunpack.c.h.b16 %v116
    %v718 = vunpack.c.l.b16 %v117
    %v719 = vunpack.c.h.b16 %v117
    %v720 = vunpack.c.l.b16 %v118
    %v721 = vunpack.c.h.b16 %v118
    %v722 = vunpack.c.l.b16 %v119
    %v723 = vunpack.c.h.b16 %v119
    %v724 = vunpack.c.l.b16 %v120
    %v725 = vunpack.c.h.b16 %v120
    %v726 = vunpack.c.l.b16 %v121
    %v727 = vunpack.c.h.b16 %v121
    %v728 = vunpack.c.l.b16 %v122
    %v729 = vunpack.c.h.b16 %v122
    %v730 = vunpack.c.l.b16 %v123
    %v731 = vunpack.c.h.b16 %v123
    %v732 = vunpack.c.l.b16 %v124
    %v733 = vunpack.c.h.b16 %v124
    %v734 = vunpack.c.l.b16 %v125
    %v735 = vunpack.c.h.b16 %v125
    %v736 = vunpack.c.l.b16 %v126
    %v737 = vunpack.c.h.b16 %v126
    %v738 = vunpack.c.l.b16 %v127
    %v739 = vunpack.c.h.b16 %v127
    %v740 = vunpack.c.l.b16 %v128
    %v741 = vunpack.c.h.b16 %v128
    %v742 = vunpack.c.l.b16 %v129
    %v743 = vunpack.c.h.b16 %v129
    %v744 = vunpack.c.l.b16 %v130
    %v745 = vunpack.c.h.b16 %v130
    %v746 = vunpack.c.l.b16 %v131
    %v747 = vunpack.c.h.b16 %v131
    %v748 = vunpack.c.l.b16 %v132
    %v749 = vunpack.c.h.b16 %v132
    %v750 = vunpack.c.l.b16 %v133
    %v751 = vunpack.c.h.b16 %v133
    %v752 = vunpack.c.l.b16 %v134
    %v753 = vunpack.c.h.b16 %v134
    %v754 = vunpack.c.l.b16 %v135
    %v755 = vunpack.c.h.b16 %v135
    %v756 = vunpack.c.l.b16 %v136
    %v757 = vunpack.c.h.b16 %v136
    %v758 = vunpack.c.l.b16 %v137
    %v759 = vunpack.c.h.b16 %v137
    %v760 = vunpack.c.l.b16 %v138
    %v761 = vunpack.c.h.b16 %v138
    %v762 = vunpack.c.l.b16 %v139
    %v763 = vunpack.c.h.b16 %v139
    %v764 = vunpack.c.l.b16 %v140
    %v765 = vunpack.c.h.b16 %v140
    %v766 = vunpack.c.l.b16 %v141
    %v767 = vunpack.c.h.b16 %v141
    %v768 = vunpack.c.l.b16 %v142
    %v769 = vunpack.c.h.b16 %v142
    %v770 = vunpack.c.l.b16 %v143
    %v771 = vunpack.c.h.b16 %v143
    %v772 = vunpack.c.l.b16 %v144
    %v773 = vunpack.c.h.b16 %v144
    %v774 = vunpack.c.l.b16 %v145
    %v775 = vunpack.c.h.b16 %v145
    %v776 = vunpack.c.l.b16 %v146
    %v777 = vunpack.c.h.b16 %v146
    %v778 = vunpack.c.l.b16 %v147
    %v779 = vunpack.c.h.b16 %v147
    %v780 = vunpack.c.l.b16 %v148
    %v781 = vunpack.c.h.b16 %v148
    %v782 = vunpack.c.l.b16 %v149
    %v783 = vunpack.c.h.b16 %v149
    %v784 = vunpack.c.l.b16 %v150
    %v785 = vunpack.c.h.b16 %v150
    %v786 = vunpack.c.l.b16 %v151
    %v787 = vunpack.c.h.b16 %v151
    %v788 = vunpack.c.l.b16 %v152
    %v789 = vunpack.c.h.b16 %v152
    %v790 = vunpack.c.l.b16 %v153
    %v791 = vunpack.c.h.b16 %v153
    %v792 = vunpack.c.l.b16 %v154
    %v793 = vunpack.c.h.b16 %v154
    %v794 = vunpack.c.l.b16 %v155
    %v795 = vunpack.c.h.b16 %v155
    %v796 = vunpack.c.l.b16 %v156
    %v797 = vunpack.c.h.b16 %v156
    %v798 = vunpack.c.l.b16 %v157
    %v799 = vunpack.c.h.b16 %v157
    %v800 = vunpack.c.l.b16 %v158
    %v801 = vunpack.c.h.b16 %v158
    %v802 = vunpack.c.l.b16 %v159
    %v803 = vunpack.c.h.b16 %v159
    %v804 = vunpack.c.l.b16 %v160
    %v805 = vunpack.c.h.b16 %v160
    %v806 = vunpack.c.l.b16 %v161
    %v807 = vunpack.c.h.b16 %v161
    %v808 = vunpack.c.l.b16 %v162
    %v809 = vunpack.c.h.b16 %v162
    %v810 = vunpack.c.l.b16 %v163
    %v811 = vunpack.c.h.b16 %v163
    %v812 = vunpack.c.l.b16 %v164
    %v813 = vunpack.c.h.b16 %v164
    %v814 = vunpack.c.l.b16 %v165
    %v815 = vunpack.c.h.b16 %v165
    %v816 = vunpack.c.l.b16 %v166
    %v817 = vunpack.c.h.b16 %v166
    %v818 = vunpack.c.l.b16 %v167
    %v819 = vunpack.c.h.b16 %v167
    %v820 = vunpack.c.l.b16 %v168
    %v821 = vunpack.c.h.b16 %v168
    %v822 = vunpack.c.l.b16 %v169
    %v823 = vunpack.c.h.b16 %v169
    %v824 = vunpack.c.l.b16 %v170
    %v825 = vunpack.c.h.b16 %v170
    %v826 = vunpack.c.l.b16 %v171
    %v827 = vunpack.c.h.b16 %v171
    %v828 = vunpack.c.l.b16 %v172
    %v829 = vunpack.c.h.b16 %v172
    %v830 = vunpack.c.l.b16 %v173
    %v831 = vunpack.c.h.b16 %v173
    %v832 = vunpack.c.l.b16 %v174
    %v833 = vunpack.c.h.b16 %v174
    %v834 = vunpack.c.l.b16 %v175
    %v835 = vunpack.c.h.b16 %v175
    %v836 = vunpack.c.l.b16 %v176
    %v837 = vunpack.c.h.b16 %v176
    %v838 = vunpack.c.l.b16 %v177
    %v839 = vunpack.c.h.b16 %v177
    %v840 = vunpack.c.l.b16 %v178
    %v841 = vunpack.c.h.b16 %v178
    %v842 = vunpack.c.l.b16 %v179
    %v843 = vunpack.c.h.b16 %v179
    %v844 = vunpack.c.l.b16 %v180
    %v845 = vunpack.c.h.b16 %v180
    %v846 = vunpack.c.l.b16 %v181
    %v847 = vunpack.c.h.b16 %v181
    %v848 = vunpack.c.l.b16 %v182
    %v849 = vunpack.c.h.b16 %v182
    %v850 = vunpack.c.l.b16 %v183
    %v851 = vunpack.c.h.b16 %v183
    %v852 = vunpack.c.l.b16 %v184
    %v853 = vunpack.c.h.b16 %v184
    %v854 = vunpack.c.l.b16 %v185
    %v855 = vunpack.c.h.b16 %v185
    %v856 = vunpack.c.l.b16 %v186
    %v857 = vunpack.c.h.b16 %v186
    %v858 = vunpack.c.l.b16 %v187
    %v859 = vunpack.c.h.b16 %v187
    %v860 = vunpack.c.l.b16 %v188
    %v861 = vunpack.c.h.b16 %v188
    %v862 = vunpack.c.l.b16 %v189
    %v863 = vunpack.c.h.b16 %v189
    %v864 = vunpack.c.l.b16 %v190
    %v865 = vunpack.c.h.b16 %v190
    %v866 = vunpack.c.l.b16 %v191
    %v867 = vunpack.c.h.b16 %v191
    %v868 = vunpack.c.l.b16 %v192
    %v869 = vunpack.c.h.b16 %v192
    %v870 = vunpack.c.l.b16 %v193
    %v871 = vunpack.c.h.b16 %v193
    %v872 = vunpack.c.l.b16 %v194
    %v873 = vunpack.c.h.b16 %v194
    %v874 = vunpack.c.l.b16 %v195
    %v875 = vunpack.c.h.b16 %v195
    %v876 = vunpack.c.l.b16 %v196
    %v877 = vunpack.c.h.b16 %v196
    %v878 = vunpack.c.l.b16 %v197
    %v879 = vunpack.c.h.b16 %v197
    %v880 = vunpack.c.l.b16 %v198
    %v881 = vunpack.c.h.b16 %v198
    %v882 = vunpack.c.l.b16 %v199
    %v883 = vunpack.c.h.b16 %v199
    %v884 = vunpack.c.l.b16 %v200
    %v885 = vunpack.c.h.b16 %v200
    %v886 = vunpack.c.l.b16 %v201
    %v887 = vunpack.c.h.b16 %v201
    %v888 = vunpack.c.l.b16 %v202
    %v889 = vunpack.c.h.b16 %v202
    %v890 = vunpack.c.l.b16 %v203
    %v891 = vunpack.c.h.b16 %v203
    %v892 = vunpack.c.l.b16 %v204
    %v893 = vunpack.c.h.b16 %v204
    %v894 = vunpack.c.l.b16 %v205
    %v895 = vunpack.c.h.b16 %v205
    %v896 = vunpack.c.l.b16 %v206
    %v897 = vunpack.c.h.b16 %v206
    %v898 = vunpack.c.l.b16 %v207
    %v899 = vunpack.c.h.b16 %v207
    %v900 = vunpack.c.l.b16 %v208
    %v901 = vunpack.c.h.b16 %v208
    %v902 = vunpack.c.l.b16 %v209
    %v903 = vunpack.c.h.b16 %v209
    %v904 = vunpack.c.l.b16 %v210
    %v905 = vunpack.c.h.b16 %v210
    %v906 = vunpack.c.l.b16 %v211
    %v907 = vunpack.c.h.b16 %v211
    %v908 = vunpack.c.l.b16 %v212
    %v909 = vunpack.c.h.b16 %v212
    %v910 = vunpack.c.l.b16 %v213
    %v911 = vunpack.c.h.b16 %v213
    %v912 = vunpack.c.l.b16 %v214
    %v913 = vunpack.c.h.b16 %v214
    %v914 = vunpack.c.l.b16 %v215
    %v915 = vunpack.c.h.b16 %v215
    %v916 = vunpack.c.l.b16 %v216
    %v917 = vunpack.c.h.b16 %v216
    %v918 = vunpack.c.l.b16 %v217
    %v919 = vunpack.c.h.b16 %v217
    %v920 = vunpack.c.l.b16 %v218
    %v921 = vunpack.c.h.b16 %v218
    %v922 = vunpack.c.l.b16 %v219
    %v923 = vunpack.c.h.b16 %v219
    %v924 = vunpack.c.l.b16 %v220
    %v925 = vunpack.c.h.b16 %v220
    %v926 = vunpack.c.l.b16 %v221
    %v927 = vunpack.c.h.b16 %v221
    %v928 = vunpack.c.l.b16 %v222
    %v929 = vunpack.c.h.b16 %v222
    %v930 = vunpack.c.l.b16 %v223
    %v931 = vunpack.c.h.b16 %v223
    %v932 = vunpack.c.l.b16 %v224
    %v933 = vunpack.c.h.b16 %v224
    %v934 = vunpack.c.l.b16 %v225
    %v935 = vunpack.c.h.b16 %v225
    %v936 = vunpack.c.l.b16 %v226
    %v937 = vunpack.c.h.b16 %v226
    %v938 = vunpack.c.l.b16 %v227
    %v939 = vunpack.c.h.b16 %v227
    %v940 = vunpack.c.l.b16 %v228
    %v941 = vunpack.c.h.b16 %v228
    %v942 = vunpack.c.l.b16 %v229
    %v943 = vunpack.c.h.b16 %v229
    %v944 = vpack.c.b16 %v546, %v544
    %v945 = vpack.c.b16 %v547, %v545
    %v946 = vpack.c.b16 %v550, %v548
    %v947 = vpack.c.b16 %v551, %v549
    %v948 = vpack.c.b16 %v554, %v552
    %v949 = vpack.c.b16 %v555, %v553
    %v950 = vpack.c.b16 %v558, %v556
    %v951 = vpack.c.b16 %v559, %v557
    %v952 = vpack.c.b16 %v562, %v560
    %v953 = vpack.c.b16 %v563, %v561
    %v954 = vpack.c.b16 %v566, %v564
    %v955 = vpack.c.b16 %v567, %v565
    %v956 = vpack.c.b16 %v570, %v568
    %v957 = vpack.c.b16 %v571, %v569
    %v958 = vpack.c.b16 %v574, %v572
    %v959 = vpack.c.b16 %v575, %v573
    %v960 = vpack.c.b16 %v578, %v576
    %v961 = vpack.c.b16 %v579, %v577
    %v962 = vpack.c.b16 %v582, %v580
    %v963 = vpack.c.b16 %v583, %v581
    %v964 = vpack.c.b16 %v586, %v584
    %v965 = vpack.c.b16 %v587, %v585
    %v966 = vpack.c.b16 %v590, %v588
    %v967 = vpack.c.b16 %v591, %v589
    %v968 = vpack.c.b16 %v594, %v592
    %v969 = vpack.c.b16 %v595, %v593
    %v970 = vpack.c.b16 %v598, %v596
    %v971 = vpack.c.b16 %v599, %v597
    %v972 = vpack.c.b16 %v602, %v600
    %v973 = vpack.c.b16 %v603, %v601
    %v974 = vpack.c.b16 %v606, %v604
    %v975 = vpack.c.b16 %v607, %v605
    %v976 = vpack.c.b16 %v610, %v608
    %v977 = vpack.c.b16 %v611, %v609
    %v978 = vpack.c.b16 %v614, %v612
    %v979 = vpack.c.b16 %v615, %v613
    %v980 = vpack.c.b16 %v618, %v616
    %v981 = vpack.c.b16 %v619, %v617
    %v982 = vpack.c.b16 %v622, %v620
    %v983 = vpack.c.b16 %v623, %v621
    %v984 = vpack.c.b16 %v626, %v624
    %v985 = vpack.c.b16 %v627, %v625
    %v986 = vpack.c.b16 %v630, %v628
    %v987 = vpack.c.b16 %v631, %v629
    %v988 = vpack.c.b16 %v634, %v632
    %v989 = vpack.c.b16 %v635, %v633
    %v990 = vpack.c.b16 %v638, %v636
    %v991 = vpack.c.b16 %v639, %v637
    %v992 = vpack.c.b16 %v642, %v640
    %v993 = vpack.c.b16 %v643, %v641
    %v994 = vpack.c.b16 %v646, %v644
    %v995 = vpack.c.b16 %v647, %v645
    %v996 = vpack.c.b16 %v650, %v648
    %v997 = vpack.c.b16 %v651, %v649
    %v998 = vpack.c.b16 %v654, %v652
    %v999 = vpack.c.b16 %v655, %v653
    %v1000 = vpack.c.b16 %v658, %v656
    %v1001 = vpack.c.b16 %v659, %v657
    %v1002 = vpack.c.b16 %v662, %v660
    %v1003 = vpack.c.b16 %v663, %v661
    %v1004 = vpack.c.b16 %v666, %v664
    %v1005 = vpack.c.b16 %v667, %v665
    %v1006 = vpack.c.b16 %v670, %v668
    %v1007 = vpack.c.b16 %v671, %v669
    %v1008 = vpack.c.b16 %v674, %v672
    %v1009 = vpack.c.b16 %v675, %v673
    %v1010 = vpack.c.b16 %v678, %v676
    %v1011 = vpack.c.b16 %v679, %v677
    %v1012 = vpack.c.b16 %v682, %v680
    %v1013 = vpack.c.b16 %v683, %v681
    %v1014 = vpack.c.b16 %v686, %v684
    %v1015 = vpack.c.b16 %v687, %v685
    %v1016 = vpack.c.b16 %v690, %v688
    %v1017 = vpack.c.b16 %v691, %v689
    %v1018 = vpack.c.b16 %v694, %v692
    %v1019 = vpack.c.b16 %v695, %v693
    %v1020 = vpack.c.b16 %v698, %v696
    %v1021 = vpack.c.b16 %v699, %v697
    %v1022 = vpack.c.b16 %v702, %v700
    %v1023 = vpack.c.b16 %v703, %v701
    %v1024 = vpack.c.b16 %v706, %v704
    %v1025 = vpack.c.b16 %v707, %v705
    %v1026 = vpack.c.b16 %v710, %v708
    %v1027 = vpack.c.b16 %v711, %v709
    %v1028 = vpack.c.b16 %v714, %v712
    %v1029 = vpack.c.b16 %v715, %v713
    %v1030 = vpack.c.b16 %v718, %v716
    %v1031 = vpack.c.b16 %v719, %v717
    %v1032 = vpack.c.b16 %v722, %v720
    %v1033 = vpack.c.b16 %v723, %v721
    %v1034 = vpack.c.b16 %v726, %v724
    %v1035 = vpack.c.b16 %v727, %v725
    %v1036 = vpack.c.b16 %v730, %v728
    %v1037 = vpack.c.b16 %v731, %v729
    %v1038 = vpack.c.b16 %v734, %v732
    %v1039 = vpack.c.b16 %v735, %v733
    %v1040 = vpack.c.b16 %v738, %v736
    %v1041 = vpack.c.b16 %v739, %v737
    %v1042 = vpack.c.b16 %v742, %v740
    %v1043 = vpack.c.b16 %v743, %v741
    %v1044 = vpack.c.b16 %v746, %v744
    %v1045 = vpack.c.b16 %v747, %v745
    %v1046 = vpack.c.b16 %v750, %v748
    %v1047 = vpack.c.b16 %v751, %v749
    %v1048 = vpack.c.b16 %v754, %v752
    %v1049 = vpack.c.b16 %v755, %v753
    %v1050 = vpack.c.b16 %v758, %v756
    %v1051 = vpack.c.b16 %v759, %v757
    %v1052 = vpack.c.b16 %v762, %v760
    %v1053 = vpack.c.b16 %v763, %v761
    %v1054 = vpack.c.b16 %v766, %v764
    %v1055 = vpack.c.b16 %v767, %v765
    %v1056 = vpack.c.b16 %v770, %v768
    %v1057 = vpack.c.b16 %v771, %v769
    %v1058 = vpack.c.b16 %v774, %v772
    %v1059 = vpack.c.b16 %v775, %v773
    %v1060 = vpack.c.b16 %v778, %v776
    %v1061 = vpack.c.b16 %v779, %v777
    %v1062 = vpack.c.b16 %v782, %v780
    %v1063 = vpack.c.b16 %v783, %v781
    %v1064 = vpack.c.b16 %v786, %v784
    %v1065 = vpack.c.b16 %v787, %v785
    %v1066 = vpack.c.b16 %v790, %v788
    %v1067 = vpack.c.b16 %v791, %v789
    %v1068 = vpack.c.b16 %v794, %v792
    %v1069 = vpack.c.b16 %v795, %v793
    %v1070 = vpack.c.b16 %v798, %v796
    %v1071 = vpack.c.b16 %v799, %v797
    %v1072 = vpack.c.b16 %v802, %v800
    %v1073 = vpack.c.b16 %v803, %v801
    %v1074 = vpack.c.b16 %v806, %v804
    %v1075 = vpack.c.b16 %v807, %v805
    %v1076 = vpack.c.b16 %v810, %v808
    %v1077 = vpack.c.b16 %v811, %v809
    %v1078 = vpack.c.b16 %v814, %v812
    %v1079 = vpack.c.b16 %v815, %v813
    %v1080 = vpack.c.b16 %v818, %v816
    %v1081 = vpack.c.b16 %v819, %v817
    %v1082 = vpack.c.b16 %v822, %v820
    %v1083 = vpack.c.b16 %v823, %v821
    %v1084 = vpack.c.b16 %v826, %v824
    %v1085 = vpack.c.b16 %v827, %v825
    %v1086 = vpack.c.b16 %v830, %v828
    %v1087 = vpack.c.b16 %v831, %v829
    %v1088 = vpack.c.b16 %v834, %v832
    %v1089 = vpack.c.b16 %v835, %v833
    %v1090 = vpack.c.b16 %v838, %v836
    %v1091 = vpack.c.b16 %v839, %v837
    %v1092 = vpack.c.b16 %v842, %v840
    %v1093 = vpack.c.b16 %v843, %v841
    %v1094 = vpack.c.b16 %v846, %v844
    %v1095 = vpack.c.b16 %v847, %v845
    %v1096 = vpack.c.b16 %v850, %v848
    %v1097 = vpack.c.b16 %v851, %v849
    %v1098 = vpack.c.b16 %v854, %v852
    %v1099 = vpack.c.b16 %v855, %v853
    %v1100 = vpack.c.b16 %v858, %v856
    %v1101 = vpack.c.b16 %v859, %v857
    %v1102 = vpack.c.b16 %v862, %v860
    %v1103 = vpack.c.b16 %v863, %v861
    %v1104 = vpack.c.b16 %v866, %v864
    %v1105 = vpack.c.b16 %v867, %v865
    %v1106 = vpack.c.b16 %v870, %v868
    %v1107 = vpack.c.b16 %v871, %v869
    %v1108 = vpack.c.b16 %v874, %v872
    %v1109 = vpack.c.b16 %v875, %v873
    %v1110 = vpack.c.b16 %v878, %v876
    %v1111 = vpack.c.b16 %v879, %v877
    %v1112 = vpack.c.b16 %v882, %v880
    %v1113 = vpack.c.b16 %v883, %v881
    %v1114 = vpack.c.b16 %v886, %v884
    %v1115 = vpack.c.b16 %v887, %v885
    %v1116 = vpack.c.b16 %v890, %v888
    %v1117 = vpack.c.b16 %v891, %v889
    %v1118 = vpack.c.b16 %v894, %v892
    %v1119 = vpack.c.b16 %v895, %v893
    %v1120 = vpack.c.b16 %v898, %v896
    %v1121 = vpack.c.b16 %v899, %v897
    %v1122 = vpack.c.b16 %v902, %v900
    %v1123 = vpack.c.b16 %v903, %v901
    %v1124 = vpack.c.b16 %v906, %v904
    %v1125 = vpack.c.b16 %v907, %v905
    %v1126 = vpack.c.b16 %v910, %v908
    %v1127 = vpack.c.b16 %v911, %v909
    %v1128 = vpack.c.b16 %v914, %v912
    %v1129 = vpack.c.b16 %v915, %v913
    %v1130 = vpack.c.b16 %v918, %v916
    %v1131 = vpack.c.b16 %v919, %v917
    %v1132 = vpack.c.b16 %v922, %v920
    %v1133 = vpack.c.b16 %v923, %v921
    %v1134 = vpack.c.b16 %v926, %v924
    %v1135 = vpack.c.b16 %v927, %v925
    %v1136 = vpack.c.b16 %v930, %v928
    %v1137 = vpack.c.b16 %v931, %v929
    %v1138 = vpack.c.b16 %v934, %v932
    %v1139 = vpack.c.b16 %v935, %v933
    %v1140 = vpack.c.b16 %v938, %v936
    %v1141 = vpack.c.b16 %v939, %v937
    %v1142 = vpack.c.b16 %v942, %v940
    %v1143 = vpack.c.b16 %v943, %v941
    %vm1344 = vcmask 523264
    %v1346 = vsel %vm1344, %v322, 0
    %1348 = vmatprep.subr.bf16.mxu0 %v945
    %1349 = vmatpush1.bf16.msra.mxu0 %v944
    %1350 = vmatprep.subr.bf16.mxu0 %v947
    %1351 = vmatpush1.bf16.msra.mxu0 %v946
    %1352 = vmatprep.subr.bf16.mxu0 %v949
    %1353 = vmatpush1.bf16.msra.mxu0 %v948
    %1354 = vmatprep.subr.bf16.mxu0 %v951
    %1355 = vmatpush1.bf16.msra.mxu0 %v950
    %1356 = vmatprep.subr.bf16.mxu0 %v953
    %1357 = vmatpush1.bf16.msra.mxu0 %v952
    %1358 = vmatprep.subr.bf16.mxu0 %v955
    %1359 = vmatpush1.bf16.msra.mxu0 %v954
    %1360 = vmatprep.subr.bf16.mxu0 %v957
    %1361 = vmatpush1.bf16.msra.mxu0 %v956
    %1362 = vmatprep.subr.bf16.mxu0 %v959
    %1363 = vmatpush1.bf16.msra.mxu0 %v958
    %1364 = vmatprep.subr.bf16.mxu0 %v961
    %1365 = vmatpush1.bf16.msra.mxu0 %v960
    %1366 = vmatprep.subr.bf16.mxu0 %v963
    %1367 = vmatpush1.bf16.msra.mxu0 %v962
    %1368 = vmatprep.subr.bf16.mxu0 %v965
    %1369 = vmatpush1.bf16.msra.mxu0 %v964
    %1370 = vmatprep.subr.bf16.mxu0 %v967
    %1371 = vmatpush1.bf16.msra.mxu0 %v966
    %1372 = vmatprep.subr.bf16.mxu0 %v969
    %1373 = vmatpush1.bf16.msra.mxu0 %v968
    %1374 = vmatprep.subr.bf16.mxu0 %v971
    %1375 = vmatpush1.bf16.msra.mxu0 %v970
    %1376 = vmatprep.subr.bf16.mxu0 %v973
    %1377 = vmatpush1.bf16.msra.mxu0 %v972
    %1378 = vmatprep.subr.bf16.mxu0 %v975
    %1379 = vmatpush1.bf16.msra.mxu0 %v974
    %1380 = vmatprep.mubr.bf16.mxu0 %v281
    %1381 = vmatmul.mubr.bf16.gmra.mrb[0].mxu0 %v267
    %v1382 = vpop.f32.mrb[0].mxu0
    %v1383 = vadd.f32 %v235, %v1382
    %v1384 = vpop.f32.mrb[0].mxu0
    %v1385 = vadd.f32 %v239, %v1384
    %v1386 = vpop.f32.mrb[0].mxu0
    %v1387 = vpop.f32.mrb[0].mxu0
    %1388 = vdwg.mxu0
    %1389 = vmatprep.subr.bf16.mxu0 %v977
    %1390 = vmatpush1.bf16.msra.mxu0 %v976
    %1391 = vmatprep.subr.bf16.mxu0 %v979
    %1392 = vmatpush1.bf16.msra.mxu0 %v978
    %1393 = vmatprep.subr.bf16.mxu0 %v981
    %1394 = vmatpush1.bf16.msra.mxu0 %v980
    %1395 = vmatprep.subr.bf16.mxu0 %v983
    %1396 = vmatpush1.bf16.msra.mxu0 %v982
    %1397 = vmatprep.subr.bf16.mxu0 %v985
    %1398 = vmatpush1.bf16.msra.mxu0 %v984
    %1399 = vmatprep.subr.bf16.mxu0 %v987
    %1400 = vmatpush1.bf16.msra.mxu0 %v986
    %1401 = vmatprep.subr.bf16.mxu0 %v989
    %1402 = vmatpush1.bf16.msra.mxu0 %v988
    %1403 = vmatprep.subr.bf16.mxu0 %v991
    %1404 = vmatpush1.bf16.msra.mxu0 %v990
    %1405 = vmatprep.subr.bf16.mxu0 %v993
    %1406 = vmatpush1.bf16.msra.mxu0 %v992
    %1407 = vmatprep.subr.bf16.mxu0 %v995
    %1408 = vmatpush1.bf16.msra.mxu0 %v994
    %1409 = vmatprep.subr.bf16.mxu0 %v997
    %1410 = vmatpush1.bf16.msra.mxu0 %v996
    %1411 = vmatprep.subr.bf16.mxu0 %v999
    %1412 = vmatpush1.bf16.msra.mxu0 %v998
    %1413 = vmatprep.subr.bf16.mxu0 %v1001
    %1414 = vmatpush1.bf16.msra.mxu0 %v1000
    %1415 = vmatprep.subr.bf16.mxu0 %v1003
    %1416 = vmatpush1.bf16.msra.mxu0 %v1002
    %1417 = vmatprep.subr.bf16.mxu0 %v1005
    %1418 = vmatpush1.bf16.msra.mxu0 %v1004
    %1419 = vmatprep.subr.bf16.mxu0 %v1007
    %1420 = vmatpush1.bf16.msra.mxu0 %v1006
    %1421 = vmatprep.mubr.bf16.mxu0 %v291
    %1422 = vmatmul.mubr.bf16.gmra.mrb[0].mxu0 %v289
    %v1423 = vpop.f32.mrb[0].mxu0
    %v1424 = vadd.f32 %v1383, %v1423
    %v1425 = vpop.f32.mrb[0].mxu0
    %v1426 = vadd.f32 %v1385, %v1425
    %v1427 = vpop.f32.mrb[0].mxu0
    %v1428 = vpop.f32.mrb[0].mxu0
    %1429 = vdwg.mxu0
    %1430 = vmatprep.subr.bf16.mxu0 %v1009
    %1431 = vmatpush1.bf16.msra.mxu0 %v1008
    %1432 = vmatprep.subr.bf16.mxu0 %v1011
    %1433 = vmatpush1.bf16.msra.mxu0 %v1010
    %1434 = vmatprep.subr.bf16.mxu0 %v1013
    %1435 = vmatpush1.bf16.msra.mxu0 %v1012
    %1436 = vmatprep.subr.bf16.mxu0 %v1015
    %1437 = vmatpush1.bf16.msra.mxu0 %v1014
    %1438 = vmatprep.subr.bf16.mxu0 %v1017
    %1439 = vmatpush1.bf16.msra.mxu0 %v1016
    %1440 = vmatprep.subr.bf16.mxu0 %v1019
    %1441 = vmatpush1.bf16.msra.mxu0 %v1018
    %1442 = vmatprep.subr.bf16.mxu0 %v1021
    %1443 = vmatpush1.bf16.msra.mxu0 %v1020
    %1444 = vmatprep.subr.bf16.mxu0 %v1023
    %1445 = vmatpush1.bf16.msra.mxu0 %v1022
    %1446 = vmatprep.subr.bf16.mxu0 %v1025
    %1447 = vmatpush1.bf16.msra.mxu0 %v1024
    %1448 = vmatprep.subr.bf16.mxu0 %v1027
    %1449 = vmatpush1.bf16.msra.mxu0 %v1026
    %1450 = vmatprep.subr.bf16.mxu0 %v1029
    %1451 = vmatpush1.bf16.msra.mxu0 %v1028
    %1452 = vmatprep.subr.bf16.mxu0 %v1031
    %1453 = vmatpush1.bf16.msra.mxu0 %v1030
    %1454 = vmatprep.subr.bf16.mxu0 %v1033
    %1455 = vmatpush1.bf16.msra.mxu0 %v1032
    %1456 = vmatprep.subr.bf16.mxu0 %v1035
    %1457 = vmatpush1.bf16.msra.mxu0 %v1034
    %1458 = vmatprep.subr.bf16.mxu0 %v1037
    %1459 = vmatpush1.bf16.msra.mxu0 %v1036
    %1460 = vmatprep.subr.bf16.mxu0 %v1039
    %1461 = vmatpush1.bf16.msra.mxu0 %v1038
    %1462 = vmatprep.mubr.bf16.mxu0 %v288
    %1463 = vmatmul.mubr.bf16.gmra.mrb[0].mxu0 %v274
    %v1464 = vpop.f32.mrb[0].mxu0
    %v1465 = vadd.f32 %v1424, %v1464
    %v1466 = vpop.f32.mrb[0].mxu0
    %v1467 = vadd.f32 %v1426, %v1466
    %v1468 = vpop.f32.mrb[0].mxu0
    %v1469 = vpop.f32.mrb[0].mxu0
    %1470 = vdwg.mxu0
    %1471 = vmatprep.subr.bf16.mxu0 %v1041
    %1472 = vmatpush1.bf16.msra.mxu0 %v1040
    %1473 = vmatprep.subr.bf16.mxu0 %v1043
    %1474 = vmatpush1.bf16.msra.mxu0 %v1042
    %1475 = vmatprep.subr.bf16.mxu0 %v1045
    %1476 = vmatpush1.bf16.msra.mxu0 %v1044
    %1477 = vmatprep.subr.bf16.mxu0 %v1047
    %1478 = vmatpush1.bf16.msra.mxu0 %v1046
    %1479 = vmatprep.subr.bf16.mxu0 %v1049
    %1480 = vmatpush1.bf16.msra.mxu0 %v1048
    %1481 = vmatprep.subr.bf16.mxu0 %v1051
    %1482 = vmatpush1.bf16.msra.mxu0 %v1050
    %1483 = vmatprep.subr.bf16.mxu0 %v1053
    %1484 = vmatpush1.bf16.msra.mxu0 %v1052
    %1485 = vmatprep.subr.bf16.mxu0 %v1055
    %1486 = vmatpush1.bf16.msra.mxu0 %v1054
    %1487 = vmatprep.subr.bf16.mxu0 %v1057
    %1488 = vmatpush1.bf16.msra.mxu0 %v1056
    %1489 = vmatprep.subr.bf16.mxu0 %v1059
    %1490 = vmatpush1.bf16.msra.mxu0 %v1058
    %1491 = vmatprep.subr.bf16.mxu0 %v1061
    %1492 = vmatpush1.bf16.msra.mxu0 %v1060
    %1493 = vmatprep.subr.bf16.mxu0 %v1063
    %1494 = vmatpush1.bf16.msra.mxu0 %v1062
    %1495 = vmatprep.subr.bf16.mxu0 %v1065
    %1496 = vmatpush1.bf16.msra.mxu0 %v1064
    %1497 = vmatprep.subr.bf16.mxu0 %v1067
    %1498 = vmatpush1.bf16.msra.mxu0 %v1066
    %1499 = vmatprep.subr.bf16.mxu0 %v1069
    %1500 = vmatpush1.bf16.msra.mxu0 %v1068
    %1501 = vmatprep.subr.bf16.mxu0 %v1071
    %1502 = vmatpush1.bf16.msra.mxu0 %v1070
    %1503 = vmatprep.mubr.bf16.mxu0 %v292
    %1504 = vmatmul.mubr.bf16.gmra.mrb[0].mxu0 %v290
    %v1505 = vpop.f32.mrb[0].mxu0
    %v1506 = vadd.f32 %v1465, %v1505
    %v1507 = vpop.f32.mrb[0].mxu0
    %v1508 = vadd.f32 %v1467, %v1507
    %v1509 = vpop.f32.mrb[0].mxu0
    %v1510 = vpop.f32.mrb[0].mxu0
    %1511 = vdwg.mxu0
    %1512 = vmatprep.subr.bf16.mxu0 %v1073
    %1513 = vmatpush1.bf16.msra.mxu0 %v1072
    %1514 = vmatprep.subr.bf16.mxu0 %v1075
    %1515 = vmatpush1.bf16.msra.mxu0 %v1074
    %1516 = vmatprep.subr.bf16.mxu0 %v1077
    %1517 = vmatpush1.bf16.msra.mxu0 %v1076
    %1518 = vmatprep.subr.bf16.mxu0 %v1079
    %1519 = vmatpush1.bf16.msra.mxu0 %v1078
    %1520 = vmatprep.subr.bf16.mxu0 %v1081
    %1521 = vmatpush1.bf16.msra.mxu0 %v1080
    %1522 = vmatprep.subr.bf16.mxu0 %v1083
    %1523 = vmatpush1.bf16.msra.mxu0 %v1082
    %1524 = vmatprep.subr.bf16.mxu0 %v1085
    %1525 = vmatpush1.bf16.msra.mxu0 %v1084
    %1526 = vmatprep.subr.bf16.mxu0 %v1087
    %1527 = vmatpush1.bf16.msra.mxu0 %v1086
    %1528 = vmatprep.subr.bf16.mxu0 %v1089
    %1529 = vmatpush1.bf16.msra.mxu0 %v1088
    %1530 = vmatprep.subr.bf16.mxu0 %v1091
    %1531 = vmatpush1.bf16.msra.mxu0 %v1090
    %1532 = vmatprep.subr.bf16.mxu0 %v1093
    %1533 = vmatpush1.bf16.msra.mxu0 %v1092
    %1534 = vmatprep.subr.bf16.mxu0 %v1095
    %1535 = vmatpush1.bf16.msra.mxu0 %v1094
    %1536 = vmatprep.subr.bf16.mxu0 %v1097
    %1537 = vmatpush1.bf16.msra.mxu0 %v1096
    %1538 = vmatprep.subr.bf16.mxu0 %v1099
    %1539 = vmatpush1.bf16.msra.mxu0 %v1098
    %1540 = vmatprep.subr.bf16.mxu0 %v1101
    %1541 = vmatpush1.bf16.msra.mxu0 %v1100
    %1542 = vmatprep.subr.bf16.mxu0 %v1103
    %1543 = vmatpush1.bf16.msra.mxu0 %v1102
    %1544 = vmatprep.mubr.bf16.mxu0 %v329
    %1545 = vmatmul.mubr.bf16.gmra.mrb[0].mxu0 %v315
    %v1546 = vpop.f32.mrb[0].mxu0
    %v1547 = vadd.f32 %v1506, %v1546
    %v1548 = vpop.f32.mrb[0].mxu0
    %v1549 = vadd.f32 %v1508, %v1548
    %v1550 = vpop.f32.mrb[0].mxu0
    %v1551 = vpop.f32.mrb[0].mxu0
    %1552 = vdwg.mxu0
    %1553 = vmatprep.subr.bf16.mxu0 %v1105
    %1554 = vmatpush1.bf16.msra.mxu0 %v1104
    %1555 = vmatprep.subr.bf16.mxu0 %v1107
    %1556 = vmatpush1.bf16.msra.mxu0 %v1106
    %1557 = vmatprep.subr.bf16.mxu0 %v1109
    %1558 = vmatpush1.bf16.msra.mxu0 %v1108
    %1559 = vmatprep.subr.bf16.mxu0 %v1111
    %1560 = vmatpush1.bf16.msra.mxu0 %v1110
    %1561 = vmatprep.subr.bf16.mxu0 %v1113
    %1562 = vmatpush1.bf16.msra.mxu0 %v1112
    %1563 = vmatprep.subr.bf16.mxu0 %v1115
    %1564 = vmatpush1.bf16.msra.mxu0 %v1114
    %1565 = vmatprep.subr.bf16.mxu0 %v1117
    %1566 = vmatpush1.bf16.msra.mxu0 %v1116
    %1567 = vmatprep.subr.bf16.mxu0 %v1119
    %1568 = vmatpush1.bf16.msra.mxu0 %v1118
    %1569 = vmatprep.subr.bf16.mxu0 %v1121
    %1570 = vmatpush1.bf16.msra.mxu0 %v1120
    %1571 = vmatprep.subr.bf16.mxu0 %v1123
    %1572 = vmatpush1.bf16.msra.mxu0 %v1122
    %1573 = vmatprep.subr.bf16.mxu0 %v1125
    %1574 = vmatpush1.bf16.msra.mxu0 %v1124
    %1575 = vmatprep.subr.bf16.mxu0 %v1127
    %1576 = vmatpush1.bf16.msra.mxu0 %v1126
    %1577 = vmatprep.subr.bf16.mxu0 %v1129
    %1578 = vmatpush1.bf16.msra.mxu0 %v1128
    %1579 = vmatprep.subr.bf16.mxu0 %v1131
    %1580 = vmatpush1.bf16.msra.mxu0 %v1130
    %1581 = vmatprep.subr.bf16.mxu0 %v1133
    %1582 = vmatpush1.bf16.msra.mxu0 %v1132
    %1583 = vmatprep.subr.bf16.mxu0 %v1135
    %1584 = vmatpush1.bf16.msra.mxu0 %v1134
    %1585 = vmatprep.mubr.bf16.mxu0 %v331
    %1586 = vmatmul.mubr.bf16.gmra.mrb[0].mxu0 %v330
    %v1587 = vpop.f32.mrb[0].mxu0
    %v1588 = vadd.f32 %v1547, %v1587
    %v1589 = vpop.f32.mrb[0].mxu0
    %v1590 = vadd.f32 %v1549, %v1589
    %v1591 = vpop.f32.mrb[0].mxu0
    %v1592 = vpop.f32.mrb[0].mxu0
    %1593 = vdwg.mxu0
    %1594 = vmatprep.subr.bf16.mxu0 %v1137
    %1595 = vmatpush1.bf16.msra.mxu0 %v1136
    %1596 = vmatprep.subr.bf16.mxu0 %v1139
    %1597 = vmatpush1.bf16.msra.mxu0 %v1138
    %1598 = vmatprep.subr.bf16.mxu0 %v1141
    %1599 = vmatpush1.bf16.msra.mxu0 %v1140
    %1600 = vmatprep.subr.bf16.mxu0 %v1143
    %1601 = vmatpush1.bf16.msra.mxu0 %v1142
    %1602 = vmatprep.subr.bf16.mxu0 0
    %1603 = vmatpush1.bf16.msra.mxu0 0
    %1604 = vmatprep.subr.bf16.mxu0 0
    %1605 = vmatpush1.bf16.msra.mxu0 0
    %1606 = vmatprep.subr.bf16.mxu0 0
    %1607 = vmatpush1.bf16.msra.mxu0 0
    %1608 = vmatprep.subr.bf16.mxu0 0
    %1609 = vmatpush1.bf16.msra.mxu0 0
    %1610 = vmatprep.subr.bf16.mxu0 0
    %1611 = vmatpush1.bf16.msra.mxu0 0
    %1612 = vmatprep.subr.bf16.mxu0 0
    %1613 = vmatpush1.bf16.msra.mxu0 0
    %1614 = vmatprep.subr.bf16.mxu0 0
    %1615 = vmatpush1.bf16.msra.mxu0 0
    %1616 = vmatprep.subr.bf16.mxu0 0
    %1617 = vmatpush1.bf16.msra.mxu0 0
    %1618 = vmatprep.subr.bf16.mxu0 0
    %1619 = vmatpush1.bf16.msra.mxu0 0
    %1620 = vmatprep.subr.bf16.mxu0 0
    %1621 = vmatpush1.bf16.msra.mxu0 0
    %1622 = vmatprep.subr.bf16.mxu0 0
    %1623 = vmatpush1.bf16.msra.mxu0 0
    %1624 = vmatprep.subr.bf16.mxu0 0
    %1625 = vmatpush1.bf16.msra.mxu0 0
    %1626 = vmatprep.mubr.bf16.mxu0 0
    %1627 = vmatmul.mubr.bf16.gmra.mrb[0].mxu0 %v1346
    %v1628 = vpop.f32.mrb[0].mxu0
    %v1629 = vadd.f32 %v1588, %v1628
    %v1630 = vpop.f32.mrb[0].mxu0
    %v1631 = vadd.f32 %v1590, %v1630
    %v1632 = vpop.f32.mrb[0].mxu0
    %v1633 = vpop.f32.mrb[0].mxu0
    %1634 = vdwg.mxu0
    %v1635 = vmax.f32 %v1629, 0.0
    %v1636 = vmax.f32 %v1631, 0.0
    %v1637 = vpack.c.bf16 %v1635, %v1635
    %v1638 = vpack.c.bf16 %v1636, %v1636
    %v1639 = vld [vmem:[%s3] sm:$0xf]
    %v1640 = vld [vmem:[%s3 + $0x4] sm:$0xf]
    %v1641 = vld [vmem:[%s3 + $0x8] sm:$0xf]
    %v1642 = vld [vmem:[%s3 + $0xc] sm:$0xf]
    %v1643 = vld [vmem:[%s3 + $0x10] sm:$0xf]
    %v1644 = vld [vmem:[%s3 + $0x14] sm:$0xf]
    %v1645 = vld [vmem:[%s3 + $0x18] sm:$0xf]
    %v1646 = vld [vmem:[%s3 + $0x1c] sm:$0xf]
    %v1647 = vld [vmem:[%s3 + $0x20] sm:$0xf]
    %v1648 = vld [vmem:[%s3 + $0x24] sm:$0xf]
    %v1649 = vld [vmem:[%s3 + $0x28] sm:$0xf]
    %v1650 = vld [vmem:[%s3 + $0x2c] sm:$0xf]
    %v1651 = vld [vmem:[%s3 + $0x30] sm:$0xf]
    %v1652 = vld [vmem:[%s3 + $0x34] sm:$0xf]
    %v1653 = vld [vmem:[%s3 + $0x38] sm:$0xf]
    %v1654 = vld [vmem:[%s3 + $0x3c] sm:$0xf]
    %v1655 = vld [vmem:[%s3 + $0x40] sm:$0xf]
    %v1656 = vld [vmem:[%s3 + $0x44] sm:$0xf]
    %v1657 = vld [vmem:[%s3 + $0x48] sm:$0xf]
    %v1658 = vld [vmem:[%s3 + $0x4c] sm:$0xf]
    %v1659 = vld [vmem:[%s3 + $0x50] sm:$0xf]
    %v1660 = vld [vmem:[%s3 + $0x54] sm:$0xf]
    %v1661 = vld [vmem:[%s3 + $0x58] sm:$0xf]
    %v1662 = vld [vmem:[%s3 + $0x5c] sm:$0xf]
    %v1663 = vld [vmem:[%s3 + $0x60] sm:$0xf]
    %v1664 = vld [vmem:[%s3 + $0x64] sm:$0xf]
    %v1665 = vld [vmem:[%s3 + $0x68] sm:$0xf]
    %v1666 = vld [vmem:[%s3 + $0x6c] sm:$0xf]
    %v1667 = vld [vmem:[%s3 + $0x70] sm:$0xf]
    %v1668 = vld [vmem:[%s3 + $0x74] sm:$0xf]
    %v1669 = vld [vmem:[%s3 + $0x78] sm:$0xf]
    %v1670 = vld [vmem:[%s3 + $0x7c] sm:$0xf]
    %v1671 = vld [vmem:[%s4] sm:$0x1]
    %v1673 = vlaneseq
    %v1674 = vshrl.u32 %v1673, 7
    %v1675 = vsub.s32 0, %v1674
    %v1676 = vrot.slane %v1671, %v1675
    %v1710 = vunpack.c.l.b16 %v1639
    %v1711 = vunpack.c.l.b16 %v1640
    %v1712 = vunpack.c.l.b16 %v1641
    %v1713 = vunpack.c.l.b16 %v1642
    %v1714 = vunpack.c.l.b16 %v1643
    %v1715 = vunpack.c.l.b16 %v1644
    %v1716 = vunpack.c.l.b16 %v1645
    %v1717 = vunpack.c.l.b16 %v1646
    %v1718 = vunpack.c.l.b16 %v1647
    %v1719 = vunpack.c.l.b16 %v1648
    %v1720 = vunpack.c.l.b16 %v1649
    %v1721 = vunpack.c.l.b16 %v1650
    %v1722 = vunpack.c.l.b16 %v1651
    %v1723 = vunpack.c.l.b16 %v1652
    %v1724 = vunpack.c.l.b16 %v1653
    %v1725 = vunpack.c.l.b16 %v1654
    %v1726 = vunpack.c.l.b16 %v1655
    %v1727 = vunpack.c.l.b16 %v1656
    %v1728 = vunpack.c.l.b16 %v1657
    %v1729 = vunpack.c.l.b16 %v1658
    %v1730 = vunpack.c.l.b16 %v1659
    %v1731 = vunpack.c.l.b16 %v1660
    %v1732 = vunpack.c.l.b16 %v1661
    %v1733 = vunpack.c.l.b16 %v1662
    %v1734 = vunpack.c.l.b16 %v1663
    %v1735 = vunpack.c.l.b16 %v1664
    %v1736 = vunpack.c.l.b16 %v1665
    %v1737 = vunpack.c.l.b16 %v1666
    %v1738 = vunpack.c.l.b16 %v1667
    %v1739 = vunpack.c.l.b16 %v1668
    %v1740 = vunpack.c.l.b16 %v1669
    %v1741 = vunpack.c.l.b16 %v1670
    %v1742 = vpack.c.b16 %v1711, %v1710
    %v1743 = vpack.c.b16 %v1713, %v1712
    %v1744 = vpack.c.b16 %v1715, %v1714
    %v1745 = vpack.c.b16 %v1717, %v1716
    %v1746 = vpack.c.b16 %v1719, %v1718
    %v1747 = vpack.c.b16 %v1721, %v1720
    %v1748 = vpack.c.b16 %v1723, %v1722
    %v1749 = vpack.c.b16 %v1725, %v1724
    %v1750 = vpack.c.b16 %v1727, %v1726
    %v1751 = vpack.c.b16 %v1729, %v1728
    %v1752 = vpack.c.b16 %v1731, %v1730
    %v1753 = vpack.c.b16 %v1733, %v1732
    %v1754 = vpack.c.b16 %v1735, %v1734
    %v1755 = vpack.c.b16 %v1737, %v1736
    %v1756 = vpack.c.b16 %v1739, %v1738
    %v1757 = vpack.c.b16 %v1741, %v1740
    %1774 = vmatprep.subr.bf16.mxu0 0
    %1775 = vmatpush1.bf16.msra.mxu0 %v1742
    %1776 = vmatprep.subr.bf16.mxu0 0
    %1777 = vmatpush1.bf16.msra.mxu0 %v1743
    %1778 = vmatprep.subr.bf16.mxu0 0
    %1779 = vmatpush1.bf16.msra.mxu0 %v1744
    %1780 = vmatprep.subr.bf16.mxu0 0
    %1781 = vmatpush1.bf16.msra.mxu0 %v1745
    %1782 = vmatprep.subr.bf16.mxu0 0
    %1783 = vmatpush1.bf16.msra.mxu0 %v1746
    %1784 = vmatprep.subr.bf16.mxu0 0
    %1785 = vmatpush1.bf16.msra.mxu0 %v1747
    %1786 = vmatprep.subr.bf16.mxu0 0
    %1787 = vmatpush1.bf16.msra.mxu0 %v1748
    %1788 = vmatprep.subr.bf16.mxu0 0
    %1789 = vmatpush1.bf16.msra.mxu0 %v1749
    %1790 = vmatprep.subr.bf16.mxu0 0
    %1791 = vmatpush1.bf16.msra.mxu0 %v1750
    %1792 = vmatprep.subr.bf16.mxu0 0
    %1793 = vmatpush1.bf16.msra.mxu0 %v1751
    %1794 = vmatprep.subr.bf16.mxu0 0
    %1795 = vmatpush1.bf16.msra.mxu0 %v1752
    %1796 = vmatprep.subr.bf16.mxu0 0
    %1797 = vmatpush1.bf16.msra.mxu0 %v1753
    %1798 = vmatprep.subr.bf16.mxu0 0
    %1799 = vmatpush1.bf16.msra.mxu0 %v1754
    %1800 = vmatprep.subr.bf16.mxu0 0
    %1801 = vmatpush1.bf16.msra.mxu0 %v1755
    %1802 = vmatprep.subr.bf16.mxu0 0
    %1803 = vmatpush1.bf16.msra.mxu0 %v1756
    %1804 = vmatprep.subr.bf16.mxu0 0
    %1805 = vmatpush1.bf16.msra.mxu0 %v1757
    %1806 = vmatprep.mubr.bf16.mxu0 %v1638
    %1807 = vmatmul.mubr.bf16.gmra.mrb[0].mxu0 %v1637
    %v1808 = vpop.f32.mrb[0].mxu0
    %v1809 = vadd.f32 %v1676, %v1808
    %v1810 = vpop.f32.mrb[0].mxu0
    %v1811 = vpop.f32.mrb[0].mxu0
    %v1812 = vpop.f32.mrb[0].mxu0
    %1813 = vdwg.mxu0
    %v1814 = vmax.f32 %v1809, 0.0
    %v1815 = vpack.c.bf16 %v1814, %v1814
    %v1816 = vld [vmem:[%s5] sm:$0xf]
    %v1817 = vld [vmem:[%s5 + $0x4] sm:$0xf]
    %v1818 = vld [vmem:[%s5 + $0x8] sm:$0xf]
    %v1819 = vld [vmem:[%s5 + $0xc] sm:$0xf]
    %v1820 = vld [vmem:[%s5 + $0x10] sm:$0xf]
    %v1821 = vld [vmem:[%s5 + $0x14] sm:$0xf]
    %v1822 = vld [vmem:[%s5 + $0x18] sm:$0xf]
    %v1823 = vld [vmem:[%s5 + $0x1c] sm:$0xf]
    %v1824 = vld [vmem:[%s5 + $0x20] sm:$0xf]
    %v1825 = vld [vmem:[%s5 + $0x24] sm:$0xf]
    %v1826 = vld [vmem:[%s5 + $0x28] sm:$0xf]
    %v1827 = vld [vmem:[%s5 + $0x2c] sm:$0xf]
    %v1828 = vld [vmem:[%s5 + $0x30] sm:$0xf]
    %v1829 = vld [vmem:[%s5 + $0x34] sm:$0xf]
    %v1830 = vld [vmem:[%s5 + $0x38] sm:$0xf]
    %v1831 = vld [vmem:[%s5 + $0x3c] sm:$0xf]
    %v1832 = vld [vmem:[%s6] sm:$0x1]
    %v1834 = vlaneseq
    %v1835 = vshrl.u32 %v1834, 7
    %v1836 = vsub.s32 0, %v1835
    %v1837 = vrot.slane %v1832, %v1836
    %v1855 = vunpack.c.l.b16 %v1816
    %v1856 = vunpack.c.l.b16 %v1817
    %v1857 = vunpack.c.l.b16 %v1818
    %v1858 = vunpack.c.l.b16 %v1819
    %v1859 = vunpack.c.l.b16 %v1820
    %v1860 = vunpack.c.l.b16 %v1821
    %v1861 = vunpack.c.l.b16 %v1822
    %v1862 = vunpack.c.l.b16 %v1823
    %v1863 = vunpack.c.l.b16 %v1824
    %v1864 = vunpack.c.l.b16 %v1825
    %v1865 = vunpack.c.l.b16 %v1826
    %v1866 = vunpack.c.l.b16 %v1827
    %v1867 = vunpack.c.l.b16 %v1828
    %v1868 = vunpack.c.l.b16 %v1829
    %v1869 = vunpack.c.l.b16 %v1830
    %v1870 = vunpack.c.l.b16 %v1831
    %v1871 = vpack.c.b16 %v1856, %v1855
    %v1872 = vpack.c.b16 %v1858, %v1857
    %v1873 = vpack.c.b16 %v1860, %v1859
    %v1874 = vpack.c.b16 %v1862, %v1861
    %v1875 = vpack.c.b16 %v1864, %v1863
    %v1876 = vpack.c.b16 %v1866, %v1865
    %v1877 = vpack.c.b16 %v1868, %v1867
    %v1878 = vpack.c.b16 %v1870, %v1869
    %1887 = vmatprep.subr.bf16.mxu0 0
    %1888 = vmatpush1.bf16.msra.mxu0 %v1871
    %1889 = vmatprep.subr.bf16.mxu0 0
    %1890 = vmatpush1.bf16.msra.mxu0 %v1872
    %1891 = vmatprep.subr.bf16.mxu0 0
    %1892 = vmatpush1.bf16.msra.mxu0 %v1873
    %1893 = vmatprep.subr.bf16.mxu0 0
    %1894 = vmatpush1.bf16.msra.mxu0 %v1874
    %1895 = vmatprep.subr.bf16.mxu0 0
    %1896 = vmatpush1.bf16.msra.mxu0 %v1875
    %1897 = vmatprep.subr.bf16.mxu0 0
    %1898 = vmatpush1.bf16.msra.mxu0 %v1876
    %1899 = vmatprep.subr.bf16.mxu0 0
    %1900 = vmatpush1.bf16.msra.mxu0 %v1877
    %1901 = vmatprep.subr.bf16.mxu0 0
    %1902 = vmatpush1.bf16.msra.mxu0 %v1878
    %1903 = vmatprep.subr.bf16.mxu0 0
    %1904 = vmatpush1.bf16.msra.mxu0 0
    %1905 = vmatprep.subr.bf16.mxu0 0
    %1906 = vmatpush1.bf16.msra.mxu0 0
    %1907 = vmatprep.subr.bf16.mxu0 0
    %1908 = vmatpush1.bf16.msra.mxu0 0
    %1909 = vmatprep.subr.bf16.mxu0 0
    %1910 = vmatpush1.bf16.msra.mxu0 0
    %1911 = vmatprep.subr.bf16.mxu0 0
    %1912 = vmatpush1.bf16.msra.mxu0 0
    %1913 = vmatprep.subr.bf16.mxu0 0
    %1914 = vmatpush1.bf16.msra.mxu0 0
    %1915 = vmatprep.subr.bf16.mxu0 0
    %1916 = vmatpush1.bf16.msra.mxu0 0
    %1917 = vmatprep.subr.bf16.mxu0 0
    %1918 = vmatpush1.bf16.msra.mxu0 0
    %1919 = vmatprep.mubr.bf16.mxu0 0
    %1920 = vmatmul.mubr.bf16.gmra.mrb[0].mxu0 %v1815
    %v1921 = vpop.f32.mrb[0].mxu0
    %v1922 = vadd.f32 %v1837, %v1921
    %v1923 = vpop.f32.mrb[0].mxu0
    %v1924 = vpop.f32.mrb[0].mxu0
    %v1925 = vpop.f32.mrb[0].mxu0
    %1926 = vdwg.mxu0
    %vm1927 = vcmask 25600
    %v1928 = vsel %vm1927, %v1922, -inf
    %1929 = vmax.xlane.f32.xlu0 %v1928
    %v1930 = vpop.xlane.xlu0 %1929
    %v1931 = vsub.f32 %v1922, %v1930
    %v1932 = vmul.f32 %v1931, 1.442695
    %v1933 = vpow.pop %v1932
    %v1934 = vsel %vm1927, %v1933, 0.0
    %1935 = vadd.xlane.f32.xlu0 %v1934
    %v1936 = vpop.xlane.xlu0 %1935
    %v1937 = vrcp.pop %v1936
    %v1938 = vmul.f32 %v1933, %v1937
    %1939 = vst.msk [vmem:[#allocation2] sm:$0x3] %vm1927, %v1938
    // Predicated region
    $region30: #{net_forward.3} parent=1 // pred_check
      _
    $region31: #{net_forward.3} parent=1 // pred_check_branch
      %1941 = sbr.rel (0) target = $region33
    $region32: #{net_forward.3} parent=1 // pred_region
      %s1943 = ssub.s32 32, 32
      %1944 = vsyncadd [#allocation3], %s1943
      %s1946 = sshll.u32 [#allocation2], 4
      %s1947 = int_to_ptr.vmem [resolvable:$true] %s1946
      %1949 = dma.vmem_to_hbm [thread:$0]  %s1947, 32, %s7, [#allocation3]
    $region33: #{net_forward.3} parent=1 // pred_fallthru
      _
    // Predicated region
    $region34: #{net_forward.3} parent=1 // pred_check
      _
    $region35: #{net_forward.3} parent=1 // pred_check_branch
      %1951 = sbr.rel (0) target = $region37
    $region36: #{net_forward.3} parent=1 // pred_region
      %1952 = dma.done [#allocation3], 32
    $region37: #{net_forward.3} parent=1 // pred_fallthru
      _
    %1953 = vsyncpa [#allocation3], 1

// kernel: net_forward.2
$region0: #{net_forward.2}
  #allocation0 [shape = 'u32[]', space=smem, size = 0x4, offset = 0x4, fixed_abs, tag = 'smem constant byte address 0x4 - core index']
  #allocation1 [shape = 'u32[144,128]{1,0:T(1,128)}', space=vmem, size = 0x12000, scoped, tag = 'internal scratch']
  #allocation2 [shape = 'bf16[100,2296]{1,0:T(8,128)(2,1)}', space=vmem, size = 0x75000, scoped, tag = 'scratch operand']
  #allocation3 [shape = 'bf16[8,2245]{1,0:T(8,128)(2,1)}', space=vmem, size = 0x9000, scoped, tag = 'scratch operand']
  #allocation4 [shape = 'bf16[128,1939]{1,0:T(16,128)(2,1)}', space=vmem, size = 0x80000, scoped, tag = 'scratch operand']
  %s0 = inlined_call_operand.vmem [shape: bf16[2,4,2500], index: 0, kind: input, shape index: {}]
  %s1 = inlined_call_operand.vmem [shape: bf16[8,100], index: 1, kind: input, shape index: {}]
  %s2 = inlined_call_operand.vmem [shape: f32[8,1], index: 2, kind: input, shape index: {}]
  %s3 = inlined_call_operand.vmem [shape: f32[8,1], index: 3, kind: input, shape index: {}]
  %s4 = inlined_call_operand.vmem [shape: bf16[16,128], index: 4, kind: input, shape index: {}]
  %s5 = inlined_call_operand.vmem [shape: f32[16,1], index: 5, kind: input, shape index: {}]
  %s6 = inlined_call_operand.vmem [shape: bf16[1837,100], index: 6, kind: input, shape index: {}]
  %s7 = inlined_call_operand.vmem [shape: bf16[2,16,100], index: 7, kind: output, shape index: {}]
  %s8 = sld [smem:[#allocation0]]
  $region61: #{net_forward.2} parent=0
    _
  %s10 = ssub.s32 1, %s8
  %s11 = scalar_select 0, %s10, %s8
  loop: start=0, step=1, limit=4
  $region2: #{net_forward.2} parent=0 // loop_pre_header
    _
  $region3: #{net_forward.2} parent=0 // loop_header
    %s13 = sphi 0, %s17
    %p14 = scmp.ge.s32.totalorder %s13, 4
    %s23 = sphi 0, %s25
    %s26 = sphi 0, %s23
    %s27 = sphi 0, %s26
    %s43 = sphi 0, %s27
    %s47 = sphi 0, %s47
    %s49 = sphi 0, %s47
    %s50 = sphi 0, %s49
    %s64 = sphi 0, %s50
    %s68 = sphi 0, %s68
    %s70 = sphi 0, %s68
    %s71 = sphi 0, %s70
    %s85 = sphi 0, %s71
    %s89 = sphi 0, %s89
    %s91 = sphi 0, %s89
    %s92 = sphi 0, %s91
    %s106 = sphi 0, %s92
    %s110 = sphi 0, %s110
    %s112 = sphi 0, %s110
    %s113 = sphi 0, %s112
    %s127 = sphi 0, %s113
    %s131 = sphi 0, %s131
    %s133 = sphi 0, %s131
    %s134 = sphi 0, %s133
    %s148 = sphi 0, %s134
    %s152 = sphi 0, %s152
    %s154 = sphi 0, %s152
    %s155 = sphi 0, %s154
    %s169 = sphi 0, %s155
    %s175 = sphi 0, %s177
    %s178 = sphi 0, %s175
    %s179 = sphi 0, %s178
    %s195 = sphi 0, %s179
  $region4: #{net_forward.2} parent=0 // loop_header_branch
    %16 = sbr.rel (%p14) target = $region8
  $region5: #{net_forward.2} parent=0 // loop_body
    %s18 = ssub.s32 %s13, 1
    %s19 = ssub.s32 %s13, 2
    %s20 = sadd.s32 %s13, 1
    %s21 = ssub.s32 %s13, %s20
    %p22 = scmp.eq.s32.totalorder %s21, 0
    %s24 = sadd.s32 %s23, 1
    %s25 = scalar_select %p22, %s23, %s24
    %p28 = pneg %p22
    %p29 = scmp.eq.s32.totalorder %s13, 1
    %p30 = por %p28, %p29
    %p31 = scmp.ne.s32.totalorder %s23, %s26
    %p32 = scmp.eq.s32.totalorder %s13, 0
    %p33 = por %p31, %p32
    %p34 = scmp.ne.s32.totalorder %s23, %s26
    %p35 = scmp.eq.s32.totalorder %s18, 1
    %p36 = por %p34, %p35
    %p37 = scmp.ne.s32.totalorder %s26, %s27
    %p38 = scmp.eq.s32.totalorder %s18, 0
    %p39 = por %p37, %p38
    %p40 = scmp.ne.s32.totalorder %s26, %s27
    %p41 = scmp.eq.s32.totalorder %s19, 1
    %p42 = por %p40, %p41
    %p44 = scmp.ne.s32.totalorder %s27, %s43
    %p45 = scmp.eq.s32.totalorder %s19, 0
    %p46 = por %p44, %p45
    %s48 = sadd.s32 %s47, 1
    %p51 = scmp.eq.s32.totalorder %s13, 1
    %p52 = scmp.ne.s32.totalorder %s47, %s49
    %p53 = scmp.eq.s32.totalorder %s13, 0
    %p54 = por %p52, %p53
    %p55 = scmp.ne.s32.totalorder %s47, %s49
    %p56 = scmp.eq.s32.totalorder %s18, 1
    %p57 = por %p55, %p56
    %p58 = scmp.ne.s32.totalorder %s49, %s50
    %p59 = scmp.eq.s32.totalorder %s18, 0
    %p60 = por %p58, %p59
    %p61 = scmp.ne.s32.totalorder %s49, %s50
    %p62 = scmp.eq.s32.totalorder %s19, 1
    %p63 = por %p61, %p62
    %p65 = scmp.ne.s32.totalorder %s50, %s64
    %p66 = scmp.eq.s32.totalorder %s19, 0
    %p67 = por %p65, %p66
    %s69 = sadd.s32 %s68, 1
    %p72 = scmp.eq.s32.totalorder %s13, 1
    %p73 = scmp.ne.s32.totalorder %s68, %s70
    %p74 = scmp.eq.s32.totalorder %s13, 0
    %p75 = por %p73, %p74
    %p76 = scmp.ne.s32.totalorder %s68, %s70
    %p77 = scmp.eq.s32.totalorder %s18, 1
    %p78 = por %p76, %p77
    %p79 = scmp.ne.s32.totalorder %s70, %s71
    %p80 = scmp.eq.s32.totalorder %s18, 0
    %p81 = por %p79, %p80
    %p82 = scmp.ne.s32.totalorder %s70, %s71
    %p83 = scmp.eq.s32.totalorder %s19, 1
    %p84 = por %p82, %p83
    %p86 = scmp.ne.s32.totalorder %s71, %s85
    %p87 = scmp.eq.s32.totalorder %s19, 0
    %p88 = por %p86, %p87
    %s90 = sadd.s32 %s89, 1
    %p93 = scmp.eq.s32.totalorder %s13, 1
    %p94 = scmp.ne.s32.totalorder %s89, %s91
    %p95 = scmp.eq.s32.totalorder %s13, 0
    %p96 = por %p94, %p95
    %p97 = scmp.ne.s32.totalorder %s89, %s91
    %p98 = scmp.eq.s32.totalorder %s18, 1
    %p99 = por %p97, %p98
    %p100 = scmp.ne.s32.totalorder %s91, %s92
    %p101 = scmp.eq.s32.totalorder %s18, 0
    %p102 = por %p100, %p101
    %p103 = scmp.ne.s32.totalorder %s91, %s92
    %p104 = scmp.eq.s32.totalorder %s19, 1
    %p105 = por %p103, %p104
    %p107 = scmp.ne.s32.totalorder %s92, %s106
    %p108 = scmp.eq.s32.totalorder %s19, 0
    %p109 = por %p107, %p108
    %s111 = sadd.s32 %s110, 1
    %p114 = scmp.eq.s32.totalorder %s13, 1
    %p115 = scmp.ne.s32.totalorder %s110, %s112
    %p116 = scmp.eq.s32.totalorder %s13, 0
    %p117 = por %p115, %p116
    %p118 = scmp.ne.s32.totalorder %s110, %s112
    %p119 = scmp.eq.s32.totalorder %s18, 1
    %p120 = por %p118, %p119
    %p121 = scmp.ne.s32.totalorder %s112, %s113
    %p122 = scmp.eq.s32.totalorder %s18, 0
    %p123 = por %p121, %p122
    %p124 = scmp.ne.s32.totalorder %s112, %s113
    %p125 = scmp.eq.s32.totalorder %s19, 1
    %p126 = por %p124, %p125
    %p128 = scmp.ne.s32.totalorder %s113, %s127
    %p129 = scmp.eq.s32.totalorder %s19, 0
    %p130 = por %p128, %p129
    %s132 = sadd.s32 %s131, 1
    %p135 = scmp.eq.s32.totalorder %s13, 1
    %p136 = scmp.ne.s32.totalorder %s131, %s133
    %p137 = scmp.eq.s32.totalorder %s13, 0
    %p138 = por %p136, %p137
    %p139 = scmp.ne.s32.totalorder %s131, %s133
    %p140 = scmp.eq.s32.totalorder %s18, 1
    %p141 = por %p139, %p140
    %p142 = scmp.ne.s32.totalorder %s133, %s134
    %p143 = scmp.eq.s32.totalorder %s18, 0
    %p144 = por %p142, %p143
    %p145 = scmp.ne.s32.totalorder %s133, %s134
    %p146 = scmp.eq.s32.totalorder %s19, 1
    %p147 = por %p145, %p146
    %p149 = scmp.ne.s32.totalorder %s134, %s148
    %p150 = scmp.eq.s32.totalorder %s19, 0
    %p151 = por %p149, %p150
    %s153 = sadd.s32 %s152, 1
    %p156 = scmp.eq.s32.totalorder %s13, 1
    %p157 = scmp.ne.s32.totalorder %s152, %s154
    %p158 = scmp.eq.s32.totalorder %s13, 0
    %p159 = por %p157, %p158
    %p160 = scmp.ne.s32.totalorder %s152, %s154
    %p161 = scmp.eq.s32.totalorder %s18, 1
    %p162 = por %p160, %p161
    %p163 = scmp.ne.s32.totalorder %s154, %s155
    %p164 = scmp.eq.s32.totalorder %s18, 0
    %p165 = por %p163, %p164
    %p166 = scmp.ne.s32.totalorder %s154, %s155
    %p167 = scmp.eq.s32.totalorder %s19, 1
    %p168 = por %p166, %p167
    %p170 = scmp.ne.s32.totalorder %s155, %s169
    %p171 = scmp.eq.s32.totalorder %s19, 0
    %p172 = por %p170, %p171
    %s173 = ssub.s32 %s13, %s20
    %p174 = scmp.eq.s32.totalorder %s173, 0
    %s176 = sadd.s32 %s175, 1
    %s177 = scalar_select %p174, %s175, %s176
    %p180 = pneg %p174
    %p181 = scmp.eq.s32.totalorder %s13, 1
    %p182 = por %p180, %p181
    %p183 = scmp.ne.s32.totalorder %s175, %s178
    %p184 = scmp.eq.s32.totalorder %s13, 0
    %p185 = por %p183, %p184
    %p186 = scmp.ne.s32.totalorder %s175, %s178
    %p187 = scmp.eq.s32.totalorder %s18, 1
    %p188 = por %p186, %p187
    %p189 = scmp.ne.s32.totalorder %s178, %s179
    %p190 = scmp.eq.s32.totalorder %s18, 0
    %p191 = por %p189, %p190
    %p192 = scmp.ne.s32.totalorder %s178, %s179
    %p193 = scmp.eq.s32.totalorder %s19, 1
    %p194 = por %p192, %p193
    %p196 = scmp.ne.s32.totalorder %s179, %s195
    %p197 = scmp.eq.s32.totalorder %s19, 0
    %p198 = por %p196, %p197
    %p199 = scmp.le.s32.totalorder 1, %s13
    %p200 = scmp.lt.s32.totalorder %s13, 3
    %p201 = pnand %p199, %p200
    %p202 = pneg %p201
    // Predicated region
    $region9: #{net_forward.2} parent=5 // pred_check
      _
    $region10: #{net_forward.2} parent=5 // pred_check_branch
      %204 = sbr.rel (%p201) target = $region12
    $region11: #{net_forward.2} parent=5 // pred_region
      %s205 = ssub.s32 %s13, 1
      // Predicated region
      $region13: #{net_forward.2} parent=11 // pred_check
        %p206 = pneg %p60
      $region14: #{net_forward.2} parent=11 // pred_check_branch
        %208 = sbr.rel (%p206) target = $region16
      $region15: #{net_forward.2} parent=11 // pred_region
        _
      $region16: #{net_forward.2} parent=11 // pred_fallthru
        _
      // Predicated region
      $region17: #{net_forward.2} parent=11 // pred_check
        %p209 = pneg %p81
      $region18: #{net_forward.2} parent=11 // pred_check_branch
        %211 = sbr.rel (%p209) target = $region20
      $region19: #{net_forward.2} parent=11 // pred_region
        _
      $region20: #{net_forward.2} parent=11 // pred_fallthru
        _
      // Predicated region
      $region21: #{net_forward.2} parent=11 // pred_check
        %p212 = pneg %p102
      $region22: #{net_forward.2} parent=11 // pred_check_branch
        %214 = sbr.rel (%p212) target = $region24
      $region23: #{net_forward.2} parent=11 // pred_region
        _
      $region24: #{net_forward.2} parent=11 // pred_fallthru
        _
      // Predicated region
      $region25: #{net_forward.2} parent=11 // pred_check
        %p215 = pneg %p123
      $region26: #{net_forward.2} parent=11 // pred_check_branch
        %217 = sbr.rel (%p215) target = $region28
      $region27: #{net_forward.2} parent=11 // pred_region
        _
      $region28: #{net_forward.2} parent=11 // pred_fallthru
        _
      // Predicated region
      $region29: #{net_forward.2} parent=11 // pred_check
        %p218 = pneg %p144
      $region30: #{net_forward.2} parent=11 // pred_check_branch
        %220 = sbr.rel (%p218) target = $region32
      $region31: #{net_forward.2} parent=11 // pred_region
        _
      $region32: #{net_forward.2} parent=11 // pred_fallthru
        _
      // Predicated region
      $region33: #{net_forward.2} parent=11 // pred_check
        %p221 = pneg %p165
      $region34: #{net_forward.2} parent=11 // pred_check_branch
        %223 = sbr.rel (%p221) target = $region36
      $region35: #{net_forward.2} parent=11 // pred_region
        _
      $region36: #{net_forward.2} parent=11 // pred_fallthru
        _
    $region12: #{net_forward.2} parent=5 // pred_fallthru
      _
    %p224 = scmp.lt.s32.totalorder %s13, 2
    // Predicated region
    $region37: #{net_forward.2} parent=5 // pred_check
      %p225 = pneg %p224
    $region38: #{net_forward.2} parent=5 // pred_check_branch
      %227 = sbr.rel (%p225) target = $region40
    $region39: #{net_forward.2} parent=5 // pred_region
      // Predicated region
      $region41: #{net_forward.2} parent=39 // pred_check
        %p228 = pneg %p33
      $region42: #{net_forward.2} parent=39 // pred_check_branch
        %230 = sbr.rel (%p228) target = $region44
      $region43: #{net_forward.2} parent=39 // pred_region
        %p231 = scmp.lt.s32.totalorder %s13, 1
        %s232 = scalar_select %p231, %s13, 1
        %s233 = smul.addr %s232, 20
        %s234 = smul.addr %s233, 2
        %s235 = scalar_lea.vmem %s0, %s234
      $region44: #{net_forward.2} parent=39 // pred_fallthru
        _
    $region40: #{net_forward.2} parent=5 // pred_fallthru
      _
    %p236 = scmp.le.s32.totalorder 1, %s13
    %p237 = scmp.lt.s32.totalorder %s13, 3
    %p238 = pnand %p236, %p237
    %p239 = pneg %p238
    // Predicated region
    $region45: #{net_forward.2} parent=5 // pred_check
      _
    $region46: #{net_forward.2} parent=5 // pred_check_branch
      %241 = sbr.rel (%p238) target = $region48
    $region47: #{net_forward.2} parent=5 // pred_region
      %s242 = ssub.s32 %s13, 1
      %p243 = scmp.lt.s32.totalorder %s18, 1
      %s244 = scalar_select %p243, %s18, 1
      %s245 = smul.addr %s244, 20
      %s246 = smul.addr %s245, 2
      %s247 = scalar_lea.vmem %s0, %s246
      %p248 = pneg %p39
      %p249 = pneg %p36
      %p250 = pneg %p60
      %p251 = pneg %p57
      %p252 = pneg %p81
      %p253 = pneg %p78
      %p254 = pneg %p102
      %p255 = pneg %p99
      %p256 = pneg %p123
      %p257 = pneg %p120
      %p258 = pneg %p144
      %p259 = pneg %p141
      %p260 = pneg %p165
      %p261 = pneg %p162
      %p262 = pneg %p191
      %p263 = pneg %p188
      %p264 = scmp.lt.s32.totalorder %s18, 1
      %s265 = scalar_select %p264, %s18, 1
      %s266 = smul.addr %s265, 2
      %s267 = smul.addr %s266, 4
      %s268 = scalar_lea.vmem %s7, %s267
      %p269 = scmp.lt.s32.totalorder %s18, 1
      %s270 = scalar_select %p269, %s18, 1
      %s271 = smul.addr %s270, 20
      %s272 = smul.addr %s271, 2
      %s273 = scalar_lea.vmem %s0, %s272
      %p274 = scmp.lt.s32.totalorder %s18, 1
      %s275 = scalar_select %p274, %s18, 1
      %s276 = smul.addr %s275, 2
      %s277 = smul.addr %s276, 4
      %s278 = scalar_lea.vmem %s7, %s277
      %v280 = vld [vmem:[%s273] sm:$0xff]
      %v281 = vld [vmem:[%s273 + $0x8] sm:$0xff]
      %v282 = vld [vmem:[%s273 + $0x10] sm:$0xff]
      %v283 = vld [vmem:[%s273 + $0x18] sm:$0xff]
      %v284 = vld [vmem:[%s273 + $0x20] sm:$0xf]
      %v290 = vcombine.high %v280, %v280
      %v292 = vunpack.c.l.s4 1983009808
      %v293 = vunpack.c.0.s8 %v292
      %v294 = vlaneseq
      %v295 = vshrl.u32 %v294, 7
      %v296 = vsub.s32 %v293, %v295
      %v297 = vrot.slane %v280, %v296
      %v299 = vunpack.c.l.s4 1983009808
      %v300 = vunpack.c.0.s8 %v299
      %v301 = vlaneseq
      %v302 = vshrl.u32 %v301, 7
      %v303 = vsub.s32 %v300, %v302
      %v304 = vrot.slane %v290, %v303
      %v305 = vcombine.high %v281, %v281
      %v307 = vunpack.c.l.s4 1983009808
      %v308 = vunpack.c.0.s8 %v307
      %v309 = vlaneseq
      %v310 = vshrl.u32 %v309, 7
      %v311 = vsub.s32 %v308, %v310
      %v312 = vrot.slane %v281, %v311
      %v314 = vunpack.c.l.s4 1983009808
      %v315 = vunpack.c.0.s8 %v314
      %v316 = vlaneseq
      %v317 = vshrl.u32 %v316, 7
      %v318 = vsub.s32 %v315, %v317
      %v319 = vrot.slane %v305, %v318
      %v320 = vcombine.high %v282, %v282
      %v322 = vunpack.c.l.s4 1983009808
      %v323 = vunpack.c.0.s8 %v322
      %v324 = vlaneseq
      %v325 = vshrl.u32 %v324, 7
      %v326 = vsub.s32 %v323, %v325
      %v327 = vrot.slane %v282, %v326
      %v329 = vunpack.c.l.s4 1983009808
      %v330 = vunpack.c.0.s8 %v329
      %v331 = vlaneseq
      %v332 = vshrl.u32 %v331, 7
      %v333 = vsub.s32 %v330, %v332
      %v334 = vrot.slane %v320, %v333
      %v335 = vcombine.high %v283, %v283
      %v337 = vunpack.c.l.s4 1983009808
      %v338 = vunpack.c.0.s8 %v337
      %v339 = vlaneseq
      %v340 = vshrl.u32 %v339, 7
      %v341 = vsub.s32 %v338, %v340
      %v342 = vrot.slane %v283, %v341
      %v344 = vunpack.c.l.s4 1983009808
      %v345 = vunpack.c.0.s8 %v344
      %v346 = vlaneseq
      %v347 = vshrl.u32 %v346, 7
      %v348 = vsub.s32 %v345, %v347
      %v349 = vrot.slane %v335, %v348
      %v351 = vunpack.c.l.s4 1983009808
      %v352 = vunpack.c.0.s8 %v351
      %v353 = vlaneseq
      %v354 = vshrl.u32 %v353, 7
      %v355 = vsub.s32 %v352, %v354
      %v356 = vrot.slane %v284, %v355
      %366 = vst [vmem:[#allocation2] sm:$0x33] %v297
      %367 = vst [vmem:[#allocation2 + $0x8] sm:$0x33] %v304
      %368 = vst [vmem:[#allocation2 + $0x10] sm:$0x33] %v312
      %369 = vst [vmem:[#allocation2 + $0x18] sm:$0x33] %v319
      %370 = vst [vmem:[#allocation2 + $0x20] sm:$0x33] %v327
      %371 = vst [vmem:[#allocation2 + $0x28] sm:$0x33] %v334
      %372 = vst [vmem:[#allocation2 + $0x30] sm:$0x33] %v342
      %373 = vst [vmem:[#allocation2 + $0x38] sm:$0x33] %v349
      %vm374 = vcmask 1041408
      %vm375 = vcmask 979972
      %vm376 = vmor %vm375, %vm374
      %377 = vst.msk [vmem:[#allocation2 + $0x40] sm:$0x33] %vm376, %v356
      %v378 = vld [vmem:[%s273] sm:$0xff]
      %v379 = vld [vmem:[%s273 + $0x8] sm:$0xff]
      %v380 = vld [vmem:[%s273 + $0x10] sm:$0xff]
      %v381 = vld [vmem:[%s273 + $0x18] sm:$0xff]
      %v382 = vld [vmem:[%s273 + $0x20] sm:$0xf]
      %v388 = vcombine.low %v378, %v378
      %v390 = vunpack.c.l.s4 1983009808
      %v391 = vunpack.c.0.s8 %v390
      %v392 = vlaneseq
      %v393 = vshrl.u32 %v392, 7
      %v394 = vsub.s32 %v391, %v393
      %v395 = vrot.slane %v388, %v394
      %v397 = vunpack.c.l.s4 1983009808
      %v398 = vunpack.c.0.s8 %v397
      %v399 = vlaneseq
      %v400 = vshrl.u32 %v399, 7
      %v401 = vsub.s32 %v398, %v400
      %v402 = vrot.slane %v378, %v401
      %v403 = vcombine.low %v379, %v379
      %v405 = vunpack.c.l.s4 1983009808
      %v406 = vunpack.c.0.s8 %v405
      %v407 = vlaneseq
      %v408 = vshrl.u32 %v407, 7
      %v409 = vsub.s32 %v406, %v408
      %v410 = vrot.slane %v403, %v409
      %v412 = vunpack.c.l.s4 1983009808
      %v413 = vunpack.c.0.s8 %v412
      %v414 = vlaneseq
      %v415 = vshrl.u32 %v414, 7
      %v416 = vsub.s32 %v413, %v415
      %v417 = vrot.slane %v379, %v416
      %v418 = vcombine.low %v380, %v380
      %v420 = vunpack.c.l.s4 1983009808
      %v421 = vunpack.c.0.s8 %v420
      %v422 = vlaneseq
      %v423 = vshrl.u32 %v422, 7
      %v424 = vsub.s32 %v421, %v423
      %v425 = vrot.slane %v418, %v424
      %v427 = vunpack.c.l.s4 1983009808
      %v428 = vunpack.c.0.s8 %v427
      %v429 = vlaneseq
      %v430 = vshrl.u32 %v429, 7
      %v431 = vsub.s32 %v428, %v430
      %v432 = vrot.slane %v380, %v431
      %v433 = vcombine.low %v381, %v381
      %v435 = vunpack.c.l.s4 1983009808
      %v436 = vunpack.c.0.s8 %v435
      %v437 = vlaneseq
      %v438 = vshrl.u32 %v437, 7
      %v439 = vsub.s32 %v436, %v438
      %v440 = vrot.slane %v433, %v439
      %v442 = vunpack.c.l.s4 1983009808
      %v443 = vunpack.c.0.s8 %v442
      %v444 = vlaneseq
      %v445 = vshrl.u32 %v444, 7
      %v446 = vsub.s32 %v443, %v445
      %v447 = vrot.slane %v381, %v446
      %v448 = vcombine.low %v382, %v382
      %v450 = vunpack.c.l.s4 1983009808
      %v451 = vunpack.c.0.s8 %v450
      %v452 = vlaneseq
      %v453 = vshrl.u32 %v452, 7
      %v454 = vsub.s32 %v451, %v453
      %v455 = vrot.slane %v448, %v454
      %456 = vrot.lane.b32.xlu0 %v395, 127
      %v457 = vpop.permute.xlu0 %456
      %458 = vrot.lane.b32.xlu0 %v402, 127
      %v459 = vpop.permute.xlu0 %458
      %460 = vrot.lane.b32.xlu0 %v410, 127
      %v461 = vpop.permute.xlu0 %460
      %462 = vrot.lane.b32.xlu0 %v417, 127
      %v463 = vpop.permute.xlu0 %462
      %464 = vrot.lane.b32.xlu0 %v425, 127
      %v465 = vpop.permute.xlu0 %464
      %466 = vrot.lane.b32.xlu0 %v432, 127
      %v467 = vpop.permute.xlu0 %466
      %468 = vrot.lane.b32.xlu0 %v440, 127
      %v469 = vpop.permute.xlu0 %468
      %470 = vrot.lane.b32.xlu0 %v447, 127
      %v471 = vpop.permute.xlu0 %470
      %472 = vrot.lane.b32.xlu0 %v455, 127
      %v473 = vpop.permute.xlu0 %472
      %v474 = vrot.slane %v457, 4
      %v475 = vrot.slane %v459, 4
      %v476 = vrot.slane %v461, 4
      %v477 = vrot.slane %v463, 4
      %v478 = vrot.slane %v465, 4
      %v479 = vrot.slane %v467, 4
      %v480 = vrot.slane %v469, 4
      %v481 = vrot.slane %v471, 4
      %v482 = vrot.slane %v473, 4
      %vm483 = vcmask 1043456
      %v484 = vsel %vm483, %v474, %v475
      %vm485 = vcmask 1039360
      %v486 = vsel %vm485, %v457, %v484
      %v487 = vsel %vm483, %v475, %v476
      %v488 = vsel %vm485, %v459, %v487
      %v489 = vsel %vm483, %v476, %v477
      %v490 = vsel %vm485, %v461, %v489
      %v491 = vsel %vm483, %v477, %v478
      %v492 = vsel %vm485, %v463, %v491
      %v493 = vsel %vm483, %v478, %v479
      %v494 = vsel %vm485, %v465, %v493
      %v495 = vsel %vm483, %v479, %v480
      %v496 = vsel %vm485, %v467, %v495
      %v497 = vsel %vm483, %v480, %v481
      %v498 = vsel %vm485, %v469, %v497
      %v499 = vsel %vm483, %v481, %v482
      %v500 = vsel %vm485, %v471, %v499
      %v501 = vsel %vm485, %v473, %v482
      %511 = vst [vmem:[#allocation2] sm:$0xcc] %v486
      %512 = vst [vmem:[#allocation2 + $0x8] sm:$0xcc] %v488
      %513 = vst [vmem:[#allocation2 + $0x10] sm:$0xcc] %v490
      %514 = vst [vmem:[#allocation2 + $0x18] sm:$0xcc] %v492
      %515 = vst [vmem:[#allocation2 + $0x20] sm:$0xcc] %v494
      %516 = vst [vmem:[#allocation2 + $0x28] sm:$0xcc] %v496
      %517 = vst [vmem:[#allocation2 + $0x30] sm:$0xcc] %v498
      %518 = vst [vmem:[#allocation2 + $0x38] sm:$0xcc] %v500
      %vm519 = vcmask 1043458
      %vm520 = vcmask 982022
      %vm521 = vmor %vm520, %vm519
      %522 = vst.msk [vmem:[#allocation2 + $0x40] sm:$0xcc] %vm521, %v501
      %v523 = vld [vmem:[%s273] sm:$0xff]
      %v524 = vld [vmem:[%s273 + $0x8] sm:$0xff]
      %v525 = vld [vmem:[%s273 + $0x10] sm:$0xff]
      %v526 = vld [vmem:[%s273 + $0x18] sm:$0xff]
      %v527 = vld [vmem:[%s273 + $0x20] sm:$0xf]
      %v533 = vcombine.high %v523, %v523
      %v535 = vunpack.c.l.s4 1983009808
      %v536 = vunpack.c.0.s8 %v535
      %v537 = vlaneseq
      %v538 = vshrl.u32 %v537, 7
      %v539 = vsub.s32 %v536, %v538
      %v540 = vrot.slane %v523, %v539
      %v542 = vunpack.c.l.s4 1983009808
      %v543 = vunpack.c.0.s8 %v542
      %v544 = vlaneseq
      %v545 = vshrl.u32 %v544, 7
      %v546 = vsub.s32 %v543, %v545
      %v547 = vrot.slane %v533, %v546
      %v548 = vcombine.high %v524, %v524
      %v550 = vunpack.c.l.s4 1983009808
      %v551 = vunpack.c.0.s8 %v550
      %v552 = vlaneseq
      %v553 = vshrl.u32 %v552, 7
      %v554 = vsub.s32 %v551, %v553
      %v555 = vrot.slane %v524, %v554
      %v557 = vunpack.c.l.s4 1983009808
      %v558 = vunpack.c.0.s8 %v557
      %v559 = vlaneseq
      %v560 = vshrl.u32 %v559, 7
      %v561 = vsub.s32 %v558, %v560
      %v562 = vrot.slane %v548, %v561
      %v563 = vcombine.high %v525, %v525
      %v565 = vunpack.c.l.s4 1983009808
      %v566 = vunpack.c.0.s8 %v565
      %v567 = vlaneseq
      %v568 = vshrl.u32 %v567, 7
      %v569 = vsub.s32 %v566, %v568
      %v570 = vrot.slane %v525, %v569
      %v572 = vunpack.c.l.s4 1983009808
      %v573 = vunpack.c.0.s8 %v572
      %v574 = vlaneseq
      %v575 = vshrl.u32 %v574, 7
      %v576 = vsub.s32 %v573, %v575
      %v577 = vrot.slane %v563, %v576
      %v578 = vcombine.high %v526, %v526
      %v580 = vunpack.c.l.s4 1983009808
      %v581 = vunpack.c.0.s8 %v580
      %v582 = vlaneseq
      %v583 = vshrl.u32 %v582, 7
      %v584 = vsub.s32 %v581, %v583
      %v585 = vrot.slane %v526, %v584
      %v587 = vunpack.c.l.s4 1983009808
      %v588 = vunpack.c.0.s8 %v587
      %v589 = vlaneseq
      %v590 = vshrl.u32 %v589, 7
      %v591 = vsub.s32 %v588, %v590
      %v592 = vrot.slane %v578, %v591
      %v594 = vunpack.c.l.s4 1983009808
      %v595 = vunpack.c.0.s8 %v594
      %v596 = vlaneseq
      %v597 = vshrl.u32 %v596, 7
      %v598 = vsub.s32 %v595, %v597
      %v599 = vrot.slane %v527, %v598
      %600 = vrot.lane.b32.xlu0 %v540, 126
      %v601 = vpop.permute.xlu0 %600
      %602 = vrot.lane.b32.xlu0 %v547, 126
      %v603 = vpop.permute.xlu0 %602
      %604 = vrot.lane.b32.xlu0 %v555, 126
      %v605 = vpop.permute.xlu0 %604
      %606 = vrot.lane.b32.xlu0 %v562, 126
      %v607 = vpop.permute.xlu0 %606
      %608 = vrot.lane.b32.xlu0 %v570, 126
      %v609 = vpop.permute.xlu0 %608
      %610 = vrot.lane.b32.xlu0 %v577, 126
      %v611 = vpop.permute.xlu0 %610
      %612 = vrot.lane.b32.xlu0 %v585, 126
      %v613 = vpop.permute.xlu0 %612
      %614 = vrot.lane.b32.xlu0 %v592, 126
      %v615 = vpop.permute.xlu0 %614
      %616 = vrot.lane.b32.xlu0 %v599, 126
      %v617 = vpop.permute.xlu0 %616
      %v618 = vrot.slane %v601, 4
      %v619 = vrot.slane %v603, 4
      %v620 = vrot.slane %v605, 4
      %v621 = vrot.slane %v607, 4
      %v622 = vrot.slane %v609, 4
      %v623 = vrot.slane %v611, 4
      %v624 = vrot.slane %v613, 4
      %v625 = vrot.slane %v615, 4
      %v626 = vrot.slane %v617, 4
      %v627 = vsel %vm483, %v618, %v619
      %vm628 = vcmask 1031168
      %v629 = vsel %vm628, %v601, %v627
      %v630 = vsel %vm483, %v619, %v620
      %v631 = vsel %vm628, %v603, %v630
      %v632 = vsel %vm483, %v620, %v621
      %v633 = vsel %vm628, %v605, %v632
      %v634 = vsel %vm483, %v621, %v622
      %v635 = vsel %vm628, %v607, %v634
      %v636 = vsel %vm483, %v622, %v623
      %v637 = vsel %vm628, %v609, %v636
      %v638 = vsel %vm483, %v623, %v624
      %v639 = vsel %vm628, %v611, %v638
      %v640 = vsel %vm483, %v624, %v625
      %v641 = vsel %vm628, %v613, %v640
      %v642 = vsel %vm483, %v625, %v626
      %v643 = vsel %vm628, %v615, %v642
      %v644 = vsel %vm628, %v617, %v626
      %654 = vst [vmem:[#allocation2 + $0x48] sm:$0x33] %v629
      %655 = vst [vmem:[#allocation2 + $0x50] sm:$0x33] %v631
      %656 = vst [vmem:[#allocation2 + $0x58] sm:$0x33] %v633
      %657 = vst [vmem:[#allocation2 + $0x60] sm:$0x33] %v635
      %658 = vst [vmem:[#allocation2 + $0x68] sm:$0x33] %v637
      %659 = vst [vmem:[#allocation2 + $0x70] sm:$0x33] %v639
      %660 = vst [vmem:[#allocation2 + $0x78] sm:$0x33] %v641
      %661 = vst [vmem:[#allocation2 + $0x80] sm:$0x33] %v643
      %662 = vst.msk [vmem:[#allocation2 + $0x88] sm:$0x33] %vm376, %v644
      %v663 = vld [vmem:[%s273] sm:$0xff]
      %v664 = vld [vmem:[%s273 + $0x8] sm:$0xff]
      %v665 = vld [vmem:[%s273 + $0x10] sm:$0xff]
      %v666 = vld [vmem:[%s273 + $0x18] sm:$0xff]
      %v667 = vld [vmem:[%s273 + $0x20] sm:$0xf]
      %v673 = vcombine.low %v663, %v663
      %v675 = vunpack.c.l.s4 1983009808
      %v676 = vunpack.c.0.s8 %v675
      %v677 = vlaneseq
      %v678 = vshrl.u32 %v677, 7
      %v679 = vsub.s32 %v676, %v678
      %v680 = vrot.slane %v673, %v679
      %v682 = vunpack.c.l.s4 1983009808
      %v683 = vunpack.c.0.s8 %v682
      %v684 = vlaneseq
      %v685 = vshrl.u32 %v684, 7
      %v686 = vsub.s32 %v683, %v685
      %v687 = vrot.slane %v663, %v686
      %v688 = vcombine.low %v664, %v664
      %v690 = vunpack.c.l.s4 1983009808
      %v691 = vunpack.c.0.s8 %v690
      %v692 = vlaneseq
      %v693 = vshrl.u32 %v692, 7
      %v694 = vsub.s32 %v691, %v693
      %v695 = vrot.slane %v688, %v694
      %v697 = vunpack.c.l.s4 1983009808
      %v698 = vunpack.c.0.s8 %v697
      %v699 = vlaneseq
      %v700 = vshrl.u32 %v699, 7
      %v701 = vsub.s32 %v698, %v700
      %v702 = vrot.slane %v664, %v701
      %v703 = vcombine.low %v665, %v665
      %v705 = vunpack.c.l.s4 1983009808
      %v706 = vunpack.c.0.s8 %v705
      %v707 = vlaneseq
      %v708 = vshrl.u32 %v707, 7
      %v709 = vsub.s32 %v706, %v708
      %v710 = vrot.slane %v703, %v709
      %v712 = vunpack.c.l.s4 1983009808
      %v713 = vunpack.c.0.s8 %v712
      %v714 = vlaneseq
      %v715 = vshrl.u32 %v714, 7
      %v716 = vsub.s32 %v713, %v715
      %v717 = vrot.slane %v665, %v716
      %v718 = vcombine.low %v666, %v666
      %v720 = vunpack.c.l.s4 1983009808
      %v721 = vunpack.c.0.s8 %v720
      %v722 = vlaneseq
      %v723 = vshrl.u32 %v722, 7
      %v724 = vsub.s32 %v721, %v723
      %v725 = vrot.slane %v718, %v724
      %v727 = vunpack.c.l.s4 1983009808
      %v728 = vunpack.c.0.s8 %v727
      %v729 = vlaneseq
      %v730 = vshrl.u32 %v729, 7
      %v731 = vsub.s32 %v728, %v730
      %v732 = vrot.slane %v666, %v731
      %v733 = vcombine.low %v667, %v667
      %v735 = vunpack.c.l.s4 1983009808
      %v736 = vunpack.c.0.s8 %v735
      %v737 = vlaneseq
      %v738 = vshrl.u32 %v737, 7
      %v739 = vsub.s32 %v736, %v738
      %v740 = vrot.slane %v733, %v739
      %741 = vrot.lane.b32.xlu0 %v680, 125
      %v742 = vpop.permute.xlu0 %741
      %743 = vrot.lane.b32.xlu0 %v687, 125
      %v744 = vpop.permute.xlu0 %743
      %745 = vrot.lane.b32.xlu0 %v695, 125
      %v746 = vpop.permute.xlu0 %745
      %747 = vrot.lane.b32.xlu0 %v702, 125
      %v748 = vpop.permute.xlu0 %747
      %749 = vrot.lane.b32.xlu0 %v710, 125
      %v750 = vpop.permute.xlu0 %749
      %751 = vrot.lane.b32.xlu0 %v717, 125
      %v752 = vpop.permute.xlu0 %751
      %753 = vrot.lane.b32.xlu0 %v725, 125
      %v754 = vpop.permute.xlu0 %753
      %755 = vrot.lane.b32.xlu0 %v732, 125
      %v756 = vpop.permute.xlu0 %755
      %757 = vrot.lane.b32.xlu0 %v740, 125
      %v758 = vpop.permute.xlu0 %757
      %v759 = vrot.slane %v742, 4
      %v760 = vrot.slane %v744, 4
      %v761 = vrot.slane %v746, 4
      %v762 = vrot.slane %v748, 4
      %v763 = vrot.slane %v750, 4
      %v764 = vrot.slane %v752, 4
      %v765 = vrot.slane %v754, 4
      %v766 = vrot.slane %v756, 4
      %v767 = vrot.slane %v758, 4
      %v768 = vsel %vm483, %v759, %v760
      %vm769 = vcmask 1022976
      %v770 = vsel %vm769, %v742, %v768
      %v771 = vsel %vm483, %v760, %v761
      %v772 = vsel %vm769, %v744, %v771
      %v773 = vsel %vm483, %v761, %v762
      %v774 = vsel %vm769, %v746, %v773
      %v775 = vsel %vm483, %v762, %v763
      %v776 = vsel %vm769, %v748, %v775
      %v777 = vsel %vm483, %v763, %v764
      %v778 = vsel %vm769, %v750, %v777
      %v779 = vsel %vm483, %v764, %v765
      %v780 = vsel %vm769, %v752, %v779
      %v781 = vsel %vm483, %v765, %v766
      %v782 = vsel %vm769, %v754, %v781
      %v783 = vsel %vm483, %v766, %v767
      %v784 = vsel %vm769, %v756, %v783
      %v785 = vsel %vm769, %v758, %v767
      %795 = vst [vmem:[#allocation2 + $0x48] sm:$0xcc] %v770
      %796 = vst [vmem:[#allocation2 + $0x50] sm:$0xcc] %v772
      %797 = vst [vmem:[#allocation2 + $0x58] sm:$0xcc] %v774
      %798 = vst [vmem:[#allocation2 + $0x60] sm:$0xcc] %v776
      %799 = vst [vmem:[#allocation2 + $0x68] sm:$0xcc] %v778
      %800 = vst [vmem:[#allocation2 + $0x70] sm:$0xcc] %v780
      %801 = vst [vmem:[#allocation2 + $0x78] sm:$0xcc] %v782
      %802 = vst [vmem:[#allocation2 + $0x80] sm:$0xcc] %v784
      %803 = vst.msk [vmem:[#allocation2 + $0x88] sm:$0xcc] %vm521, %v785
      %v804 = vld [vmem:[%s273] sm:$0xff]
      %v805 = vld [vmem:[%s273 + $0x8] sm:$0xff]
      %v806 = vld [vmem:[%s273 + $0x10] sm:$0xff]
      %v807 = vld [vmem:[%s273 + $0x18] sm:$0xff]
      %v808 = vld [vmem:[%s273 + $0x20] sm:$0xf]
      %v814 = vcombine.high %v804, %v804
      %v816 = vunpack.c.l.s4 1983009808
      %v817 = vunpack.c.0.s8 %v816
      %v818 = vlaneseq
      %v819 = vshrl.u32 %v818, 7
      %v820 = vsub.s32 %v817, %v819
      %v821 = vrot.slane %v804, %v820
      %v823 = vunpack.c.l.s4 1983009808
      %v824 = vunpack.c.0.s8 %v823
      %v825 = vlaneseq
      %v826 = vshrl.u32 %v825, 7
      %v827 = vsub.s32 %v824, %v826
      %v828 = vrot.slane %v814, %v827
      %v829 = vcombine.high %v805, %v805
      %v831 = vunpack.c.l.s4 1983009808
      %v832 = vunpack.c.0.s8 %v831
      %v833 = vlaneseq
      %v834 = vshrl.u32 %v833, 7
      %v835 = vsub.s32 %v832, %v834
      %v836 = vrot.slane %v805, %v835
      %v838 = vunpack.c.l.s4 1983009808
      %v839 = vunpack.c.0.s8 %v838
      %v840 = vlaneseq
      %v841 = vshrl.u32 %v840, 7
      %v842 = vsub.s32 %v839, %v841
      %v843 = vrot.slane %v829, %v842
      %v844 = vcombine.high %v806, %v806
      %v846 = vunpack.c.l.s4 1983009808
      %v847 = vunpack.c.0.s8 %v846
      %v848 = vlaneseq
      %v849 = vshrl.u32 %v848, 7
      %v850 = vsub.s32 %v847, %v849
      %v851 = vrot.slane %v806, %v850
      %v853 = vunpack.c.l.s4 1983009808
      %v854 = vunpack.c.0.s8 %v853
      %v855 = vlaneseq
      %v856 = vshrl.u32 %v855, 7
      %v857 = vsub.s32 %v854, %v856
      %v858 = vrot.slane %v844, %v857
      %v859 = vcombine.high %v807, %v807
      %v861 = vunpack.c.l.s4 1983009808
      %v862 = vunpack.c.0.s8 %v861
      %v863 = vlaneseq
      %v864 = vshrl.u32 %v863, 7
      %v865 = vsub.s32 %v862, %v864
      %v866 = vrot.slane %v807, %v865
      %v868 = vunpack.c.l.s4 1983009808
      %v869 = vunpack.c.0.s8 %v868
      %v870 = vlaneseq
      %v871 = vshrl.u32 %v870, 7
      %v872 = vsub.s32 %v869, %v871
      %v873 = vrot.slane %v859, %v872
      %v875 = vunpack.c.l.s4 1983009808
      %v876 = vunpack.c.0.s8 %v875
      %v877 = vlaneseq
      %v878 = vshrl.u32 %v877, 7
      %v879 = vsub.s32 %v876, %v878
      %v880 = vrot.slane %v808, %v879
      %881 = vrot.lane.b32.xlu0 %v821, 124
      %v882 = vpop.permute.xlu0 %881
      %883 = vrot.lane.b32.xlu0 %v828, 124
      %v884 = vpop.permute.xlu0 %883
      %885 = vrot.lane.b32.xlu0 %v836, 124
      %v886 = vpop.permute.xlu0 %885
      %887 = vrot.lane.b32.xlu0 %v843, 124
      %v888 = vpop.permute.xlu0 %887
      %889 = vrot.lane.b32.xlu0 %v851, 124
      %v890 = vpop.permute.xlu0 %889
      %891 = vrot.lane.b32.xlu0 %v858, 124
      %v892 = vpop.permute.xlu0 %891
      %893 = vrot.lane.b32.xlu0 %v866, 124
      %v894 = vpop.permute.xlu0 %893
      %895 = vrot.lane.b32.xlu0 %v873, 124
      %v896 = vpop.permute.xlu0 %895
      %897 = vrot.lane.b32.xlu0 %v880, 124
      %v898 = vpop.permute.xlu0 %897
      %v899 = vrot.slane %v882, 4
      %v900 = vrot.slane %v884, 4
      %v901 = vrot.slane %v886, 4
      %v902 = vrot.slane %v888, 4
      %v903 = vrot.slane %v890, 4
      %v904 = vrot.slane %v892, 4
      %v905 = vrot.slane %v894, 4
      %v906 = vrot.slane %v896, 4
      %v907 = vrot.slane %v898, 4
      %v908 = vsel %vm483, %v899, %v900
      %vm909 = vcmask 1014784
      %v910 = vsel %vm909, %v882, %v908
      %v911 = vsel %vm483, %v900, %v901
      %v912 = vsel %vm909, %v884, %v911
      %v913 = vsel %vm483, %v901, %v902
      %v914 = vsel %vm909, %v886, %v913
      %v915 = vsel %vm483, %v902, %v903
      %v916 = vsel %vm909, %v888, %v915
      %v917 = vsel %vm483, %v903, %v904
      %v918 = vsel %vm909, %v890, %v917
      %v919 = vsel %vm483, %v904, %v905
      %v920 = vsel %vm909, %v892, %v919
      %v921 = vsel %vm483, %v905, %v906
      %v922 = vsel %vm909, %v894, %v921
      %v923 = vsel %vm483, %v906, %v907
      %v924 = vsel %vm909, %v896, %v923
      %v925 = vsel %vm909, %v898, %v907
      %935 = vst [vmem:[#allocation2 + $0x90] sm:$0x33] %v910
      %936 = vst [vmem:[#allocation2 + $0x98] sm:$0x33] %v912
      %937 = vst [vmem:[#allocation2 + $0xa0] sm:$0x33] %v914
      %938 = vst [vmem:[#allocation2 + $0xa8] sm:$0x33] %v916
      %939 = vst [vmem:[#allocation2 + $0xb0] sm:$0x33] %v918
      %940 = vst [vmem:[#allocation2 + $0xb8] sm:$0x33] %v920
      %941 = vst [vmem:[#allocation2 + $0xc0] sm:$0x33] %v922
      %942 = vst [vmem:[#allocation2 + $0xc8] sm:$0x33] %v924
      %943 = vst.msk [vmem:[#allocation2 + $0xd0] sm:$0x33] %vm376, %v925
      %v944 = vld [vmem:[%s273] sm:$0xff]
      %v945 = vld [vmem:[%s273 + $0x8] sm:$0xff]
      %v946 = vld [vmem:[%s273 + $0x10] sm:$0xff]
      %v947 = vld [vmem:[%s273 + $0x18] sm:$0xff]
      %v948 = vld [vmem:[%s273 + $0x20] sm:$0x3f]
      %v954 = vcombine.low %v944, %v944
      %v956 = vunpack.c.l.s4 1983009808
      %v957 = vunpack.c.0.s8 %v956
      %v958 = vlaneseq
      %v959 = vshrl.u32 %v958, 7
      %v960 = vsub.s32 %v957, %v959
      %v961 = vrot.slane %v954, %v960
      %v963 = vunpack.c.l.s4 1983009808
      %v964 = vunpack.c.0.s8 %v963
      %v965 = vlaneseq
      %v966 = vshrl.u32 %v965, 7
      %v967 = vsub.s32 %v964, %v966
      %v968 = vrot.slane %v944, %v967
      %v969 = vcombine.low %v945, %v945
      %v971 = vunpack.c.l.s4 1983009808
      %v972 = vunpack.c.0.s8 %v971
      %v973 = vlaneseq
      %v974 = vshrl.u32 %v973, 7
      %v975 = vsub.s32 %v972, %v974
      %v976 = vrot.slane %v969, %v975
      %v978 = vunpack.c.l.s4 1983009808
      %v979 = vunpack.c.0.s8 %v978
      %v980 = vlaneseq
      %v981 = vshrl.u32 %v980, 7
      %v982 = vsub.s32 %v979, %v981
      %v983 = vrot.slane %v945, %v982
      %v984 = vcombine.low %v946, %v946
      %v986 = vunpack.c.l.s4 1983009808
      %v987 = vunpack.c.0.s8 %v986
      %v988 = vlaneseq
      %v989 = vshrl.u32 %v988, 7
      %v990 = vsub.s32 %v987, %v989
      %v991 = vrot.slane %v984, %v990
      %v993 = vunpack.c.l.s4 1983009808
      %v994 = vunpack.c.0.s8 %v993
      %v995 = vlaneseq
      %v996 = vshrl.u32 %v995, 7
      %v997 = vsub.s32 %v994, %v996
      %v998 = vrot.slane %v946, %v997
      %v999 = vcombine.low %v947, %v947
      %v1001 = vunpack.c.l.s4 1983009808
      %v1002 = vunpack.c.0.s8 %v1001
      %v1003 = vlaneseq
      %v1004 = vshrl.u32 %v1003, 7
      %v1005 = vsub.s32 %v1002, %v1004
      %v1006 = vrot.slane %v999, %v1005
      %v1008 = vunpack.c.l.s4 1983009808
      %v1009 = vunpack.c.0.s8 %v1008
      %v1010 = vlaneseq
      %v1011 = vshrl.u32 %v1010, 7
      %v1012 = vsub.s32 %v1009, %v1011
      %v1013 = vrot.slane %v947, %v1012
      %v1014 = vcombine.low %v948, %v948
      %v1016 = vunpack.c.l.s4 1983009808
      %v1017 = vunpack.c.0.s8 %v1016
      %v1018 = vlaneseq
      %v1019 = vshrl.u32 %v1018, 7
      %v1020 = vsub.s32 %v1017, %v1019
      %v1021 = vrot.slane %v1014, %v1020
      %v1023 = vunpack.c.l.s4 1983009808
      %v1024 = vunpack.c.0.s8 %v1023
      %v1025 = vlaneseq
      %v1026 = vshrl.u32 %v1025, 7
      %v1027 = vsub.s32 %v1024, %v1026
      %v1028 = vrot.slane %v948, %v1027
      %1029 = vrot.lane.b32.xlu0 %v961, 78
      %v1030 = vpop.permute.xlu0 %1029
      %1031 = vrot.lane.b32.xlu0 %v968, 78
      %v1032 = vpop.permute.xlu0 %1031
      %1033 = vrot.lane.b32.xlu0 %v976, 78
      %v1034 = vpop.permute.xlu0 %1033
      %1035 = vrot.lane.b32.xlu0 %v983, 78
      %v1036 = vpop.permute.xlu0 %1035
      %1037 = vrot.lane.b32.xlu0 %v991, 78
      %v1038 = vpop.permute.xlu0 %1037
      %1039 = vrot.lane.b32.xlu0 %v998, 78
      %v1040 = vpop.permute.xlu0 %1039
      %1041 = vrot.lane.b32.xlu0 %v1006, 78
      %v1042 = vpop.permute.xlu0 %1041
      %1043 = vrot.lane.b32.xlu0 %v1013, 78
      %v1044 = vpop.permute.xlu0 %1043
      %1045 = vrot.lane.b32.xlu0 %v1021, 78
      %v1046 = vpop.permute.xlu0 %1045
      %1047 = vrot.lane.b32.xlu0 %v1028, 78
      %v1048 = vpop.permute.xlu0 %1047
      %v1049 = vrot.slane %v1030, 4
      %v1050 = vrot.slane %v1032, 4
      %v1051 = vrot.slane %v1034, 4
      %v1052 = vrot.slane %v1036, 4
      %v1053 = vrot.slane %v1038, 4
      %v1054 = vrot.slane %v1040, 4
      %v1055 = vrot.slane %v1042, 4
      %v1056 = vrot.slane %v1044, 4
      %v1057 = vrot.slane %v1046, 4
      %v1058 = vrot.slane %v1048, 4
      %v1059 = vsel %vm483, %v1049, %v1050
      %vm1060 = vcmask 637952
      %v1061 = vsel %vm1060, %v1030, %v1059
      %v1062 = vsel %vm483, %v1050, %v1051
      %v1063 = vsel %vm1060, %v1032, %v1062
      %v1064 = vsel %vm483, %v1051, %v1052
      %v1065 = vsel %vm1060, %v1034, %v1064
      %v1066 = vsel %vm483, %v1052, %v1053
      %v1067 = vsel %vm1060, %v1036, %v1066
      %v1068 = vsel %vm483, %v1053, %v1054
      %v1069 = vsel %vm1060, %v1038, %v1068
      %v1070 = vsel %vm483, %v1054, %v1055
      %v1071 = vsel %vm1060, %v1040, %v1070
      %v1072 = vsel %vm483, %v1055, %v1056
      %v1073 = vsel %vm1060, %v1042, %v1072
      %v1074 = vsel %vm483, %v1056, %v1057
      %v1075 = vsel %vm1060, %v1044, %v1074
      %v1076 = vsel %vm483, %v1057, %v1058
      %v1077 = vsel %vm1060, %v1046, %v1076
      %1087 = vst [vmem:[#allocation2 + $0x90] sm:$0xcc] %v1061
      %1088 = vst [vmem:[#allocation2 + $0x98] sm:$0xcc] %v1063
      %1089 = vst [vmem:[#allocation2 + $0xa0] sm:$0xcc] %v1065
      %1090 = vst [vmem:[#allocation2 + $0xa8] sm:$0xcc] %v1067
      %1091 = vst [vmem:[#allocation2 + $0xb0] sm:$0xcc] %v1069
      %1092 = vst [vmem:[#allocation2 + $0xb8] sm:$0xcc] %v1071
      %1093 = vst [vmem:[#allocation2 + $0xc0] sm:$0xcc] %v1073
      %1094 = vst [vmem:[#allocation2 + $0xc8] sm:$0xcc] %v1075
      %1095 = vst.msk [vmem:[#allocation2 + $0xd0] sm:$0xcc] %vm521, %v1077
      %v1096 = vld [vmem:[%s273] sm:$0xff]
      %v1097 = vld [vmem:[%s273 + $0x8] sm:$0xff]
      %v1098 = vld [vmem:[%s273 + $0x10] sm:$0xff]
      %v1099 = vld [vmem:[%s273 + $0x18] sm:$0xff]
      %v1100 = vld [vmem:[%s273 + $0x20] sm:$0x3f]
      %v1106 = vcombine.high %v1096, %v1096
      %v1108 = vunpack.c.l.s4 1983009808
      %v1109 = vunpack.c.0.s8 %v1108
      %v1110 = vlaneseq
      %v1111 = vshrl.u32 %v1110, 7
      %v1112 = vsub.s32 %v1109, %v1111
      %v1113 = vrot.slane %v1096, %v1112
      %v1115 = vunpack.c.l.s4 1983009808
      %v1116 = vunpack.c.0.s8 %v1115
      %v1117 = vlaneseq
      %v1118 = vshrl.u32 %v1117, 7
      %v1119 = vsub.s32 %v1116, %v1118
      %v1120 = vrot.slane %v1106, %v1119
      %v1121 = vcombine.high %v1097, %v1097
      %v1123 = vunpack.c.l.s4 1983009808
      %v1124 = vunpack.c.0.s8 %v1123
      %v1125 = vlaneseq
      %v1126 = vshrl.u32 %v1125, 7
      %v1127 = vsub.s32 %v1124, %v1126
      %v1128 = vrot.slane %v1097, %v1127
      %v1130 = vunpack.c.l.s4 1983009808
      %v1131 = vunpack.c.0.s8 %v1130
      %v1132 = vlaneseq
      %v1133 = vshrl.u32 %v1132, 7
      %v1134 = vsub.s32 %v1131, %v1133
      %v1135 = vrot.slane %v1121, %v1134
      %v1136 = vcombine.high %v1098, %v1098
      %v1138 = vunpack.c.l.s4 1983009808
      %v1139 = vunpack.c.0.s8 %v1138
      %v1140 = vlaneseq
      %v1141 = vshrl.u32 %v1140, 7
      %v1142 = vsub.s32 %v1139, %v1141
      %v1143 = vrot.slane %v1098, %v1142
      %v1145 = vunpack.c.l.s4 1983009808
      %v1146 = vunpack.c.0.s8 %v1145
      %v1147 = vlaneseq
      %v1148 = vshrl.u32 %v1147, 7
      %v1149 = vsub.s32 %v1146, %v1148
      %v1150 = vrot.slane %v1136, %v1149
      %v1151 = vcombine.high %v1099, %v1099
      %v1153 = vunpack.c.l.s4 1983009808
      %v1154 = vunpack.c.0.s8 %v1153
      %v1155 = vlaneseq
      %v1156 = vshrl.u32 %v1155, 7
      %v1157 = vsub.s32 %v1154, %v1156
      %v1158 = vrot.slane %v1099, %v1157
      %v1160 = vunpack.c.l.s4 1983009808
      %v1161 = vunpack.c.0.s8 %v1160
      %v1162 = vlaneseq
      %v1163 = vshrl.u32 %v1162, 7
      %v1164 = vsub.s32 %v1161, %v1163
      %v1165 = vrot.slane %v1151, %v1164
      %v1166 = vcombine.high %v1100, %v1100
      %v1168 = vunpack.c.l.s4 1983009808
      %v1169 = vunpack.c.0.s8 %v1168
      %v1170 = vlaneseq
      %v1171 = vshrl.u32 %v1170, 7
      %v1172 = vsub.s32 %v1169, %v1171
      %v1173 = vrot.slane %v1100, %v1172
      %v1175 = vunpack.c.l.s4 1983009808
      %v1176 = vunpack.c.0.s8 %v1175
      %v1177 = vlaneseq
      %v1178 = vshrl.u32 %v1177, 7
      %v1179 = vsub.s32 %v1176, %v1178
      %v1180 = vrot.slane %v1166, %v1179
      %1181 = vrot.lane.b32.xlu0 %v1113, 77
      %v1182 = vpop.permute.xlu0 %1181
      %1183 = vrot.lane.b32.xlu0 %v1120, 77
      %v1184 = vpop.permute.xlu0 %1183
      %1185 = vrot.lane.b32.xlu0 %v1128, 77
      %v1186 = vpop.permute.xlu0 %1185
      %1187 = vrot.lane.b32.xlu0 %v1135, 77
      %v1188 = vpop.permute.xlu0 %1187
      %1189 = vrot.lane.b32.xlu0 %v1143, 77
      %v1190 = vpop.permute.xlu0 %1189
      %1191 = vrot.lane.b32.xlu0 %v1150, 77
      %v1192 = vpop.permute.xlu0 %1191
      %1193 = vrot.lane.b32.xlu0 %v1158, 77
      %v1194 = vpop.permute.xlu0 %1193
      %1195 = vrot.lane.b32.xlu0 %v1165, 77
      %v1196 = vpop.permute.xlu0 %1195
      %1197 = vrot.lane.b32.xlu0 %v1173, 77
      %v1198 = vpop.permute.xlu0 %1197
      %1199 = vrot.lane.b32.xlu0 %v1180, 77
      %v1200 = vpop.permute.xlu0 %1199
      %v1201 = vrot.slane %v1182, 4
      %v1202 = vrot.slane %v1184, 4
      %v1203 = vrot.slane %v1186, 4
      %v1204 = vrot.slane %v1188, 4
      %v1205 = vrot.slane %v1190, 4
      %v1206 = vrot.slane %v1192, 4
      %v1207 = vrot.slane %v1194, 4
      %v1208 = vrot.slane %v1196, 4
      %v1209 = vrot.slane %v1198, 4
      %v1210 = vrot.slane %v1200, 4
      %v1211 = vsel %vm483, %v1201, %v1202
      %vm1212 = vcmask 629760
      %v1213 = vsel %vm1212, %v1182, %v1211
      %v1214 = vsel %vm483, %v1202, %v1203
      %v1215 = vsel %vm1212, %v1184, %v1214
      %v1216 = vsel %vm483, %v1203, %v1204
      %v1217 = vsel %vm1212, %v1186, %v1216
      %v1218 = vsel %vm483, %v1204, %v1205
      %v1219 = vsel %vm1212, %v1188, %v1218
      %v1220 = vsel %vm483, %v1205, %v1206
      %v1221 = vsel %vm1212, %v1190, %v1220
      %v1222 = vsel %vm483, %v1206, %v1207
      %v1223 = vsel %vm1212, %v1192, %v1222
      %v1224 = vsel %vm483, %v1207, %v1208
      %v1225 = vsel %vm1212, %v1194, %v1224
      %v1226 = vsel %vm483, %v1208, %v1209
      %v1227 = vsel %vm1212, %v1196, %v1226
      %v1228 = vsel %vm483, %v1209, %v1210
      %v1229 = vsel %vm1212, %v1198, %v1228
      %1239 = vst [vmem:[#allocation2 + $0xd8] sm:$0x33] %v1213
      %1240 = vst [vmem:[#allocation2 + $0xe0] sm:$0x33] %v1215
      %1241 = vst [vmem:[#allocation2 + $0xe8] sm:$0x33] %v1217
      %1242 = vst [vmem:[#allocation2 + $0xf0] sm:$0x33] %v1219
      %1243 = vst [vmem:[#allocation2 + $0xf8] sm:$0x33] %v1221
      %1244 = vst [vmem:[#allocation2 + $0x100] sm:$0x33] %v1223
      %1245 = vst [vmem:[#allocation2 + $0x108] sm:$0x33] %v1225
      %1246 = vst [vmem:[#allocation2 + $0x110] sm:$0x33] %v1227
      %1247 = vst.msk [vmem:[#allocation2 + $0x118] sm:$0x33] %vm376, %v1229
      %v1248 = vld [vmem:[%s273] sm:$0xff]
      %v1249 = vld [vmem:[%s273 + $0x8] sm:$0xff]
      %v1250 = vld [vmem:[%s273 + $0x10] sm:$0xff]
      %v1251 = vld [vmem:[%s273 + $0x18] sm:$0xff]
      %v1252 = vld [vmem:[%s273 + $0x20] sm:$0x3f]
      %v1258 = vcombine.low %v1248, %v1248
      %v1260 = vunpack.c.l.s4 1983009808
      %v1261 = vunpack.c.0.s8 %v1260
      %v1262 = vlaneseq
      %v1263 = vshrl.u32 %v1262, 7
      %v1264 = vsub.s32 %v1261, %v1263
      %v1265 = vrot.slane %v1258, %v1264
      %v1267 = vunpack.c.l.s4 1983009808
      %v1268 = vunpack.c.0.s8 %v1267
      %v1269 = vlaneseq
      %v1270 = vshrl.u32 %v1269, 7
      %v1271 = vsub.s32 %v1268, %v1270
      %v1272 = vrot.slane %v1248, %v1271
      %v1273 = vcombine.low %v1249, %v1249
      %v1275 = vunpack.c.l.s4 1983009808
      %v1276 = vunpack.c.0.s8 %v1275
      %v1277 = vlaneseq
      %v1278 = vshrl.u32 %v1277, 7
      %v1279 = vsub.s32 %v1276, %v1278
      %v1280 = vrot.slane %v1273, %v1279
      %v1282 = vunpack.c.l.s4 1983009808
      %v1283 = vunpack.c.0.s8 %v1282
      %v1284 = vlaneseq
      %v1285 = vshrl.u32 %v1284, 7
      %v1286 = vsub.s32 %v1283, %v1285
      %v1287 = vrot.slane %v1249, %v1286
      %v1288 = vcombine.low %v1250, %v1250
      %v1290 = vunpack.c.l.s4 1983009808
      %v1291 = vunpack.c.0.s8 %v1290
      %v1292 = vlaneseq
      %v1293 = vshrl.u32 %v1292, 7
      %v1294 = vsub.s32 %v1291, %v1293
      %v1295 = vrot.slane %v1288, %v1294
      %v1297 = vunpack.c.l.s4 1983009808
      %v1298 = vunpack.c.0.s8 %v1297
      %v1299 = vlaneseq
      %v1300 = vshrl.u32 %v1299, 7
      %v1301 = vsub.s32 %v1298, %v1300
      %v1302 = vrot.slane %v1250, %v1301
      %v1303 = vcombine.low %v1251, %v1251
      %v1305 = vunpack.c.l.s4 1983009808
      %v1306 = vunpack.c.0.s8 %v1305
      %v1307 = vlaneseq
      %v1308 = vshrl.u32 %v1307, 7
      %v1309 = vsub.s32 %v1306, %v1308
      %v1310 = vrot.slane %v1303, %v1309
      %v1312 = vunpack.c.l.s4 1983009808
      %v1313 = vunpack.c.0.s8 %v1312
      %v1314 = vlaneseq
      %v1315 = vshrl.u32 %v1314, 7
      %v1316 = vsub.s32 %v1313, %v1315
      %v1317 = vrot.slane %v1251, %v1316
      %v1318 = vcombine.low %v1252, %v1252
      %v1320 = vunpack.c.l.s4 1983009808
      %v1321 = vunpack.c.0.s8 %v1320
      %v1322 = vlaneseq
      %v1323 = vshrl.u32 %v1322, 7
      %v1324 = vsub.s32 %v1321, %v1323
      %v1325 = vrot.slane %v1318, %v1324
      %v1327 = vunpack.c.l.s4 1983009808
      %v1328 = vunpack.c.0.s8 %v1327
      %v1329 = vlaneseq
      %v1330 = vshrl.u32 %v1329, 7
      %v1331 = vsub.s32 %v1328, %v1330
      %v1332 = vrot.slane %v1252, %v1331
      %1333 = vrot.lane.b32.xlu0 %v1265, 76
      %v1334 = vpop.permute.xlu0 %1333
      %1335 = vrot.lane.b32.xlu0 %v1272, 76
      %v1336 = vpop.permute.xlu0 %1335
      %1337 = vrot.lane.b32.xlu0 %v1280, 76
      %v1338 = vpop.permute.xlu0 %1337
      %1339 = vrot.lane.b32.xlu0 %v1287, 76
      %v1340 = vpop.permute.xlu0 %1339
      %1341 = vrot.lane.b32.xlu0 %v1295, 76
      %v1342 = vpop.permute.xlu0 %1341
      %1343 = vrot.lane.b32.xlu0 %v1302, 76
      %v1344 = vpop.permute.xlu0 %1343
      %1345 = vrot.lane.b32.xlu0 %v1310, 76
      %v1346 = vpop.permute.xlu0 %1345
      %1347 = vrot.lane.b32.xlu0 %v1317, 76
      %v1348 = vpop.permute.xlu0 %1347
      %1349 = vrot.lane.b32.xlu0 %v1325, 76
      %v1350 = vpop.permute.xlu0 %1349
      %1351 = vrot.lane.b32.xlu0 %v1332, 76
      %v1352 = vpop.permute.xlu0 %1351
      %v1353 = vrot.slane %v1334, 4
      %v1354 = vrot.slane %v1336, 4
      %v1355 = vrot.slane %v1338, 4
      %v1356 = vrot.slane %v1340, 4
      %v1357 = vrot.slane %v1342, 4
      %v1358 = vrot.slane %v1344, 4
      %v1359 = vrot.slane %v1346, 4
      %v1360 = vrot.slane %v1348, 4
      %v1361 = vrot.slane %v1350, 4
      %v1362 = vrot.slane %v1352, 4
      %v1363 = vsel %vm483, %v1353, %v1354
      %vm1364 = vcmask 621568
      %v1365 = vsel %vm1364, %v1334, %v1363
      %v1366 = vsel %vm483, %v1354, %v1355
      %v1367 = vsel %vm1364, %v1336, %v1366
      %v1368 = vsel %vm483, %v1355, %v1356
      %v1369 = vsel %vm1364, %v1338, %v1368
      %v1370 = vsel %vm483, %v1356, %v1357
      %v1371 = vsel %vm1364, %v1340, %v1370
      %v1372 = vsel %vm483, %v1357, %v1358
      %v1373 = vsel %vm1364, %v1342, %v1372
      %v1374 = vsel %vm483, %v1358, %v1359
      %v1375 = vsel %vm1364, %v1344, %v1374
      %v1376 = vsel %vm483, %v1359, %v1360
      %v1377 = vsel %vm1364, %v1346, %v1376
      %v1378 = vsel %vm483, %v1360, %v1361
      %v1379 = vsel %vm1364, %v1348, %v1378
      %v1380 = vsel %vm483, %v1361, %v1362
      %v1381 = vsel %vm1364, %v1350, %v1380
      %1391 = vst [vmem:[#allocation2 + $0xd8] sm:$0xcc] %v1365
      %1392 = vst [vmem:[#allocation2 + $0xe0] sm:$0xcc] %v1367
      %1393 = vst [vmem:[#allocation2 + $0xe8] sm:$0xcc] %v1369
      %1394 = vst [vmem:[#allocation2 + $0xf0] sm:$0xcc] %v1371
      %1395 = vst [vmem:[#allocation2 + $0xf8] sm:$0xcc] %v1373
      %1396 = vst [vmem:[#allocation2 + $0x100] sm:$0xcc] %v1375
      %1397 = vst [vmem:[#allocation2 + $0x108] sm:$0xcc] %v1377
      %1398 = vst [vmem:[#allocation2 + $0x110] sm:$0xcc] %v1379
      %1399 = vst.msk [vmem:[#allocation2 + $0x118] sm:$0xcc] %vm521, %v1381
      %v1400 = vld [vmem:[%s273] sm:$0xff]
      %v1401 = vld [vmem:[%s273 + $0x8] sm:$0xff]
      %v1402 = vld [vmem:[%s273 + $0x10] sm:$0xff]
      %v1403 = vld [vmem:[%s273 + $0x18] sm:$0xff]
      %v1404 = vld [vmem:[%s273 + $0x20] sm:$0x3f]
      %v1410 = vcombine.high %v1400, %v1400
      %v1412 = vunpack.c.l.s4 1983009808
      %v1413 = vunpack.c.0.s8 %v1412
      %v1414 = vlaneseq
      %v1415 = vshrl.u32 %v1414, 7
      %v1416 = vsub.s32 %v1413, %v1415
      %v1417 = vrot.slane %v1400, %v1416
      %v1419 = vunpack.c.l.s4 1983009808
      %v1420 = vunpack.c.0.s8 %v1419
      %v1421 = vlaneseq
      %v1422 = vshrl.u32 %v1421, 7
      %v1423 = vsub.s32 %v1420, %v1422
      %v1424 = vrot.slane %v1410, %v1423
      %v1425 = vcombine.high %v1401, %v1401
      %v1427 = vunpack.c.l.s4 1983009808
      %v1428 = vunpack.c.0.s8 %v1427
      %v1429 = vlaneseq
      %v1430 = vshrl.u32 %v1429, 7
      %v1431 = vsub.s32 %v1428, %v1430
      %v1432 = vrot.slane %v1401, %v1431
      %v1434 = vunpack.c.l.s4 1983009808
      %v1435 = vunpack.c.0.s8 %v1434
      %v1436 = vlaneseq
      %v1437 = vshrl.u32 %v1436, 7
      %v1438 = vsub.s32 %v1435, %v1437
      %v1439 = vrot.slane %v1425, %v1438
      %v1440 = vcombine.high %v1402, %v1402
      %v1442 = vunpack.c.l.s4 1983009808
      %v1443 = vunpack.c.0.s8 %v1442
      %v1444 = vlaneseq
      %v1445 = vshrl.u32 %v1444, 7
      %v1446 = vsub.s32 %v1443, %v1445
      %v1447 = vrot.slane %v1402, %v1446
      %v1449 = vunpack.c.l.s4 1983009808
      %v1450 = vunpack.c.0.s8 %v1449
      %v1451 = vlaneseq
      %v1452 = vshrl.u32 %v1451, 7
      %v1453 = vsub.s32 %v1450, %v1452
      %v1454 = vrot.slane %v1440, %v1453
      %v1455 = vcombine.high %v1403, %v1403
      %v1457 = vunpack.c.l.s4 1983009808
      %v1458 = vunpack.c.0.s8 %v1457
      %v1459 = vlaneseq
      %v1460 = vshrl.u32 %v1459, 7
      %v1461 = vsub.s32 %v1458, %v1460
      %v1462 = vrot.slane %v1403, %v1461
      %v1464 = vunpack.c.l.s4 1983009808
      %v1465 = vunpack.c.0.s8 %v1464
      %v1466 = vlaneseq
      %v1467 = vshrl.u32 %v1466, 7
      %v1468 = vsub.s32 %v1465, %v1467
      %v1469 = vrot.slane %v1455, %v1468
      %v1470 = vcombine.high %v1404, %v1404
      %v1472 = vunpack.c.l.s4 1983009808
      %v1473 = vunpack.c.0.s8 %v1472
      %v1474 = vlaneseq
      %v1475 = vshrl.u32 %v1474, 7
      %v1476 = vsub.s32 %v1473, %v1475
      %v1477 = vrot.slane %v1404, %v1476
      %v1479 = vunpack.c.l.s4 1983009808
      %v1480 = vunpack.c.0.s8 %v1479
      %v1481 = vlaneseq
      %v1482 = vshrl.u32 %v1481, 7
      %v1483 = vsub.s32 %v1480, %v1482
      %v1484 = vrot.slane %v1470, %v1483
      %1485 = vrot.lane.b32.xlu0 %v1417, 75
      %v1486 = vpop.permute.xlu0 %1485
      %1487 = vrot.lane.b32.xlu0 %v1424, 75
      %v1488 = vpop.permute.xlu0 %1487
      %1489 = vrot.lane.b32.xlu0 %v1432, 75
      %v1490 = vpop.permute.xlu0 %1489
      %1491 = vrot.lane.b32.xlu0 %v1439, 75
      %v1492 = vpop.permute.xlu0 %1491
      %1493 = vrot.lane.b32.xlu0 %v1447, 75
      %v1494 = vpop.permute.xlu0 %1493
      %1495 = vrot.lane.b32.xlu0 %v1454, 75
      %v1496 = vpop.permute.xlu0 %1495
      %1497 = vrot.lane.b32.xlu0 %v1462, 75
      %v1498 = vpop.permute.xlu0 %1497
      %1499 = vrot.lane.b32.xlu0 %v1469, 75
      %v1500 = vpop.permute.xlu0 %1499
      %1501 = vrot.lane.b32.xlu0 %v1477, 75
      %v1502 = vpop.permute.xlu0 %1501
      %1503 = vrot.lane.b32.xlu0 %v1484, 75
      %v1504 = vpop.permute.xlu0 %1503
      %v1505 = vrot.slane %v1486, 4
      %v1506 = vrot.slane %v1488, 4
      %v1507 = vrot.slane %v1490, 4
      %v1508 = vrot.slane %v1492, 4
      %v1509 = vrot.slane %v1494, 4
      %v1510 = vrot.slane %v1496, 4
      %v1511 = vrot.slane %v1498, 4
      %v1512 = vrot.slane %v1500, 4
      %v1513 = vrot.slane %v1502, 4
      %v1514 = vrot.slane %v1504, 4
      %v1515 = vsel %vm483, %v1505, %v1506
      %vm1516 = vcmask 613376
      %v1517 = vsel %vm1516, %v1486, %v1515
      %v1518 = vsel %vm483, %v1506, %v1507
      %v1519 = vsel %vm1516, %v1488, %v1518
      %v1520 = vsel %vm483, %v1507, %v1508
      %v1521 = vsel %vm1516, %v1490, %v1520
      %v1522 = vsel %vm483, %v1508, %v1509
      %v1523 = vsel %vm1516, %v1492, %v1522
      %v1524 = vsel %vm483, %v1509, %v1510
      %v1525 = vsel %vm1516, %v1494, %v1524
      %v1526 = vsel %vm483, %v1510, %v1511
      %v1527 = vsel %vm1516, %v1496, %v1526
      %v1528 = vsel %vm483, %v1511, %v1512
      %v1529 = vsel %vm1516, %v1498, %v1528
      %v1530 = vsel %vm483, %v1512, %v1513
      %v1531 = vsel %vm1516, %v1500, %v1530
      %v1532 = vsel %vm483, %v1513, %v1514
      %v1533 = vsel %vm1516, %v1502, %v1532
      %1543 = vst [vmem:[#allocation2 + $0x120] sm:$0x33] %v1517
      %1544 = vst [vmem:[#allocation2 + $0x128] sm:$0x33] %v1519
      %1545 = vst [vmem:[#allocation2 + $0x130] sm:$0x33] %v1521
      %1546 = vst [vmem:[#allocation2 + $0x138] sm:$0x33] %v1523
      %1547 = vst [vmem:[#allocation2 + $0x140] sm:$0x33] %v1525
      %1548 = vst [vmem:[#allocation2 + $0x148] sm:$0x33] %v1527
      %1549 = vst [vmem:[#allocation2 + $0x150] sm:$0x33] %v1529
      %1550 = vst [vmem:[#allocation2 + $0x158] sm:$0x33] %v1531
      %1551 = vst.msk [vmem:[#allocation2 + $0x160] sm:$0x33] %vm376, %v1533
      %v1552 = vld [vmem:[%s273] sm:$0xff]
      %v1553 = vld [vmem:[%s273 + $0x8] sm:$0xff]
      %v1554 = vld [vmem:[%s273 + $0x10] sm:$0xff]
      %v1555 = vld [vmem:[%s273 + $0x18] sm:$0xff]
      %v1556 = vld [vmem:[%s273 + $0x20] sm:$0x3f]
      %v1562 = vcombine.low %v1552, %v1552
      %v1564 = vunpack.c.l.s4 1983009808
      %v1565 = vunpack.c.0.s8 %v1564
      %v1566 = vlaneseq
      %v1567 = vshrl.u32 %v1566, 7
      %v1568 = vsub.s32 %v1565, %v1567
      %v1569 = vrot.slane %v1562, %v1568
      %v1571 = vunpack.c.l.s4 1983009808
      %v1572 = vunpack.c.0.s8 %v1571
      %v1573 = vlaneseq
      %v1574 = vshrl.u32 %v1573, 7
      %v1575 = vsub.s32 %v1572, %v1574
      %v1576 = vrot.slane %v1552, %v1575
      %v1577 = vcombine.low %v1553, %v1553
      %v1579 = vunpack.c.l.s4 1983009808
      %v1580 = vunpack.c.0.s8 %v1579
      %v1581 = vlaneseq
      %v1582 = vshrl.u32 %v1581, 7
      %v1583 = vsub.s32 %v1580, %v1582
      %v1584 = vrot.slane %v1577, %v1583
      %v1586 = vunpack.c.l.s4 1983009808
      %v1587 = vunpack.c.0.s8 %v1586
      %v1588 = vlaneseq
      %v1589 = vshrl.u32 %v1588, 7
      %v1590 = vsub.s32 %v1587, %v1589
      %v1591 = vrot.slane %v1553, %v1590
      %v1592 = vcombine.low %v1554, %v1554
      %v1594 = vunpack.c.l.s4 1983009808
      %v1595 = vunpack.c.0.s8 %v1594
      %v1596 = vlaneseq
      %v1597 = vshrl.u32 %v1596, 7
      %v1598 = vsub.s32 %v1595, %v1597
      %v1599 = vrot.slane %v1592, %v1598
      %v1601 = vunpack.c.l.s4 1983009808
      %v1602 = vunpack.c.0.s8 %v1601
      %v1603 = vlaneseq
      %v1604 = vshrl.u32 %v1603, 7
      %v1605 = vsub.s32 %v1602, %v1604
      %v1606 = vrot.slane %v1554, %v1605
      %v1607 = vcombine.low %v1555, %v1555
      %v1609 = vunpack.c.l.s4 1983009808
      %v1610 = vunpack.c.0.s8 %v1609
      %v1611 = vlaneseq
      %v1612 = vshrl.u32 %v1611, 7
      %v1613 = vsub.s32 %v1610, %v1612
      %v1614 = vrot.slane %v1607, %v1613
      %v1616 = vunpack.c.l.s4 1983009808
      %v1617 = vunpack.c.0.s8 %v1616
      %v1618 = vlaneseq
      %v1619 = vshrl.u32 %v1618, 7
      %v1620 = vsub.s32 %v1617, %v1619
      %v1621 = vrot.slane %v1555, %v1620
      %v1622 = vcombine.low %v1556, %v1556
      %v1624 = vunpack.c.l.s4 1983009808
      %v1625 = vunpack.c.0.s8 %v1624
      %v1626 = vlaneseq
      %v1627 = vshrl.u32 %v1626, 7
      %v1628 = vsub.s32 %v1625, %v1627
      %v1629 = vrot.slane %v1622, %v1628
      %v1631 = vunpack.c.l.s4 1983009808
      %v1632 = vunpack.c.0.s8 %v1631
      %v1633 = vlaneseq
      %v1634 = vshrl.u32 %v1633, 7
      %v1635 = vsub.s32 %v1632, %v1634
      %v1636 = vrot.slane %v1556, %v1635
      %1637 = vrot.lane.b32.xlu0 %v1569, 74
      %v1638 = vpop.permute.xlu0 %1637
      %1639 = vrot.lane.b32.xlu0 %v1576, 74
      %v1640 = vpop.permute.xlu0 %1639
      %1641 = vrot.lane.b32.xlu0 %v1584, 74
      %v1642 = vpop.permute.xlu0 %1641
      %1643 = vrot.lane.b32.xlu0 %v1591, 74
      %v1644 = vpop.permute.xlu0 %1643
      %1645 = vrot.lane.b32.xlu0 %v1599, 74
      %v1646 = vpop.permute.xlu0 %1645
      %1647 = vrot.lane.b32.xlu0 %v1606, 74
      %v1648 = vpop.permute.xlu0 %1647
      %1649 = vrot.lane.b32.xlu0 %v1614, 74
      %v1650 = vpop.permute.xlu0 %1649
      %1651 = vrot.lane.b32.xlu0 %v1621, 74
      %v1652 = vpop.permute.xlu0 %1651
      %1653 = vrot.lane.b32.xlu0 %v1629, 74
      %v1654 = vpop.permute.xlu0 %1653
      %1655 = vrot.lane.b32.xlu0 %v1636, 74
      %v1656 = vpop.permute.xlu0 %1655
      %v1657 = vrot.slane %v1638, 4
      %v1658 = vrot.slane %v1640, 4
      %v1659 = vrot.slane %v1642, 4
      %v1660 = vrot.slane %v1644, 4
      %v1661 = vrot.slane %v1646, 4
      %v1662 = vrot.slane %v1648, 4
      %v1663 = vrot.slane %v1650, 4
      %v1664 = vrot.slane %v1652, 4
      %v1665 = vrot.slane %v1654, 4
      %v1666 = vrot.slane %v1656, 4
      %v1667 = vsel %vm483, %v1657, %v1658
      %vm1668 = vcmask 605184
      %v1669 = vsel %vm1668, %v1638, %v1667
      %v1670 = vsel %vm483, %v1658, %v1659
      %v1671 = vsel %vm1668, %v1640, %v1670
      %v1672 = vsel %vm483, %v1659, %v1660
      %v1673 = vsel %vm1668, %v1642, %v1672
      %v1674 = vsel %vm483, %v1660, %v1661
      %v1675 = vsel %vm1668, %v1644, %v1674
      %v1676 = vsel %vm483, %v1661, %v1662
      %v1677 = vsel %vm1668, %v1646, %v1676
      %v1678 = vsel %vm483, %v1662, %v1663
      %v1679 = vsel %vm1668, %v1648, %v1678
      %v1680 = vsel %vm483, %v1663, %v1664
      %v1681 = vsel %vm1668, %v1650, %v1680
      %v1682 = vsel %vm483, %v1664, %v1665
      %v1683 = vsel %vm1668, %v1652, %v1682
      %v1684 = vsel %vm483, %v1665, %v1666
      %v1685 = vsel %vm1668, %v1654, %v1684
      %1695 = vst [vmem:[#allocation2 + $0x120] sm:$0xcc] %v1669
      %1696 = vst [vmem:[#allocation2 + $0x128] sm:$0xcc] %v1671
      %1697 = vst [vmem:[#allocation2 + $0x130] sm:$0xcc] %v1673
      %1698 = vst [vmem:[#allocation2 + $0x138] sm:$0xcc] %v1675
      %1699 = vst [vmem:[#allocation2 + $0x140] sm:$0xcc] %v1677
      %1700 = vst [vmem:[#allocation2 + $0x148] sm:$0xcc] %v1679
      %1701 = vst [vmem:[#allocation2 + $0x150] sm:$0xcc] %v1681
      %1702 = vst [vmem:[#allocation2 + $0x158] sm:$0xcc] %v1683
      %1703 = vst.msk [vmem:[#allocation2 + $0x160] sm:$0xcc] %vm521, %v1685
      %v1704 = vld [vmem:[%s273] sm:$0xff]
      %v1705 = vld [vmem:[%s273 + $0x8] sm:$0xff]
      %v1706 = vld [vmem:[%s273 + $0x10] sm:$0xff]
      %v1707 = vld [vmem:[%s273 + $0x18] sm:$0xff]
      %v1708 = vld [vmem:[%s273 + $0x20] sm:$0x3f]
      %v1714 = vcombine.high %v1704, %v1704
      %v1716 = vunpack.c.l.s4 1983009808
      %v1717 = vunpack.c.0.s8 %v1716
      %v1718 = vlaneseq
      %v1719 = vshrl.u32 %v1718, 7
      %v1720 = vsub.s32 %v1717, %v1719
      %v1721 = vrot.slane %v1704, %v1720
      %v1723 = vunpack.c.l.s4 1983009808
      %v1724 = vunpack.c.0.s8 %v1723
      %v1725 = vlaneseq
      %v1726 = vshrl.u32 %v1725, 7
      %v1727 = vsub.s32 %v1724, %v1726
      %v1728 = vrot.slane %v1714, %v1727
      %v1729 = vcombine.high %v1705, %v1705
      %v1731 = vunpack.c.l.s4 1983009808
      %v1732 = vunpack.c.0.s8 %v1731
      %v1733 = vlaneseq
      %v1734 = vshrl.u32 %v1733, 7
      %v1735 = vsub.s32 %v1732, %v1734
      %v1736 = vrot.slane %v1705, %v1735
      %v1738 = vunpack.c.l.s4 1983009808
      %v1739 = vunpack.c.0.s8 %v1738
      %v1740 = vlaneseq
      %v1741 = vshrl.u32 %v1740, 7
      %v1742 = vsub.s32 %v1739, %v1741
      %v1743 = vrot.slane %v1729, %v1742
      %v1744 = vcombine.high %v1706, %v1706
      %v1746 = vunpack.c.l.s4 1983009808
      %v1747 = vunpack.c.0.s8 %v1746
      %v1748 = vlaneseq
      %v1749 = vshrl.u32 %v1748, 7
      %v1750 = vsub.s32 %v1747, %v1749
      %v1751 = vrot.slane %v1706, %v1750
      %v1753 = vunpack.c.l.s4 1983009808
      %v1754 = vunpack.c.0.s8 %v1753
      %v1755 = vlaneseq
      %v1756 = vshrl.u32 %v1755, 7
      %v1757 = vsub.s32 %v1754, %v1756
      %v1758 = vrot.slane %v1744, %v1757
      %v1759 = vcombine.high %v1707, %v1707
      %v1761 = vunpack.c.l.s4 1983009808
      %v1762 = vunpack.c.0.s8 %v1761
      %v1763 = vlaneseq
      %v1764 = vshrl.u32 %v1763, 7
      %v1765 = vsub.s32 %v1762, %v1764
      %v1766 = vrot.slane %v1707, %v1765
      %v1768 = vunpack.c.l.s4 1983009808
      %v1769 = vunpack.c.0.s8 %v1768
      %v1770 = vlaneseq
      %v1771 = vshrl.u32 %v1770, 7
      %v1772 = vsub.s32 %v1769, %v1771
      %v1773 = vrot.slane %v1759, %v1772
      %v1774 = vcombine.high %v1708, %v1708
      %v1776 = vunpack.c.l.s4 1983009808
      %v1777 = vunpack.c.0.s8 %v1776
      %v1778 = vlaneseq
      %v1779 = vshrl.u32 %v1778, 7
      %v1780 = vsub.s32 %v1777, %v1779
      %v1781 = vrot.slane %v1708, %v1780
      %v1783 = vunpack.c.l.s4 1983009808
      %v1784 = vunpack.c.0.s8 %v1783
      %v1785 = vlaneseq
      %v1786 = vshrl.u32 %v1785, 7
      %v1787 = vsub.s32 %v1784, %v1786
      %v1788 = vrot.slane %v1774, %v1787
      %1789 = vrot.lane.b32.xlu0 %v1721, 28
      %v1790 = vpop.permute.xlu0 %1789
      %1791 = vrot.lane.b32.xlu0 %v1728, 28
      %v1792 = vpop.permute.xlu0 %1791
      %1793 = vrot.lane.b32.xlu0 %v1736, 28
      %v1794 = vpop.permute.xlu0 %1793
      %1795 = vrot.lane.b32.xlu0 %v1743, 28
      %v1796 = vpop.permute.xlu0 %1795
      %1797 = vrot.lane.b32.xlu0 %v1751, 28
      %v1798 = vpop.permute.xlu0 %1797
      %1799 = vrot.lane.b32.xlu0 %v1758, 28
      %v1800 = vpop.permute.xlu0 %1799
      %1801 = vrot.lane.b32.xlu0 %v1766, 28
      %v1802 = vpop.permute.xlu0 %1801
      %1803 = vrot.lane.b32.xlu0 %v1773, 28
      %v1804 = vpop.permute.xlu0 %1803
      %1805 = vrot.lane.b32.xlu0 %v1781, 28
      %v1806 = vpop.permute.xlu0 %1805
      %1807 = vrot.lane.b32.xlu0 %v1788, 28
      %v1808 = vpop.permute.xlu0 %1807
      %v1809 = vrot.slane %v1790, 4
      %v1810 = vrot.slane %v1792, 4
      %v1811 = vrot.slane %v1794, 4
      %v1812 = vrot.slane %v1796, 4
      %v1813 = vrot.slane %v1798, 4
      %v1814 = vrot.slane %v1800, 4
      %v1815 = vrot.slane %v1802, 4
      %v1816 = vrot.slane %v1804, 4
      %v1817 = vrot.slane %v1806, 4
      %v1818 = vrot.slane %v1808, 4
      %v1819 = vsel %vm483, %v1809, %v1810
      %vm1820 = vcmask 228352
      %v1821 = vsel %vm1820, %v1790, %v1819
      %v1822 = vsel %vm483, %v1810, %v1811
      %v1823 = vsel %vm1820, %v1792, %v1822
      %v1824 = vsel %vm483, %v1811, %v1812
      %v1825 = vsel %vm1820, %v1794, %v1824
      %v1826 = vsel %vm483, %v1812, %v1813
      %v1827 = vsel %vm1820, %v1796, %v1826
      %v1828 = vsel %vm483, %v1813, %v1814
      %v1829 = vsel %vm1820, %v1798, %v1828
      %v1830 = vsel %vm483, %v1814, %v1815
      %v1831 = vsel %vm1820, %v1800, %v1830
      %v1832 = vsel %vm483, %v1815, %v1816
      %v1833 = vsel %vm1820, %v1802, %v1832
      %v1834 = vsel %vm483, %v1816, %v1817
      %v1835 = vsel %vm1820, %v1804, %v1834
      %v1836 = vsel %vm483, %v1817, %v1818
      %v1837 = vsel %vm1820, %v1806, %v1836
      %1847 = vst [vmem:[#allocation2 + $0x168] sm:$0x33] %v1821
      %1848 = vst [vmem:[#allocation2 + $0x170] sm:$0x33] %v1823
      %1849 = vst [vmem:[#allocation2 + $0x178] sm:$0x33] %v1825
      %1850 = vst [vmem:[#allocation2 + $0x180] sm:$0x33] %v1827
      %1851 = vst [vmem:[#allocation2 + $0x188] sm:$0x33] %v1829
      %1852 = vst [vmem:[#allocation2 + $0x190] sm:$0x33] %v1831
      %1853 = vst [vmem:[#allocation2 + $0x198] sm:$0x33] %v1833
      %1854 = vst [vmem:[#allocation2 + $0x1a0] sm:$0x33] %v1835
      %1855 = vst.msk [vmem:[#allocation2 + $0x1a8] sm:$0x33] %vm376, %v1837
      %v1856 = vld [vmem:[%s273] sm:$0xff]
      %v1857 = vld [vmem:[%s273 + $0x8] sm:$0xff]
      %v1858 = vld [vmem:[%s273 + $0x10] sm:$0xff]
      %v1859 = vld [vmem:[%s273 + $0x18] sm:$0xff]
      %v1860 = vld [vmem:[%s273 + $0x20] sm:$0x3f]
      %v1866 = vcombine.low %v1856, %v1856
      %v1868 = vunpack.c.l.s4 1983009808
      %v1869 = vunpack.c.0.s8 %v1868
      %v1870 = vlaneseq
      %v1871 = vshrl.u32 %v1870, 7
      %v1872 = vsub.s32 %v1869, %v1871
      %v1873 = vrot.slane %v1866, %v1872
      %v1875 = vunpack.c.l.s4 1983009808
      %v1876 = vunpack.c.0.s8 %v1875
      %v1877 = vlaneseq
      %v1878 = vshrl.u32 %v1877, 7
      %v1879 = vsub.s32 %v1876, %v1878
      %v1880 = vrot.slane %v1856, %v1879
      %v1881 = vcombine.low %v1857, %v1857
      %v1883 = vunpack.c.l.s4 1983009808
      %v1884 = vunpack.c.0.s8 %v1883
      %v1885 = vlaneseq
      %v1886 = vshrl.u32 %v1885, 7
      %v1887 = vsub.s32 %v1884, %v1886
      %v1888 = vrot.slane %v1881, %v1887
      %v1890 = vunpack.c.l.s4 1983009808
      %v1891 = vunpack.c.0.s8 %v1890
      %v1892 = vlaneseq
      %v1893 = vshrl.u32 %v1892, 7
      %v1894 = vsub.s32 %v1891, %v1893
      %v1895 = vrot.slane %v1857, %v1894
      %v1896 = vcombine.low %v1858, %v1858
      %v1898 = vunpack.c.l.s4 1983009808
      %v1899 = vunpack.c.0.s8 %v1898
      %v1900 = vlaneseq
      %v1901 = vshrl.u32 %v1900, 7
      %v1902 = vsub.s32 %v1899, %v1901
      %v1903 = vrot.slane %v1896, %v1902
      %v1905 = vunpack.c.l.s4 1983009808
      %v1906 = vunpack.c.0.s8 %v1905
      %v1907 = vlaneseq
      %v1908 = vshrl.u32 %v1907, 7
      %v1909 = vsub.s32 %v1906, %v1908
      %v1910 = vrot.slane %v1858, %v1909
      %v1911 = vcombine.low %v1859, %v1859
      %v1913 = vunpack.c.l.s4 1983009808
      %v1914 = vunpack.c.0.s8 %v1913
      %v1915 = vlaneseq
      %v1916 = vshrl.u32 %v1915, 7
      %v1917 = vsub.s32 %v1914, %v1916
      %v1918 = vrot.slane %v1911, %v1917
      %v1920 = vunpack.c.l.s4 1983009808
      %v1921 = vunpack.c.0.s8 %v1920
      %v1922 = vlaneseq
      %v1923 = vshrl.u32 %v1922, 7
      %v1924 = vsub.s32 %v1921, %v1923
      %v1925 = vrot.slane %v1859, %v1924
      %v1926 = vcombine.low %v1860, %v1860
      %v1928 = vunpack.c.l.s4 1983009808
      %v1929 = vunpack.c.0.s8 %v1928
      %v1930 = vlaneseq
      %v1931 = vshrl.u32 %v1930, 7
      %v1932 = vsub.s32 %v1929, %v1931
      %v1933 = vrot.slane %v1926, %v1932
      %v1935 = vunpack.c.l.s4 1983009808
      %v1936 = vunpack.c.0.s8 %v1935
      %v1937 = vlaneseq
      %v1938 = vshrl.u32 %v1937, 7
      %v1939 = vsub.s32 %v1936, %v1938
      %v1940 = vrot.slane %v1860, %v1939
      %1941 = vrot.lane.b32.xlu0 %v1873, 27
      %v1942 = vpop.permute.xlu0 %1941
      %1943 = vrot.lane.b32.xlu0 %v1880, 27
      %v1944 = vpop.permute.xlu0 %1943
      %1945 = vrot.lane.b32.xlu0 %v1888, 27
      %v1946 = vpop.permute.xlu0 %1945
      %1947 = vrot.lane.b32.xlu0 %v1895, 27
      %v1948 = vpop.permute.xlu0 %1947
      %1949 = vrot.lane.b32.xlu0 %v1903, 27
      %v1950 = vpop.permute.xlu0 %1949
      %1951 = vrot.lane.b32.xlu0 %v1910, 27
      %v1952 = vpop.permute.xlu0 %1951
      %1953 = vrot.lane.b32.xlu0 %v1918, 27
      %v1954 = vpop.permute.xlu0 %1953
      %1955 = vrot.lane.b32.xlu0 %v1925, 27
      %v1956 = vpop.permute.xlu0 %1955
      %1957 = vrot.lane.b32.xlu0 %v1933, 27
      %v1958 = vpop.permute.xlu0 %1957
      %1959 = vrot.lane.b32.xlu0 %v1940, 27
      %v1960 = vpop.permute.xlu0 %1959
      %v1961 = vrot.slane %v1942, 4
      %v1962 = vrot.slane %v1944, 4
      %v1963 = vrot.slane %v1946, 4
      %v1964 = vrot.slane %v1948, 4
      %v1965 = vrot.slane %v1950, 4
      %v1966 = vrot.slane %v1952, 4
      %v1967 = vrot.slane %v1954, 4
      %v1968 = vrot.slane %v1956, 4
      %v1969 = vrot.slane %v1958, 4
      %v1970 = vrot.slane %v1960, 4
      %v1971 = vsel %vm483, %v1961, %v1962
      %vm1972 = vcmask 220160
      %v1973 = vsel %vm1972, %v1942, %v1971
      %v1974 = vsel %vm483, %v1962, %v1963
      %v1975 = vsel %vm1972, %v1944, %v1974
      %v1976 = vsel %vm483, %v1963, %v1964
      %v1977 = vsel %vm1972, %v1946, %v1976
      %v1978 = vsel %vm483, %v1964, %v1965
      %v1979 = vsel %vm1972, %v1948, %v1978
      %v1980 = vsel %vm483, %v1965, %v1966
      %v1981 = vsel %vm1972, %v1950, %v1980
      %v1982 = vsel %vm483, %v1966, %v1967
      %v1983 = vsel %vm1972, %v1952, %v1982
      %v1984 = vsel %vm483, %v1967, %v1968
      %v1985 = vsel %vm1972, %v1954, %v1984
      %v1986 = vsel %vm483, %v1968, %v1969
      %v1987 = vsel %vm1972, %v1956, %v1986
      %v1988 = vsel %vm483, %v1969, %v1970
      %v1989 = vsel %vm1972, %v1958, %v1988
      %1999 = vst [vmem:[#allocation2 + $0x168] sm:$0xcc] %v1973
      %2000 = vst [vmem:[#allocation2 + $0x170] sm:$0xcc] %v1975
      %2001 = vst [vmem:[#allocation2 + $0x178] sm:$0xcc] %v1977
      %2002 = vst [vmem:[#allocation2 + $0x180] sm:$0xcc] %v1979
      %2003 = vst [vmem:[#allocation2 + $0x188] sm:$0xcc] %v1981
      %2004 = vst [vmem:[#allocation2 + $0x190] sm:$0xcc] %v1983
      %2005 = vst [vmem:[#allocation2 + $0x198] sm:$0xcc] %v1985
      %2006 = vst [vmem:[#allocation2 + $0x1a0] sm:$0xcc] %v1987
      %2007 = vst.msk [vmem:[#allocation2 + $0x1a8] sm:$0xcc] %vm521, %v1989
      %v2008 = vld [vmem:[%s273] sm:$0xff]
      %v2009 = vld [vmem:[%s273 + $0x8] sm:$0xff]
      %v2010 = vld [vmem:[%s273 + $0x10] sm:$0xff]
      %v2011 = vld [vmem:[%s273 + $0x18] sm:$0xff]
      %v2012 = vld [vmem:[%s273 + $0x20] sm:$0x3f]
      %v2018 = vcombine.high %v2008, %v2008
      %v2020 = vunpack.c.l.s4 1983009808
      %v2021 = vunpack.c.0.s8 %v2020
      %v2022 = vlaneseq
      %v2023 = vshrl.u32 %v2022, 7
      %v2024 = vsub.s32 %v2021, %v2023
      %v2025 = vrot.slane %v2008, %v2024
      %v2027 = vunpack.c.l.s4 1983009808
      %v2028 = vunpack.c.0.s8 %v2027
      %v2029 = vlaneseq
      %v2030 = vshrl.u32 %v2029, 7
      %v2031 = vsub.s32 %v2028, %v2030
      %v2032 = vrot.slane %v2018, %v2031
      %v2033 = vcombine.high %v2009, %v2009
      %v2035 = vunpack.c.l.s4 1983009808
      %v2036 = vunpack.c.0.s8 %v2035
      %v2037 = vlaneseq
      %v2038 = vshrl.u32 %v2037, 7
      %v2039 = vsub.s32 %v2036, %v2038
      %v2040 = vrot.slane %v2009, %v2039
      %v2042 = vunpack.c.l.s4 1983009808
      %v2043 = vunpack.c.0.s8 %v2042
      %v2044 = vlaneseq
      %v2045 = vshrl.u32 %v2044, 7
      %v2046 = vsub.s32 %v2043, %v2045
      %v2047 = vrot.slane %v2033, %v2046
      %v2048 = vcombine.high %v2010, %v2010
      %v2050 = vunpack.c.l.s4 1983009808
      %v2051 = vunpack.c.0.s8 %v2050
      %v2052 = vlaneseq
      %v2053 = vshrl.u32 %v2052, 7
      %v2054 = vsub.s32 %v2051, %v2053
      %v2055 = vrot.slane %v2010, %v2054
      %v2057 = vunpack.c.l.s4 1983009808
      %v2058 = vunpack.c.0.s8 %v2057
      %v2059 = vlaneseq
      %v2060 = vshrl.u32 %v2059, 7
      %v2061 = vsub.s32 %v2058, %v2060
      %v2062 = vrot.slane %v2048, %v2061
      %v2063 = vcombine.high %v2011, %v2011
      %v2065 = vunpack.c.l.s4 1983009808
      %v2066 = vunpack.c.0.s8 %v2065
      %v2067 = vlaneseq
      %v2068 = vshrl.u32 %v2067, 7
      %v2069 = vsub.s32 %v2066, %v2068
      %v2070 = vrot.slane %v2011, %v2069
      %v2072 = vunpack.c.l.s4 1983009808
      %v2073 = vunpack.c.0.s8 %v2072
      %v2074 = vlaneseq
      %v2075 = vshrl.u32 %v2074, 7
      %v2076 = vsub.s32 %v2073, %v2075
      %v2077 = vrot.slane %v2063, %v2076
      %v2078 = vcombine.high %v2012, %v2012
      %v2080 = vunpack.c.l.s4 1983009808
      %v2081 = vunpack.c.0.s8 %v2080
      %v2082 = vlaneseq
      %v2083 = vshrl.u32 %v2082, 7
      %v2084 = vsub.s32 %v2081, %v2083
      %v2085 = vrot.slane %v2012, %v2084
      %v2087 = vunpack.c.l.s4 1983009808
      %v2088 = vunpack.c.0.s8 %v2087
      %v2089 = vlaneseq
      %v2090 = vshrl.u32 %v2089, 7
      %v2091 = vsub.s32 %v2088, %v2090
      %v2092 = vrot.slane %v2078, %v2091
      %2093 = vrot.lane.b32.xlu0 %v2025, 26
      %v2094 = vpop.permute.xlu0 %2093
      %2095 = vrot.lane.b32.xlu0 %v2032, 26
      %v2096 = vpop.permute.xlu0 %2095
      %2097 = vrot.lane.b32.xlu0 %v2040, 26
      %v2098 = vpop.permute.xlu0 %2097
      %2099 = vrot.lane.b32.xlu0 %v2047, 26
      %v2100 = vpop.permute.xlu0 %2099
      %2101 = vrot.lane.b32.xlu0 %v2055, 26
      %v2102 = vpop.permute.xlu0 %2101
      %2103 = vrot.lane.b32.xlu0 %v2062, 26
      %v2104 = vpop.permute.xlu0 %2103
      %2105 = vrot.lane.b32.xlu0 %v2070, 26
      %v2106 = vpop.permute.xlu0 %2105
      %2107 = vrot.lane.b32.xlu0 %v2077, 26
      %v2108 = vpop.permute.xlu0 %2107
      %2109 = vrot.lane.b32.xlu0 %v2085, 26
      %v2110 = vpop.permute.xlu0 %2109
      %2111 = vrot.lane.b32.xlu0 %v2092, 26
      %v2112 = vpop.permute.xlu0 %2111
      %v2113 = vrot.slane %v2094, 4
      %v2114 = vrot.slane %v2096, 4
      %v2115 = vrot.slane %v2098, 4
      %v2116 = vrot.slane %v2100, 4
      %v2117 = vrot.slane %v2102, 4
      %v2118 = vrot.slane %v2104, 4
      %v2119 = vrot.slane %v2106, 4
      %v2120 = vrot.slane %v2108, 4
      %v2121 = vrot.slane %v2110, 4
      %v2122 = vrot.slane %v2112, 4
      %v2123 = vsel %vm483, %v2113, %v2114
      %vm2124 = vcmask 211968
      %v2125 = vsel %vm2124, %v2094, %v2123
      %v2126 = vsel %vm483, %v2114, %v2115
      %v2127 = vsel %vm2124, %v2096, %v2126
      %v2128 = vsel %vm483, %v2115, %v2116
      %v2129 = vsel %vm2124, %v2098, %v2128
      %v2130 = vsel %vm483, %v2116, %v2117
      %v2131 = vsel %vm2124, %v2100, %v2130
      %v2132 = vsel %vm483, %v2117, %v2118
      %v2133 = vsel %vm2124, %v2102, %v2132
      %v2134 = vsel %vm483, %v2118, %v2119
      %v2135 = vsel %vm2124, %v2104, %v2134
      %v2136 = vsel %vm483, %v2119, %v2120
      %v2137 = vsel %vm2124, %v2106, %v2136
      %v2138 = vsel %vm483, %v2120, %v2121
      %v2139 = vsel %vm2124, %v2108, %v2138
      %v2140 = vsel %vm483, %v2121, %v2122
      %v2141 = vsel %vm2124, %v2110, %v2140
      %2151 = vst [vmem:[#allocation2 + $0x1b0] sm:$0x33] %v2125
      %2152 = vst [vmem:[#allocation2 + $0x1b8] sm:$0x33] %v2127
      %2153 = vst [vmem:[#allocation2 + $0x1c0] sm:$0x33] %v2129
      %2154 = vst [vmem:[#allocation2 + $0x1c8] sm:$0x33] %v2131
      %2155 = vst [vmem:[#allocation2 + $0x1d0] sm:$0x33] %v2133
      %2156 = vst [vmem:[#allocation2 + $0x1d8] sm:$0x33] %v2135
      %2157 = vst [vmem:[#allocation2 + $0x1e0] sm:$0x33] %v2137
      %2158 = vst [vmem:[#allocation2 + $0x1e8] sm:$0x33] %v2139
      %2159 = vst.msk [vmem:[#allocation2 + $0x1f0] sm:$0x33] %vm376, %v2141
      %v2160 = vld [vmem:[%s273] sm:$0xff]
      %v2161 = vld [vmem:[%s273 + $0x8] sm:$0xff]
      %v2162 = vld [vmem:[%s273 + $0x10] sm:$0xff]
      %v2163 = vld [vmem:[%s273 + $0x18] sm:$0xff]
      %v2164 = vld [vmem:[%s273 + $0x20] sm:$0x3f]
      %v2170 = vcombine.low %v2160, %v2160
      %v2172 = vunpack.c.l.s4 1983009808
      %v2173 = vunpack.c.0.s8 %v2172
      %v2174 = vlaneseq
      %v2175 = vshrl.u32 %v2174, 7
      %v2176 = vsub.s32 %v2173, %v2175
      %v2177 = vrot.slane %v2170, %v2176
      %v2179 = vunpack.c.l.s4 1983009808
      %v2180 = vunpack.c.0.s8 %v2179
      %v2181 = vlaneseq
      %v2182 = vshrl.u32 %v2181, 7
      %v2183 = vsub.s32 %v2180, %v2182
      %v2184 = vrot.slane %v2160, %v2183
      %v2185 = vcombine.low %v2161, %v2161
      %v2187 = vunpack.c.l.s4 1983009808
      %v2188 = vunpack.c.0.s8 %v2187
      %v2189 = vlaneseq
      %v2190 = vshrl.u32 %v2189, 7
      %v2191 = vsub.s32 %v2188, %v2190
      %v2192 = vrot.slane %v2185, %v2191
      %v2194 = vunpack.c.l.s4 1983009808
      %v2195 = vunpack.c.0.s8 %v2194
      %v2196 = vlaneseq
      %v2197 = vshrl.u32 %v2196, 7
      %v2198 = vsub.s32 %v2195, %v2197
      %v2199 = vrot.slane %v2161, %v2198
      %v2200 = vcombine.low %v2162, %v2162
      %v2202 = vunpack.c.l.s4 1983009808
      %v2203 = vunpack.c.0.s8 %v2202
      %v2204 = vlaneseq
      %v2205 = vshrl.u32 %v2204, 7
      %v2206 = vsub.s32 %v2203, %v2205
      %v2207 = vrot.slane %v2200, %v2206
      %v2209 = vunpack.c.l.s4 1983009808
      %v2210 = vunpack.c.0.s8 %v2209
      %v2211 = vlaneseq
      %v2212 = vshrl.u32 %v2211, 7
      %v2213 = vsub.s32 %v2210, %v2212
      %v2214 = vrot.slane %v2162, %v2213
      %v2215 = vcombine.low %v2163, %v2163
      %v2217 = vunpack.c.l.s4 1983009808
      %v2218 = vunpack.c.0.s8 %v2217
      %v2219 = vlaneseq
      %v2220 = vshrl.u32 %v2219, 7
      %v2221 = vsub.s32 %v2218, %v2220
      %v2222 = vrot.slane %v2215, %v2221
      %v2224 = vunpack.c.l.s4 1983009808
      %v2225 = vunpack.c.0.s8 %v2224
      %v2226 = vlaneseq
      %v2227 = vshrl.u32 %v2226, 7
      %v2228 = vsub.s32 %v2225, %v2227
      %v2229 = vrot.slane %v2163, %v2228
      %v2230 = vcombine.low %v2164, %v2164
      %v2232 = vunpack.c.l.s4 1983009808
      %v2233 = vunpack.c.0.s8 %v2232
      %v2234 = vlaneseq
      %v2235 = vshrl.u32 %v2234, 7
      %v2236 = vsub.s32 %v2233, %v2235
      %v2237 = vrot.slane %v2230, %v2236
      %v2239 = vunpack.c.l.s4 1983009808
      %v2240 = vunpack.c.0.s8 %v2239
      %v2241 = vlaneseq
      %v2242 = vshrl.u32 %v2241, 7
      %v2243 = vsub.s32 %v2240, %v2242
      %v2244 = vrot.slane %v2164, %v2243
      %2245 = vrot.lane.b32.xlu0 %v2177, 25
      %v2246 = vpop.permute.xlu0 %2245
      %2247 = vrot.lane.b32.xlu0 %v2184, 25
      %v2248 = vpop.permute.xlu0 %2247
      %2249 = vrot.lane.b32.xlu0 %v2192, 25
      %v2250 = vpop.permute.xlu0 %2249
      %2251 = vrot.lane.b32.xlu0 %v2199, 25
      %v2252 = vpop.permute.xlu0 %2251
      %2253 = vrot.lane.b32.xlu0 %v2207, 25
      %v2254 = vpop.permute.xlu0 %2253
      %2255 = vrot.lane.b32.xlu0 %v2214, 25
      %v2256 = vpop.permute.xlu0 %2255
      %2257 = vrot.lane.b32.xlu0 %v2222, 25
      %v2258 = vpop.permute.xlu0 %2257
      %2259 = vrot.lane.b32.xlu0 %v2229, 25
      %v2260 = vpop.permute.xlu0 %2259
      %2261 = vrot.lane.b32.xlu0 %v2237, 25
      %v2262 = vpop.permute.xlu0 %2261
      %2263 = vrot.lane.b32.xlu0 %v2244, 25
      %v2264 = vpop.permute.xlu0 %2263
      %v2265 = vrot.slane %v2246, 4
      %v2266 = vrot.slane %v2248, 4
      %v2267 = vrot.slane %v2250, 4
      %v2268 = vrot.slane %v2252, 4
      %v2269 = vrot.slane %v2254, 4
      %v2270 = vrot.slane %v2256, 4
      %v2271 = vrot.slane %v2258, 4
      %v2272 = vrot.slane %v2260, 4
      %v2273 = vrot.slane %v2262, 4
      %v2274 = vrot.slane %v2264, 4
      %v2275 = vsel %vm483, %v2265, %v2266
      %vm2276 = vcmask 203776
      %v2277 = vsel %vm2276, %v2246, %v2275
      %v2278 = vsel %vm483, %v2266, %v2267
      %v2279 = vsel %vm2276, %v2248, %v2278
      %v2280 = vsel %vm483, %v2267, %v2268
      %v2281 = vsel %vm2276, %v2250, %v2280
      %v2282 = vsel %vm483, %v2268, %v2269
      %v2283 = vsel %vm2276, %v2252, %v2282
      %v2284 = vsel %vm483, %v2269, %v2270
      %v2285 = vsel %vm2276, %v2254, %v2284
      %v2286 = vsel %vm483, %v2270, %v2271
      %v2287 = vsel %vm2276, %v2256, %v2286
      %v2288 = vsel %vm483, %v2271, %v2272
      %v2289 = vsel %vm2276, %v2258, %v2288
      %v2290 = vsel %vm483, %v2272, %v2273
      %v2291 = vsel %vm2276, %v2260, %v2290
      %v2292 = vsel %vm483, %v2273, %v2274
      %v2293 = vsel %vm2276, %v2262, %v2292
      %2303 = vst [vmem:[#allocation2 + $0x1b0] sm:$0xcc] %v2277
      %2304 = vst [vmem:[#allocation2 + $0x1b8] sm:$0xcc] %v2279
      %2305 = vst [vmem:[#allocation2 + $0x1c0] sm:$0xcc] %v2281
      %2306 = vst [vmem:[#allocation2 + $0x1c8] sm:$0xcc] %v2283
      %2307 = vst [vmem:[#allocation2 + $0x1d0] sm:$0xcc] %v2285
      %2308 = vst [vmem:[#allocation2 + $0x1d8] sm:$0xcc] %v2287
      %2309 = vst [vmem:[#allocation2 + $0x1e0] sm:$0xcc] %v2289
      %2310 = vst [vmem:[#allocation2 + $0x1e8] sm:$0xcc] %v2291
      %2311 = vst.msk [vmem:[#allocation2 + $0x1f0] sm:$0xcc] %vm521, %v2293
      %v2312 = vld [vmem:[%s273] sm:$0xff]
      %v2313 = vld [vmem:[%s273 + $0x8] sm:$0xff]
      %v2314 = vld [vmem:[%s273 + $0x10] sm:$0xff]
      %v2315 = vld [vmem:[%s273 + $0x18] sm:$0xff]
      %v2316 = vld [vmem:[%s273 + $0x20] sm:$0x3f]
      %v2322 = vcombine.high %v2312, %v2312
      %v2324 = vunpack.c.l.s4 1983009808
      %v2325 = vunpack.c.0.s8 %v2324
      %v2326 = vlaneseq
      %v2327 = vshrl.u32 %v2326, 7
      %v2328 = vsub.s32 %v2325, %v2327
      %v2329 = vrot.slane %v2312, %v2328
      %v2331 = vunpack.c.l.s4 1983009808
      %v2332 = vunpack.c.0.s8 %v2331
      %v2333 = vlaneseq
      %v2334 = vshrl.u32 %v2333, 7
      %v2335 = vsub.s32 %v2332, %v2334
      %v2336 = vrot.slane %v2322, %v2335
      %v2337 = vcombine.high %v2313, %v2313
      %v2339 = vunpack.c.l.s4 1983009808
      %v2340 = vunpack.c.0.s8 %v2339
      %v2341 = vlaneseq
      %v2342 = vshrl.u32 %v2341, 7
      %v2343 = vsub.s32 %v2340, %v2342
      %v2344 = vrot.slane %v2313, %v2343
      %v2346 = vunpack.c.l.s4 1983009808
      %v2347 = vunpack.c.0.s8 %v2346
      %v2348 = vlaneseq
      %v2349 = vshrl.u32 %v2348, 7
      %v2350 = vsub.s32 %v2347, %v2349
      %v2351 = vrot.slane %v2337, %v2350
      %v2352 = vcombine.high %v2314, %v2314
      %v2354 = vunpack.c.l.s4 1983009808
      %v2355 = vunpack.c.0.s8 %v2354
      %v2356 = vlaneseq
      %v2357 = vshrl.u32 %v2356, 7
      %v2358 = vsub.s32 %v2355, %v2357
      %v2359 = vrot.slane %v2314, %v2358
      %v2361 = vunpack.c.l.s4 1983009808
      %v2362 = vunpack.c.0.s8 %v2361
      %v2363 = vlaneseq
      %v2364 = vshrl.u32 %v2363, 7
      %v2365 = vsub.s32 %v2362, %v2364
      %v2366 = vrot.slane %v2352, %v2365
      %v2367 = vcombine.high %v2315, %v2315
      %v2369 = vunpack.c.l.s4 1983009808
      %v2370 = vunpack.c.0.s8 %v2369
      %v2371 = vlaneseq
      %v2372 = vshrl.u32 %v2371, 7
      %v2373 = vsub.s32 %v2370, %v2372
      %v2374 = vrot.slane %v2315, %v2373
      %v2376 = vunpack.c.l.s4 1983009808
      %v2377 = vunpack.c.0.s8 %v2376
      %v2378 = vlaneseq
      %v2379 = vshrl.u32 %v2378, 7
      %v2380 = vsub.s32 %v2377, %v2379
      %v2381 = vrot.slane %v2367, %v2380
      %v2382 = vcombine.high %v2316, %v2316
      %v2384 = vunpack.c.l.s4 1983009808
      %v2385 = vunpack.c.0.s8 %v2384
      %v2386 = vlaneseq
      %v2387 = vshrl.u32 %v2386, 7
      %v2388 = vsub.s32 %v2385, %v2387
      %v2389 = vrot.slane %v2316, %v2388
      %v2391 = vunpack.c.l.s4 1983009808
      %v2392 = vunpack.c.0.s8 %v2391
      %v2393 = vlaneseq
      %v2394 = vshrl.u32 %v2393, 7
      %v2395 = vsub.s32 %v2392, %v2394
      %v2396 = vrot.slane %v2382, %v2395
      %2397 = vrot.lane.b32.xlu0 %v2329, 24
      %v2398 = vpop.permute.xlu0 %2397
      %2399 = vrot.lane.b32.xlu0 %v2336, 24
      %v2400 = vpop.permute.xlu0 %2399
      %2401 = vrot.lane.b32.xlu0 %v2344, 24
      %v2402 = vpop.permute.xlu0 %2401
      %2403 = vrot.lane.b32.xlu0 %v2351, 24
      %v2404 = vpop.permute.xlu0 %2403
      %2405 = vrot.lane.b32.xlu0 %v2359, 24
      %v2406 = vpop.permute.xlu0 %2405
      %2407 = vrot.lane.b32.xlu0 %v2366, 24
      %v2408 = vpop.permute.xlu0 %2407
      %2409 = vrot.lane.b32.xlu0 %v2374, 24
      %v2410 = vpop.permute.xlu0 %2409
      %2411 = vrot.lane.b32.xlu0 %v2381, 24
      %v2412 = vpop.permute.xlu0 %2411
      %2413 = vrot.lane.b32.xlu0 %v2389, 24
      %v2414 = vpop.permute.xlu0 %2413
      %2415 = vrot.lane.b32.xlu0 %v2396, 24
      %v2416 = vpop.permute.xlu0 %2415
      %v2417 = vrot.slane %v2398, 4
      %v2418 = vrot.slane %v2400, 4
      %v2419 = vrot.slane %v2402, 4
      %v2420 = vrot.slane %v2404, 4
      %v2421 = vrot.slane %v2406, 4
      %v2422 = vrot.slane %v2408, 4
      %v2423 = vrot.slane %v2410, 4
      %v2424 = vrot.slane %v2412, 4
      %v2425 = vrot.slane %v2414, 4
      %v2426 = vrot.slane %v2416, 4
      %v2427 = vsel %vm483, %v2417, %v2418
      %vm2428 = vcmask 195584
      %v2429 = vsel %vm2428, %v2398, %v2427
      %v2430 = vsel %vm483, %v2418, %v2419
      %v2431 = vsel %vm2428, %v2400, %v2430
      %v2432 = vsel %vm483, %v2419, %v2420
      %v2433 = vsel %vm2428, %v2402, %v2432
      %v2434 = vsel %vm483, %v2420, %v2421
      %v2435 = vsel %vm2428, %v2404, %v2434
      %v2436 = vsel %vm483, %v2421, %v2422
      %v2437 = vsel %vm2428, %v2406, %v2436
      %v2438 = vsel %vm483, %v2422, %v2423
      %v2439 = vsel %vm2428, %v2408, %v2438
      %v2440 = vsel %vm483, %v2423, %v2424
      %v2441 = vsel %vm2428, %v2410, %v2440
      %v2442 = vsel %vm483, %v2424, %v2425
      %v2443 = vsel %vm2428, %v2412, %v2442
      %v2444 = vsel %vm483, %v2425, %v2426
      %v2445 = vsel %vm2428, %v2414, %v2444
      %2455 = vst [vmem:[#allocation2 + $0x1f8] sm:$0x33] %v2429
      %2456 = vst [vmem:[#allocation2 + $0x200] sm:$0x33] %v2431
      %2457 = vst [vmem:[#allocation2 + $0x208] sm:$0x33] %v2433
      %2458 = vst [vmem:[#allocation2 + $0x210] sm:$0x33] %v2435
      %2459 = vst [vmem:[#allocation2 + $0x218] sm:$0x33] %v2437
      %2460 = vst [vmem:[#allocation2 + $0x220] sm:$0x33] %v2439
      %2461 = vst [vmem:[#allocation2 + $0x228] sm:$0x33] %v2441
      %2462 = vst [vmem:[#allocation2 + $0x230] sm:$0x33] %v2443
      %2463 = vst.msk [vmem:[#allocation2 + $0x238] sm:$0x33] %vm376, %v2445
      %v2464 = vld [vmem:[%s273 + $0x2] sm:$0xff]
      %v2465 = vld [vmem:[%s273 + $0xa] sm:$0xff]
      %v2466 = vld [vmem:[%s273 + $0x12] sm:$0xff]
      %v2467 = vld [vmem:[%s273 + $0x1a] sm:$0xff]
      %v2468 = vld [vmem:[%s273 + $0x22] sm:$0x3f]
      %v2474 = vcombine.low %v2464, %v2464
      %v2476 = vunpack.c.l.s4 1983009808
      %v2477 = vunpack.c.0.s8 %v2476
      %v2478 = vlaneseq
      %v2479 = vshrl.u32 %v2478, 7
      %v2480 = vsub.s32 %v2477, %v2479
      %v2481 = vrot.slane %v2474, %v2480
      %v2483 = vunpack.c.l.s4 1983009808
      %v2484 = vunpack.c.0.s8 %v2483
      %v2485 = vlaneseq
      %v2486 = vshrl.u32 %v2485, 7
      %v2487 = vsub.s32 %v2484, %v2486
      %v2488 = vrot.slane %v2464, %v2487
      %v2489 = vcombine.low %v2465, %v2465
      %v2491 = vunpack.c.l.s4 1983009808
      %v2492 = vunpack.c.0.s8 %v2491
      %v2493 = vlaneseq
      %v2494 = vshrl.u32 %v2493, 7
      %v2495 = vsub.s32 %v2492, %v2494
      %v2496 = vrot.slane %v2489, %v2495
      %v2498 = vunpack.c.l.s4 1983009808
      %v2499 = vunpack.c.0.s8 %v2498
      %v2500 = vlaneseq
      %v2501 = vshrl.u32 %v2500, 7
      %v2502 = vsub.s32 %v2499, %v2501
      %v2503 = vrot.slane %v2465, %v2502
      %v2504 = vcombine.low %v2466, %v2466
      %v2506 = vunpack.c.l.s4 1983009808
      %v2507 = vunpack.c.0.s8 %v2506
      %v2508 = vlaneseq
      %v2509 = vshrl.u32 %v2508, 7
      %v2510 = vsub.s32 %v2507, %v2509
      %v2511 = vrot.slane %v2504, %v2510
      %v2513 = vunpack.c.l.s4 1983009808
      %v2514 = vunpack.c.0.s8 %v2513
      %v2515 = vlaneseq
      %v2516 = vshrl.u32 %v2515, 7
      %v2517 = vsub.s32 %v2514, %v2516
      %v2518 = vrot.slane %v2466, %v2517
      %v2519 = vcombine.low %v2467, %v2467
      %v2521 = vunpack.c.l.s4 1983009808
      %v2522 = vunpack.c.0.s8 %v2521
      %v2523 = vlaneseq
      %v2524 = vshrl.u32 %v2523, 7
      %v2525 = vsub.s32 %v2522, %v2524
      %v2526 = vrot.slane %v2519, %v2525
      %v2528 = vunpack.c.l.s4 1983009808
      %v2529 = vunpack.c.0.s8 %v2528
      %v2530 = vlaneseq
      %v2531 = vshrl.u32 %v2530, 7
      %v2532 = vsub.s32 %v2529, %v2531
      %v2533 = vrot.slane %v2467, %v2532
      %v2534 = vcombine.low %v2468, %v2468
      %v2536 = vunpack.c.l.s4 1983009808
      %v2537 = vunpack.c.0.s8 %v2536
      %v2538 = vlaneseq
      %v2539 = vshrl.u32 %v2538, 7
      %v2540 = vsub.s32 %v2537, %v2539
      %v2541 = vrot.slane %v2534, %v2540
      %v2543 = vunpack.c.l.s4 1983009808
      %v2544 = vunpack.c.0.s8 %v2543
      %v2545 = vlaneseq
      %v2546 = vshrl.u32 %v2545, 7
      %v2547 = vsub.s32 %v2544, %v2546
      %v2548 = vrot.slane %v2468, %v2547
      %2549 = vrot.lane.b32.xlu0 %v2481, 106
      %v2550 = vpop.permute.xlu0 %2549
      %2551 = vrot.lane.b32.xlu0 %v2488, 106
      %v2552 = vpop.permute.xlu0 %2551
      %2553 = vrot.lane.b32.xlu0 %v2496, 106
      %v2554 = vpop.permute.xlu0 %2553
      %2555 = vrot.lane.b32.xlu0 %v2503, 106
      %v2556 = vpop.permute.xlu0 %2555
      %2557 = vrot.lane.b32.xlu0 %v2511, 106
      %v2558 = vpop.permute.xlu0 %2557
      %2559 = vrot.lane.b32.xlu0 %v2518, 106
      %v2560 = vpop.permute.xlu0 %2559
      %2561 = vrot.lane.b32.xlu0 %v2526, 106
      %v2562 = vpop.permute.xlu0 %2561
      %2563 = vrot.lane.b32.xlu0 %v2533, 106
      %v2564 = vpop.permute.xlu0 %2563
      %2565 = vrot.lane.b32.xlu0 %v2541, 106
      %v2566 = vpop.permute.xlu0 %2565
      %2567 = vrot.lane.b32.xlu0 %v2548, 106
      %v2568 = vpop.permute.xlu0 %2567
      %v2569 = vrot.slane %v2550, 4
      %v2570 = vrot.slane %v2552, 4
      %v2571 = vrot.slane %v2554, 4
      %v2572 = vrot.slane %v2556, 4
      %v2573 = vrot.slane %v2558, 4
      %v2574 = vrot.slane %v2560, 4
      %v2575 = vrot.slane %v2562, 4
      %v2576 = vrot.slane %v2564, 4
      %v2577 = vrot.slane %v2566, 4
      %v2578 = vrot.slane %v2568, 4
      %v2579 = vsel %vm483, %v2569, %v2570
      %vm2580 = vcmask 867328
      %v2581 = vsel %vm2580, %v2550, %v2579
      %v2582 = vsel %vm483, %v2570, %v2571
      %v2583 = vsel %vm2580, %v2552, %v2582
      %v2584 = vsel %vm483, %v2571, %v2572
      %v2585 = vsel %vm2580, %v2554, %v2584
      %v2586 = vsel %vm483, %v2572, %v2573
      %v2587 = vsel %vm2580, %v2556, %v2586
      %v2588 = vsel %vm483, %v2573, %v2574
      %v2589 = vsel %vm2580, %v2558, %v2588
      %v2590 = vsel %vm483, %v2574, %v2575
      %v2591 = vsel %vm2580, %v2560, %v2590
      %v2592 = vsel %vm483, %v2575, %v2576
      %v2593 = vsel %vm2580, %v2562, %v2592
      %v2594 = vsel %vm483, %v2576, %v2577
      %v2595 = vsel %vm2580, %v2564, %v2594
      %v2596 = vsel %vm483, %v2577, %v2578
      %v2597 = vsel %vm2580, %v2566, %v2596
      %2607 = vst [vmem:[#allocation2 + $0x1f8] sm:$0xcc] %v2581
      %2608 = vst [vmem:[#allocation2 + $0x200] sm:$0xcc] %v2583
      %2609 = vst [vmem:[#allocation2 + $0x208] sm:$0xcc] %v2585
      %2610 = vst [vmem:[#allocation2 + $0x210] sm:$0xcc] %v2587
      %2611 = vst [vmem:[#allocation2 + $0x218] sm:$0xcc] %v2589
      %2612 = vst [vmem:[#allocation2 + $0x220] sm:$0xcc] %v2591
      %2613 = vst [vmem:[#allocation2 + $0x228] sm:$0xcc] %v2593
      %2614 = vst [vmem:[#allocation2 + $0x230] sm:$0xcc] %v2595
      %2615 = vst.msk [vmem:[#allocation2 + $0x238] sm:$0xcc] %vm521, %v2597
      %v2616 = vld [vmem:[%s273 + $0x2] sm:$0xff]
      %v2617 = vld [vmem:[%s273 + $0xa] sm:$0xff]
      %v2618 = vld [vmem:[%s273 + $0x12] sm:$0xff]
      %v2619 = vld [vmem:[%s273 + $0x1a] sm:$0xff]
      %v2620 = vld [vmem:[%s273 + $0x22] sm:$0x3f]
      %v2626 = vcombine.high %v2616, %v2616
      %v2628 = vunpack.c.l.s4 1983009808
      %v2629 = vunpack.c.0.s8 %v2628
      %v2630 = vlaneseq
      %v2631 = vshrl.u32 %v2630, 7
      %v2632 = vsub.s32 %v2629, %v2631
      %v2633 = vrot.slane %v2616, %v2632
      %v2635 = vunpack.c.l.s4 1983009808
      %v2636 = vunpack.c.0.s8 %v2635
      %v2637 = vlaneseq
      %v2638 = vshrl.u32 %v2637, 7
      %v2639 = vsub.s32 %v2636, %v2638
      %v2640 = vrot.slane %v2626, %v2639
      %v2641 = vcombine.high %v2617, %v2617
      %v2643 = vunpack.c.l.s4 1983009808
      %v2644 = vunpack.c.0.s8 %v2643
      %v2645 = vlaneseq
      %v2646 = vshrl.u32 %v2645, 7
      %v2647 = vsub.s32 %v2644, %v2646
      %v2648 = vrot.slane %v2617, %v2647
      %v2650 = vunpack.c.l.s4 1983009808
      %v2651 = vunpack.c.0.s8 %v2650
      %v2652 = vlaneseq
      %v2653 = vshrl.u32 %v2652, 7
      %v2654 = vsub.s32 %v2651, %v2653
      %v2655 = vrot.slane %v2641, %v2654
      %v2656 = vcombine.high %v2618, %v2618
      %v2658 = vunpack.c.l.s4 1983009808
      %v2659 = vunpack.c.0.s8 %v2658
      %v2660 = vlaneseq
      %v2661 = vshrl.u32 %v2660, 7
      %v2662 = vsub.s32 %v2659, %v2661
      %v2663 = vrot.slane %v2618, %v2662
      %v2665 = vunpack.c.l.s4 1983009808
      %v2666 = vunpack.c.0.s8 %v2665
      %v2667 = vlaneseq
      %v2668 = vshrl.u32 %v2667, 7
      %v2669 = vsub.s32 %v2666, %v2668
      %v2670 = vrot.slane %v2656, %v2669
      %v2671 = vcombine.high %v2619, %v2619
      %v2673 = vunpack.c.l.s4 1983009808
      %v2674 = vunpack.c.0.s8 %v2673
      %v2675 = vlaneseq
      %v2676 = vshrl.u32 %v2675, 7
      %v2677 = vsub.s32 %v2674, %v2676
      %v2678 = vrot.slane %v2619, %v2677
      %v2680 = vunpack.c.l.s4 1983009808
      %v2681 = vunpack.c.0.s8 %v2680
      %v2682 = vlaneseq
      %v2683 = vshrl.u32 %v2682, 7
      %v2684 = vsub.s32 %v2681, %v2683
      %v2685 = vrot.slane %v2671, %v2684
      %v2686 = vcombine.high %v2620, %v2620
      %v2688 = vunpack.c.l.s4 1983009808
      %v2689 = vunpack.c.0.s8 %v2688
      %v2690 = vlaneseq
      %v2691 = vshrl.u32 %v2690, 7
      %v2692 = vsub.s32 %v2689, %v2691
      %v2693 = vrot.slane %v2620, %v2692
      %v2695 = vunpack.c.l.s4 1983009808
      %v2696 = vunpack.c.0.s8 %v2695
      %v2697 = vlaneseq
      %v2698 = vshrl.u32 %v2697, 7
      %v2699 = vsub.s32 %v2696, %v2698
      %v2700 = vrot.slane %v2686, %v2699
      %2701 = vrot.lane.b32.xlu0 %v2633, 105
      %v2702 = vpop.permute.xlu0 %2701
      %2703 = vrot.lane.b32.xlu0 %v2640, 105
      %v2704 = vpop.permute.xlu0 %2703
      %2705 = vrot.lane.b32.xlu0 %v2648, 105
      %v2706 = vpop.permute.xlu0 %2705
      %2707 = vrot.lane.b32.xlu0 %v2655, 105
      %v2708 = vpop.permute.xlu0 %2707
      %2709 = vrot.lane.b32.xlu0 %v2663, 105
      %v2710 = vpop.permute.xlu0 %2709
      %2711 = vrot.lane.b32.xlu0 %v2670, 105
      %v2712 = vpop.permute.xlu0 %2711
      %2713 = vrot.lane.b32.xlu0 %v2678, 105
      %v2714 = vpop.permute.xlu0 %2713
      %2715 = vrot.lane.b32.xlu0 %v2685, 105
      %v2716 = vpop.permute.xlu0 %2715
      %2717 = vrot.lane.b32.xlu0 %v2693, 105
      %v2718 = vpop.permute.xlu0 %2717
      %2719 = vrot.lane.b32.xlu0 %v2700, 105
      %v2720 = vpop.permute.xlu0 %2719
      %v2721 = vrot.slane %v2702, 4
      %v2722 = vrot.slane %v2704, 4
      %v2723 = vrot.slane %v2706, 4
      %v2724 = vrot.slane %v2708, 4
      %v2725 = vrot.slane %v2710, 4
      %v2726 = vrot.slane %v2712, 4
      %v2727 = vrot.slane %v2714, 4
      %v2728 = vrot.slane %v2716, 4
      %v2729 = vrot.slane %v2718, 4
      %v2730 = vrot.slane %v2720, 4
      %v2731 = vsel %vm483, %v2721, %v2722
      %vm2732 = vcmask 859136
      %v2733 = vsel %vm2732, %v2702, %v2731
      %v2734 = vsel %vm483, %v2722, %v2723
      %v2735 = vsel %vm2732, %v2704, %v2734
      %v2736 = vsel %vm483, %v2723, %v2724
      %v2737 = vsel %vm2732, %v2706, %v2736
      %v2738 = vsel %vm483, %v2724, %v2725
      %v2739 = vsel %vm2732, %v2708, %v2738
      %v2740 = vsel %vm483, %v2725, %v2726
      %v2741 = vsel %vm2732, %v2710, %v2740
      %v2742 = vsel %vm483, %v2726, %v2727
      %v2743 = vsel %vm2732, %v2712, %v2742
      %v2744 = vsel %vm483, %v2727, %v2728
      %v2745 = vsel %vm2732, %v2714, %v2744
      %v2746 = vsel %vm483, %v2728, %v2729
      %v2747 = vsel %vm2732, %v2716, %v2746
      %v2748 = vsel %vm483, %v2729, %v2730
      %v2749 = vsel %vm2732, %v2718, %v2748
      %2759 = vst [vmem:[#allocation2 + $0x240] sm:$0x33] %v2733
      %2760 = vst [vmem:[#allocation2 + $0x248] sm:$0x33] %v2735
      %2761 = vst [vmem:[#allocation2 + $0x250] sm:$0x33] %v2737
      %2762 = vst [vmem:[#allocation2 + $0x258] sm:$0x33] %v2739
      %2763 = vst [vmem:[#allocation2 + $0x260] sm:$0x33] %v2741
      %2764 = vst [vmem:[#allocation2 + $0x268] sm:$0x33] %v2743
      %2765 = vst [vmem:[#allocation2 + $0x270] sm:$0x33] %v2745
      %2766 = vst [vmem:[#allocation2 + $0x278] sm:$0x33] %v2747
      %2767 = vst.msk [vmem:[#allocation2 + $0x280] sm:$0x33] %vm376, %v2749
      %v2768 = vld [vmem:[%s273 + $0x2] sm:$0xff]
      %v2769 = vld [vmem:[%s273 + $0xa] sm:$0xff]
      %v2770 = vld [vmem:[%s273 + $0x12] sm:$0xff]
      %v2771 = vld [vmem:[%s273 + $0x1a] sm:$0xff]
      %v2772 = vld [vmem:[%s273 + $0x22] sm:$0x3f]
      %v2778 = vcombine.low %v2768, %v2768
      %v2780 = vunpack.c.l.s4 1983009808
      %v2781 = vunpack.c.0.s8 %v2780
      %v2782 = vlaneseq
      %v2783 = vshrl.u32 %v2782, 7
      %v2784 = vsub.s32 %v2781, %v2783
      %v2785 = vrot.slane %v2778, %v2784
      %v2787 = vunpack.c.l.s4 1983009808
      %v2788 = vunpack.c.0.s8 %v2787
      %v2789 = vlaneseq
      %v2790 = vshrl.u32 %v2789, 7
      %v2791 = vsub.s32 %v2788, %v2790
      %v2792 = vrot.slane %v2768, %v2791
      %v2793 = vcombine.low %v2769, %v2769
      %v2795 = vunpack.c.l.s4 1983009808
      %v2796 = vunpack.c.0.s8 %v2795
      %v2797 = vlaneseq
      %v2798 = vshrl.u32 %v2797, 7
      %v2799 = vsub.s32 %v2796, %v2798
      %v2800 = vrot.slane %v2793, %v2799
      %v2802 = vunpack.c.l.s4 1983009808
      %v2803 = vunpack.c.0.s8 %v2802
      %v2804 = vlaneseq
      %v2805 = vshrl.u32 %v2804, 7
      %v2806 = vsub.s32 %v2803, %v2805
      %v2807 = vrot.slane %v2769, %v2806
      %v2808 = vcombine.low %v2770, %v2770
      %v2810 = vunpack.c.l.s4 1983009808
      %v2811 = vunpack.c.0.s8 %v2810
      %v2812 = vlaneseq
      %v2813 = vshrl.u32 %v2812, 7
      %v2814 = vsub.s32 %v2811, %v2813
      %v2815 = vrot.slane %v2808, %v2814
      %v2817 = vunpack.c.l.s4 1983009808
      %v2818 = vunpack.c.0.s8 %v2817
      %v2819 = vlaneseq
      %v2820 = vshrl.u32 %v2819, 7
      %v2821 = vsub.s32 %v2818, %v2820
      %v2822 = vrot.slane %v2770, %v2821
      %v2823 = vcombine.low %v2771, %v2771
      %v2825 = vunpack.c.l.s4 1983009808
      %v2826 = vunpack.c.0.s8 %v2825
      %v2827 = vlaneseq
      %v2828 = vshrl.u32 %v2827, 7
      %v2829 = vsub.s32 %v2826, %v2828
      %v2830 = vrot.slane %v2823, %v2829
      %v2832 = vunpack.c.l.s4 1983009808
      %v2833 = vunpack.c.0.s8 %v2832
      %v2834 = vlaneseq
      %v2835 = vshrl.u32 %v2834, 7
      %v2836 = vsub.s32 %v2833, %v2835
      %v2837 = vrot.slane %v2771, %v2836
      %v2838 = vcombine.low %v2772, %v2772
      %v2840 = vunpack.c.l.s4 1983009808
      %v2841 = vunpack.c.0.s8 %v2840
      %v2842 = vlaneseq
      %v2843 = vshrl.u32 %v2842, 7
      %v2844 = vsub.s32 %v2841, %v2843
      %v2845 = vrot.slane %v2838, %v2844
      %v2847 = vunpack.c.l.s4 1983009808
      %v2848 = vunpack.c.0.s8 %v2847
      %v2849 = vlaneseq
      %v2850 = vshrl.u32 %v2849, 7
      %v2851 = vsub.s32 %v2848, %v2850
      %v2852 = vrot.slane %v2772, %v2851
      %2853 = vrot.lane.b32.xlu0 %v2785, 104
      %v2854 = vpop.permute.xlu0 %2853
      %2855 = vrot.lane.b32.xlu0 %v2792, 104
      %v2856 = vpop.permute.xlu0 %2855
      %2857 = vrot.lane.b32.xlu0 %v2800, 104
      %v2858 = vpop.permute.xlu0 %2857
      %2859 = vrot.lane.b32.xlu0 %v2807, 104
      %v2860 = vpop.permute.xlu0 %2859
      %2861 = vrot.lane.b32.xlu0 %v2815, 104
      %v2862 = vpop.permute.xlu0 %2861
      %2863 = vrot.lane.b32.xlu0 %v2822, 104
      %v2864 = vpop.permute.xlu0 %2863
      %2865 = vrot.lane.b32.xlu0 %v2830, 104
      %v2866 = vpop.permute.xlu0 %2865
      %2867 = vrot.lane.b32.xlu0 %v2837, 104
      %v2868 = vpop.permute.xlu0 %2867
      %2869 = vrot.lane.b32.xlu0 %v2845, 104
      %v2870 = vpop.permute.xlu0 %2869
      %2871 = vrot.lane.b32.xlu0 %v2852, 104
      %v2872 = vpop.permute.xlu0 %2871
      %v2873 = vrot.slane %v2854, 4
      %v2874 = vrot.slane %v2856, 4
      %v2875 = vrot.slane %v2858, 4
      %v2876 = vrot.slane %v2860, 4
      %v2877 = vrot.slane %v2862, 4
      %v2878 = vrot.slane %v2864, 4
      %v2879 = vrot.slane %v2866, 4
      %v2880 = vrot.slane %v2868, 4
      %v2881 = vrot.slane %v2870, 4
      %v2882 = vrot.slane %v2872, 4
      %v2883 = vsel %vm483, %v2873, %v2874
      %vm2884 = vcmask 850944
      %v2885 = vsel %vm2884, %v2854, %v2883
      %v2886 = vsel %vm483, %v2874, %v2875
      %v2887 = vsel %vm2884, %v2856, %v2886
      %v2888 = vsel %vm483, %v2875, %v2876
      %v2889 = vsel %vm2884, %v2858, %v2888
      %v2890 = vsel %vm483, %v2876, %v2877
      %v2891 = vsel %vm2884, %v2860, %v2890
      %v2892 = vsel %vm483, %v2877, %v2878
      %v2893 = vsel %vm2884, %v2862, %v2892
      %v2894 = vsel %vm483, %v2878, %v2879
      %v2895 = vsel %vm2884, %v2864, %v2894
      %v2896 = vsel %vm483, %v2879, %v2880
      %v2897 = vsel %vm2884, %v2866, %v2896
      %v2898 = vsel %vm483, %v2880, %v2881
      %v2899 = vsel %vm2884, %v2868, %v2898
      %v2900 = vsel %vm483, %v2881, %v2882
      %v2901 = vsel %vm2884, %v2870, %v2900
      %2911 = vst [vmem:[#allocation2 + $0x240] sm:$0xcc] %v2885
      %2912 = vst [vmem:[#allocation2 + $0x248] sm:$0xcc] %v2887
      %2913 = vst [vmem:[#allocation2 + $0x250] sm:$0xcc] %v2889
      %2914 = vst [vmem:[#allocation2 + $0x258] sm:$0xcc] %v2891
      %2915 = vst [vmem:[#allocation2 + $0x260] sm:$0xcc] %v2893
      %2916 = vst [vmem:[#allocation2 + $0x268] sm:$0xcc] %v2895
      %2917 = vst [vmem:[#allocation2 + $0x270] sm:$0xcc] %v2897
      %2918 = vst [vmem:[#allocation2 + $0x278] sm:$0xcc] %v2899
      %2919 = vst.msk [vmem:[#allocation2 + $0x280] sm:$0xcc] %vm521, %v2901
      %v2920 = vld [vmem:[%s273 + $0x2] sm:$0xff]
      %v2921 = vld [vmem:[%s273 + $0xa] sm:$0xff]
      %v2922 = vld [vmem:[%s273 + $0x12] sm:$0xff]
      %v2923 = vld [vmem:[%s273 + $0x1a] sm:$0xff]
      %v2924 = vld [vmem:[%s273 + $0x22] sm:$0x3f]
      %v2930 = vcombine.high %v2920, %v2920
      %v2932 = vunpack.c.l.s4 1983009808
      %v2933 = vunpack.c.0.s8 %v2932
      %v2934 = vlaneseq
      %v2935 = vshrl.u32 %v2934, 7
      %v2936 = vsub.s32 %v2933, %v2935
      %v2937 = vrot.slane %v2920, %v2936
      %v2939 = vunpack.c.l.s4 1983009808
      %v2940 = vunpack.c.0.s8 %v2939
      %v2941 = vlaneseq
      %v2942 = vshrl.u32 %v2941, 7
      %v2943 = vsub.s32 %v2940, %v2942
      %v2944 = vrot.slane %v2930, %v2943
      %v2945 = vcombine.high %v2921, %v2921
      %v2947 = vunpack.c.l.s4 1983009808
      %v2948 = vunpack.c.0.s8 %v2947
      %v2949 = vlaneseq
      %v2950 = vshrl.u32 %v2949, 7
      %v2951 = vsub.s32 %v2948, %v2950
      %v2952 = vrot.slane %v2921, %v2951
      %v2954 = vunpack.c.l.s4 1983009808
      %v2955 = vunpack.c.0.s8 %v2954
      %v2956 = vlaneseq
      %v2957 = vshrl.u32 %v2956, 7
      %v2958 = vsub.s32 %v2955, %v2957
      %v2959 = vrot.slane %v2945, %v2958
      %v2960 = vcombine.high %v2922, %v2922
      %v2962 = vunpack.c.l.s4 1983009808
      %v2963 = vunpack.c.0.s8 %v2962
      %v2964 = vlaneseq
      %v2965 = vshrl.u32 %v2964, 7
      %v2966 = vsub.s32 %v2963, %v2965
      %v2967 = vrot.slane %v2922, %v2966
      %v2969 = vunpack.c.l.s4 1983009808
      %v2970 = vunpack.c.0.s8 %v2969
      %v2971 = vlaneseq
      %v2972 = vshrl.u32 %v2971, 7
      %v2973 = vsub.s32 %v2970, %v2972
      %v2974 = vrot.slane %v2960, %v2973
      %v2975 = vcombine.high %v2923, %v2923
      %v2977 = vunpack.c.l.s4 1983009808
      %v2978 = vunpack.c.0.s8 %v2977
      %v2979 = vlaneseq
      %v2980 = vshrl.u32 %v2979, 7
      %v2981 = vsub.s32 %v2978, %v2980
      %v2982 = vrot.slane %v2923, %v2981
      %v2984 = vunpack.c.l.s4 1983009808
      %v2985 = vunpack.c.0.s8 %v2984
      %v2986 = vlaneseq
      %v2987 = vshrl.u32 %v2986, 7
      %v2988 = vsub.s32 %v2985, %v2987
      %v2989 = vrot.slane %v2975, %v2988
      %v2990 = vcombine.high %v2924, %v2924
      %v2992 = vunpack.c.l.s4 1983009808
      %v2993 = vunpack.c.0.s8 %v2992
      %v2994 = vlaneseq
      %v2995 = vshrl.u32 %v2994, 7
      %v2996 = vsub.s32 %v2993, %v2995
      %v2997 = vrot.slane %v2924, %v2996
      %v2999 = vunpack.c.l.s4 1983009808
      %v3000 = vunpack.c.0.s8 %v2999
      %v3001 = vlaneseq
      %v3002 = vshrl.u32 %v3001, 7
      %v3003 = vsub.s32 %v3000, %v3002
      %v3004 = vrot.slane %v2990, %v3003
      %3005 = vrot.lane.b32.xlu0 %v2937, 103
      %v3006 = vpop.permute.xlu0 %3005
      %3007 = vrot.lane.b32.xlu0 %v2944, 103
      %v3008 = vpop.permute.xlu0 %3007
      %3009 = vrot.lane.b32.xlu0 %v2952, 103
      %v3010 = vpop.permute.xlu0 %3009
      %3011 = vrot.lane.b32.xlu0 %v2959, 103
      %v3012 = vpop.permute.xlu0 %3011
      %3013 = vrot.lane.b32.xlu0 %v2967, 103
      %v3014 = vpop.permute.xlu0 %3013
      %3015 = vrot.lane.b32.xlu0 %v2974, 103
      %v3016 = vpop.permute.xlu0 %3015
      %3017 = vrot.lane.b32.xlu0 %v2982, 103
      %v3018 = vpop.permute.xlu0 %3017
      %3019 = vrot.lane.b32.xlu0 %v2989, 103
      %v3020 = vpop.permute.xlu0 %3019
      %3021 = vrot.lane.b32.xlu0 %v2997, 103
      %v3022 = vpop.permute.xlu0 %3021
      %3023 = vrot.lane.b32.xlu0 %v3004, 103
      %v3024 = vpop.permute.xlu0 %3023
      %v3025 = vrot.slane %v3006, 4
      %v3026 = vrot.slane %v3008, 4
      %v3027 = vrot.slane %v3010, 4
      %v3028 = vrot.slane %v3012, 4
      %v3029 = vrot.slane %v3014, 4
      %v3030 = vrot.slane %v3016, 4
      %v3031 = vrot.slane %v3018, 4
      %v3032 = vrot.slane %v3020, 4
      %v3033 = vrot.slane %v3022, 4
      %v3034 = vrot.slane %v3024, 4
      %v3035 = vsel %vm483, %v3025, %v3026
      %vm3036 = vcmask 842752
      %v3037 = vsel %vm3036, %v3006, %v3035
      %v3038 = vsel %vm483, %v3026, %v3027
      %v3039 = vsel %vm3036, %v3008, %v3038
      %v3040 = vsel %vm483, %v3027, %v3028
      %v3041 = vsel %vm3036, %v3010, %v3040
      %v3042 = vsel %vm483, %v3028, %v3029
      %v3043 = vsel %vm3036, %v3012, %v3042
      %v3044 = vsel %vm483, %v3029, %v3030
      %v3045 = vsel %vm3036, %v3014, %v3044
      %v3046 = vsel %vm483, %v3030, %v3031
      %v3047 = vsel %vm3036, %v3016, %v3046
      %v3048 = vsel %vm483, %v3031, %v3032
      %v3049 = vsel %vm3036, %v3018, %v3048
      %v3050 = vsel %vm483, %v3032, %v3033
      %v3051 = vsel %vm3036, %v3020, %v3050
      %v3052 = vsel %vm483, %v3033, %v3034
      %v3053 = vsel %vm3036, %v3022, %v3052
      %3063 = vst [vmem:[#allocation2 + $0x288] sm:$0x33] %v3037
      %3064 = vst [vmem:[#allocation2 + $0x290] sm:$0x33] %v3039
      %3065 = vst [vmem:[#allocation2 + $0x298] sm:$0x33] %v3041
      %3066 = vst [vmem:[#allocation2 + $0x2a0] sm:$0x33] %v3043
      %3067 = vst [vmem:[#allocation2 + $0x2a8] sm:$0x33] %v3045
      %3068 = vst [vmem:[#allocation2 + $0x2b0] sm:$0x33] %v3047
      %3069 = vst [vmem:[#allocation2 + $0x2b8] sm:$0x33] %v3049
      %3070 = vst [vmem:[#allocation2 + $0x2c0] sm:$0x33] %v3051
      %3071 = vst.msk [vmem:[#allocation2 + $0x2c8] sm:$0x33] %vm376, %v3053
      %v3072 = vld [vmem:[%s273 + $0x2] sm:$0xff]
      %v3073 = vld [vmem:[%s273 + $0xa] sm:$0xff]
      %v3074 = vld [vmem:[%s273 + $0x12] sm:$0xff]
      %v3075 = vld [vmem:[%s273 + $0x1a] sm:$0xff]
      %v3076 = vld [vmem:[%s273 + $0x22] sm:$0x3f]
      %v3082 = vcombine.low %v3072, %v3072
      %v3084 = vunpack.c.l.s4 1983009808
      %v3085 = vunpack.c.0.s8 %v3084
      %v3086 = vlaneseq
      %v3087 = vshrl.u32 %v3086, 7
      %v3088 = vsub.s32 %v3085, %v3087
      %v3089 = vrot.slane %v3082, %v3088
      %v3091 = vunpack.c.l.s4 1983009808
      %v3092 = vunpack.c.0.s8 %v3091
      %v3093 = vlaneseq
      %v3094 = vshrl.u32 %v3093, 7
      %v3095 = vsub.s32 %v3092, %v3094
      %v3096 = vrot.slane %v3072, %v3095
      %v3097 = vcombine.low %v3073, %v3073
      %v3099 = vunpack.c.l.s4 1983009808
      %v3100 = vunpack.c.0.s8 %v3099
      %v3101 = vlaneseq
      %v3102 = vshrl.u32 %v3101, 7
      %v3103 = vsub.s32 %v3100, %v3102
      %v3104 = vrot.slane %v3097, %v3103
      %v3106 = vunpack.c.l.s4 1983009808
      %v3107 = vunpack.c.0.s8 %v3106
      %v3108 = vlaneseq
      %v3109 = vshrl.u32 %v3108, 7
      %v3110 = vsub.s32 %v3107, %v3109
      %v3111 = vrot.slane %v3073, %v3110
      %v3112 = vcombine.low %v3074, %v3074
      %v3114 = vunpack.c.l.s4 1983009808
      %v3115 = vunpack.c.0.s8 %v3114
      %v3116 = vlaneseq
      %v3117 = vshrl.u32 %v3116, 7
      %v3118 = vsub.s32 %v3115, %v3117
      %v3119 = vrot.slane %v3112, %v3118
      %v3121 = vunpack.c.l.s4 1983009808
      %v3122 = vunpack.c.0.s8 %v3121
      %v3123 = vlaneseq
      %v3124 = vshrl.u32 %v3123, 7
      %v3125 = vsub.s32 %v3122, %v3124
      %v3126 = vrot.slane %v3074, %v3125
      %v3127 = vcombine.low %v3075, %v3075
      %v3129 = vunpack.c.l.s4 1983009808
      %v3130 = vunpack.c.0.s8 %v3129
      %v3131 = vlaneseq
      %v3132 = vshrl.u32 %v3131, 7
      %v3133 = vsub.s32 %v3130, %v3132
      %v3134 = vrot.slane %v3127, %v3133
      %v3136 = vunpack.c.l.s4 1983009808
      %v3137 = vunpack.c.0.s8 %v3136
      %v3138 = vlaneseq
      %v3139 = vshrl.u32 %v3138, 7
      %v3140 = vsub.s32 %v3137, %v3139
      %v3141 = vrot.slane %v3075, %v3140
      %v3142 = vcombine.low %v3076, %v3076
      %v3144 = vunpack.c.l.s4 1983009808
      %v3145 = vunpack.c.0.s8 %v3144
      %v3146 = vlaneseq
      %v3147 = vshrl.u32 %v3146, 7
      %v3148 = vsub.s32 %v3145, %v3147
      %v3149 = vrot.slane %v3142, %v3148
      %v3151 = vunpack.c.l.s4 1983009808
      %v3152 = vunpack.c.0.s8 %v3151
      %v3153 = vlaneseq
      %v3154 = vshrl.u32 %v3153, 7
      %v3155 = vsub.s32 %v3152, %v3154
      %v3156 = vrot.slane %v3076, %v3155
      %3157 = vrot.lane.b32.xlu0 %v3089, 102
      %v3158 = vpop.permute.xlu0 %3157
      %3159 = vrot.lane.b32.xlu0 %v3096, 102
      %v3160 = vpop.permute.xlu0 %3159
      %3161 = vrot.lane.b32.xlu0 %v3104, 102
      %v3162 = vpop.permute.xlu0 %3161
      %3163 = vrot.lane.b32.xlu0 %v3111, 102
      %v3164 = vpop.permute.xlu0 %3163
      %3165 = vrot.lane.b32.xlu0 %v3119, 102
      %v3166 = vpop.permute.xlu0 %3165
      %3167 = vrot.lane.b32.xlu0 %v3126, 102
      %v3168 = vpop.permute.xlu0 %3167
      %3169 = vrot.lane.b32.xlu0 %v3134, 102
      %v3170 = vpop.permute.xlu0 %3169
      %3171 = vrot.lane.b32.xlu0 %v3141, 102
      %v3172 = vpop.permute.xlu0 %3171
      %3173 = vrot.lane.b32.xlu0 %v3149, 102
      %v3174 = vpop.permute.xlu0 %3173
      %3175 = vrot.lane.b32.xlu0 %v3156, 102
      %v3176 = vpop.permute.xlu0 %3175
      %v3177 = vrot.slane %v3158, 4
      %v3178 = vrot.slane %v3160, 4
      %v3179 = vrot.slane %v3162, 4
      %v3180 = vrot.slane %v3164, 4
      %v3181 = vrot.slane %v3166, 4
      %v3182 = vrot.slane %v3168, 4
      %v3183 = vrot.slane %v3170, 4
      %v3184 = vrot.slane %v3172, 4
      %v3185 = vrot.slane %v3174, 4
      %v3186 = vrot.slane %v3176, 4
      %v3187 = vsel %vm483, %v3177, %v3178
      %vm3188 = vcmask 834560
      %v3189 = vsel %vm3188, %v3158, %v3187
      %v3190 = vsel %vm483, %v3178, %v3179
      %v3191 = vsel %vm3188, %v3160, %v3190
      %v3192 = vsel %vm483, %v3179, %v3180
      %v3193 = vsel %vm3188, %v3162, %v3192
      %v3194 = vsel %vm483, %v3180, %v3181
      %v3195 = vsel %vm3188, %v3164, %v3194
      %v3196 = vsel %vm483, %v3181, %v3182
      %v3197 = vsel %vm3188, %v3166, %v3196
      %v3198 = vsel %vm483, %v3182, %v3183
      %v3199 = vsel %vm3188, %v3168, %v3198
      %v3200 = vsel %vm483, %v3183, %v3184
      %v3201 = vsel %vm3188, %v3170, %v3200
      %v3202 = vsel %vm483, %v3184, %v3185
      %v3203 = vsel %vm3188, %v3172, %v3202
      %v3204 = vsel %vm483, %v3185, %v3186
      %v3205 = vsel %vm3188, %v3174, %v3204
      %3215 = vst [vmem:[#allocation2 + $0x288] sm:$0xcc] %v3189
      %3216 = vst [vmem:[#allocation2 + $0x290] sm:$0xcc] %v3191
      %3217 = vst [vmem:[#allocation2 + $0x298] sm:$0xcc] %v3193
      %3218 = vst [vmem:[#allocation2 + $0x2a0] sm:$0xcc] %v3195
      %3219 = vst [vmem:[#allocation2 + $0x2a8] sm:$0xcc] %v3197
      %3220 = vst [vmem:[#allocation2 + $0x2b0] sm:$0xcc] %v3199
      %3221 = vst [vmem:[#allocation2 + $0x2b8] sm:$0xcc] %v3201
      %3222 = vst [vmem:[#allocation2 + $0x2c0] sm:$0xcc] %v3203
      %3223 = vst.msk [vmem:[#allocation2 + $0x2c8] sm:$0xcc] %vm521, %v3205
      %v3224 = vld [vmem:[%s273 + $0x2] sm:$0xff]
      %v3225 = vld [vmem:[%s273 + $0xa] sm:$0xff]
      %v3226 = vld [vmem:[%s273 + $0x12] sm:$0xff]
      %v3227 = vld [vmem:[%s273 + $0x1a] sm:$0xff]
      %v3228 = vld [vmem:[%s273 + $0x22] sm:$0x3f]
      %v3234 = vcombine.high %v3224, %v3224
      %v3236 = vunpack.c.l.s4 1983009808
      %v3237 = vunpack.c.0.s8 %v3236
      %v3238 = vlaneseq
      %v3239 = vshrl.u32 %v3238, 7
      %v3240 = vsub.s32 %v3237, %v3239
      %v3241 = vrot.slane %v3224, %v3240
      %v3243 = vunpack.c.l.s4 1983009808
      %v3244 = vunpack.c.0.s8 %v3243
      %v3245 = vlaneseq
      %v3246 = vshrl.u32 %v3245, 7
      %v3247 = vsub.s32 %v3244, %v3246
      %v3248 = vrot.slane %v3234, %v3247
      %v3249 = vcombine.high %v3225, %v3225
      %v3251 = vunpack.c.l.s4 1983009808
      %v3252 = vunpack.c.0.s8 %v3251
      %v3253 = vlaneseq
      %v3254 = vshrl.u32 %v3253, 7
      %v3255 = vsub.s32 %v3252, %v3254
      %v3256 = vrot.slane %v3225, %v3255
      %v3258 = vunpack.c.l.s4 1983009808
      %v3259 = vunpack.c.0.s8 %v3258
      %v3260 = vlaneseq
      %v3261 = vshrl.u32 %v3260, 7
      %v3262 = vsub.s32 %v3259, %v3261
      %v3263 = vrot.slane %v3249, %v3262
      %v3264 = vcombine.high %v3226, %v3226
      %v3266 = vunpack.c.l.s4 1983009808
      %v3267 = vunpack.c.0.s8 %v3266
      %v3268 = vlaneseq
      %v3269 = vshrl.u32 %v3268, 7
      %v3270 = vsub.s32 %v3267, %v3269
      %v3271 = vrot.slane %v3226, %v3270
      %v3273 = vunpack.c.l.s4 1983009808
      %v3274 = vunpack.c.0.s8 %v3273
      %v3275 = vlaneseq
      %v3276 = vshrl.u32 %v3275, 7
      %v3277 = vsub.s32 %v3274, %v3276
      %v3278 = vrot.slane %v3264, %v3277
      %v3279 = vcombine.high %v3227, %v3227
      %v3281 = vunpack.c.l.s4 1983009808
      %v3282 = vunpack.c.0.s8 %v3281
      %v3283 = vlaneseq
      %v3284 = vshrl.u32 %v3283, 7
      %v3285 = vsub.s32 %v3282, %v3284
      %v3286 = vrot.slane %v3227, %v3285
      %v3288 = vunpack.c.l.s4 1983009808
      %v3289 = vunpack.c.0.s8 %v3288
      %v3290 = vlaneseq
      %v3291 = vshrl.u32 %v3290, 7
      %v3292 = vsub.s32 %v3289, %v3291
      %v3293 = vrot.slane %v3279, %v3292
      %v3294 = vcombine.high %v3228, %v3228
      %v3296 = vunpack.c.l.s4 1983009808
      %v3297 = vunpack.c.0.s8 %v3296
      %v3298 = vlaneseq
      %v3299 = vshrl.u32 %v3298, 7
      %v3300 = vsub.s32 %v3297, %v3299
      %v3301 = vrot.slane %v3228, %v3300
      %v3303 = vunpack.c.l.s4 1983009808
      %v3304 = vunpack.c.0.s8 %v3303
      %v3305 = vlaneseq
      %v3306 = vshrl.u32 %v3305, 7
      %v3307 = vsub.s32 %v3304, %v3306
      %v3308 = vrot.slane %v3294, %v3307
      %3309 = vrot.lane.b32.xlu0 %v3241, 56
      %v3310 = vpop.permute.xlu0 %3309
      %3311 = vrot.lane.b32.xlu0 %v3248, 56
      %v3312 = vpop.permute.xlu0 %3311
      %3313 = vrot.lane.b32.xlu0 %v3256, 56
      %v3314 = vpop.permute.xlu0 %3313
      %3315 = vrot.lane.b32.xlu0 %v3263, 56
      %v3316 = vpop.permute.xlu0 %3315
      %3317 = vrot.lane.b32.xlu0 %v3271, 56
      %v3318 = vpop.permute.xlu0 %3317
      %3319 = vrot.lane.b32.xlu0 %v3278, 56
      %v3320 = vpop.permute.xlu0 %3319
      %3321 = vrot.lane.b32.xlu0 %v3286, 56
      %v3322 = vpop.permute.xlu0 %3321
      %3323 = vrot.lane.b32.xlu0 %v3293, 56
      %v3324 = vpop.permute.xlu0 %3323
      %3325 = vrot.lane.b32.xlu0 %v3301, 56
      %v3326 = vpop.permute.xlu0 %3325
      %3327 = vrot.lane.b32.xlu0 %v3308, 56
      %v3328 = vpop.permute.xlu0 %3327
      %v3329 = vrot.slane %v3310, 4
      %v3330 = vrot.slane %v3312, 4
      %v3331 = vrot.slane %v3314, 4
      %v3332 = vrot.slane %v3316, 4
      %v3333 = vrot.slane %v3318, 4
      %v3334 = vrot.slane %v3320, 4
      %v3335 = vrot.slane %v3322, 4
      %v3336 = vrot.slane %v3324, 4
      %v3337 = vrot.slane %v3326, 4
      %v3338 = vrot.slane %v3328, 4
      %v3339 = vsel %vm483, %v3329, %v3330
      %vm3340 = vcmask 457728
      %v3341 = vsel %vm3340, %v3310, %v3339
      %v3342 = vsel %vm483, %v3330, %v3331
      %v3343 = vsel %vm3340, %v3312, %v3342
      %v3344 = vsel %vm483, %v3331, %v3332
      %v3345 = vsel %vm3340, %v3314, %v3344
      %v3346 = vsel %vm483, %v3332, %v3333
      %v3347 = vsel %vm3340, %v3316, %v3346
      %v3348 = vsel %vm483, %v3333, %v3334
      %v3349 = vsel %vm3340, %v3318, %v3348
      %v3350 = vsel %vm483, %v3334, %v3335
      %v3351 = vsel %vm3340, %v3320, %v3350
      %v3352 = vsel %vm483, %v3335, %v3336
      %v3353 = vsel %vm3340, %v3322, %v3352
      %v3354 = vsel %vm483, %v3336, %v3337
      %v3355 = vsel %vm3340, %v3324, %v3354
      %v3356 = vsel %vm483, %v3337, %v3338
      %v3357 = vsel %vm3340, %v3326, %v3356
      %3367 = vst [vmem:[#allocation2 + $0x2d0] sm:$0x33] %v3341
      %3368 = vst [vmem:[#allocation2 + $0x2d8] sm:$0x33] %v3343
      %3369 = vst [vmem:[#allocation2 + $0x2e0] sm:$0x33] %v3345
      %3370 = vst [vmem:[#allocation2 + $0x2e8] sm:$0x33] %v3347
      %3371 = vst [vmem:[#allocation2 + $0x2f0] sm:$0x33] %v3349
      %3372 = vst [vmem:[#allocation2 + $0x2f8] sm:$0x33] %v3351
      %3373 = vst [vmem:[#allocation2 + $0x300] sm:$0x33] %v3353
      %3374 = vst [vmem:[#allocation2 + $0x308] sm:$0x33] %v3355
      %3375 = vst.msk [vmem:[#allocation2 + $0x310] sm:$0x33] %vm376, %v3357
      %v3376 = vld [vmem:[%s273 + $0x2] sm:$0xff]
      %v3377 = vld [vmem:[%s273 + $0xa] sm:$0xff]
      %v3378 = vld [vmem:[%s273 + $0x12] sm:$0xff]
      %v3379 = vld [vmem:[%s273 + $0x1a] sm:$0xff]
      %v3380 = vld [vmem:[%s273 + $0x22] sm:$0x3f]
      %v3386 = vcombine.low %v3376, %v3376
      %v3388 = vunpack.c.l.s4 1983009808
      %v3389 = vunpack.c.0.s8 %v3388
      %v3390 = vlaneseq
      %v3391 = vshrl.u32 %v3390, 7
      %v3392 = vsub.s32 %v3389, %v3391
      %v3393 = vrot.slane %v3386, %v3392
      %v3395 = vunpack.c.l.s4 1983009808
      %v3396 = vunpack.c.0.s8 %v3395
      %v3397 = vlaneseq
      %v3398 = vshrl.u32 %v3397, 7
      %v3399 = vsub.s32 %v3396, %v3398
      %v3400 = vrot.slane %v3376, %v3399
      %v3401 = vcombine.low %v3377, %v3377
      %v3403 = vunpack.c.l.s4 1983009808
      %v3404 = vunpack.c.0.s8 %v3403
      %v3405 = vlaneseq
      %v3406 = vshrl.u32 %v3405, 7
      %v3407 = vsub.s32 %v3404, %v3406
      %v3408 = vrot.slane %v3401, %v3407
      %v3410 = vunpack.c.l.s4 1983009808
      %v3411 = vunpack.c.0.s8 %v3410
      %v3412 = vlaneseq
      %v3413 = vshrl.u32 %v3412, 7
      %v3414 = vsub.s32 %v3411, %v3413
      %v3415 = vrot.slane %v3377, %v3414
      %v3416 = vcombine.low %v3378, %v3378
      %v3418 = vunpack.c.l.s4 1983009808
      %v3419 = vunpack.c.0.s8 %v3418
      %v3420 = vlaneseq
      %v3421 = vshrl.u32 %v3420, 7
      %v3422 = vsub.s32 %v3419, %v3421
      %v3423 = vrot.slane %v3416, %v3422
      %v3425 = vunpack.c.l.s4 1983009808
      %v3426 = vunpack.c.0.s8 %v3425
      %v3427 = vlaneseq
      %v3428 = vshrl.u32 %v3427, 7
      %v3429 = vsub.s32 %v3426, %v3428
      %v3430 = vrot.slane %v3378, %v3429
      %v3431 = vcombine.low %v3379, %v3379
      %v3433 = vunpack.c.l.s4 1983009808
      %v3434 = vunpack.c.0.s8 %v3433
      %v3435 = vlaneseq
      %v3436 = vshrl.u32 %v3435, 7
      %v3437 = vsub.s32 %v3434, %v3436
      %v3438 = vrot.slane %v3431, %v3437
      %v3440 = vunpack.c.l.s4 1983009808
      %v3441 = vunpack.c.0.s8 %v3440
      %v3442 = vlaneseq
      %v3443 = vshrl.u32 %v3442, 7
      %v3444 = vsub.s32 %v3441, %v3443
      %v3445 = vrot.slane %v3379, %v3444
      %v3446 = vcombine.low %v3380, %v3380
      %v3448 = vunpack.c.l.s4 1983009808
      %v3449 = vunpack.c.0.s8 %v3448
      %v3450 = vlaneseq
      %v3451 = vshrl.u32 %v3450, 7
      %v3452 = vsub.s32 %v3449, %v3451
      %v3453 = vrot.slane %v3446, %v3452
      %v3455 = vunpack.c.l.s4 1983009808
      %v3456 = vunpack.c.0.s8 %v3455
      %v3457 = vlaneseq
      %v3458 = vshrl.u32 %v3457, 7
      %v3459 = vsub.s32 %v3456, %v3458
      %v3460 = vrot.slane %v3380, %v3459
      %3461 = vrot.lane.b32.xlu0 %v3393, 55
      %v3462 = vpop.permute.xlu0 %3461
      %3463 = vrot.lane.b32.xlu0 %v3400, 55
      %v3464 = vpop.permute.xlu0 %3463
      %3465 = vrot.lane.b32.xlu0 %v3408, 55
      %v3466 = vpop.permute.xlu0 %3465
      %3467 = vrot.lane.b32.xlu0 %v3415, 55
      %v3468 = vpop.permute.xlu0 %3467
      %3469 = vrot.lane.b32.xlu0 %v3423, 55
      %v3470 = vpop.permute.xlu0 %3469
      %3471 = vrot.lane.b32.xlu0 %v3430, 55
      %v3472 = vpop.permute.xlu0 %3471
      %3473 = vrot.lane.b32.xlu0 %v3438, 55
      %v3474 = vpop.permute.xlu0 %3473
      %3475 = vrot.lane.b32.xlu0 %v3445, 55
      %v3476 = vpop.permute.xlu0 %3475
      %3477 = vrot.lane.b32.xlu0 %v3453, 55
      %v3478 = vpop.permute.xlu0 %3477
      %3479 = vrot.lane.b32.xlu0 %v3460, 55
      %v3480 = vpop.permute.xlu0 %3479
      %v3481 = vrot.slane %v3462, 4
      %v3482 = vrot.slane %v3464, 4
      %v3483 = vrot.slane %v3466, 4
      %v3484 = vrot.slane %v3468, 4
      %v3485 = vrot.slane %v3470, 4
      %v3486 = vrot.slane %v3472, 4
      %v3487 = vrot.slane %v3474, 4
      %v3488 = vrot.slane %v3476, 4
      %v3489 = vrot.slane %v3478, 4
      %v3490 = vrot.slane %v3480, 4
      %v3491 = vsel %vm483, %v3481, %v3482
      %vm3492 = vcmask 449536
      %v3493 = vsel %vm3492, %v3462, %v3491
      %v3494 = vsel %vm483, %v3482, %v3483
      %v3495 = vsel %vm3492, %v3464, %v3494
      %v3496 = vsel %vm483, %v3483, %v3484
      %v3497 = vsel %vm3492, %v3466, %v3496
      %v3498 = vsel %vm483, %v3484, %v3485
      %v3499 = vsel %vm3492, %v3468, %v3498
      %v3500 = vsel %vm483, %v3485, %v3486
      %v3501 = vsel %vm3492, %v3470, %v3500
      %v3502 = vsel %vm483, %v3486, %v3487
      %v3503 = vsel %vm3492, %v3472, %v3502
      %v3504 = vsel %vm483, %v3487, %v3488
      %v3505 = vsel %vm3492, %v3474, %v3504
      %v3506 = vsel %vm483, %v3488, %v3489
      %v3507 = vsel %vm3492, %v3476, %v3506
      %v3508 = vsel %vm483, %v3489, %v3490
      %v3509 = vsel %vm3492, %v3478, %v3508
      %3519 = vst [vmem:[#allocation2 + $0x2d0] sm:$0xcc] %v3493
      %3520 = vst [vmem:[#allocation2 + $0x2d8] sm:$0xcc] %v3495
      %3521 = vst [vmem:[#allocation2 + $0x2e0] sm:$0xcc] %v3497
      %3522 = vst [vmem:[#allocation2 + $0x2e8] sm:$0xcc] %v3499
      %3523 = vst [vmem:[#allocation2 + $0x2f0] sm:$0xcc] %v3501
      %3524 = vst [vmem:[#allocation2 + $0x2f8] sm:$0xcc] %v3503
      %3525 = vst [vmem:[#allocation2 + $0x300] sm:$0xcc] %v3505
      %3526 = vst [vmem:[#allocation2 + $0x308] sm:$0xcc] %v3507
      %3527 = vst.msk [vmem:[#allocation2 + $0x310] sm:$0xcc] %vm521, %v3509
      %v3528 = vld [vmem:[%s273 + $0x2] sm:$0xff]
      %v3529 = vld [vmem:[%s273 + $0xa] sm:$0xff]
      %v3530 = vld [vmem:[%s273 + $0x12] sm:$0xff]
      %v3531 = vld [vmem:[%s273 + $0x1a] sm:$0xff]
      %v3532 = vld [vmem:[%s273 + $0x22] sm:$0x3f]
      %v3538 = vcombine.high %v3528, %v3528
      %v3540 = vunpack.c.l.s4 1983009808
      %v3541 = vunpack.c.0.s8 %v3540
      %v3542 = vlaneseq
      %v3543 = vshrl.u32 %v3542, 7
      %v3544 = vsub.s32 %v3541, %v3543
      %v3545 = vrot.slane %v3528, %v3544
      %v3547 = vunpack.c.l.s4 1983009808
      %v3548 = vunpack.c.0.s8 %v3547
      %v3549 = vlaneseq
      %v3550 = vshrl.u32 %v3549, 7
      %v3551 = vsub.s32 %v3548, %v3550
      %v3552 = vrot.slane %v3538, %v3551
      %v3553 = vcombine.high %v3529, %v3529
      %v3555 = vunpack.c.l.s4 1983009808
      %v3556 = vunpack.c.0.s8 %v3555
      %v3557 = vlaneseq
      %v3558 = vshrl.u32 %v3557, 7
      %v3559 = vsub.s32 %v3556, %v3558
      %v3560 = vrot.slane %v3529, %v3559
      %v3562 = vunpack.c.l.s4 1983009808
      %v3563 = vunpack.c.0.s8 %v3562
      %v3564 = vlaneseq
      %v3565 = vshrl.u32 %v3564, 7
      %v3566 = vsub.s32 %v3563, %v3565
      %v3567 = vrot.slane %v3553, %v3566
      %v3568 = vcombine.high %v3530, %v3530
      %v3570 = vunpack.c.l.s4 1983009808
      %v3571 = vunpack.c.0.s8 %v3570
      %v3572 = vlaneseq
      %v3573 = vshrl.u32 %v3572, 7
      %v3574 = vsub.s32 %v3571, %v3573
      %v3575 = vrot.slane %v3530, %v3574
      %v3577 = vunpack.c.l.s4 1983009808
      %v3578 = vunpack.c.0.s8 %v3577
      %v3579 = vlaneseq
      %v3580 = vshrl.u32 %v3579, 7
      %v3581 = vsub.s32 %v3578, %v3580
      %v3582 = vrot.slane %v3568, %v3581
      %v3583 = vcombine.high %v3531, %v3531
      %v3585 = vunpack.c.l.s4 1983009808
      %v3586 = vunpack.c.0.s8 %v3585
      %v3587 = vlaneseq
      %v3588 = vshrl.u32 %v3587, 7
      %v3589 = vsub.s32 %v3586, %v3588
      %v3590 = vrot.slane %v3531, %v3589
      %v3592 = vunpack.c.l.s4 1983009808
      %v3593 = vunpack.c.0.s8 %v3592
      %v3594 = vlaneseq
      %v3595 = vshrl.u32 %v3594, 7
      %v3596 = vsub.s32 %v3593, %v3595
      %v3597 = vrot.slane %v3583, %v3596
      %v3598 = vcombine.high %v3532, %v3532
      %v3600 = vunpack.c.l.s4 1983009808
      %v3601 = vunpack.c.0.s8 %v3600
      %v3602 = vlaneseq
      %v3603 = vshrl.u32 %v3602, 7
      %v3604 = vsub.s32 %v3601, %v3603
      %v3605 = vrot.slane %v3532, %v3604
      %v3607 = vunpack.c.l.s4 1983009808
      %v3608 = vunpack.c.0.s8 %v3607
      %v3609 = vlaneseq
      %v3610 = vshrl.u32 %v3609, 7
      %v3611 = vsub.s32 %v3608, %v3610
      %v3612 = vrot.slane %v3598, %v3611
      %3613 = vrot.lane.b32.xlu0 %v3545, 54
      %v3614 = vpop.permute.xlu0 %3613
      %3615 = vrot.lane.b32.xlu0 %v3552, 54
      %v3616 = vpop.permute.xlu0 %3615
      %3617 = vrot.lane.b32.xlu0 %v3560, 54
      %v3618 = vpop.permute.xlu0 %3617
      %3619 = vrot.lane.b32.xlu0 %v3567, 54
      %v3620 = vpop.permute.xlu0 %3619
      %3621 = vrot.lane.b32.xlu0 %v3575, 54
      %v3622 = vpop.permute.xlu0 %3621
      %3623 = vrot.lane.b32.xlu0 %v3582, 54
      %v3624 = vpop.permute.xlu0 %3623
      %3625 = vrot.lane.b32.xlu0 %v3590, 54
      %v3626 = vpop.permute.xlu0 %3625
      %3627 = vrot.lane.b32.xlu0 %v3597, 54
      %v3628 = vpop.permute.xlu0 %3627
      %3629 = vrot.lane.b32.xlu0 %v3605, 54
      %v3630 = vpop.permute.xlu0 %3629
      %3631 = vrot.lane.b32.xlu0 %v3612, 54
      %v3632 = vpop.permute.xlu0 %3631
      %v3633 = vrot.slane %v3614, 4
      %v3634 = vrot.slane %v3616, 4
      %v3635 = vrot.slane %v3618, 4
      %v3636 = vrot.slane %v3620, 4
      %v3637 = vrot.slane %v3622, 4
      %v3638 = vrot.slane %v3624, 4
      %v3639 = vrot.slane %v3626, 4
      %v3640 = vrot.slane %v3628, 4
      %v3641 = vrot.slane %v3630, 4
      %v3642 = vrot.slane %v3632, 4
      %v3643 = vsel %vm483, %v3633, %v3634
      %vm3644 = vcmask 441344
      %v3645 = vsel %vm3644, %v3614, %v3643
      %v3646 = vsel %vm483, %v3634, %v3635
      %v3647 = vsel %vm3644, %v3616, %v3646
      %v3648 = vsel %vm483, %v3635, %v3636
      %v3649 = vsel %vm3644, %v3618, %v3648
      %v3650 = vsel %vm483, %v3636, %v3637
      %v3651 = vsel %vm3644, %v3620, %v3650
      %v3652 = vsel %vm483, %v3637, %v3638
      %v3653 = vsel %vm3644, %v3622, %v3652
      %v3654 = vsel %vm483, %v3638, %v3639
      %v3655 = vsel %vm3644, %v3624, %v3654
      %v3656 = vsel %vm483, %v3639, %v3640
      %v3657 = vsel %vm3644, %v3626, %v3656
      %v3658 = vsel %vm483, %v3640, %v3641
      %v3659 = vsel %vm3644, %v3628, %v3658
      %v3660 = vsel %vm483, %v3641, %v3642
      %v3661 = vsel %vm3644, %v3630, %v3660
      %3671 = vst [vmem:[#allocation2 + $0x318] sm:$0x33] %v3645
      %3672 = vst [vmem:[#allocation2 + $0x320] sm:$0x33] %v3647
      %3673 = vst [vmem:[#allocation2 + $0x328] sm:$0x33] %v3649
      %3674 = vst [vmem:[#allocation2 + $0x330] sm:$0x33] %v3651
      %3675 = vst [vmem:[#allocation2 + $0x338] sm:$0x33] %v3653
      %3676 = vst [vmem:[#allocation2 + $0x340] sm:$0x33] %v3655
      %3677 = vst [vmem:[#allocation2 + $0x348] sm:$0x33] %v3657
      %3678 = vst [vmem:[#allocation2 + $0x350] sm:$0x33] %v3659
      %3679 = vst.msk [vmem:[#allocation2 + $0x358] sm:$0x33] %vm376, %v3661
      %v3680 = vld [vmem:[%s273 + $0x2] sm:$0xff]
      %v3681 = vld [vmem:[%s273 + $0xa] sm:$0xff]
      %v3682 = vld [vmem:[%s273 + $0x12] sm:$0xff]
      %v3683 = vld [vmem:[%s273 + $0x1a] sm:$0xff]
      %v3684 = vld [vmem:[%s273 + $0x22] sm:$0x3f]
      %v3690 = vcombine.low %v3680, %v3680
      %v3692 = vunpack.c.l.s4 1983009808
      %v3693 = vunpack.c.0.s8 %v3692
      %v3694 = vlaneseq
      %v3695 = vshrl.u32 %v3694, 7
      %v3696 = vsub.s32 %v3693, %v3695
      %v3697 = vrot.slane %v3690, %v3696
      %v3699 = vunpack.c.l.s4 1983009808
      %v3700 = vunpack.c.0.s8 %v3699
      %v3701 = vlaneseq
      %v3702 = vshrl.u32 %v3701, 7
      %v3703 = vsub.s32 %v3700, %v3702
      %v3704 = vrot.slane %v3680, %v3703
      %v3705 = vcombine.low %v3681, %v3681
      %v3707 = vunpack.c.l.s4 1983009808
      %v3708 = vunpack.c.0.s8 %v3707
      %v3709 = vlaneseq
      %v3710 = vshrl.u32 %v3709, 7
      %v3711 = vsub.s32 %v3708, %v3710
      %v3712 = vrot.slane %v3705, %v3711
      %v3714 = vunpack.c.l.s4 1983009808
      %v3715 = vunpack.c.0.s8 %v3714
      %v3716 = vlaneseq
      %v3717 = vshrl.u32 %v3716, 7
      %v3718 = vsub.s32 %v3715, %v3717
      %v3719 = vrot.slane %v3681, %v3718
      %v3720 = vcombine.low %v3682, %v3682
      %v3722 = vunpack.c.l.s4 1983009808
      %v3723 = vunpack.c.0.s8 %v3722
      %v3724 = vlaneseq
      %v3725 = vshrl.u32 %v3724, 7
      %v3726 = vsub.s32 %v3723, %v3725
      %v3727 = vrot.slane %v3720, %v3726
      %v3729 = vunpack.c.l.s4 1983009808
      %v3730 = vunpack.c.0.s8 %v3729
      %v3731 = vlaneseq
      %v3732 = vshrl.u32 %v3731, 7
      %v3733 = vsub.s32 %v3730, %v3732
      %v3734 = vrot.slane %v3682, %v3733
      %v3735 = vcombine.low %v3683, %v3683
      %v3737 = vunpack.c.l.s4 1983009808
      %v3738 = vunpack.c.0.s8 %v3737
      %v3739 = vlaneseq
      %v3740 = vshrl.u32 %v3739, 7
      %v3741 = vsub.s32 %v3738, %v3740
      %v3742 = vrot.slane %v3735, %v3741
      %v3744 = vunpack.c.l.s4 1983009808
      %v3745 = vunpack.c.0.s8 %v3744
      %v3746 = vlaneseq
      %v3747 = vshrl.u32 %v3746, 7
      %v3748 = vsub.s32 %v3745, %v3747
      %v3749 = vrot.slane %v3683, %v3748
      %v3750 = vcombine.low %v3684, %v3684
      %v3752 = vunpack.c.l.s4 1983009808
      %v3753 = vunpack.c.0.s8 %v3752
      %v3754 = vlaneseq
      %v3755 = vshrl.u32 %v3754, 7
      %v3756 = vsub.s32 %v3753, %v3755
      %v3757 = vrot.slane %v3750, %v3756
      %v3759 = vunpack.c.l.s4 1983009808
      %v3760 = vunpack.c.0.s8 %v3759
      %v3761 = vlaneseq
      %v3762 = vshrl.u32 %v3761, 7
      %v3763 = vsub.s32 %v3760, %v3762
      %v3764 = vrot.slane %v3684, %v3763
      %3765 = vrot.lane.b32.xlu0 %v3697, 53
      %v3766 = vpop.permute.xlu0 %3765
      %3767 = vrot.lane.b32.xlu0 %v3704, 53
      %v3768 = vpop.permute.xlu0 %3767
      %3769 = vrot.lane.b32.xlu0 %v3712, 53
      %v3770 = vpop.permute.xlu0 %3769
      %3771 = vrot.lane.b32.xlu0 %v3719, 53
      %v3772 = vpop.permute.xlu0 %3771
      %3773 = vrot.lane.b32.xlu0 %v3727, 53
      %v3774 = vpop.permute.xlu0 %3773
      %3775 = vrot.lane.b32.xlu0 %v3734, 53
      %v3776 = vpop.permute.xlu0 %3775
      %3777 = vrot.lane.b32.xlu0 %v3742, 53
      %v3778 = vpop.permute.xlu0 %3777
      %3779 = vrot.lane.b32.xlu0 %v3749, 53
      %v3780 = vpop.permute.xlu0 %3779
      %3781 = vrot.lane.b32.xlu0 %v3757, 53
      %v3782 = vpop.permute.xlu0 %3781
      %3783 = vrot.lane.b32.xlu0 %v3764, 53
      %v3784 = vpop.permute.xlu0 %3783
      %v3785 = vrot.slane %v3766, 4
      %v3786 = vrot.slane %v3768, 4
      %v3787 = vrot.slane %v3770, 4
      %v3788 = vrot.slane %v3772, 4
      %v3789 = vrot.slane %v3774, 4
      %v3790 = vrot.slane %v3776, 4
      %v3791 = vrot.slane %v3778, 4
      %v3792 = vrot.slane %v3780, 4
      %v3793 = vrot.slane %v3782, 4
      %v3794 = vrot.slane %v3784, 4
      %v3795 = vsel %vm483, %v3785, %v3786
      %vm3796 = vcmask 433152
      %v3797 = vsel %vm3796, %v3766, %v3795
      %v3798 = vsel %vm483, %v3786, %v3787
      %v3799 = vsel %vm3796, %v3768, %v3798
      %v3800 = vsel %vm483, %v3787, %v3788
      %v3801 = vsel %vm3796, %v3770, %v3800
      %v3802 = vsel %vm483, %v3788, %v3789
      %v3803 = vsel %vm3796, %v3772, %v3802
      %v3804 = vsel %vm483, %v3789, %v3790
      %v3805 = vsel %vm3796, %v3774, %v3804
      %v3806 = vsel %vm483, %v3790, %v3791
      %v3807 = vsel %vm3796, %v3776, %v3806
      %v3808 = vsel %vm483, %v3791, %v3792
      %v3809 = vsel %vm3796, %v3778, %v3808
      %v3810 = vsel %vm483, %v3792, %v3793
      %v3811 = vsel %vm3796, %v3780, %v3810
      %v3812 = vsel %vm483, %v3793, %v3794
      %v3813 = vsel %vm3796, %v3782, %v3812
      %3823 = vst [vmem:[#allocation2 + $0x318] sm:$0xcc] %v3797
      %3824 = vst [vmem:[#allocation2 + $0x320] sm:$0xcc] %v3799
      %3825 = vst [vmem:[#allocation2 + $0x328] sm:$0xcc] %v3801
      %3826 = vst [vmem:[#allocation2 + $0x330] sm:$0xcc] %v3803
      %3827 = vst [vmem:[#allocation2 + $0x338] sm:$0xcc] %v3805
      %3828 = vst [vmem:[#allocation2 + $0x340] sm:$0xcc] %v3807
      %3829 = vst [vmem:[#allocation2 + $0x348] sm:$0xcc] %v3809
      %3830 = vst [vmem:[#allocation2 + $0x350] sm:$0xcc] %v3811
      %3831 = vst.msk [vmem:[#allocation2 + $0x358] sm:$0xcc] %vm521, %v3813
      %v3832 = vld [vmem:[%s273 + $0x2] sm:$0xff]
      %v3833 = vld [vmem:[%s273 + $0xa] sm:$0xff]
      %v3834 = vld [vmem:[%s273 + $0x12] sm:$0xff]
      %v3835 = vld [vmem:[%s273 + $0x1a] sm:$0xff]
      %v3836 = vld [vmem:[%s273 + $0x22] sm:$0x3f]
      %v3842 = vcombine.high %v3832, %v3832
      %v3844 = vunpack.c.l.s4 1983009808
      %v3845 = vunpack.c.0.s8 %v3844
      %v3846 = vlaneseq
      %v3847 = vshrl.u32 %v3846, 7
      %v3848 = vsub.s32 %v3845, %v3847
      %v3849 = vrot.slane %v3832, %v3848
      %v3851 = vunpack.c.l.s4 1983009808
      %v3852 = vunpack.c.0.s8 %v3851
      %v3853 = vlaneseq
      %v3854 = vshrl.u32 %v3853, 7
      %v3855 = vsub.s32 %v3852, %v3854
      %v3856 = vrot.slane %v3842, %v3855
      %v3857 = vcombine.high %v3833, %v3833
      %v3859 = vunpack.c.l.s4 1983009808
      %v3860 = vunpack.c.0.s8 %v3859
      %v3861 = vlaneseq
      %v3862 = vshrl.u32 %v3861, 7
      %v3863 = vsub.s32 %v3860, %v3862
      %v3864 = vrot.slane %v3833, %v3863
      %v3866 = vunpack.c.l.s4 1983009808
      %v3867 = vunpack.c.0.s8 %v3866
      %v3868 = vlaneseq
      %v3869 = vshrl.u32 %v3868, 7
      %v3870 = vsub.s32 %v3867, %v3869
      %v3871 = vrot.slane %v3857, %v3870
      %v3872 = vcombine.high %v3834, %v3834
      %v3874 = vunpack.c.l.s4 1983009808
      %v3875 = vunpack.c.0.s8 %v3874
      %v3876 = vlaneseq
      %v3877 = vshrl.u32 %v3876, 7
      %v3878 = vsub.s32 %v3875, %v3877
      %v3879 = vrot.slane %v3834, %v3878
      %v3881 = vunpack.c.l.s4 1983009808
      %v3882 = vunpack.c.0.s8 %v3881
      %v3883 = vlaneseq
      %v3884 = vshrl.u32 %v3883, 7
      %v3885 = vsub.s32 %v3882, %v3884
      %v3886 = vrot.slane %v3872, %v3885
      %v3887 = vcombine.high %v3835, %v3835
      %v3889 = vunpack.c.l.s4 1983009808
      %v3890 = vunpack.c.0.s8 %v3889
      %v3891 = vlaneseq
      %v3892 = vshrl.u32 %v3891, 7
      %v3893 = vsub.s32 %v3890, %v3892
      %v3894 = vrot.slane %v3835, %v3893
      %v3896 = vunpack.c.l.s4 1983009808
      %v3897 = vunpack.c.0.s8 %v3896
      %v3898 = vlaneseq
      %v3899 = vshrl.u32 %v3898, 7
      %v3900 = vsub.s32 %v3897, %v3899
      %v3901 = vrot.slane %v3887, %v3900
      %v3902 = vcombine.high %v3836, %v3836
      %v3904 = vunpack.c.l.s4 1983009808
      %v3905 = vunpack.c.0.s8 %v3904
      %v3906 = vlaneseq
      %v3907 = vshrl.u32 %v3906, 7
      %v3908 = vsub.s32 %v3905, %v3907
      %v3909 = vrot.slane %v3836, %v3908
      %v3911 = vunpack.c.l.s4 1983009808
      %v3912 = vunpack.c.0.s8 %v3911
      %v3913 = vlaneseq
      %v3914 = vshrl.u32 %v3913, 7
      %v3915 = vsub.s32 %v3912, %v3914
      %v3916 = vrot.slane %v3902, %v3915
      %3917 = vrot.lane.b32.xlu0 %v3849, 52
      %v3918 = vpop.permute.xlu0 %3917
      %3919 = vrot.lane.b32.xlu0 %v3856, 52
      %v3920 = vpop.permute.xlu0 %3919
      %3921 = vrot.lane.b32.xlu0 %v3864, 52
      %v3922 = vpop.permute.xlu0 %3921
      %3923 = vrot.lane.b32.xlu0 %v3871, 52
      %v3924 = vpop.permute.xlu0 %3923
      %3925 = vrot.lane.b32.xlu0 %v3879, 52
      %v3926 = vpop.permute.xlu0 %3925
      %3927 = vrot.lane.b32.xlu0 %v3886, 52
      %v3928 = vpop.permute.xlu0 %3927
      %3929 = vrot.lane.b32.xlu0 %v3894, 52
      %v3930 = vpop.permute.xlu0 %3929
      %3931 = vrot.lane.b32.xlu0 %v3901, 52
      %v3932 = vpop.permute.xlu0 %3931
      %3933 = vrot.lane.b32.xlu0 %v3909, 52
      %v3934 = vpop.permute.xlu0 %3933
      %3935 = vrot.lane.b32.xlu0 %v3916, 52
      %v3936 = vpop.permute.xlu0 %3935
      %v3937 = vrot.slane %v3918, 4
      %v3938 = vrot.slane %v3920, 4
      %v3939 = vrot.slane %v3922, 4
      %v3940 = vrot.slane %v3924, 4
      %v3941 = vrot.slane %v3926, 4
      %v3942 = vrot.slane %v3928, 4
      %v3943 = vrot.slane %v3930, 4
      %v3944 = vrot.slane %v3932, 4
      %v3945 = vrot.slane %v3934, 4
      %v3946 = vrot.slane %v3936, 4
      %v3947 = vsel %vm483, %v3937, %v3938
      %vm3948 = vcmask 424960
      %v3949 = vsel %vm3948, %v3918, %v3947
      %v3950 = vsel %vm483, %v3938, %v3939
      %v3951 = vsel %vm3948, %v3920, %v3950
      %v3952 = vsel %vm483, %v3939, %v3940
      %v3953 = vsel %vm3948, %v3922, %v3952
      %v3954 = vsel %vm483, %v3940, %v3941
      %v3955 = vsel %vm3948, %v3924, %v3954
      %v3956 = vsel %vm483, %v3941, %v3942
      %v3957 = vsel %vm3948, %v3926, %v3956
      %v3958 = vsel %vm483, %v3942, %v3943
      %v3959 = vsel %vm3948, %v3928, %v3958
      %v3960 = vsel %vm483, %v3943, %v3944
      %v3961 = vsel %vm3948, %v3930, %v3960
      %v3962 = vsel %vm483, %v3944, %v3945
      %v3963 = vsel %vm3948, %v3932, %v3962
      %v3964 = vsel %vm483, %v3945, %v3946
      %v3965 = vsel %vm3948, %v3934, %v3964
      %3975 = vst [vmem:[#allocation2 + $0x360] sm:$0x33] %v3949
      %3976 = vst [vmem:[#allocation2 + $0x368] sm:$0x33] %v3951
      %3977 = vst [vmem:[#allocation2 + $0x370] sm:$0x33] %v3953
      %3978 = vst [vmem:[#allocation2 + $0x378] sm:$0x33] %v3955
      %3979 = vst [vmem:[#allocation2 + $0x380] sm:$0x33] %v3957
      %3980 = vst [vmem:[#allocation2 + $0x388] sm:$0x33] %v3959
      %3981 = vst [vmem:[#allocation2 + $0x390] sm:$0x33] %v3961
      %3982 = vst [vmem:[#allocation2 + $0x398] sm:$0x33] %v3963
      %3983 = vst.msk [vmem:[#allocation2 + $0x3a0] sm:$0x33] %vm376, %v3965
      %v3984 = vld [vmem:[%s1] sm:$0xf]
      %v3985 = vld [vmem:[#allocation2] sm:$0xff]
      %v3986 = vld [vmem:[#allocation2 + $0x8] sm:$0xff]
      %v3987 = vld [vmem:[#allocation2 + $0x10] sm:$0xff]
      %v3988 = vld [vmem:[#allocation2 + $0x18] sm:$0xff]
      %v3989 = vld [vmem:[#allocation2 + $0x20] sm:$0xff]
      %v3990 = vld [vmem:[#allocation2 + $0x28] sm:$0xff]
      %v3991 = vld [vmem:[#allocation2 + $0x30] sm:$0xff]
      %v3992 = vld [vmem:[#allocation2 + $0x38] sm:$0xff]
      %v3993 = vld [vmem:[#allocation2 + $0x40] sm:$0xff]
      %v3994 = vld [vmem:[#allocation2 + $0x48] sm:$0xff]
      %v3995 = vld [vmem:[#allocation2 + $0x50] sm:$0xff]
      %v3996 = vld [vmem:[#allocation2 + $0x58] sm:$0xff]
      %v3997 = vld [vmem:[#allocation2 + $0x60] sm:$0xff]
      %v3998 = vld [vmem:[#allocation2 + $0x68] sm:$0xff]
      %v3999 = vld [vmem:[#allocation2 + $0x70] sm:$0xff]
      %v4000 = vld [vmem:[#allocation2 + $0x78] sm:$0xff]
      %v4001 = vld [vmem:[#allocation2 + $0x80] sm:$0xff]
      %v4002 = vld [vmem:[#allocation2 + $0x88] sm:$0xff]
      %v4003 = vld [vmem:[#allocation2 + $0x90] sm:$0xff]
      %v4004 = vld [vmem:[#allocation2 + $0x98] sm:$0xff]
      %v4005 = vld [vmem:[#allocation2 + $0xa0] sm:$0xff]
      %v4006 = vld [vmem:[#allocation2 + $0xa8] sm:$0xff]
      %v4007 = vld [vmem:[#allocation2 + $0xb0] sm:$0xff]
      %v4008 = vld [vmem:[#allocation2 + $0xb8] sm:$0xff]
      %v4009 = vld [vmem:[#allocation2 + $0xc0] sm:$0xff]
      %v4010 = vld [vmem:[#allocation2 + $0xc8] sm:$0xff]
      %v4011 = vld [vmem:[#allocation2 + $0xd0] sm:$0xff]
      %v4012 = vld [vmem:[#allocation2 + $0xd8] sm:$0xff]
      %v4013 = vld [vmem:[#allocation2 + $0xe0] sm:$0xff]
      %v4014 = vld [vmem:[#allocation2 + $0xe8] sm:$0xff]
      %v4015 = vld [vmem:[#allocation2 + $0xf0] sm:$0xff]
      %v4016 = vld [vmem:[#allocation2 + $0xf8] sm:$0xff]
      %v4017 = vld [vmem:[#allocation2 + $0x100] sm:$0xff]
      %v4018 = vld [vmem:[#allocation2 + $0x108] sm:$0xff]
      %v4019 = vld [vmem:[#allocation2 + $0x110] sm:$0xff]
      %v4020 = vld [vmem:[#allocation2 + $0x118] sm:$0xff]
      %v4021 = vld [vmem:[#allocation2 + $0x120] sm:$0xff]
      %v4022 = vld [vmem:[#allocation2 + $0x128] sm:$0xff]
      %v4023 = vld [vmem:[#allocation2 + $0x130] sm:$0xff]
      %v4024 = vld [vmem:[#allocation2 + $0x138] sm:$0xff]
      %v4025 = vld [vmem:[#allocation2 + $0x140] sm:$0xff]
      %v4026 = vld [vmem:[#allocation2 + $0x148] sm:$0xff]
      %v4027 = vld [vmem:[#allocation2 + $0x150] sm:$0xff]
      %v4028 = vld [vmem:[#allocation2 + $0x158] sm:$0xff]
      %v4029 = vld [vmem:[#allocation2 + $0x160] sm:$0xff]
      %v4030 = vld [vmem:[#allocation2 + $0x168] sm:$0xff]
      %v4031 = vld [vmem:[#allocation2 + $0x170] sm:$0xff]
      %v4032 = vld [vmem:[#allocation2 + $0x178] sm:$0xff]
      %v4033 = vld [vmem:[#allocation2 + $0x180] sm:$0xff]
      %v4034 = vld [vmem:[#allocation2 + $0x188] sm:$0xff]
      %v4035 = vld [vmem:[#allocation2 + $0x190] sm:$0xff]
      %v4036 = vld [vmem:[#allocation2 + $0x198] sm:$0xff]
      %v4037 = vld [vmem:[#allocation2 + $0x1a0] sm:$0xff]
      %v4038 = vld [vmem:[#allocation2 + $0x1a8] sm:$0xff]
      %v4039 = vld [vmem:[#allocation2 + $0x1b0] sm:$0xff]
      %v4040 = vld [vmem:[#allocation2 + $0x1b8] sm:$0xff]
      %v4041 = vld [vmem:[#allocation2 + $0x1c0] sm:$0xff]
      %v4042 = vld [vmem:[#allocation2 + $0x1c8] sm:$0xff]
      %v4043 = vld [vmem:[#allocation2 + $0x1d0] sm:$0xff]
      %v4044 = vld [vmem:[#allocation2 + $0x1d8] sm:$0xff]
      %v4045 = vld [vmem:[#allocation2 + $0x1e0] sm:$0xff]
      %v4046 = vld [vmem:[#allocation2 + $0x1e8] sm:$0xff]
      %v4047 = vld [vmem:[#allocation2 + $0x1f0] sm:$0xff]
      %v4048 = vld [vmem:[#allocation2 + $0x1f8] sm:$0xff]
      %v4049 = vld [vmem:[#allocation2 + $0x200] sm:$0xff]
      %v4050 = vld [vmem:[#allocation2 + $0x208] sm:$0xff]
      %v4051 = vld [vmem:[#allocation2 + $0x210] sm:$0xff]
      %v4052 = vld [vmem:[#allocation2 + $0x218] sm:$0xff]
      %v4053 = vld [vmem:[#allocation2 + $0x220] sm:$0xff]
      %v4054 = vld [vmem:[#allocation2 + $0x228] sm:$0xff]
      %v4055 = vld [vmem:[#allocation2 + $0x230] sm:$0xff]
      %v4056 = vld [vmem:[#allocation2 + $0x238] sm:$0xff]
      %v4057 = vld [vmem:[#allocation2 + $0x240] sm:$0xff]
      %v4058 = vld [vmem:[#allocation2 + $0x248] sm:$0xff]
      %v4059 = vld [vmem:[#allocation2 + $0x250] sm:$0xff]
      %v4060 = vld [vmem:[#allocation2 + $0x258] sm:$0xff]
      %v4061 = vld [vmem:[#allocation2 + $0x260] sm:$0xff]
      %v4062 = vld [vmem:[#allocation2 + $0x268] sm:$0xff]
      %v4063 = vld [vmem:[#allocation2 + $0x270] sm:$0xff]
      %v4064 = vld [vmem:[#allocation2 + $0x278] sm:$0xff]
      %v4065 = vld [vmem:[#allocation2 + $0x280] sm:$0xff]
      %v4066 = vld [vmem:[#allocation2 + $0x288] sm:$0xff]
      %v4067 = vld [vmem:[#allocation2 + $0x290] sm:$0xff]
      %v4068 = vld [vmem:[#allocation2 + $0x298] sm:$0xff]
      %v4069 = vld [vmem:[#allocation2 + $0x2a0] sm:$0xff]
      %v4070 = vld [vmem:[#allocation2 + $0x2a8] sm:$0xff]
      %v4071 = vld [vmem:[#allocation2 + $0x2b0] sm:$0xff]
      %v4072 = vld [vmem:[#allocation2 + $0x2b8] sm:$0xff]
      %v4073 = vld [vmem:[#allocation2 + $0x2c0] sm:$0xff]
      %v4074 = vld [vmem:[#allocation2 + $0x2c8] sm:$0xff]
      %v4075 = vld [vmem:[#allocation2 + $0x2d0] sm:$0xff]
      %v4076 = vld [vmem:[#allocation2 + $0x2d8] sm:$0xff]
      %v4077 = vld [vmem:[#allocation2 + $0x2e0] sm:$0xff]
      %v4078 = vld [vmem:[#allocation2 + $0x2e8] sm:$0xff]
      %v4079 = vld [vmem:[#allocation2 + $0x2f0] sm:$0xff]
      %v4080 = vld [vmem:[#allocation2 + $0x2f8] sm:$0xff]
      %v4081 = vld [vmem:[#allocation2 + $0x300] sm:$0xff]
      %v4082 = vld [vmem:[#allocation2 + $0x308] sm:$0xff]
      %v4083 = vld [vmem:[#allocation2 + $0x310] sm:$0xff]
      %v4084 = vld [vmem:[#allocation2 + $0x318] sm:$0xff]
      %v4085 = vld [vmem:[#allocation2 + $0x320] sm:$0xff]
      %v4086 = vld [vmem:[#allocation2 + $0x328] sm:$0xff]
      %v4087 = vld [vmem:[#allocation2 + $0x330] sm:$0xff]
      %v4088 = vld [vmem:[#allocation2 + $0x338] sm:$0xff]
      %v4089 = vld [vmem:[#allocation2 + $0x340] sm:$0xff]
      %v4090 = vld [vmem:[#allocation2 + $0x348] sm:$0xff]
      %v4091 = vld [vmem:[#allocation2 + $0x350] sm:$0xff]
      %v4092 = vld [vmem:[#allocation2 + $0x358] sm:$0xff]
      %v4093 = vld [vmem:[#allocation2 + $0x360] sm:$0x33]
      %v4094 = vld [vmem:[#allocation2 + $0x368] sm:$0x33]
      %v4095 = vld [vmem:[#allocation2 + $0x370] sm:$0x33]
      %v4096 = vld [vmem:[#allocation2 + $0x378] sm:$0x33]
      %v4097 = vld [vmem:[#allocation2 + $0x380] sm:$0x33]
      %v4098 = vld [vmem:[#allocation2 + $0x388] sm:$0x33]
      %v4099 = vld [vmem:[#allocation2 + $0x390] sm:$0x33]
      %v4100 = vld [vmem:[#allocation2 + $0x398] sm:$0x33]
      %v4101 = vld [vmem:[#allocation2 + $0x3a0] sm:$0x33]
      %v4219 = vunpack.c.l.b16 %v3985
      %v4220 = vunpack.c.h.b16 %v3985
      %v4221 = vunpack.c.l.b16 %v3986
      %v4222 = vunpack.c.h.b16 %v3986
      %v4223 = vunpack.c.l.b16 %v3987
      %v4224 = vunpack.c.h.b16 %v3987
      %v4225 = vunpack.c.l.b16 %v3988
      %v4226 = vunpack.c.h.b16 %v3988
      %v4227 = vunpack.c.l.b16 %v3989
      %v4228 = vunpack.c.h.b16 %v3989
      %v4229 = vunpack.c.l.b16 %v3990
      %v4230 = vunpack.c.h.b16 %v3990
      %v4231 = vunpack.c.l.b16 %v3991
      %v4232 = vunpack.c.h.b16 %v3991
      %v4233 = vunpack.c.l.b16 %v3992
      %v4234 = vunpack.c.h.b16 %v3992
      %v4235 = vunpack.c.l.b16 %v3993
      %v4236 = vunpack.c.h.b16 %v3993
      %v4237 = vunpack.c.l.b16 %v3994
      %v4238 = vunpack.c.h.b16 %v3994
      %v4239 = vunpack.c.l.b16 %v3995
      %v4240 = vunpack.c.h.b16 %v3995
      %v4241 = vunpack.c.l.b16 %v3996
      %v4242 = vunpack.c.h.b16 %v3996
      %v4243 = vunpack.c.l.b16 %v3997
      %v4244 = vunpack.c.h.b16 %v3997
      %v4245 = vunpack.c.l.b16 %v3998
      %v4246 = vunpack.c.h.b16 %v3998
      %v4247 = vunpack.c.l.b16 %v3999
      %v4248 = vunpack.c.h.b16 %v3999
      %v4249 = vunpack.c.l.b16 %v4000
      %v4250 = vunpack.c.h.b16 %v4000
      %v4251 = vunpack.c.l.b16 %v4001
      %v4252 = vunpack.c.h.b16 %v4001
      %v4253 = vunpack.c.l.b16 %v4002
      %v4254 = vunpack.c.h.b16 %v4002
      %v4255 = vunpack.c.l.b16 %v4003
      %v4256 = vunpack.c.h.b16 %v4003
      %v4257 = vunpack.c.l.b16 %v4004
      %v4258 = vunpack.c.h.b16 %v4004
      %v4259 = vunpack.c.l.b16 %v4005
      %v4260 = vunpack.c.h.b16 %v4005
      %v4261 = vunpack.c.l.b16 %v4006
      %v4262 = vunpack.c.h.b16 %v4006
      %v4263 = vunpack.c.l.b16 %v4007
      %v4264 = vunpack.c.h.b16 %v4007
      %v4265 = vunpack.c.l.b16 %v4008
      %v4266 = vunpack.c.h.b16 %v4008
      %v4267 = vunpack.c.l.b16 %v4009
      %v4268 = vunpack.c.h.b16 %v4009
      %v4269 = vunpack.c.l.b16 %v4010
      %v4270 = vunpack.c.h.b16 %v4010
      %v4271 = vunpack.c.l.b16 %v4011
      %v4272 = vunpack.c.h.b16 %v4011
      %v4273 = vunpack.c.l.b16 %v4012
      %v4274 = vunpack.c.h.b16 %v4012
      %v4275 = vunpack.c.l.b16 %v4013
      %v4276 = vunpack.c.h.b16 %v4013
      %v4277 = vunpack.c.l.b16 %v4014
      %v4278 = vunpack.c.h.b16 %v4014
      %v4279 = vunpack.c.l.b16 %v4015
      %v4280 = vunpack.c.h.b16 %v4015
      %v4281 = vunpack.c.l.b16 %v4016
      %v4282 = vunpack.c.h.b16 %v4016
      %v4283 = vunpack.c.l.b16 %v4017
      %v4284 = vunpack.c.h.b16 %v4017
      %v4285 = vunpack.c.l.b16 %v4018
      %v4286 = vunpack.c.h.b16 %v4018
      %v4287 = vunpack.c.l.b16 %v4019
      %v4288 = vunpack.c.h.b16 %v4019
      %v4289 = vunpack.c.l.b16 %v4020
      %v4290 = vunpack.c.h.b16 %v4020
      %v4291 = vunpack.c.l.b16 %v4021
      %v4292 = vunpack.c.h.b16 %v4021
      %v4293 = vunpack.c.l.b16 %v4022
      %v4294 = vunpack.c.h.b16 %v4022
      %v4295 = vunpack.c.l.b16 %v4023
      %v4296 = vunpack.c.h.b16 %v4023
      %v4297 = vunpack.c.l.b16 %v4024
      %v4298 = vunpack.c.h.b16 %v4024
      %v4299 = vunpack.c.l.b16 %v4025
      %v4300 = vunpack.c.h.b16 %v4025
      %v4301 = vunpack.c.l.b16 %v4026
      %v4302 = vunpack.c.h.b16 %v4026
      %v4303 = vunpack.c.l.b16 %v4027
      %v4304 = vunpack.c.h.b16 %v4027
      %v4305 = vunpack.c.l.b16 %v4028
      %v4306 = vunpack.c.h.b16 %v4028
      %v4307 = vunpack.c.l.b16 %v4029
      %v4308 = vunpack.c.h.b16 %v4029
      %v4309 = vunpack.c.l.b16 %v4030
      %v4310 = vunpack.c.h.b16 %v4030
      %v4311 = vunpack.c.l.b16 %v4031
      %v4312 = vunpack.c.h.b16 %v4031
      %v4313 = vunpack.c.l.b16 %v4032
      %v4314 = vunpack.c.h.b16 %v4032
      %v4315 = vunpack.c.l.b16 %v4033
      %v4316 = vunpack.c.h.b16 %v4033
      %v4317 = vunpack.c.l.b16 %v4034
      %v4318 = vunpack.c.h.b16 %v4034
      %v4319 = vunpack.c.l.b16 %v4035
      %v4320 = vunpack.c.h.b16 %v4035
      %v4321 = vunpack.c.l.b16 %v4036
      %v4322 = vunpack.c.h.b16 %v4036
      %v4323 = vunpack.c.l.b16 %v4037
      %v4324 = vunpack.c.h.b16 %v4037
      %v4325 = vunpack.c.l.b16 %v4038
      %v4326 = vunpack.c.h.b16 %v4038
      %v4327 = vunpack.c.l.b16 %v4039
      %v4328 = vunpack.c.h.b16 %v4039
      %v4329 = vunpack.c.l.b16 %v4040
      %v4330 = vunpack.c.h.b16 %v4040
      %v4331 = vunpack.c.l.b16 %v4041
      %v4332 = vunpack.c.h.b16 %v4041
      %v4333 = vunpack.c.l.b16 %v4042
      %v4334 = vunpack.c.h.b16 %v4042
      %v4335 = vunpack.c.l.b16 %v4043
      %v4336 = vunpack.c.h.b16 %v4043
      %v4337 = vunpack.c.l.b16 %v4044
      %v4338 = vunpack.c.h.b16 %v4044
      %v4339 = vunpack.c.l.b16 %v4045
      %v4340 = vunpack.c.h.b16 %v4045
      %v4341 = vunpack.c.l.b16 %v4046
      %v4342 = vunpack.c.h.b16 %v4046
      %v4343 = vunpack.c.l.b16 %v4047
      %v4344 = vunpack.c.h.b16 %v4047
      %v4345 = vunpack.c.l.b16 %v4048
      %v4346 = vunpack.c.h.b16 %v4048
      %v4347 = vunpack.c.l.b16 %v4049
      %v4348 = vunpack.c.h.b16 %v4049
      %v4349 = vunpack.c.l.b16 %v4050
      %v4350 = vunpack.c.h.b16 %v4050
      %v4351 = vunpack.c.l.b16 %v4051
      %v4352 = vunpack.c.h.b16 %v4051
      %v4353 = vunpack.c.l.b16 %v4052
      %v4354 = vunpack.c.h.b16 %v4052
      %v4355 = vunpack.c.l.b16 %v4053
      %v4356 = vunpack.c.h.b16 %v4053
      %v4357 = vunpack.c.l.b16 %v4054
      %v4358 = vunpack.c.h.b16 %v4054
      %v4359 = vunpack.c.l.b16 %v4055
      %v4360 = vunpack.c.h.b16 %v4055
      %v4361 = vunpack.c.l.b16 %v4056
      %v4362 = vunpack.c.h.b16 %v4056
      %v4363 = vunpack.c.l.b16 %v4057
      %v4364 = vunpack.c.h.b16 %v4057
      %v4365 = vunpack.c.l.b16 %v4058
      %v4366 = vunpack.c.h.b16 %v4058
      %v4367 = vunpack.c.l.b16 %v4059
      %v4368 = vunpack.c.h.b16 %v4059
      %v4369 = vunpack.c.l.b16 %v4060
      %v4370 = vunpack.c.h.b16 %v4060
      %v4371 = vunpack.c.l.b16 %v4061
      %v4372 = vunpack.c.h.b16 %v4061
      %v4373 = vunpack.c.l.b16 %v4062
      %v4374 = vunpack.c.h.b16 %v4062
      %v4375 = vunpack.c.l.b16 %v4063
      %v4376 = vunpack.c.h.b16 %v4063
      %v4377 = vunpack.c.l.b16 %v4064
      %v4378 = vunpack.c.h.b16 %v4064
      %v4379 = vunpack.c.l.b16 %v4065
      %v4380 = vunpack.c.h.b16 %v4065
      %v4381 = vunpack.c.l.b16 %v4066
      %v4382 = vunpack.c.h.b16 %v4066
      %v4383 = vunpack.c.l.b16 %v4067
      %v4384 = vunpack.c.h.b16 %v4067
      %v4385 = vunpack.c.l.b16 %v4068
      %v4386 = vunpack.c.h.b16 %v4068
      %v4387 = vunpack.c.l.b16 %v4069
      %v4388 = vunpack.c.h.b16 %v4069
      %v4389 = vunpack.c.l.b16 %v4070
      %v4390 = vunpack.c.h.b16 %v4070
      %v4391 = vunpack.c.l.b16 %v4071
      %v4392 = vunpack.c.h.b16 %v4071
      %v4393 = vunpack.c.l.b16 %v4072
      %v4394 = vunpack.c.h.b16 %v4072
      %v4395 = vunpack.c.l.b16 %v4073
      %v4396 = vunpack.c.h.b16 %v4073
      %v4397 = vunpack.c.l.b16 %v4074
      %v4398 = vunpack.c.h.b16 %v4074
      %v4399 = vunpack.c.l.b16 %v4075
      %v4400 = vunpack.c.h.b16 %v4075
      %v4401 = vunpack.c.l.b16 %v4076
      %v4402 = vunpack.c.h.b16 %v4076
      %v4403 = vunpack.c.l.b16 %v4077
      %v4404 = vunpack.c.h.b16 %v4077
      %v4405 = vunpack.c.l.b16 %v4078
      %v4406 = vunpack.c.h.b16 %v4078
      %v4407 = vunpack.c.l.b16 %v4079
      %v4408 = vunpack.c.h.b16 %v4079
      %v4409 = vunpack.c.l.b16 %v4080
      %v4410 = vunpack.c.h.b16 %v4080
      %v4411 = vunpack.c.l.b16 %v4081
      %v4412 = vunpack.c.h.b16 %v4081
      %v4413 = vunpack.c.l.b16 %v4082
      %v4414 = vunpack.c.h.b16 %v4082
      %v4415 = vunpack.c.l.b16 %v4083
      %v4416 = vunpack.c.h.b16 %v4083
      %v4417 = vunpack.c.l.b16 %v4084
      %v4418 = vunpack.c.h.b16 %v4084
      %v4419 = vunpack.c.l.b16 %v4085
      %v4420 = vunpack.c.h.b16 %v4085
      %v4421 = vunpack.c.l.b16 %v4086
      %v4422 = vunpack.c.h.b16 %v4086
      %v4423 = vunpack.c.l.b16 %v4087
      %v4424 = vunpack.c.h.b16 %v4087
      %v4425 = vunpack.c.l.b16 %v4088
      %v4426 = vunpack.c.h.b16 %v4088
      %v4427 = vunpack.c.l.b16 %v4089
      %v4428 = vunpack.c.h.b16 %v4089
      %v4429 = vunpack.c.l.b16 %v4090
      %v4430 = vunpack.c.h.b16 %v4090
      %v4431 = vunpack.c.l.b16 %v4091
      %v4432 = vunpack.c.h.b16 %v4091
      %v4433 = vunpack.c.l.b16 %v4092
      %v4434 = vunpack.c.h.b16 %v4092
      %v4435 = vunpack.c.l.b16 %v4093
      %v4436 = vunpack.c.h.b16 %v4093
      %v4437 = vunpack.c.l.b16 %v4094
      %v4438 = vunpack.c.h.b16 %v4094
      %v4439 = vunpack.c.l.b16 %v4095
      %v4440 = vunpack.c.h.b16 %v4095
      %v4441 = vunpack.c.l.b16 %v4096
      %v4442 = vunpack.c.h.b16 %v4096
      %v4443 = vunpack.c.l.b16 %v4097
      %v4444 = vunpack.c.h.b16 %v4097
      %v4445 = vunpack.c.l.b16 %v4098
      %v4446 = vunpack.c.h.b16 %v4098
      %v4447 = vunpack.c.l.b16 %v4099
      %v4448 = vunpack.c.h.b16 %v4099
      %v4449 = vunpack.c.l.b16 %v4100
      %v4450 = vunpack.c.h.b16 %v4100
      %v4451 = vunpack.c.l.b16 %v4101
      %v4452 = vunpack.c.h.b16 %v4101
      %v4453 = vpack.c.b16 %v4237, %v4219
      %v4454 = vpack.c.b16 %v4238, %v4220
      %v4455 = vpack.c.b16 %v4239, %v4221
      %v4456 = vpack.c.b16 %v4240, %v4222
      %v4457 = vpack.c.b16 %v4241, %v4223
      %v4458 = vpack.c.b16 %v4242, %v4224
      %v4459 = vpack.c.b16 %v4243, %v4225
      %v4460 = vpack.c.b16 %v4244, %v4226
      %v4461 = vpack.c.b16 %v4245, %v4227
      %v4462 = vpack.c.b16 %v4246, %v4228
      %v4463 = vpack.c.b16 %v4247, %v4229
      %v4464 = vpack.c.b16 %v4248, %v4230
      %v4465 = vpack.c.b16 %v4249, %v4231
      %v4466 = vpack.c.b16 %v4250, %v4232
      %v4467 = vpack.c.b16 %v4251, %v4233
      %v4468 = vpack.c.b16 %v4252, %v4234
      %v4469 = vpack.c.b16 %v4253, %v4235
      %v4470 = vpack.c.b16 %v4254, %v4236
      %v4471 = vpack.c.b16 %v4273, %v4255
      %v4472 = vpack.c.b16 %v4274, %v4256
      %v4473 = vpack.c.b16 %v4275, %v4257
      %v4474 = vpack.c.b16 %v4276, %v4258
      %v4475 = vpack.c.b16 %v4277, %v4259
      %v4476 = vpack.c.b16 %v4278, %v4260
      %v4477 = vpack.c.b16 %v4279, %v4261
      %v4478 = vpack.c.b16 %v4280, %v4262
      %v4479 = vpack.c.b16 %v4281, %v4263
      %v4480 = vpack.c.b16 %v4282, %v4264
      %v4481 = vpack.c.b16 %v4283, %v4265
      %v4482 = vpack.c.b16 %v4284, %v4266
      %v4483 = vpack.c.b16 %v4285, %v4267
      %v4484 = vpack.c.b16 %v4286, %v4268
      %v4485 = vpack.c.b16 %v4287, %v4269
      %v4486 = vpack.c.b16 %v4288, %v4270
      %v4487 = vpack.c.b16 %v4289, %v4271
      %v4488 = vpack.c.b16 %v4290, %v4272
      %v4489 = vpack.c.b16 %v4309, %v4291
      %v4490 = vpack.c.b16 %v4310, %v4292
      %v4491 = vpack.c.b16 %v4311, %v4293
      %v4492 = vpack.c.b16 %v4312, %v4294
      %v4493 = vpack.c.b16 %v4313, %v4295
      %v4494 = vpack.c.b16 %v4314, %v4296
      %v4495 = vpack.c.b16 %v4315, %v4297
      %v4496 = vpack.c.b16 %v4316, %v4298
      %v4497 = vpack.c.b16 %v4317, %v4299
      %v4498 = vpack.c.b16 %v4318, %v4300
      %v4499 = vpack.c.b16 %v4319, %v4301
      %v4500 = vpack.c.b16 %v4320, %v4302
      %v4501 = vpack.c.b16 %v4321, %v4303
      %v4502 = vpack.c.b16 %v4322, %v4304
      %v4503 = vpack.c.b16 %v4323, %v4305
      %v4504 = vpack.c.b16 %v4324, %v4306
      %v4505 = vpack.c.b16 %v4325, %v4307
      %v4506 = vpack.c.b16 %v4326, %v4308
      %v4507 = vpack.c.b16 %v4345, %v4327
      %v4508 = vpack.c.b16 %v4346, %v4328
      %v4509 = vpack.c.b16 %v4347, %v4329
      %v4510 = vpack.c.b16 %v4348, %v4330
      %v4511 = vpack.c.b16 %v4349, %v4331
      %v4512 = vpack.c.b16 %v4350, %v4332
      %v4513 = vpack.c.b16 %v4351, %v4333
      %v4514 = vpack.c.b16 %v4352, %v4334
      %v4515 = vpack.c.b16 %v4353, %v4335
      %v4516 = vpack.c.b16 %v4354, %v4336
      %v4517 = vpack.c.b16 %v4355, %v4337
      %v4518 = vpack.c.b16 %v4356, %v4338
      %v4519 = vpack.c.b16 %v4357, %v4339
      %v4520 = vpack.c.b16 %v4358, %v4340
      %v4521 = vpack.c.b16 %v4359, %v4341
      %v4522 = vpack.c.b16 %v4360, %v4342
      %v4523 = vpack.c.b16 %v4361, %v4343
      %v4524 = vpack.c.b16 %v4362, %v4344
      %v4525 = vpack.c.b16 %v4381, %v4363
      %v4526 = vpack.c.b16 %v4382, %v4364
      %v4527 = vpack.c.b16 %v4383, %v4365
      %v4528 = vpack.c.b16 %v4384, %v4366
      %v4529 = vpack.c.b16 %v4385, %v4367
      %v4530 = vpack.c.b16 %v4386, %v4368
      %v4531 = vpack.c.b16 %v4387, %v4369
      %v4532 = vpack.c.b16 %v4388, %v4370
      %v4533 = vpack.c.b16 %v4389, %v4371
      %v4534 = vpack.c.b16 %v4390, %v4372
      %v4535 = vpack.c.b16 %v4391, %v4373
      %v4536 = vpack.c.b16 %v4392, %v4374
      %v4537 = vpack.c.b16 %v4393, %v4375
      %v4538 = vpack.c.b16 %v4394, %v4376
      %v4539 = vpack.c.b16 %v4395, %v4377
      %v4540 = vpack.c.b16 %v4396, %v4378
      %v4541 = vpack.c.b16 %v4397, %v4379
      %v4542 = vpack.c.b16 %v4398, %v4380
      %v4543 = vpack.c.b16 %v4417, %v4399
      %v4544 = vpack.c.b16 %v4418, %v4400
      %v4545 = vpack.c.b16 %v4419, %v4401
      %v4546 = vpack.c.b16 %v4420, %v4402
      %v4547 = vpack.c.b16 %v4421, %v4403
      %v4548 = vpack.c.b16 %v4422, %v4404
      %v4549 = vpack.c.b16 %v4423, %v4405
      %v4550 = vpack.c.b16 %v4424, %v4406
      %v4551 = vpack.c.b16 %v4425, %v4407
      %v4552 = vpack.c.b16 %v4426, %v4408
      %v4553 = vpack.c.b16 %v4427, %v4409
      %v4554 = vpack.c.b16 %v4428, %v4410
      %v4555 = vpack.c.b16 %v4429, %v4411
      %v4556 = vpack.c.b16 %v4430, %v4412
      %v4557 = vpack.c.b16 %v4431, %v4413
      %v4558 = vpack.c.b16 %v4432, %v4414
      %v4559 = vpack.c.b16 %v4433, %v4415
      %v4560 = vpack.c.b16 %v4434, %v4416
      %v4561 = vpack.c.b16 %v4435, %v4435
      %v4562 = vpack.c.b16 %v4436, %v4436
      %v4563 = vpack.c.b16 %v4437, %v4437
      %v4564 = vpack.c.b16 %v4438, %v4438
      %v4565 = vpack.c.b16 %v4439, %v4439
      %v4566 = vpack.c.b16 %v4440, %v4440
      %v4567 = vpack.c.b16 %v4441, %v4441
      %v4568 = vpack.c.b16 %v4442, %v4442
      %v4569 = vpack.c.b16 %v4443, %v4443
      %v4570 = vpack.c.b16 %v4444, %v4444
      %v4571 = vpack.c.b16 %v4445, %v4445
      %v4572 = vpack.c.b16 %v4446, %v4446
      %v4573 = vpack.c.b16 %v4447, %v4447
      %v4574 = vpack.c.b16 %v4448, %v4448
      %v4575 = vpack.c.b16 %v4449, %v4449
      %v4576 = vpack.c.b16 %v4450, %v4450
      %v4577 = vpack.c.b16 %v4451, %v4451
      %v4578 = vpack.c.b16 %v4452, %v4452
      %vm4687 = vcmask 818176
      %v4689 = vsel %vm4687, %v3984, 0
      %v4692 = vsel %vm374, %v4561, 0
      %v4695 = vsel %vm374, %v4562, 0
      %v4698 = vsel %vm374, %v4563, 0
      %v4701 = vsel %vm374, %v4564, 0
      %v4704 = vsel %vm374, %v4565, 0
      %v4707 = vsel %vm374, %v4566, 0
      %v4710 = vsel %vm374, %v4567, 0
      %v4713 = vsel %vm374, %v4568, 0
      %v4716 = vsel %vm374, %v4569, 0
      %v4719 = vsel %vm374, %v4570, 0
      %v4722 = vsel %vm374, %v4571, 0
      %v4725 = vsel %vm374, %v4572, 0
      %v4728 = vsel %vm374, %v4573, 0
      %v4731 = vsel %vm374, %v4574, 0
      %v4734 = vsel %vm374, %v4575, 0
      %v4737 = vsel %vm374, %v4576, 0
      %v4740 = vsel %vm374, %v4577, 0
      %v4743 = vsel %vm374, %v4578, 0
      %4745 = vmatprep.subr.bf16.mxu0 %v4454
      %4746 = vmatpush1.bf16.msra.mxu0 %v4453
      %4747 = vmatprep.subr.bf16.mxu0 %v4472
      %4748 = vmatpush1.bf16.msra.mxu0 %v4471
      %4749 = vmatprep.subr.bf16.mxu0 %v4490
      %4750 = vmatpush1.bf16.msra.mxu0 %v4489
      %4751 = vmatprep.subr.bf16.mxu0 %v4508
      %4752 = vmatpush1.bf16.msra.mxu0 %v4507
      %4753 = vmatprep.subr.bf16.mxu0 %v4526
      %4754 = vmatpush1.bf16.msra.mxu0 %v4525
      %4755 = vmatprep.subr.bf16.mxu0 %v4544
      %4756 = vmatpush1.bf16.msra.mxu0 %v4543
      %4757 = vmatprep.subr.bf16.mxu0 %v4695
      %4758 = vmatpush1.bf16.msra.mxu0 %v4692
      %4759 = vmatprep.subr.bf16.mxu0 0
      %4760 = vmatpush1.bf16.msra.mxu0 0
      %4761 = vmatprep.subr.bf16.mxu0 0
      %4762 = vmatpush1.bf16.msra.mxu0 0
      %4763 = vmatprep.subr.bf16.mxu0 0
      %4764 = vmatpush1.bf16.msra.mxu0 0
      %4765 = vmatprep.subr.bf16.mxu0 0
      %4766 = vmatpush1.bf16.msra.mxu0 0
      %4767 = vmatprep.subr.bf16.mxu0 0
      %4768 = vmatpush1.bf16.msra.mxu0 0
      %4769 = vmatprep.subr.bf16.mxu0 0
      %4770 = vmatpush1.bf16.msra.mxu0 0
      %4771 = vmatprep.subr.bf16.mxu0 0
      %4772 = vmatpush1.bf16.msra.mxu0 0
      %4773 = vmatprep.subr.bf16.mxu0 0
      %4774 = vmatpush1.bf16.msra.mxu0 0
      %4775 = vmatprep.subr.bf16.mxu0 0
      %4776 = vmatpush1.bf16.msra.mxu0 0
      %4777 = vmatprep.mubr.bf16.mxu0 0
      %4778 = vmatmul.mubr.bf16.gmra.mrb[0].mxu0 %v4689
      %v4779 = vpop.f32.mrb[0].mxu0
      %v4780 = vadd.f32 0.0, %v4779
      %v4781 = vpop.f32.mrb[0].mxu0
      %v4782 = vadd.f32 0.0, %v4781
      %v4783 = vpop.f32.mrb[0].mxu0
      %v4784 = vpop.f32.mrb[0].mxu0
      %4785 = vdwg.mxu0
      %4786 = vmatprep.subr.bf16.mxu0 %v4456
      %4787 = vmatpush1.bf16.msra.mxu0 %v4455
      %4788 = vmatprep.subr.bf16.mxu0 %v4474
      %4789 = vmatpush1.bf16.msra.mxu0 %v4473
      %4790 = vmatprep.subr.bf16.mxu0 %v4492
      %4791 = vmatpush1.bf16.msra.mxu0 %v4491
      %4792 = vmatprep.subr.bf16.mxu0 %v4510
      %4793 = vmatpush1.bf16.msra.mxu0 %v4509
      %4794 = vmatprep.subr.bf16.mxu0 %v4528
      %4795 = vmatpush1.bf16.msra.mxu0 %v4527
      %4796 = vmatprep.subr.bf16.mxu0 %v4546
      %4797 = vmatpush1.bf16.msra.mxu0 %v4545
      %4798 = vmatprep.subr.bf16.mxu0 %v4701
      %4799 = vmatpush1.bf16.msra.mxu0 %v4698
      %4800 = vmatprep.subr.bf16.mxu0 0
      %4801 = vmatpush1.bf16.msra.mxu0 0
      %4802 = vmatprep.subr.bf16.mxu0 0
      %4803 = vmatpush1.bf16.msra.mxu0 0
      %4804 = vmatprep.subr.bf16.mxu0 0
      %4805 = vmatpush1.bf16.msra.mxu0 0
      %4806 = vmatprep.subr.bf16.mxu0 0
      %4807 = vmatpush1.bf16.msra.mxu0 0
      %4808 = vmatprep.subr.bf16.mxu0 0
      %4809 = vmatpush1.bf16.msra.mxu0 0
      %4810 = vmatprep.subr.bf16.mxu0 0
      %4811 = vmatpush1.bf16.msra.mxu0 0
      %4812 = vmatprep.subr.bf16.mxu0 0
      %4813 = vmatpush1.bf16.msra.mxu0 0
      %4814 = vmatprep.subr.bf16.mxu0 0
      %4815 = vmatpush1.bf16.msra.mxu0 0
      %4816 = vmatprep.subr.bf16.mxu0 0
      %4817 = vmatpush1.bf16.msra.mxu0 0
      %4818 = vmatprep.mubr.bf16.mxu0 0
      %4819 = vmatmul.mubr.bf16.gmra.mrb[0].mxu0 %v4689
      %v4820 = vpop.f32.mrb[0].mxu0
      %v4821 = vadd.f32 0.0, %v4820
      %v4822 = vpop.f32.mrb[0].mxu0
      %v4823 = vadd.f32 0.0, %v4822
      %v4824 = vpop.f32.mrb[0].mxu0
      %v4825 = vpop.f32.mrb[0].mxu0
      %4826 = vdwg.mxu0
      %4827 = vmatprep.subr.bf16.mxu0 %v4458
      %4828 = vmatpush1.bf16.msra.mxu0 %v4457
      %4829 = vmatprep.subr.bf16.mxu0 %v4476
      %4830 = vmatpush1.bf16.msra.mxu0 %v4475
      %4831 = vmatprep.subr.bf16.mxu0 %v4494
      %4832 = vmatpush1.bf16.msra.mxu0 %v4493
      %4833 = vmatprep.subr.bf16.mxu0 %v4512
      %4834 = vmatpush1.bf16.msra.mxu0 %v4511
      %4835 = vmatprep.subr.bf16.mxu0 %v4530
      %4836 = vmatpush1.bf16.msra.mxu0 %v4529
      %4837 = vmatprep.subr.bf16.mxu0 %v4548
      %4838 = vmatpush1.bf16.msra.mxu0 %v4547
      %4839 = vmatprep.subr.bf16.mxu0 %v4707
      %4840 = vmatpush1.bf16.msra.mxu0 %v4704
      %4841 = vmatprep.subr.bf16.mxu0 0
      %4842 = vmatpush1.bf16.msra.mxu0 0
      %4843 = vmatprep.subr.bf16.mxu0 0
      %4844 = vmatpush1.bf16.msra.mxu0 0
      %4845 = vmatprep.subr.bf16.mxu0 0
      %4846 = vmatpush1.bf16.msra.mxu0 0
      %4847 = vmatprep.subr.bf16.mxu0 0
      %4848 = vmatpush1.bf16.msra.mxu0 0
      %4849 = vmatprep.subr.bf16.mxu0 0
      %4850 = vmatpush1.bf16.msra.mxu0 0
      %4851 = vmatprep.subr.bf16.mxu0 0
      %4852 = vmatpush1.bf16.msra.mxu0 0
      %4853 = vmatprep.subr.bf16.mxu0 0
      %4854 = vmatpush1.bf16.msra.mxu0 0
      %4855 = vmatprep.subr.bf16.mxu0 0
      %4856 = vmatpush1.bf16.msra.mxu0 0
      %4857 = vmatprep.subr.bf16.mxu0 0
      %4858 = vmatpush1.bf16.msra.mxu0 0
      %4859 = vmatprep.mubr.bf16.mxu0 0
      %4860 = vmatmul.mubr.bf16.gmra.mrb[0].mxu0 %v4689
      %v4861 = vpop.f32.mrb[0].mxu0
      %v4862 = vadd.f32 0.0, %v4861
      %v4863 = vpop.f32.mrb[0].mxu0
      %v4864 = vadd.f32 0.0, %v4863
      %v4865 = vpop.f32.mrb[0].mxu0
      %v4866 = vpop.f32.mrb[0].mxu0
      %4867 = vdwg.mxu0
      %4868 = vmatprep.subr.bf16.mxu0 %v4460
      %4869 = vmatpush1.bf16.msra.mxu0 %v4459
      %4870 = vmatprep.subr.bf16.mxu0 %v4478
      %4871 = vmatpush1.bf16.msra.mxu0 %v4477
      %4872 = vmatprep.subr.bf16.mxu0 %v4496
      %4873 = vmatpush1.bf16.msra.mxu0 %v4495
      %4874 = vmatprep.subr.bf16.mxu0 %v4514
      %4875 = vmatpush1.bf16.msra.mxu0 %v4513
      %4876 = vmatprep.subr.bf16.mxu0 %v4532
      %4877 = vmatpush1.bf16.msra.mxu0 %v4531
      %4878 = vmatprep.subr.bf16.mxu0 %v4550
      %4879 = vmatpush1.bf16.msra.mxu0 %v4549
      %4880 = vmatprep.subr.bf16.mxu0 %v4713
      %4881 = vmatpush1.bf16.msra.mxu0 %v4710
      %4882 = vmatprep.subr.bf16.mxu0 0
      %4883 = vmatpush1.bf16.msra.mxu0 0
      %4884 = vmatprep.subr.bf16.mxu0 0
      %4885 = vmatpush1.bf16.msra.mxu0 0
      %4886 = vmatprep.subr.bf16.mxu0 0
      %4887 = vmatpush1.bf16.msra.mxu0 0
      %4888 = vmatprep.subr.bf16.mxu0 0
      %4889 = vmatpush1.bf16.msra.mxu0 0
      %4890 = vmatprep.subr.bf16.mxu0 0
      %4891 = vmatpush1.bf16.msra.mxu0 0
      %4892 = vmatprep.subr.bf16.mxu0 0
      %4893 = vmatpush1.bf16.msra.mxu0 0
      %4894 = vmatprep.subr.bf16.mxu0 0
      %4895 = vmatpush1.bf16.msra.mxu0 0
      %4896 = vmatprep.subr.bf16.mxu0 0
      %4897 = vmatpush1.bf16.msra.mxu0 0
      %4898 = vmatprep.subr.bf16.mxu0 0
      %4899 = vmatpush1.bf16.msra.mxu0 0
      %4900 = vmatprep.mubr.bf16.mxu0 0
      %4901 = vmatmul.mubr.bf16.gmra.mrb[0].mxu0 %v4689
      %v4902 = vpop.f32.mrb[0].mxu0
      %v4903 = vadd.f32 0.0, %v4902
      %v4904 = vpop.f32.mrb[0].mxu0
      %v4905 = vadd.f32 0.0, %v4904
      %v4906 = vpop.f32.mrb[0].mxu0
      %v4907 = vpop.f32.mrb[0].mxu0
      %4908 = vdwg.mxu0
      %4909 = vmatprep.subr.bf16.mxu0 %v4462
      %4910 = vmatpush1.bf16.msra.mxu0 %v4461
      %4911 = vmatprep.subr.bf16.mxu0 %v4480
      %4912 = vmatpush1.bf16.msra.mxu0 %v4479
      %4913 = vmatprep.subr.bf16.mxu0 %v4498
      %4914 = vmatpush1.bf16.msra.mxu0 %v4497
      %4915 = vmatprep.subr.bf16.mxu0 %v4516
      %4916 = vmatpush1.bf16.msra.mxu0 %v4515
      %4917 = vmatprep.subr.bf16.mxu0 %v4534
      %4918 = vmatpush1.bf16.msra.mxu0 %v4533
      %4919 = vmatprep.subr.bf16.mxu0 %v4552
      %4920 = vmatpush1.bf16.msra.mxu0 %v4551
      %4921 = vmatprep.subr.bf16.mxu0 %v4719
      %4922 = vmatpush1.bf16.msra.mxu0 %v4716
      %4923 = vmatprep.subr.bf16.mxu0 0
      %4924 = vmatpush1.bf16.msra.mxu0 0
      %4925 = vmatprep.subr.bf16.mxu0 0
      %4926 = vmatpush1.bf16.msra.mxu0 0
      %4927 = vmatprep.subr.bf16.mxu0 0
      %4928 = vmatpush1.bf16.msra.mxu0 0
      %4929 = vmatprep.subr.bf16.mxu0 0
      %4930 = vmatpush1.bf16.msra.mxu0 0
      %4931 = vmatprep.subr.bf16.mxu0 0
      %4932 = vmatpush1.bf16.msra.mxu0 0
      %4933 = vmatprep.subr.bf16.mxu0 0
      %4934 = vmatpush1.bf16.msra.mxu0 0
      %4935 = vmatprep.subr.bf16.mxu0 0
      %4936 = vmatpush1.bf16.msra.mxu0 0
      %4937 = vmatprep.subr.bf16.mxu0 0
      %4938 = vmatpush1.bf16.msra.mxu0 0
      %4939 = vmatprep.subr.bf16.mxu0 0
      %4940 = vmatpush1.bf16.msra.mxu0 0
      %4941 = vmatprep.mubr.bf16.mxu0 0
      %4942 = vmatmul.mubr.bf16.gmra.mrb[0].mxu0 %v4689
      %v4943 = vpop.f32.mrb[0].mxu0
      %v4944 = vadd.f32 0.0, %v4943
      %v4945 = vpop.f32.mrb[0].mxu0
      %v4946 = vadd.f32 0.0, %v4945
      %v4947 = vpop.f32.mrb[0].mxu0
      %v4948 = vpop.f32.mrb[0].mxu0
      %4949 = vdwg.mxu0
      %4950 = vmatprep.subr.bf16.mxu0 %v4464
      %4951 = vmatpush1.bf16.msra.mxu0 %v4463
      %4952 = vmatprep.subr.bf16.mxu0 %v4482
      %4953 = vmatpush1.bf16.msra.mxu0 %v4481
      %4954 = vmatprep.subr.bf16.mxu0 %v4500
      %4955 = vmatpush1.bf16.msra.mxu0 %v4499
      %4956 = vmatprep.subr.bf16.mxu0 %v4518
      %4957 = vmatpush1.bf16.msra.mxu0 %v4517
      %4958 = vmatprep.subr.bf16.mxu0 %v4536
      %4959 = vmatpush1.bf16.msra.mxu0 %v4535
      %4960 = vmatprep.subr.bf16.mxu0 %v4554
      %4961 = vmatpush1.bf16.msra.mxu0 %v4553
      %4962 = vmatprep.subr.bf16.mxu0 %v4725
      %4963 = vmatpush1.bf16.msra.mxu0 %v4722
      %4964 = vmatprep.subr.bf16.mxu0 0
      %4965 = vmatpush1.bf16.msra.mxu0 0
      %4966 = vmatprep.subr.bf16.mxu0 0
      %4967 = vmatpush1.bf16.msra.mxu0 0
      %4968 = vmatprep.subr.bf16.mxu0 0
      %4969 = vmatpush1.bf16.msra.mxu0 0
      %4970 = vmatprep.subr.bf16.mxu0 0
      %4971 = vmatpush1.bf16.msra.mxu0 0
      %4972 = vmatprep.subr.bf16.mxu0 0
      %4973 = vmatpush1.bf16.msra.mxu0 0
      %4974 = vmatprep.subr.bf16.mxu0 0
      %4975 = vmatpush1.bf16.msra.mxu0 0
      %4976 = vmatprep.subr.bf16.mxu0 0
      %4977 = vmatpush1.bf16.msra.mxu0 0
      %4978 = vmatprep.subr.bf16.mxu0 0
      %4979 = vmatpush1.bf16.msra.mxu0 0
      %4980 = vmatprep.subr.bf16.mxu0 0
      %4981 = vmatpush1.bf16.msra.mxu0 0
      %4982 = vmatprep.mubr.bf16.mxu0 0
      %4983 = vmatmul.mubr.bf16.gmra.mrb[0].mxu0 %v4689
      %v4984 = vpop.f32.mrb[0].mxu0
      %v4985 = vadd.f32 0.0, %v4984
      %v4986 = vpop.f32.mrb[0].mxu0
      %v4987 = vadd.f32 0.0, %v4986
      %v4988 = vpop.f32.mrb[0].mxu0
      %v4989 = vpop.f32.mrb[0].mxu0
      %4990 = vdwg.mxu0
      %4991 = vmatprep.subr.bf16.mxu0 %v4466
      %4992 = vmatpush1.bf16.msra.mxu0 %v4465
      %4993 = vmatprep.subr.bf16.mxu0 %v4484
      %4994 = vmatpush1.bf16.msra.mxu0 %v4483
      %4995 = vmatprep.subr.bf16.mxu0 %v4502
      %4996 = vmatpush1.bf16.msra.mxu0 %v4501
      %4997 = vmatprep.subr.bf16.mxu0 %v4520
      %4998 = vmatpush1.bf16.msra.mxu0 %v4519
      %4999 = vmatprep.subr.bf16.mxu0 %v4538
      %5000 = vmatpush1.bf16.msra.mxu0 %v4537
      %5001 = vmatprep.subr.bf16.mxu0 %v4556
      %5002 = vmatpush1.bf16.msra.mxu0 %v4555
      %5003 = vmatprep.subr.bf16.mxu0 %v4731
      %5004 = vmatpush1.bf16.msra.mxu0 %v4728
      %5005 = vmatprep.subr.bf16.mxu0 0
      %5006 = vmatpush1.bf16.msra.mxu0 0
      %5007 = vmatprep.subr.bf16.mxu0 0
      %5008 = vmatpush1.bf16.msra.mxu0 0
      %5009 = vmatprep.subr.bf16.mxu0 0
      %5010 = vmatpush1.bf16.msra.mxu0 0
      %5011 = vmatprep.subr.bf16.mxu0 0
      %5012 = vmatpush1.bf16.msra.mxu0 0
      %5013 = vmatprep.subr.bf16.mxu0 0
      %5014 = vmatpush1.bf16.msra.mxu0 0
      %5015 = vmatprep.subr.bf16.mxu0 0
      %5016 = vmatpush1.bf16.msra.mxu0 0
      %5017 = vmatprep.subr.bf16.mxu0 0
      %5018 = vmatpush1.bf16.msra.mxu0 0
      %5019 = vmatprep.subr.bf16.mxu0 0
      %5020 = vmatpush1.bf16.msra.mxu0 0
      %5021 = vmatprep.subr.bf16.mxu0 0
      %5022 = vmatpush1.bf16.msra.mxu0 0
      %5023 = vmatprep.mubr.bf16.mxu0 0
      %5024 = vmatmul.mubr.bf16.gmra.mrb[0].mxu0 %v4689
      %v5025 = vpop.f32.mrb[0].mxu0
      %v5026 = vadd.f32 0.0, %v5025
      %v5027 = vpop.f32.mrb[0].mxu0
      %v5028 = vadd.f32 0.0, %v5027
      %v5029 = vpop.f32.mrb[0].mxu0
      %v5030 = vpop.f32.mrb[0].mxu0
      %5031 = vdwg.mxu0
      %5032 = vmatprep.subr.bf16.mxu0 %v4468
      %5033 = vmatpush1.bf16.msra.mxu0 %v4467
      %5034 = vmatprep.subr.bf16.mxu0 %v4486
      %5035 = vmatpush1.bf16.msra.mxu0 %v4485
      %5036 = vmatprep.subr.bf16.mxu0 %v4504
      %5037 = vmatpush1.bf16.msra.mxu0 %v4503
      %5038 = vmatprep.subr.bf16.mxu0 %v4522
      %5039 = vmatpush1.bf16.msra.mxu0 %v4521
      %5040 = vmatprep.subr.bf16.mxu0 %v4540
      %5041 = vmatpush1.bf16.msra.mxu0 %v4539
      %5042 = vmatprep.subr.bf16.mxu0 %v4558
      %5043 = vmatpush1.bf16.msra.mxu0 %v4557
      %5044 = vmatprep.subr.bf16.mxu0 %v4737
      %5045 = vmatpush1.bf16.msra.mxu0 %v4734
      %5046 = vmatprep.subr.bf16.mxu0 0
      %5047 = vmatpush1.bf16.msra.mxu0 0
      %5048 = vmatprep.subr.bf16.mxu0 0
      %5049 = vmatpush1.bf16.msra.mxu0 0
      %5050 = vmatprep.subr.bf16.mxu0 0
      %5051 = vmatpush1.bf16.msra.mxu0 0
      %5052 = vmatprep.subr.bf16.mxu0 0
      %5053 = vmatpush1.bf16.msra.mxu0 0
      %5054 = vmatprep.subr.bf16.mxu0 0
      %5055 = vmatpush1.bf16.msra.mxu0 0
      %5056 = vmatprep.subr.bf16.mxu0 0
      %5057 = vmatpush1.bf16.msra.mxu0 0
      %5058 = vmatprep.subr.bf16.mxu0 0
      %5059 = vmatpush1.bf16.msra.mxu0 0
      %5060 = vmatprep.subr.bf16.mxu0 0
      %5061 = vmatpush1.bf16.msra.mxu0 0
      %5062 = vmatprep.subr.bf16.mxu0 0
      %5063 = vmatpush1.bf16.msra.mxu0 0
      %5064 = vmatprep.mubr.bf16.mxu0 0
      %5065 = vmatmul.mubr.bf16.gmra.mrb[0].mxu0 %v4689
      %v5066 = vpop.f32.mrb[0].mxu0
      %v5067 = vadd.f32 0.0, %v5066
      %v5068 = vpop.f32.mrb[0].mxu0
      %v5069 = vadd.f32 0.0, %v5068
      %v5070 = vpop.f32.mrb[0].mxu0
      %v5071 = vpop.f32.mrb[0].mxu0
      %5072 = vdwg.mxu0
      %5073 = vmatprep.subr.bf16.mxu0 %v4470
      %5074 = vmatpush1.bf16.msra.mxu0 %v4469
      %5075 = vmatprep.subr.bf16.mxu0 %v4488
      %5076 = vmatpush1.bf16.msra.mxu0 %v4487
      %5077 = vmatprep.subr.bf16.mxu0 %v4506
      %5078 = vmatpush1.bf16.msra.mxu0 %v4505
      %5079 = vmatprep.subr.bf16.mxu0 %v4524
      %5080 = vmatpush1.bf16.msra.mxu0 %v4523
      %5081 = vmatprep.subr.bf16.mxu0 %v4542
      %5082 = vmatpush1.bf16.msra.mxu0 %v4541
      %5083 = vmatprep.subr.bf16.mxu0 %v4560
      %5084 = vmatpush1.bf16.msra.mxu0 %v4559
      %5085 = vmatprep.subr.bf16.mxu0 %v4743
      %5086 = vmatpush1.bf16.msra.mxu0 %v4740
      %5087 = vmatprep.subr.bf16.mxu0 0
      %5088 = vmatpush1.bf16.msra.mxu0 0
      %5089 = vmatprep.subr.bf16.mxu0 0
      %5090 = vmatpush1.bf16.msra.mxu0 0
      %5091 = vmatprep.subr.bf16.mxu0 0
      %5092 = vmatpush1.bf16.msra.mxu0 0
      %5093 = vmatprep.subr.bf16.mxu0 0
      %5094 = vmatpush1.bf16.msra.mxu0 0
      %5095 = vmatprep.subr.bf16.mxu0 0
      %5096 = vmatpush1.bf16.msra.mxu0 0
      %5097 = vmatprep.subr.bf16.mxu0 0
      %5098 = vmatpush1.bf16.msra.mxu0 0
      %5099 = vmatprep.subr.bf16.mxu0 0
      %5100 = vmatpush1.bf16.msra.mxu0 0
      %5101 = vmatprep.subr.bf16.mxu0 0
      %5102 = vmatpush1.bf16.msra.mxu0 0
      %5103 = vmatprep.subr.bf16.mxu0 0
      %5104 = vmatpush1.bf16.msra.mxu0 0
      %5105 = vmatprep.mubr.bf16.mxu0 0
      %5106 = vmatmul.mubr.bf16.gmra.mrb[0].mxu0 %v4689
      %v5107 = vpop.f32.mrb[0].mxu0
      %v5108 = vadd.f32 0.0, %v5107
      %v5109 = vpop.f32.mrb[0].mxu0
      %v5110 = vadd.f32 0.0, %v5109
      %v5111 = vpop.f32.mrb[0].mxu0
      %v5112 = vpop.f32.mrb[0].mxu0
      %5113 = vdwg.mxu0
      %v5114 = vld [vmem:[%s2] sm:$0xff]
      %5116 = vset.pattern.permute.xlu0 0
      %5117 = vperm.xlu0 %5116, %v5114
      %v5118 = vpop.permute.xlu0 %5117
      %v5120 = vmul.f32 %v4780, %v5118
      %v5121 = vmul.f32 %v4782, %v5118
      %v5122 = vmul.f32 %v4821, %v5118
      %v5123 = vmul.f32 %v4823, %v5118
      %v5124 = vmul.f32 %v4862, %v5118
      %v5125 = vmul.f32 %v4864, %v5118
      %v5126 = vmul.f32 %v4903, %v5118
      %v5127 = vmul.f32 %v4905, %v5118
      %v5128 = vmul.f32 %v4944, %v5118
      %v5129 = vmul.f32 %v4946, %v5118
      %v5130 = vmul.f32 %v4985, %v5118
      %v5131 = vmul.f32 %v4987, %v5118
      %v5132 = vmul.f32 %v5026, %v5118
      %v5133 = vmul.f32 %v5028, %v5118
      %v5134 = vmul.f32 %v5067, %v5118
      %v5135 = vmul.f32 %v5069, %v5118
      %v5136 = vmul.f32 %v5108, %v5118
      %v5137 = vmul.f32 %v5110, %v5118
      %v5138 = vld [vmem:[%s3] sm:$0xff]
      %5140 = vset.pattern.permute.xlu0 0
      %5141 = vperm.xlu0 %5140, %v5138
      %v5142 = vpop.permute.xlu0 %5141
      %v5144 = vadd.f32 %v5120, %v5142
      %v5145 = vadd.f32 %v5121, %v5142
      %v5146 = vadd.f32 %v5122, %v5142
      %v5147 = vadd.f32 %v5123, %v5142
      %v5148 = vadd.f32 %v5124, %v5142
      %v5149 = vadd.f32 %v5125, %v5142
      %v5150 = vadd.f32 %v5126, %v5142
      %v5151 = vadd.f32 %v5127, %v5142
      %v5152 = vadd.f32 %v5128, %v5142
      %v5153 = vadd.f32 %v5129, %v5142
      %v5154 = vadd.f32 %v5130, %v5142
      %v5155 = vadd.f32 %v5131, %v5142
      %v5156 = vadd.f32 %v5132, %v5142
      %v5157 = vadd.f32 %v5133, %v5142
      %v5158 = vadd.f32 %v5134, %v5142
      %v5159 = vadd.f32 %v5135, %v5142
      %v5160 = vadd.f32 %v5136, %v5142
      %v5161 = vadd.f32 %v5137, %v5142
      %v5162 = vmax.f32 %v5144, 0.0
      %v5163 = vmax.f32 %v5145, 0.0
      %v5164 = vmax.f32 %v5146, 0.0
      %v5165 = vmax.f32 %v5147, 0.0
      %v5166 = vmax.f32 %v5148, 0.0
      %v5167 = vmax.f32 %v5149, 0.0
      %v5168 = vmax.f32 %v5150, 0.0
      %v5169 = vmax.f32 %v5151, 0.0
      %v5170 = vmax.f32 %v5152, 0.0
      %v5171 = vmax.f32 %v5153, 0.0
      %v5172 = vmax.f32 %v5154, 0.0
      %v5173 = vmax.f32 %v5155, 0.0
      %v5174 = vmax.f32 %v5156, 0.0
      %v5175 = vmax.f32 %v5157, 0.0
      %v5176 = vmax.f32 %v5158, 0.0
      %v5177 = vmax.f32 %v5159, 0.0
      %v5178 = vmax.f32 %v5160, 0.0
      %v5179 = vmax.f32 %v5161, 0.0
      %5198 = vrot.lane.b32.xlu0 %v5162, 127
      %v5199 = vpop.permute.xlu0 %5198
      %5200 = vrot.lane.b32.xlu0 %v5163, 127
      %v5201 = vpop.permute.xlu0 %5200
      %5202 = vrot.lane.b32.xlu0 %v5164, 127
      %v5203 = vpop.permute.xlu0 %5202
      %5204 = vrot.lane.b32.xlu0 %v5165, 127
      %v5205 = vpop.permute.xlu0 %5204
      %5206 = vrot.lane.b32.xlu0 %v5166, 127
      %v5207 = vpop.permute.xlu0 %5206
      %5208 = vrot.lane.b32.xlu0 %v5167, 127
      %v5209 = vpop.permute.xlu0 %5208
      %5210 = vrot.lane.b32.xlu0 %v5168, 127
      %v5211 = vpop.permute.xlu0 %5210
      %5212 = vrot.lane.b32.xlu0 %v5169, 127
      %v5213 = vpop.permute.xlu0 %5212
      %5214 = vrot.lane.b32.xlu0 %v5170, 127
      %v5215 = vpop.permute.xlu0 %5214
      %5216 = vrot.lane.b32.xlu0 %v5171, 127
      %v5217 = vpop.permute.xlu0 %5216
      %5218 = vrot.lane.b32.xlu0 %v5172, 127
      %v5219 = vpop.permute.xlu0 %5218
      %5220 = vrot.lane.b32.xlu0 %v5173, 127
      %v5221 = vpop.permute.xlu0 %5220
      %5222 = vrot.lane.b32.xlu0 %v5174, 127
      %v5223 = vpop.permute.xlu0 %5222
      %5224 = vrot.lane.b32.xlu0 %v5175, 127
      %v5225 = vpop.permute.xlu0 %5224
      %5226 = vrot.lane.b32.xlu0 %v5176, 127
      %v5227 = vpop.permute.xlu0 %5226
      %5228 = vrot.lane.b32.xlu0 %v5177, 127
      %v5229 = vpop.permute.xlu0 %5228
      %5230 = vrot.lane.b32.xlu0 %v5178, 127
      %v5231 = vpop.permute.xlu0 %5230
      %5232 = vrot.lane.b32.xlu0 %v5179, 127
      %v5233 = vpop.permute.xlu0 %5232
      %vm5234 = vcmask 1039360
      %v5235 = vsel %vm5234, %v5199, %v5201
      %v5236 = vsel %vm5234, %v5201, %v5203
      %v5237 = vsel %vm5234, %v5203, %v5205
      %v5238 = vsel %vm5234, %v5205, %v5207
      %v5239 = vsel %vm5234, %v5207, %v5209
      %v5240 = vsel %vm5234, %v5209, %v5211
      %v5241 = vsel %vm5234, %v5211, %v5213
      %v5242 = vsel %vm5234, %v5213, %v5215
      %v5243 = vsel %vm5234, %v5215, %v5217
      %v5244 = vsel %vm5234, %v5217, %v5219
      %v5245 = vsel %vm5234, %v5219, %v5221
      %v5246 = vsel %vm5234, %v5221, %v5223
      %v5247 = vsel %vm5234, %v5223, %v5225
      %v5248 = vsel %vm5234, %v5225, %v5227
      %v5249 = vsel %vm5234, %v5227, %v5229
      %v5250 = vsel %vm5234, %v5229, %v5231
      %v5251 = vsel %vm5234, %v5231, %v5233
      %v5270 = vmax.f32 %v5162, %v5235
      %v5271 = vmax.f32 %v5163, %v5236
      %v5272 = vmax.f32 %v5164, %v5237
      %v5273 = vmax.f32 %v5165, %v5238
      %v5274 = vmax.f32 %v5166, %v5239
      %v5275 = vmax.f32 %v5167, %v5240
      %v5276 = vmax.f32 %v5168, %v5241
      %v5277 = vmax.f32 %v5169, %v5242
      %v5278 = vmax.f32 %v5170, %v5243
      %v5279 = vmax.f32 %v5171, %v5244
      %v5280 = vmax.f32 %v5172, %v5245
      %v5281 = vmax.f32 %v5173, %v5246
      %v5282 = vmax.f32 %v5174, %v5247
      %v5283 = vmax.f32 %v5175, %v5248
      %v5284 = vmax.f32 %v5176, %v5249
      %v5285 = vmax.f32 %v5177, %v5250
      %v5286 = vmax.f32 %v5178, %v5251
      %v5287 = vmax.f32 %v5179, %v5233
      %5306 = vrot.lane.b32.xlu0 %v5270, 78
      %v5307 = vpop.permute.xlu0 %5306
      %5308 = vrot.lane.b32.xlu0 %v5271, 78
      %v5309 = vpop.permute.xlu0 %5308
      %5310 = vrot.lane.b32.xlu0 %v5272, 78
      %v5311 = vpop.permute.xlu0 %5310
      %5312 = vrot.lane.b32.xlu0 %v5273, 78
      %v5313 = vpop.permute.xlu0 %5312
      %5314 = vrot.lane.b32.xlu0 %v5274, 78
      %v5315 = vpop.permute.xlu0 %5314
      %5316 = vrot.lane.b32.xlu0 %v5275, 78
      %v5317 = vpop.permute.xlu0 %5316
      %5318 = vrot.lane.b32.xlu0 %v5276, 78
      %v5319 = vpop.permute.xlu0 %5318
      %5320 = vrot.lane.b32.xlu0 %v5277, 78
      %v5321 = vpop.permute.xlu0 %5320
      %5322 = vrot.lane.b32.xlu0 %v5278, 78
      %v5323 = vpop.permute.xlu0 %5322
      %5324 = vrot.lane.b32.xlu0 %v5279, 78
      %v5325 = vpop.permute.xlu0 %5324
      %5326 = vrot.lane.b32.xlu0 %v5280, 78
      %v5327 = vpop.permute.xlu0 %5326
      %5328 = vrot.lane.b32.xlu0 %v5281, 78
      %v5329 = vpop.permute.xlu0 %5328
      %5330 = vrot.lane.b32.xlu0 %v5282, 78
      %v5331 = vpop.permute.xlu0 %5330
      %5332 = vrot.lane.b32.xlu0 %v5283, 78
      %v5333 = vpop.permute.xlu0 %5332
      %5334 = vrot.lane.b32.xlu0 %v5284, 78
      %v5335 = vpop.permute.xlu0 %5334
      %5336 = vrot.lane.b32.xlu0 %v5285, 78
      %v5337 = vpop.permute.xlu0 %5336
      %5338 = vrot.lane.b32.xlu0 %v5286, 78
      %v5339 = vpop.permute.xlu0 %5338
      %5340 = vrot.lane.b32.xlu0 %v5287, 78
      %v5341 = vpop.permute.xlu0 %5340
      %vm5342 = vcmask 637952
      %v5343 = vsel %vm5342, %v5307, %v5309
      %v5344 = vsel %vm5342, %v5309, %v5311
      %v5345 = vsel %vm5342, %v5311, %v5313
      %v5346 = vsel %vm5342, %v5313, %v5315
      %v5347 = vsel %vm5342, %v5315, %v5317
      %v5348 = vsel %vm5342, %v5317, %v5319
      %v5349 = vsel %vm5342, %v5319, %v5321
      %v5350 = vsel %vm5342, %v5321, %v5323
      %v5351 = vsel %vm5342, %v5323, %v5325
      %v5352 = vsel %vm5342, %v5325, %v5327
      %v5353 = vsel %vm5342, %v5327, %v5329
      %v5354 = vsel %vm5342, %v5329, %v5331
      %v5355 = vsel %vm5342, %v5331, %v5333
      %v5356 = vsel %vm5342, %v5333, %v5335
      %v5357 = vsel %vm5342, %v5335, %v5337
      %v5358 = vsel %vm5342, %v5337, %v5339
      %v5359 = vsel %vm5342, %v5339, %v5341
      %v5378 = vmax.f32 %v5270, %v5343
      %v5379 = vmax.f32 %v5271, %v5344
      %v5380 = vmax.f32 %v5272, %v5345
      %v5381 = vmax.f32 %v5273, %v5346
      %v5382 = vmax.f32 %v5274, %v5347
      %v5383 = vmax.f32 %v5275, %v5348
      %v5384 = vmax.f32 %v5276, %v5349
      %v5385 = vmax.f32 %v5277, %v5350
      %v5386 = vmax.f32 %v5278, %v5351
      %v5387 = vmax.f32 %v5279, %v5352
      %v5388 = vmax.f32 %v5280, %v5353
      %v5389 = vmax.f32 %v5281, %v5354
      %v5390 = vmax.f32 %v5282, %v5355
      %v5391 = vmax.f32 %v5283, %v5356
      %v5392 = vmax.f32 %v5284, %v5357
      %v5393 = vmax.f32 %v5285, %v5358
      %v5394 = vmax.f32 %v5286, %v5359
      %v5395 = vmax.f32 %v5287, %v5341
      %v5396 = vpack.c.bf16 %v5378, %v5378
      %v5397 = vpack.c.bf16 %v5379, %v5379
      %v5398 = vpack.c.bf16 %v5380, %v5380
      %v5399 = vpack.c.bf16 %v5381, %v5381
      %v5400 = vpack.c.bf16 %v5382, %v5382
      %v5401 = vpack.c.bf16 %v5383, %v5383
      %v5402 = vpack.c.bf16 %v5384, %v5384
      %v5403 = vpack.c.bf16 %v5385, %v5385
      %v5404 = vpack.c.bf16 %v5386, %v5386
      %v5405 = vpack.c.bf16 %v5387, %v5387
      %v5406 = vpack.c.bf16 %v5388, %v5388
      %v5407 = vpack.c.bf16 %v5389, %v5389
      %v5408 = vpack.c.bf16 %v5390, %v5390
      %v5409 = vpack.c.bf16 %v5391, %v5391
      %v5410 = vpack.c.bf16 %v5392, %v5392
      %v5411 = vpack.c.bf16 %v5393, %v5393
      %v5412 = vpack.c.bf16 %v5394, %v5394
      %v5413 = vpack.c.bf16 %v5395, %v5395
      %v5432 = vunpack.c.l.b16 %v5396
      %v5433 = vunpack.c.l.b16 %v5397
      %v5434 = vunpack.c.l.b16 %v5398
      %v5435 = vunpack.c.l.b16 %v5399
      %v5436 = vunpack.c.l.b16 %v5400
      %v5437 = vunpack.c.l.b16 %v5401
      %v5438 = vunpack.c.l.b16 %v5402
      %v5439 = vunpack.c.l.b16 %v5403
      %v5440 = vunpack.c.l.b16 %v5404
      %v5441 = vunpack.c.l.b16 %v5405
      %v5442 = vunpack.c.l.b16 %v5406
      %v5443 = vunpack.c.l.b16 %v5407
      %v5444 = vunpack.c.l.b16 %v5408
      %v5445 = vunpack.c.l.b16 %v5409
      %v5446 = vunpack.c.l.b16 %v5410
      %v5447 = vunpack.c.l.b16 %v5411
      %v5448 = vunpack.c.l.b16 %v5412
      %v5449 = vunpack.c.l.b16 %v5413
      %v5450 = vpack.c.b16 %v5433, %v5432
      %v5451 = vpack.c.b16 %v5435, %v5434
      %v5452 = vpack.c.b16 %v5437, %v5436
      %v5453 = vpack.c.b16 %v5439, %v5438
      %v5454 = vpack.c.b16 %v5441, %v5440
      %v5455 = vpack.c.b16 %v5443, %v5442
      %v5456 = vpack.c.b16 %v5445, %v5444
      %v5457 = vpack.c.b16 %v5447, %v5446
      %v5458 = vpack.c.b16 %v5449, %v5448
      %5468 = vst [vmem:[#allocation3] sm:$0xff] %v5450
      %5469 = vst [vmem:[#allocation3 + $0x8] sm:$0xff] %v5451
      %5470 = vst [vmem:[#allocation3 + $0x10] sm:$0xff] %v5452
      %5471 = vst [vmem:[#allocation3 + $0x18] sm:$0xff] %v5453
      %5472 = vst [vmem:[#allocation3 + $0x20] sm:$0xff] %v5454
      %5473 = vst [vmem:[#allocation3 + $0x28] sm:$0xff] %v5455
      %5474 = vst [vmem:[#allocation3 + $0x30] sm:$0xff] %v5456
      %5475 = vst [vmem:[#allocation3 + $0x38] sm:$0xff] %v5457
      %vm5476 = vcmask 1043456
      %vm5477 = vcmask 564228
      %vm5478 = vmor %vm5477, %vm5476
      %5479 = vst.msk [vmem:[#allocation3 + $0x40] sm:$0xff] %vm5478, %v5458
      %v5480 = vld [vmem:[#allocation3] sm:$0xff]
      %v5481 = vld [vmem:[#allocation3 + $0x8] sm:$0xff]
      %v5482 = vld [vmem:[#allocation3 + $0x10] sm:$0xff]
      %v5483 = vld [vmem:[#allocation3 + $0x18] sm:$0xff]
      %v5484 = vld [vmem:[#allocation3 + $0x20] sm:$0xff]
      %v5485 = vld [vmem:[#allocation3 + $0x28] sm:$0xff]
      %v5486 = vld [vmem:[#allocation3 + $0x30] sm:$0xff]
      %v5487 = vld [vmem:[#allocation3 + $0x38] sm:$0xff]
      %v5496 = vunpack.c.l.b16 %v5480
      %v5497 = vunpack.c.h.b16 %v5480
      %v5498 = vunpack.c.l.b16 %v5481
      %v5499 = vunpack.c.h.b16 %v5481
      %v5500 = vunpack.c.l.b16 %v5482
      %v5501 = vunpack.c.h.b16 %v5482
      %v5502 = vunpack.c.l.b16 %v5483
      %v5503 = vunpack.c.h.b16 %v5483
      %v5504 = vunpack.c.l.b16 %v5484
      %v5505 = vunpack.c.h.b16 %v5484
      %v5506 = vunpack.c.l.b16 %v5485
      %v5507 = vunpack.c.h.b16 %v5485
      %v5508 = vunpack.c.l.b16 %v5486
      %v5509 = vunpack.c.h.b16 %v5486
      %v5510 = vunpack.c.l.b16 %v5487
      %v5511 = vunpack.c.h.b16 %v5487
      %v5512 = vpack.c.b16 %v5496, %v5496
      %v5513 = vpack.c.b16 %v5497, %v5497
      %v5514 = vpack.c.b16 %v5498, %v5498
      %v5515 = vpack.c.b16 %v5499, %v5499
      %v5516 = vpack.c.b16 %v5500, %v5500
      %v5517 = vpack.c.b16 %v5501, %v5501
      %v5518 = vpack.c.b16 %v5502, %v5502
      %v5519 = vpack.c.b16 %v5503, %v5503
      %v5520 = vpack.c.b16 %v5504, %v5504
      %v5521 = vpack.c.b16 %v5505, %v5505
      %v5522 = vpack.c.b16 %v5506, %v5506
      %v5523 = vpack.c.b16 %v5507, %v5507
      %v5524 = vpack.c.b16 %v5508, %v5508
      %v5525 = vpack.c.b16 %v5509, %v5509
      %v5526 = vpack.c.b16 %v5510, %v5510
      %v5527 = vpack.c.b16 %v5511, %v5511
      %5544 = vst [vmem:[#allocation4] sm:$0xf] %v5512
      %5545 = vst [vmem:[#allocation4 + $0x8] sm:$0xf] %v5513
      %5546 = vst [vmem:[#allocation4 + $0x10] sm:$0xf] %v5514
      %5547 = vst [vmem:[#allocation4 + $0x18] sm:$0xf] %v5515
      %5548 = vst [vmem:[#allocation4 + $0x20] sm:$0xf] %v5516
      %5549 = vst [vmem:[#allocation4 + $0x28] sm:$0xf] %v5517
      %5550 = vst [vmem:[#allocation4 + $0x30] sm:$0xf] %v5518
      %5551 = vst [vmem:[#allocation4 + $0x38] sm:$0xf] %v5519
      %5552 = vst [vmem:[#allocation4 + $0x40] sm:$0xf] %v5520
      %5553 = vst [vmem:[#allocation4 + $0x48] sm:$0xf] %v5521
      %5554 = vst [vmem:[#allocation4 + $0x50] sm:$0xf] %v5522
      %5555 = vst [vmem:[#allocation4 + $0x58] sm:$0xf] %v5523
      %5556 = vst [vmem:[#allocation4 + $0x60] sm:$0xf] %v5524
      %5557 = vst [vmem:[#allocation4 + $0x68] sm:$0xf] %v5525
      %5558 = vst [vmem:[#allocation4 + $0x70] sm:$0xf] %v5526
      %vm5559 = vcmask 150528
      %5560 = vst.msk [vmem:[#allocation4 + $0x78] sm:$0xf] %vm5559, %v5527
      %v5561 = vld [vmem:[#allocation3] sm:$0xff]
      %v5562 = vld [vmem:[#allocation3 + $0x8] sm:$0xff]
      %v5563 = vld [vmem:[#allocation3 + $0x10] sm:$0xff]
      %v5564 = vld [vmem:[#allocation3 + $0x18] sm:$0xff]
      %v5565 = vld [vmem:[#allocation3 + $0x20] sm:$0xff]
      %v5566 = vld [vmem:[#allocation3 + $0x28] sm:$0xff]
      %v5567 = vld [vmem:[#allocation3 + $0x30] sm:$0xff]
      %v5568 = vld [vmem:[#allocation3 + $0x38] sm:$0xff]
      %v5577 = vunpack.c.l.b16 %v5561
      %v5578 = vunpack.c.h.b16 %v5561
      %v5579 = vunpack.c.l.b16 %v5562
      %v5580 = vunpack.c.h.b16 %v5562
      %v5581 = vunpack.c.l.b16 %v5563
      %v5582 = vunpack.c.h.b16 %v5563
      %v5583 = vunpack.c.l.b16 %v5564
      %v5584 = vunpack.c.h.b16 %v5564
      %v5585 = vunpack.c.l.b16 %v5565
      %v5586 = vunpack.c.h.b16 %v5565
      %v5587 = vunpack.c.l.b16 %v5566
      %v5588 = vunpack.c.h.b16 %v5566
      %v5589 = vunpack.c.l.b16 %v5567
      %v5590 = vunpack.c.h.b16 %v5567
      %v5591 = vunpack.c.l.b16 %v5568
      %v5592 = vunpack.c.h.b16 %v5568
      %v5593 = vpack.c.b16 %v5577, %v5577
      %v5594 = vpack.c.b16 %v5578, %v5578
      %v5595 = vpack.c.b16 %v5579, %v5579
      %v5596 = vpack.c.b16 %v5580, %v5580
      %v5597 = vpack.c.b16 %v5581, %v5581
      %v5598 = vpack.c.b16 %v5582, %v5582
      %v5599 = vpack.c.b16 %v5583, %v5583
      %v5600 = vpack.c.b16 %v5584, %v5584
      %v5601 = vpack.c.b16 %v5585, %v5585
      %v5602 = vpack.c.b16 %v5586, %v5586
      %v5603 = vpack.c.b16 %v5587, %v5587
      %v5604 = vpack.c.b16 %v5588, %v5588
      %v5605 = vpack.c.b16 %v5589, %v5589
      %v5606 = vpack.c.b16 %v5590, %v5590
      %v5607 = vpack.c.b16 %v5591, %v5591
      %v5608 = vpack.c.b16 %v5592, %v5592
      %5609 = vrot.lane.b32.xlu0 %v5593, 126
      %v5610 = vpop.permute.xlu0 %5609
      %5611 = vrot.lane.b32.xlu0 %v5594, 126
      %v5612 = vpop.permute.xlu0 %5611
      %5613 = vrot.lane.b32.xlu0 %v5595, 126
      %v5614 = vpop.permute.xlu0 %5613
      %5615 = vrot.lane.b32.xlu0 %v5596, 126
      %v5616 = vpop.permute.xlu0 %5615
      %5617 = vrot.lane.b32.xlu0 %v5597, 126
      %v5618 = vpop.permute.xlu0 %5617
      %5619 = vrot.lane.b32.xlu0 %v5598, 126
      %v5620 = vpop.permute.xlu0 %5619
      %5621 = vrot.lane.b32.xlu0 %v5599, 126
      %v5622 = vpop.permute.xlu0 %5621
      %5623 = vrot.lane.b32.xlu0 %v5600, 126
      %v5624 = vpop.permute.xlu0 %5623
      %5625 = vrot.lane.b32.xlu0 %v5601, 126
      %v5626 = vpop.permute.xlu0 %5625
      %5627 = vrot.lane.b32.xlu0 %v5602, 126
      %v5628 = vpop.permute.xlu0 %5627
      %5629 = vrot.lane.b32.xlu0 %v5603, 126
      %v5630 = vpop.permute.xlu0 %5629
      %5631 = vrot.lane.b32.xlu0 %v5604, 126
      %v5632 = vpop.permute.xlu0 %5631
      %5633 = vrot.lane.b32.xlu0 %v5605, 126
      %v5634 = vpop.permute.xlu0 %5633
      %5635 = vrot.lane.b32.xlu0 %v5606, 126
      %v5636 = vpop.permute.xlu0 %5635
      %5637 = vrot.lane.b32.xlu0 %v5607, 126
      %v5638 = vpop.permute.xlu0 %5637
      %5639 = vrot.lane.b32.xlu0 %v5608, 126
      %v5640 = vpop.permute.xlu0 %5639
      %v5641 = vsel %vm628, %v5610, %v5612
      %v5642 = vsel %vm628, %v5612, %v5614
      %v5643 = vsel %vm628, %v5614, %v5616
      %v5644 = vsel %vm628, %v5616, %v5618
      %v5645 = vsel %vm628, %v5618, %v5620
      %v5646 = vsel %vm628, %v5620, %v5622
      %v5647 = vsel %vm628, %v5622, %v5624
      %v5648 = vsel %vm628, %v5624, %v5626
      %v5649 = vsel %vm628, %v5626, %v5628
      %v5650 = vsel %vm628, %v5628, %v5630
      %v5651 = vsel %vm628, %v5630, %v5632
      %v5652 = vsel %vm628, %v5632, %v5634
      %v5653 = vsel %vm628, %v5634, %v5636
      %v5654 = vsel %vm628, %v5636, %v5638
      %v5655 = vsel %vm628, %v5638, %v5640
      %5672 = vst [vmem:[#allocation4] sm:$0xf0] %v5641
      %5673 = vst [vmem:[#allocation4 + $0x8] sm:$0xf0] %v5642
      %5674 = vst [vmem:[#allocation4 + $0x10] sm:$0xf0] %v5643
      %5675 = vst [vmem:[#allocation4 + $0x18] sm:$0xf0] %v5644
      %5676 = vst [vmem:[#allocation4 + $0x20] sm:$0xf0] %v5645
      %5677 = vst [vmem:[#allocation4 + $0x28] sm:$0xf0] %v5646
      %5678 = vst [vmem:[#allocation4 + $0x30] sm:$0xf0] %v5647
      %5679 = vst [vmem:[#allocation4 + $0x38] sm:$0xf0] %v5648
      %5680 = vst [vmem:[#allocation4 + $0x40] sm:$0xf0] %v5649
      %5681 = vst [vmem:[#allocation4 + $0x48] sm:$0xf0] %v5650
      %5682 = vst [vmem:[#allocation4 + $0x50] sm:$0xf0] %v5651
      %5683 = vst [vmem:[#allocation4 + $0x58] sm:$0xf0] %v5652
      %5684 = vst [vmem:[#allocation4 + $0x60] sm:$0xf0] %v5653
      %5685 = vst [vmem:[#allocation4 + $0x68] sm:$0xf0] %v5654
      %5686 = vst [vmem:[#allocation4 + $0x70] sm:$0xf0] %v5655
      %vm5687 = vcmask 154628
      %5688 = vst.msk [vmem:[#allocation4 + $0x78] sm:$0xf0] %vm5687, %v5640
      %v5689 = vld [vmem:[#allocation3] sm:$0xff]
      %v5690 = vld [vmem:[#allocation3 + $0x8] sm:$0xff]
      %v5691 = vld [vmem:[#allocation3 + $0x10] sm:$0xff]
      %v5692 = vld [vmem:[#allocation3 + $0x18] sm:$0xff]
      %v5693 = vld [vmem:[#allocation3 + $0x20] sm:$0xff]
      %v5694 = vld [vmem:[#allocation3 + $0x28] sm:$0xff]
      %v5695 = vld [vmem:[#allocation3 + $0x30] sm:$0xff]
      %v5696 = vld [vmem:[#allocation3 + $0x38] sm:$0xff]
      %v5705 = vunpack.c.l.b16 %v5689
      %v5706 = vunpack.c.h.b16 %v5689
      %v5707 = vunpack.c.l.b16 %v5690
      %v5708 = vunpack.c.h.b16 %v5690
      %v5709 = vunpack.c.l.b16 %v5691
      %v5710 = vunpack.c.h.b16 %v5691
      %v5711 = vunpack.c.l.b16 %v5692
      %v5712 = vunpack.c.h.b16 %v5692
      %v5713 = vunpack.c.l.b16 %v5693
      %v5714 = vunpack.c.h.b16 %v5693
      %v5715 = vunpack.c.l.b16 %v5694
      %v5716 = vunpack.c.h.b16 %v5694
      %v5717 = vunpack.c.l.b16 %v5695
      %v5718 = vunpack.c.h.b16 %v5695
      %v5719 = vunpack.c.l.b16 %v5696
      %v5720 = vunpack.c.h.b16 %v5696
      %v5721 = vpack.c.b16 %v5705, %v5705
      %v5722 = vpack.c.b16 %v5706, %v5706
      %v5723 = vpack.c.b16 %v5707, %v5707
      %v5724 = vpack.c.b16 %v5708, %v5708
      %v5725 = vpack.c.b16 %v5709, %v5709
      %v5726 = vpack.c.b16 %v5710, %v5710
      %v5727 = vpack.c.b16 %v5711, %v5711
      %v5728 = vpack.c.b16 %v5712, %v5712
      %v5729 = vpack.c.b16 %v5713, %v5713
      %v5730 = vpack.c.b16 %v5714, %v5714
      %v5731 = vpack.c.b16 %v5715, %v5715
      %v5732 = vpack.c.b16 %v5716, %v5716
      %v5733 = vpack.c.b16 %v5717, %v5717
      %v5734 = vpack.c.b16 %v5718, %v5718
      %v5735 = vpack.c.b16 %v5719, %v5719
      %v5736 = vpack.c.b16 %v5720, %v5720
      %5737 = vrot.lane.b32.xlu0 %v5721, 124
      %v5738 = vpop.permute.xlu0 %5737
      %5739 = vrot.lane.b32.xlu0 %v5722, 124
      %v5740 = vpop.permute.xlu0 %5739
      %5741 = vrot.lane.b32.xlu0 %v5723, 124
      %v5742 = vpop.permute.xlu0 %5741
      %5743 = vrot.lane.b32.xlu0 %v5724, 124
      %v5744 = vpop.permute.xlu0 %5743
      %5745 = vrot.lane.b32.xlu0 %v5725, 124
      %v5746 = vpop.permute.xlu0 %5745
      %5747 = vrot.lane.b32.xlu0 %v5726, 124
      %v5748 = vpop.permute.xlu0 %5747
      %5749 = vrot.lane.b32.xlu0 %v5727, 124
      %v5750 = vpop.permute.xlu0 %5749
      %5751 = vrot.lane.b32.xlu0 %v5728, 124
      %v5752 = vpop.permute.xlu0 %5751
      %5753 = vrot.lane.b32.xlu0 %v5729, 124
      %v5754 = vpop.permute.xlu0 %5753
      %5755 = vrot.lane.b32.xlu0 %v5730, 124
      %v5756 = vpop.permute.xlu0 %5755
      %5757 = vrot.lane.b32.xlu0 %v5731, 124
      %v5758 = vpop.permute.xlu0 %5757
      %5759 = vrot.lane.b32.xlu0 %v5732, 124
      %v5760 = vpop.permute.xlu0 %5759
      %5761 = vrot.lane.b32.xlu0 %v5733, 124
      %v5762 = vpop.permute.xlu0 %5761
      %5763 = vrot.lane.b32.xlu0 %v5734, 124
      %v5764 = vpop.permute.xlu0 %5763
      %5765 = vrot.lane.b32.xlu0 %v5735, 124
      %v5766 = vpop.permute.xlu0 %5765
      %5767 = vrot.lane.b32.xlu0 %v5736, 124
      %v5768 = vpop.permute.xlu0 %5767
      %v5769 = vsel %vm909, %v5738, %v5740
      %v5770 = vsel %vm909, %v5740, %v5742
      %v5771 = vsel %vm909, %v5742, %v5744
      %v5772 = vsel %vm909, %v5744, %v5746
      %v5773 = vsel %vm909, %v5746, %v5748
      %v5774 = vsel %vm909, %v5748, %v5750
      %v5775 = vsel %vm909, %v5750, %v5752
      %v5776 = vsel %vm909, %v5752, %v5754
      %v5777 = vsel %vm909, %v5754, %v5756
      %v5778 = vsel %vm909, %v5756, %v5758
      %v5779 = vsel %vm909, %v5758, %v5760
      %v5780 = vsel %vm909, %v5760, %v5762
      %v5781 = vsel %vm909, %v5762, %v5764
      %v5782 = vsel %vm909, %v5764, %v5766
      %v5783 = vsel %vm909, %v5766, %v5768
      %5800 = vst [vmem:[#allocation4 + $0x80] sm:$0xf] %v5769
      %5801 = vst [vmem:[#allocation4 + $0x88] sm:$0xf] %v5770
      %5802 = vst [vmem:[#allocation4 + $0x90] sm:$0xf] %v5771
      %5803 = vst [vmem:[#allocation4 + $0x98] sm:$0xf] %v5772
      %5804 = vst [vmem:[#allocation4 + $0xa0] sm:$0xf] %v5773
      %5805 = vst [vmem:[#allocation4 + $0xa8] sm:$0xf] %v5774
      %5806 = vst [vmem:[#allocation4 + $0xb0] sm:$0xf] %v5775
      %5807 = vst [vmem:[#allocation4 + $0xb8] sm:$0xf] %v5776
      %5808 = vst [vmem:[#allocation4 + $0xc0] sm:$0xf] %v5777
      %5809 = vst [vmem:[#allocation4 + $0xc8] sm:$0xf] %v5778
      %5810 = vst [vmem:[#allocation4 + $0xd0] sm:$0xf] %v5779
      %5811 = vst [vmem:[#allocation4 + $0xd8] sm:$0xf] %v5780
      %5812 = vst [vmem:[#allocation4 + $0xe0] sm:$0xf] %v5781
      %5813 = vst [vmem:[#allocation4 + $0xe8] sm:$0xf] %v5782
      %5814 = vst [vmem:[#allocation4 + $0xf0] sm:$0xf] %v5783
      %5815 = vst.msk [vmem:[#allocation4 + $0xf8] sm:$0xf] %vm5559, %v5768
      %v5816 = vld [vmem:[#allocation3] sm:$0xff]
      %v5817 = vld [vmem:[#allocation3 + $0x8] sm:$0xff]
      %v5818 = vld [vmem:[#allocation3 + $0x10] sm:$0xff]
      %v5819 = vld [vmem:[#allocation3 + $0x18] sm:$0xff]
      %v5820 = vld [vmem:[#allocation3 + $0x20] sm:$0xff]
      %v5821 = vld [vmem:[#allocation3 + $0x28] sm:$0xff]
      %v5822 = vld [vmem:[#allocation3 + $0x30] sm:$0xff]
      %v5823 = vld [vmem:[#allocation3 + $0x38] sm:$0xff]
      %v5832 = vunpack.c.l.b16 %v5816
      %v5833 = vunpack.c.h.b16 %v5816
      %v5834 = vunpack.c.l.b16 %v5817
      %v5835 = vunpack.c.h.b16 %v5817
      %v5836 = vunpack.c.l.b16 %v5818
      %v5837 = vunpack.c.h.b16 %v5818
      %v5838 = vunpack.c.l.b16 %v5819
      %v5839 = vunpack.c.h.b16 %v5819
      %v5840 = vunpack.c.l.b16 %v5820
      %v5841 = vunpack.c.h.b16 %v5820
      %v5842 = vunpack.c.l.b16 %v5821
      %v5843 = vunpack.c.h.b16 %v5821
      %v5844 = vunpack.c.l.b16 %v5822
      %v5845 = vunpack.c.h.b16 %v5822
      %v5846 = vunpack.c.l.b16 %v5823
      %v5847 = vunpack.c.h.b16 %v5823
      %v5848 = vpack.c.b16 %v5832, %v5832
      %v5849 = vpack.c.b16 %v5833, %v5833
      %v5850 = vpack.c.b16 %v5834, %v5834
      %v5851 = vpack.c.b16 %v5835, %v5835
      %v5852 = vpack.c.b16 %v5836, %v5836
      %v5853 = vpack.c.b16 %v5837, %v5837
      %v5854 = vpack.c.b16 %v5838, %v5838
      %v5855 = vpack.c.b16 %v5839, %v5839
      %v5856 = vpack.c.b16 %v5840, %v5840
      %v5857 = vpack.c.b16 %v5841, %v5841
      %v5858 = vpack.c.b16 %v5842, %v5842
      %v5859 = vpack.c.b16 %v5843, %v5843
      %v5860 = vpack.c.b16 %v5844, %v5844
      %v5861 = vpack.c.b16 %v5845, %v5845
      %v5862 = vpack.c.b16 %v5846, %v5846
      %v5863 = vpack.c.b16 %v5847, %v5847
      %5864 = vrot.lane.b32.xlu0 %v5848, 122
      %v5865 = vpop.permute.xlu0 %5864
      %5866 = vrot.lane.b32.xlu0 %v5849, 122
      %v5867 = vpop.permute.xlu0 %5866
      %5868 = vrot.lane.b32.xlu0 %v5850, 122
      %v5869 = vpop.permute.xlu0 %5868
      %5870 = vrot.lane.b32.xlu0 %v5851, 122
      %v5871 = vpop.permute.xlu0 %5870
      %5872 = vrot.lane.b32.xlu0 %v5852, 122
      %v5873 = vpop.permute.xlu0 %5872
      %5874 = vrot.lane.b32.xlu0 %v5853, 122
      %v5875 = vpop.permute.xlu0 %5874
      %5876 = vrot.lane.b32.xlu0 %v5854, 122
      %v5877 = vpop.permute.xlu0 %5876
      %5878 = vrot.lane.b32.xlu0 %v5855, 122
      %v5879 = vpop.permute.xlu0 %5878
      %5880 = vrot.lane.b32.xlu0 %v5856, 122
      %v5881 = vpop.permute.xlu0 %5880
      %5882 = vrot.lane.b32.xlu0 %v5857, 122
      %v5883 = vpop.permute.xlu0 %5882
      %5884 = vrot.lane.b32.xlu0 %v5858, 122
      %v5885 = vpop.permute.xlu0 %5884
      %5886 = vrot.lane.b32.xlu0 %v5859, 122
      %v5887 = vpop.permute.xlu0 %5886
      %5888 = vrot.lane.b32.xlu0 %v5860, 122
      %v5889 = vpop.permute.xlu0 %5888
      %5890 = vrot.lane.b32.xlu0 %v5861, 122
      %v5891 = vpop.permute.xlu0 %5890
      %5892 = vrot.lane.b32.xlu0 %v5862, 122
      %v5893 = vpop.permute.xlu0 %5892
      %5894 = vrot.lane.b32.xlu0 %v5863, 122
      %v5895 = vpop.permute.xlu0 %5894
      %vm5896 = vcmask 998400
      %v5897 = vsel %vm5896, %v5865, %v5867
      %v5898 = vsel %vm5896, %v5867, %v5869
      %v5899 = vsel %vm5896, %v5869, %v5871
      %v5900 = vsel %vm5896, %v5871, %v5873
      %v5901 = vsel %vm5896, %v5873, %v5875
      %v5902 = vsel %vm5896, %v5875, %v5877
      %v5903 = vsel %vm5896, %v5877, %v5879
      %v5904 = vsel %vm5896, %v5879, %v5881
      %v5905 = vsel %vm5896, %v5881, %v5883
      %v5906 = vsel %vm5896, %v5883, %v5885
      %v5907 = vsel %vm5896, %v5885, %v5887
      %v5908 = vsel %vm5896, %v5887, %v5889
      %v5909 = vsel %vm5896, %v5889, %v5891
      %v5910 = vsel %vm5896, %v5891, %v5893
      %v5911 = vsel %vm5896, %v5893, %v5895
      %5928 = vst [vmem:[#allocation4 + $0x80] sm:$0xf0] %v5897
      %5929 = vst [vmem:[#allocation4 + $0x88] sm:$0xf0] %v5898
      %5930 = vst [vmem:[#allocation4 + $0x90] sm:$0xf0] %v5899
      %5931 = vst [vmem:[#allocation4 + $0x98] sm:$0xf0] %v5900
      %5932 = vst [vmem:[#allocation4 + $0xa0] sm:$0xf0] %v5901
      %5933 = vst [vmem:[#allocation4 + $0xa8] sm:$0xf0] %v5902
      %5934 = vst [vmem:[#allocation4 + $0xb0] sm:$0xf0] %v5903
      %5935 = vst [vmem:[#allocation4 + $0xb8] sm:$0xf0] %v5904
      %5936 = vst [vmem:[#allocation4 + $0xc0] sm:$0xf0] %v5905
      %5937 = vst [vmem:[#allocation4 + $0xc8] sm:$0xf0] %v5906
      %5938 = vst [vmem:[#allocation4 + $0xd0] sm:$0xf0] %v5907
      %5939 = vst [vmem:[#allocation4 + $0xd8] sm:$0xf0] %v5908
      %5940 = vst [vmem:[#allocation4 + $0xe0] sm:$0xf0] %v5909
      %5941 = vst [vmem:[#allocation4 + $0xe8] sm:$0xf0] %v5910
      %5942 = vst [vmem:[#allocation4 + $0xf0] sm:$0xf0] %v5911
      %5943 = vst.msk [vmem:[#allocation4 + $0xf8] sm:$0xf0] %vm5687, %v5895
      %v5944 = vld [vmem:[#allocation3] sm:$0xff]
      %v5945 = vld [vmem:[#allocation3 + $0x8] sm:$0xff]
      %v5946 = vld [vmem:[#allocation3 + $0x10] sm:$0xff]
      %v5947 = vld [vmem:[#allocation3 + $0x18] sm:$0xff]
      %v5948 = vld [vmem:[#allocation3 + $0x20] sm:$0xff]
      %v5949 = vld [vmem:[#allocation3 + $0x28] sm:$0xff]
      %v5950 = vld [vmem:[#allocation3 + $0x30] sm:$0xff]
      %v5951 = vld [vmem:[#allocation3 + $0x38] sm:$0xff]
      %v5960 = vunpack.c.l.b16 %v5944
      %v5961 = vunpack.c.h.b16 %v5944
      %v5962 = vunpack.c.l.b16 %v5945
      %v5963 = vunpack.c.h.b16 %v5945
      %v5964 = vunpack.c.l.b16 %v5946
      %v5965 = vunpack.c.h.b16 %v5946
      %v5966 = vunpack.c.l.b16 %v5947
      %v5967 = vunpack.c.h.b16 %v5947
      %v5968 = vunpack.c.l.b16 %v5948
      %v5969 = vunpack.c.h.b16 %v5948
      %v5970 = vunpack.c.l.b16 %v5949
      %v5971 = vunpack.c.h.b16 %v5949
      %v5972 = vunpack.c.l.b16 %v5950
      %v5973 = vunpack.c.h.b16 %v5950
      %v5974 = vunpack.c.l.b16 %v5951
      %v5975 = vunpack.c.h.b16 %v5951
      %v5976 = vpack.c.b16 %v5960, %v5960
      %v5977 = vpack.c.b16 %v5961, %v5961
      %v5978 = vpack.c.b16 %v5962, %v5962
      %v5979 = vpack.c.b16 %v5963, %v5963
      %v5980 = vpack.c.b16 %v5964, %v5964
      %v5981 = vpack.c.b16 %v5965, %v5965
      %v5982 = vpack.c.b16 %v5966, %v5966
      %v5983 = vpack.c.b16 %v5967, %v5967
      %v5984 = vpack.c.b16 %v5968, %v5968
      %v5985 = vpack.c.b16 %v5969, %v5969
      %v5986 = vpack.c.b16 %v5970, %v5970
      %v5987 = vpack.c.b16 %v5971, %v5971
      %v5988 = vpack.c.b16 %v5972, %v5972
      %v5989 = vpack.c.b16 %v5973, %v5973
      %v5990 = vpack.c.b16 %v5974, %v5974
      %v5991 = vpack.c.b16 %v5975, %v5975
      %5992 = vrot.lane.b32.xlu0 %v5976, 28
      %v5993 = vpop.permute.xlu0 %5992
      %5994 = vrot.lane.b32.xlu0 %v5977, 28
      %v5995 = vpop.permute.xlu0 %5994
      %5996 = vrot.lane.b32.xlu0 %v5978, 28
      %v5997 = vpop.permute.xlu0 %5996
      %5998 = vrot.lane.b32.xlu0 %v5979, 28
      %v5999 = vpop.permute.xlu0 %5998
      %6000 = vrot.lane.b32.xlu0 %v5980, 28
      %v6001 = vpop.permute.xlu0 %6000
      %6002 = vrot.lane.b32.xlu0 %v5981, 28
      %v6003 = vpop.permute.xlu0 %6002
      %6004 = vrot.lane.b32.xlu0 %v5982, 28
      %v6005 = vpop.permute.xlu0 %6004
      %6006 = vrot.lane.b32.xlu0 %v5983, 28
      %v6007 = vpop.permute.xlu0 %6006
      %6008 = vrot.lane.b32.xlu0 %v5984, 28
      %v6009 = vpop.permute.xlu0 %6008
      %6010 = vrot.lane.b32.xlu0 %v5985, 28
      %v6011 = vpop.permute.xlu0 %6010
      %6012 = vrot.lane.b32.xlu0 %v5986, 28
      %v6013 = vpop.permute.xlu0 %6012
      %6014 = vrot.lane.b32.xlu0 %v5987, 28
      %v6015 = vpop.permute.xlu0 %6014
      %6016 = vrot.lane.b32.xlu0 %v5988, 28
      %v6017 = vpop.permute.xlu0 %6016
      %6018 = vrot.lane.b32.xlu0 %v5989, 28
      %v6019 = vpop.permute.xlu0 %6018
      %6020 = vrot.lane.b32.xlu0 %v5990, 28
      %v6021 = vpop.permute.xlu0 %6020
      %6022 = vrot.lane.b32.xlu0 %v5991, 28
      %v6023 = vpop.permute.xlu0 %6022
      %v6024 = vsel %vm1820, %v5993, %v5995
      %v6025 = vsel %vm1820, %v5995, %v5997
      %v6026 = vsel %vm1820, %v5997, %v5999
      %v6027 = vsel %vm1820, %v5999, %v6001
      %v6028 = vsel %vm1820, %v6001, %v6003
      %v6029 = vsel %vm1820, %v6003, %v6005
      %v6030 = vsel %vm1820, %v6005, %v6007
      %v6031 = vsel %vm1820, %v6007, %v6009
      %v6032 = vsel %vm1820, %v6009, %v6011
      %v6033 = vsel %vm1820, %v6011, %v6013
      %v6034 = vsel %vm1820, %v6013, %v6015
      %v6035 = vsel %vm1820, %v6015, %v6017
      %v6036 = vsel %vm1820, %v6017, %v6019
      %v6037 = vsel %vm1820, %v6019, %v6021
      %v6038 = vsel %vm1820, %v6021, %v6023
      %6055 = vst [vmem:[#allocation4 + $0x100] sm:$0xf] %v6024
      %6056 = vst [vmem:[#allocation4 + $0x108] sm:$0xf] %v6025
      %6057 = vst [vmem:[#allocation4 + $0x110] sm:$0xf] %v6026
      %6058 = vst [vmem:[#allocation4 + $0x118] sm:$0xf] %v6027
      %6059 = vst [vmem:[#allocation4 + $0x120] sm:$0xf] %v6028
      %6060 = vst [vmem:[#allocation4 + $0x128] sm:$0xf] %v6029
      %6061 = vst [vmem:[#allocation4 + $0x130] sm:$0xf] %v6030
      %6062 = vst [vmem:[#allocation4 + $0x138] sm:$0xf] %v6031
      %6063 = vst [vmem:[#allocation4 + $0x140] sm:$0xf] %v6032
      %6064 = vst [vmem:[#allocation4 + $0x148] sm:$0xf] %v6033
      %6065 = vst [vmem:[#allocation4 + $0x150] sm:$0xf] %v6034
      %6066 = vst [vmem:[#allocation4 + $0x158] sm:$0xf] %v6035
      %6067 = vst [vmem:[#allocation4 + $0x160] sm:$0xf] %v6036
      %6068 = vst [vmem:[#allocation4 + $0x168] sm:$0xf] %v6037
      %6069 = vst [vmem:[#allocation4 + $0x170] sm:$0xf] %v6038
      %6070 = vst.msk [vmem:[#allocation4 + $0x178] sm:$0xf] %vm5559, %v6023
      %v6071 = vld [vmem:[#allocation3] sm:$0xff]
      %v6072 = vld [vmem:[#allocation3 + $0x8] sm:$0xff]
      %v6073 = vld [vmem:[#allocation3 + $0x10] sm:$0xff]
      %v6074 = vld [vmem:[#allocation3 + $0x18] sm:$0xff]
      %v6075 = vld [vmem:[#allocation3 + $0x20] sm:$0xff]
      %v6076 = vld [vmem:[#allocation3 + $0x28] sm:$0xff]
      %v6077 = vld [vmem:[#allocation3 + $0x30] sm:$0xff]
      %v6078 = vld [vmem:[#allocation3 + $0x38] sm:$0xff]
      %v6087 = vunpack.c.l.b16 %v6071
      %v6088 = vunpack.c.h.b16 %v6071
      %v6089 = vunpack.c.l.b16 %v6072
      %v6090 = vunpack.c.h.b16 %v6072
      %v6091 = vunpack.c.l.b16 %v6073
      %v6092 = vunpack.c.h.b16 %v6073
      %v6093 = vunpack.c.l.b16 %v6074
      %v6094 = vunpack.c.h.b16 %v6074
      %v6095 = vunpack.c.l.b16 %v6075
      %v6096 = vunpack.c.h.b16 %v6075
      %v6097 = vunpack.c.l.b16 %v6076
      %v6098 = vunpack.c.h.b16 %v6076
      %v6099 = vunpack.c.l.b16 %v6077
      %v6100 = vunpack.c.h.b16 %v6077
      %v6101 = vunpack.c.l.b16 %v6078
      %v6102 = vunpack.c.h.b16 %v6078
      %v6103 = vpack.c.b16 %v6087, %v6087
      %v6104 = vpack.c.b16 %v6088, %v6088
      %v6105 = vpack.c.b16 %v6089, %v6089
      %v6106 = vpack.c.b16 %v6090, %v6090
      %v6107 = vpack.c.b16 %v6091, %v6091
      %v6108 = vpack.c.b16 %v6092, %v6092
      %v6109 = vpack.c.b16 %v6093, %v6093
      %v6110 = vpack.c.b16 %v6094, %v6094
      %v6111 = vpack.c.b16 %v6095, %v6095
      %v6112 = vpack.c.b16 %v6096, %v6096
      %v6113 = vpack.c.b16 %v6097, %v6097
      %v6114 = vpack.c.b16 %v6098, %v6098
      %v6115 = vpack.c.b16 %v6099, %v6099
      %v6116 = vpack.c.b16 %v6100, %v6100
      %v6117 = vpack.c.b16 %v6101, %v6101
      %v6118 = vpack.c.b16 %v6102, %v6102
      %6119 = vrot.lane.b32.xlu0 %v6103, 26
      %v6120 = vpop.permute.xlu0 %6119
      %6121 = vrot.lane.b32.xlu0 %v6104, 26
      %v6122 = vpop.permute.xlu0 %6121
      %6123 = vrot.lane.b32.xlu0 %v6105, 26
      %v6124 = vpop.permute.xlu0 %6123
      %6125 = vrot.lane.b32.xlu0 %v6106, 26
      %v6126 = vpop.permute.xlu0 %6125
      %6127 = vrot.lane.b32.xlu0 %v6107, 26
      %v6128 = vpop.permute.xlu0 %6127
      %6129 = vrot.lane.b32.xlu0 %v6108, 26
      %v6130 = vpop.permute.xlu0 %6129
      %6131 = vrot.lane.b32.xlu0 %v6109, 26
      %v6132 = vpop.permute.xlu0 %6131
      %6133 = vrot.lane.b32.xlu0 %v6110, 26
      %v6134 = vpop.permute.xlu0 %6133
      %6135 = vrot.lane.b32.xlu0 %v6111, 26
      %v6136 = vpop.permute.xlu0 %6135
      %6137 = vrot.lane.b32.xlu0 %v6112, 26
      %v6138 = vpop.permute.xlu0 %6137
      %6139 = vrot.lane.b32.xlu0 %v6113, 26
      %v6140 = vpop.permute.xlu0 %6139
      %6141 = vrot.lane.b32.xlu0 %v6114, 26
      %v6142 = vpop.permute.xlu0 %6141
      %6143 = vrot.lane.b32.xlu0 %v6115, 26
      %v6144 = vpop.permute.xlu0 %6143
      %6145 = vrot.lane.b32.xlu0 %v6116, 26
      %v6146 = vpop.permute.xlu0 %6145
      %6147 = vrot.lane.b32.xlu0 %v6117, 26
      %v6148 = vpop.permute.xlu0 %6147
      %6149 = vrot.lane.b32.xlu0 %v6118, 26
      %v6150 = vpop.permute.xlu0 %6149
      %v6151 = vsel %vm2124, %v6120, %v6122
      %v6152 = vsel %vm2124, %v6122, %v6124
      %v6153 = vsel %vm2124, %v6124, %v6126
      %v6154 = vsel %vm2124, %v6126, %v6128
      %v6155 = vsel %vm2124, %v6128, %v6130
      %v6156 = vsel %vm2124, %v6130, %v6132
      %v6157 = vsel %vm2124, %v6132, %v6134
      %v6158 = vsel %vm2124, %v6134, %v6136
      %v6159 = vsel %vm2124, %v6136, %v6138
      %v6160 = vsel %vm2124, %v6138, %v6140
      %v6161 = vsel %vm2124, %v6140, %v6142
      %v6162 = vsel %vm2124, %v6142, %v6144
      %v6163 = vsel %vm2124, %v6144, %v6146
      %v6164 = vsel %vm2124, %v6146, %v6148
      %v6165 = vsel %vm2124, %v6148, %v6150
      %6182 = vst [vmem:[#allocation4 + $0x100] sm:$0xf0] %v6151
      %6183 = vst [vmem:[#allocation4 + $0x108] sm:$0xf0] %v6152
      %6184 = vst [vmem:[#allocation4 + $0x110] sm:$0xf0] %v6153
      %6185 = vst [vmem:[#allocation4 + $0x118] sm:$0xf0] %v6154
      %6186 = vst [vmem:[#allocation4 + $0x120] sm:$0xf0] %v6155
      %6187 = vst [vmem:[#allocation4 + $0x128] sm:$0xf0] %v6156
      %6188 = vst [vmem:[#allocation4 + $0x130] sm:$0xf0] %v6157
      %6189 = vst [vmem:[#allocation4 + $0x138] sm:$0xf0] %v6158
      %6190 = vst [vmem:[#allocation4 + $0x140] sm:$0xf0] %v6159
      %6191 = vst [vmem:[#allocation4 + $0x148] sm:$0xf0] %v6160
      %6192 = vst [vmem:[#allocation4 + $0x150] sm:$0xf0] %v6161
      %6193 = vst [vmem:[#allocation4 + $0x158] sm:$0xf0] %v6162
      %6194 = vst [vmem:[#allocation4 + $0x160] sm:$0xf0] %v6163
      %6195 = vst [vmem:[#allocation4 + $0x168] sm:$0xf0] %v6164
      %6196 = vst [vmem:[#allocation4 + $0x170] sm:$0xf0] %v6165
      %6197 = vst.msk [vmem:[#allocation4 + $0x178] sm:$0xf0] %vm5687, %v6150
      %v6198 = vld [vmem:[#allocation3] sm:$0xff]
      %v6199 = vld [vmem:[#allocation3 + $0x8] sm:$0xff]
      %v6200 = vld [vmem:[#allocation3 + $0x10] sm:$0xff]
      %v6201 = vld [vmem:[#allocation3 + $0x18] sm:$0xff]
      %v6202 = vld [vmem:[#allocation3 + $0x20] sm:$0xff]
      %v6203 = vld [vmem:[#allocation3 + $0x28] sm:$0xff]
      %v6204 = vld [vmem:[#allocation3 + $0x30] sm:$0xff]
      %v6205 = vld [vmem:[#allocation3 + $0x38] sm:$0xff]
      %v6214 = vunpack.c.l.b16 %v6198
      %v6215 = vunpack.c.h.b16 %v6198
      %v6216 = vunpack.c.l.b16 %v6199
      %v6217 = vunpack.c.h.b16 %v6199
      %v6218 = vunpack.c.l.b16 %v6200
      %v6219 = vunpack.c.h.b16 %v6200
      %v6220 = vunpack.c.l.b16 %v6201
      %v6221 = vunpack.c.h.b16 %v6201
      %v6222 = vunpack.c.l.b16 %v6202
      %v6223 = vunpack.c.h.b16 %v6202
      %v6224 = vunpack.c.l.b16 %v6203
      %v6225 = vunpack.c.h.b16 %v6203
      %v6226 = vunpack.c.l.b16 %v6204
      %v6227 = vunpack.c.h.b16 %v6204
      %v6228 = vunpack.c.l.b16 %v6205
      %v6229 = vunpack.c.h.b16 %v6205
      %v6230 = vpack.c.b16 %v6214, %v6214
      %v6231 = vpack.c.b16 %v6215, %v6215
      %v6232 = vpack.c.b16 %v6216, %v6216
      %v6233 = vpack.c.b16 %v6217, %v6217
      %v6234 = vpack.c.b16 %v6218, %v6218
      %v6235 = vpack.c.b16 %v6219, %v6219
      %v6236 = vpack.c.b16 %v6220, %v6220
      %v6237 = vpack.c.b16 %v6221, %v6221
      %v6238 = vpack.c.b16 %v6222, %v6222
      %v6239 = vpack.c.b16 %v6223, %v6223
      %v6240 = vpack.c.b16 %v6224, %v6224
      %v6241 = vpack.c.b16 %v6225, %v6225
      %v6242 = vpack.c.b16 %v6226, %v6226
      %v6243 = vpack.c.b16 %v6227, %v6227
      %v6244 = vpack.c.b16 %v6228, %v6228
      %v6245 = vpack.c.b16 %v6229, %v6229
      %6246 = vrot.lane.b32.xlu0 %v6230, 24
      %v6247 = vpop.permute.xlu0 %6246
      %6248 = vrot.lane.b32.xlu0 %v6231, 24
      %v6249 = vpop.permute.xlu0 %6248
      %6250 = vrot.lane.b32.xlu0 %v6232, 24
      %v6251 = vpop.permute.xlu0 %6250
      %6252 = vrot.lane.b32.xlu0 %v6233, 24
      %v6253 = vpop.permute.xlu0 %6252
      %6254 = vrot.lane.b32.xlu0 %v6234, 24
      %v6255 = vpop.permute.xlu0 %6254
      %6256 = vrot.lane.b32.xlu0 %v6235, 24
      %v6257 = vpop.permute.xlu0 %6256
      %6258 = vrot.lane.b32.xlu0 %v6236, 24
      %v6259 = vpop.permute.xlu0 %6258
      %6260 = vrot.lane.b32.xlu0 %v6237, 24
      %v6261 = vpop.permute.xlu0 %6260
      %6262 = vrot.lane.b32.xlu0 %v6238, 24
      %v6263 = vpop.permute.xlu0 %6262
      %6264 = vrot.lane.b32.xlu0 %v6239, 24
      %v6265 = vpop.permute.xlu0 %6264
      %6266 = vrot.lane.b32.xlu0 %v6240, 24
      %v6267 = vpop.permute.xlu0 %6266
      %6268 = vrot.lane.b32.xlu0 %v6241, 24
      %v6269 = vpop.permute.xlu0 %6268
      %6270 = vrot.lane.b32.xlu0 %v6242, 24
      %v6271 = vpop.permute.xlu0 %6270
      %6272 = vrot.lane.b32.xlu0 %v6243, 24
      %v6273 = vpop.permute.xlu0 %6272
      %6274 = vrot.lane.b32.xlu0 %v6244, 24
      %v6275 = vpop.permute.xlu0 %6274
      %6276 = vrot.lane.b32.xlu0 %v6245, 24
      %v6277 = vpop.permute.xlu0 %6276
      %v6278 = vsel %vm2428, %v6247, %v6249
      %v6279 = vsel %vm2428, %v6249, %v6251
      %v6280 = vsel %vm2428, %v6251, %v6253
      %v6281 = vsel %vm2428, %v6253, %v6255
      %v6282 = vsel %vm2428, %v6255, %v6257
      %v6283 = vsel %vm2428, %v6257, %v6259
      %v6284 = vsel %vm2428, %v6259, %v6261
      %v6285 = vsel %vm2428, %v6261, %v6263
      %v6286 = vsel %vm2428, %v6263, %v6265
      %v6287 = vsel %vm2428, %v6265, %v6267
      %v6288 = vsel %vm2428, %v6267, %v6269
      %v6289 = vsel %vm2428, %v6269, %v6271
      %v6290 = vsel %vm2428, %v6271, %v6273
      %v6291 = vsel %vm2428, %v6273, %v6275
      %v6292 = vsel %vm2428, %v6275, %v6277
      %6309 = vst [vmem:[#allocation4 + $0x180] sm:$0xf] %v6278
      %6310 = vst [vmem:[#allocation4 + $0x188] sm:$0xf] %v6279
      %6311 = vst [vmem:[#allocation4 + $0x190] sm:$0xf] %v6280
      %6312 = vst [vmem:[#allocation4 + $0x198] sm:$0xf] %v6281
      %6313 = vst [vmem:[#allocation4 + $0x1a0] sm:$0xf] %v6282
      %6314 = vst [vmem:[#allocation4 + $0x1a8] sm:$0xf] %v6283
      %6315 = vst [vmem:[#allocation4 + $0x1b0] sm:$0xf] %v6284
      %6316 = vst [vmem:[#allocation4 + $0x1b8] sm:$0xf] %v6285
      %6317 = vst [vmem:[#allocation4 + $0x1c0] sm:$0xf] %v6286
      %6318 = vst [vmem:[#allocation4 + $0x1c8] sm:$0xf] %v6287
      %6319 = vst [vmem:[#allocation4 + $0x1d0] sm:$0xf] %v6288
      %6320 = vst [vmem:[#allocation4 + $0x1d8] sm:$0xf] %v6289
      %6321 = vst [vmem:[#allocation4 + $0x1e0] sm:$0xf] %v6290
      %6322 = vst [vmem:[#allocation4 + $0x1e8] sm:$0xf] %v6291
      %6323 = vst [vmem:[#allocation4 + $0x1f0] sm:$0xf] %v6292
      %6324 = vst.msk [vmem:[#allocation4 + $0x1f8] sm:$0xf] %vm5559, %v6277
      %v6325 = vld [vmem:[#allocation3] sm:$0xff]
      %v6326 = vld [vmem:[#allocation3 + $0x8] sm:$0xff]
      %v6327 = vld [vmem:[#allocation3 + $0x10] sm:$0xff]
      %v6328 = vld [vmem:[#allocation3 + $0x18] sm:$0xff]
      %v6329 = vld [vmem:[#allocation3 + $0x20] sm:$0xff]
      %v6330 = vld [vmem:[#allocation3 + $0x28] sm:$0xff]
      %v6331 = vld [vmem:[#allocation3 + $0x30] sm:$0xff]
      %v6332 = vld [vmem:[#allocation3 + $0x38] sm:$0xff]
      %v6341 = vunpack.c.l.b16 %v6325
      %v6342 = vunpack.c.h.b16 %v6325
      %v6343 = vunpack.c.l.b16 %v6326
      %v6344 = vunpack.c.h.b16 %v6326
      %v6345 = vunpack.c.l.b16 %v6327
      %v6346 = vunpack.c.h.b16 %v6327
      %v6347 = vunpack.c.l.b16 %v6328
      %v6348 = vunpack.c.h.b16 %v6328
      %v6349 = vunpack.c.l.b16 %v6329
      %v6350 = vunpack.c.h.b16 %v6329
      %v6351 = vunpack.c.l.b16 %v6330
      %v6352 = vunpack.c.h.b16 %v6330
      %v6353 = vunpack.c.l.b16 %v6331
      %v6354 = vunpack.c.h.b16 %v6331
      %v6355 = vunpack.c.l.b16 %v6332
      %v6356 = vunpack.c.h.b16 %v6332
      %v6357 = vpack.c.b16 %v6341, %v6341
      %v6358 = vpack.c.b16 %v6342, %v6342
      %v6359 = vpack.c.b16 %v6343, %v6343
      %v6360 = vpack.c.b16 %v6344, %v6344
      %v6361 = vpack.c.b16 %v6345, %v6345
      %v6362 = vpack.c.b16 %v6346, %v6346
      %v6363 = vpack.c.b16 %v6347, %v6347
      %v6364 = vpack.c.b16 %v6348, %v6348
      %v6365 = vpack.c.b16 %v6349, %v6349
      %v6366 = vpack.c.b16 %v6350, %v6350
      %v6367 = vpack.c.b16 %v6351, %v6351
      %v6368 = vpack.c.b16 %v6352, %v6352
      %v6369 = vpack.c.b16 %v6353, %v6353
      %v6370 = vpack.c.b16 %v6354, %v6354
      %v6371 = vpack.c.b16 %v6355, %v6355
      %v6372 = vpack.c.b16 %v6356, %v6356
      %6373 = vrot.lane.b32.xlu0 %v6357, 22
      %v6374 = vpop.permute.xlu0 %6373
      %6375 = vrot.lane.b32.xlu0 %v6358, 22
      %v6376 = vpop.permute.xlu0 %6375
      %6377 = vrot.lane.b32.xlu0 %v6359, 22
      %v6378 = vpop.permute.xlu0 %6377
      %6379 = vrot.lane.b32.xlu0 %v6360, 22
      %v6380 = vpop.permute.xlu0 %6379
      %6381 = vrot.lane.b32.xlu0 %v6361, 22
      %v6382 = vpop.permute.xlu0 %6381
      %6383 = vrot.lane.b32.xlu0 %v6362, 22
      %v6384 = vpop.permute.xlu0 %6383
      %6385 = vrot.lane.b32.xlu0 %v6363, 22
      %v6386 = vpop.permute.xlu0 %6385
      %6387 = vrot.lane.b32.xlu0 %v6364, 22
      %v6388 = vpop.permute.xlu0 %6387
      %6389 = vrot.lane.b32.xlu0 %v6365, 22
      %v6390 = vpop.permute.xlu0 %6389
      %6391 = vrot.lane.b32.xlu0 %v6366, 22
      %v6392 = vpop.permute.xlu0 %6391
      %6393 = vrot.lane.b32.xlu0 %v6367, 22
      %v6394 = vpop.permute.xlu0 %6393
      %6395 = vrot.lane.b32.xlu0 %v6368, 22
      %v6396 = vpop.permute.xlu0 %6395
      %6397 = vrot.lane.b32.xlu0 %v6369, 22
      %v6398 = vpop.permute.xlu0 %6397
      %6399 = vrot.lane.b32.xlu0 %v6370, 22
      %v6400 = vpop.permute.xlu0 %6399
      %6401 = vrot.lane.b32.xlu0 %v6371, 22
      %v6402 = vpop.permute.xlu0 %6401
      %6403 = vrot.lane.b32.xlu0 %v6372, 22
      %v6404 = vpop.permute.xlu0 %6403
      %vm6405 = vcmask 179200
      %v6406 = vsel %vm6405, %v6374, %v6376
      %v6407 = vsel %vm6405, %v6376, %v6378
      %v6408 = vsel %vm6405, %v6378, %v6380
      %v6409 = vsel %vm6405, %v6380, %v6382
      %v6410 = vsel %vm6405, %v6382, %v6384
      %v6411 = vsel %vm6405, %v6384, %v6386
      %v6412 = vsel %vm6405, %v6386, %v6388
      %v6413 = vsel %vm6405, %v6388, %v6390
      %v6414 = vsel %vm6405, %v6390, %v6392
      %v6415 = vsel %vm6405, %v6392, %v6394
      %v6416 = vsel %vm6405, %v6394, %v6396
      %v6417 = vsel %vm6405, %v6396, %v6398
      %v6418 = vsel %vm6405, %v6398, %v6400
      %v6419 = vsel %vm6405, %v6400, %v6402
      %v6420 = vsel %vm6405, %v6402, %v6404
      %6437 = vst [vmem:[#allocation4 + $0x180] sm:$0xf0] %v6406
      %6438 = vst [vmem:[#allocation4 + $0x188] sm:$0xf0] %v6407
      %6439 = vst [vmem:[#allocation4 + $0x190] sm:$0xf0] %v6408
      %6440 = vst [vmem:[#allocation4 + $0x198] sm:$0xf0] %v6409
      %6441 = vst [vmem:[#allocation4 + $0x1a0] sm:$0xf0] %v6410
      %6442 = vst [vmem:[#allocation4 + $0x1a8] sm:$0xf0] %v6411
      %6443 = vst [vmem:[#allocation4 + $0x1b0] sm:$0xf0] %v6412
      %6444 = vst [vmem:[#allocation4 + $0x1b8] sm:$0xf0] %v6413
      %6445 = vst [vmem:[#allocation4 + $0x1c0] sm:$0xf0] %v6414
      %6446 = vst [vmem:[#allocation4 + $0x1c8] sm:$0xf0] %v6415
      %6447 = vst [vmem:[#allocation4 + $0x1d0] sm:$0xf0] %v6416
      %6448 = vst [vmem:[#allocation4 + $0x1d8] sm:$0xf0] %v6417
      %6449 = vst [vmem:[#allocation4 + $0x1e0] sm:$0xf0] %v6418
      %6450 = vst [vmem:[#allocation4 + $0x1e8] sm:$0xf0] %v6419
      %6451 = vst [vmem:[#allocation4 + $0x1f0] sm:$0xf0] %v6420
      %6452 = vst.msk [vmem:[#allocation4 + $0x1f8] sm:$0xf0] %vm5687, %v6404
      %v6453 = vld [vmem:[#allocation3 + $0x4] sm:$0xff]
      %v6454 = vld [vmem:[#allocation3 + $0xc] sm:$0xff]
      %v6455 = vld [vmem:[#allocation3 + $0x14] sm:$0xff]
      %v6456 = vld [vmem:[#allocation3 + $0x1c] sm:$0xff]
      %v6457 = vld [vmem:[#allocation3 + $0x24] sm:$0xff]
      %v6458 = vld [vmem:[#allocation3 + $0x2c] sm:$0xff]
      %v6459 = vld [vmem:[#allocation3 + $0x34] sm:$0xff]
      %v6460 = vld [vmem:[#allocation3 + $0x3c] sm:$0xff]
      %v6469 = vunpack.c.l.b16 %v6453
      %v6470 = vunpack.c.h.b16 %v6453
      %v6471 = vunpack.c.l.b16 %v6454
      %v6472 = vunpack.c.h.b16 %v6454
      %v6473 = vunpack.c.l.b16 %v6455
      %v6474 = vunpack.c.h.b16 %v6455
      %v6475 = vunpack.c.l.b16 %v6456
      %v6476 = vunpack.c.h.b16 %v6456
      %v6477 = vunpack.c.l.b16 %v6457
      %v6478 = vunpack.c.h.b16 %v6457
      %v6479 = vunpack.c.l.b16 %v6458
      %v6480 = vunpack.c.h.b16 %v6458
      %v6481 = vunpack.c.l.b16 %v6459
      %v6482 = vunpack.c.h.b16 %v6459
      %v6483 = vunpack.c.l.b16 %v6460
      %v6484 = vunpack.c.h.b16 %v6460
      %v6485 = vpack.c.b16 %v6469, %v6469
      %v6486 = vpack.c.b16 %v6470, %v6470
      %v6487 = vpack.c.b16 %v6471, %v6471
      %v6488 = vpack.c.b16 %v6472, %v6472
      %v6489 = vpack.c.b16 %v6473, %v6473
      %v6490 = vpack.c.b16 %v6474, %v6474
      %v6491 = vpack.c.b16 %v6475, %v6475
      %v6492 = vpack.c.b16 %v6476, %v6476
      %v6493 = vpack.c.b16 %v6477, %v6477
      %v6494 = vpack.c.b16 %v6478, %v6478
      %v6495 = vpack.c.b16 %v6479, %v6479
      %v6496 = vpack.c.b16 %v6480, %v6480
      %v6497 = vpack.c.b16 %v6481, %v6481
      %v6498 = vpack.c.b16 %v6482, %v6482
      %v6499 = vpack.c.b16 %v6483, %v6483
      %v6500 = vpack.c.b16 %v6484, %v6484
      %6501 = vrot.lane.b32.xlu0 %v6485, 56
      %v6502 = vpop.permute.xlu0 %6501
      %6503 = vrot.lane.b32.xlu0 %v6486, 56
      %v6504 = vpop.permute.xlu0 %6503
      %6505 = vrot.lane.b32.xlu0 %v6487, 56
      %v6506 = vpop.permute.xlu0 %6505
      %6507 = vrot.lane.b32.xlu0 %v6488, 56
      %v6508 = vpop.permute.xlu0 %6507
      %6509 = vrot.lane.b32.xlu0 %v6489, 56
      %v6510 = vpop.permute.xlu0 %6509
      %6511 = vrot.lane.b32.xlu0 %v6490, 56
      %v6512 = vpop.permute.xlu0 %6511
      %6513 = vrot.lane.b32.xlu0 %v6491, 56
      %v6514 = vpop.permute.xlu0 %6513
      %6515 = vrot.lane.b32.xlu0 %v6492, 56
      %v6516 = vpop.permute.xlu0 %6515
      %6517 = vrot.lane.b32.xlu0 %v6493, 56
      %v6518 = vpop.permute.xlu0 %6517
      %6519 = vrot.lane.b32.xlu0 %v6494, 56
      %v6520 = vpop.permute.xlu0 %6519
      %6521 = vrot.lane.b32.xlu0 %v6495, 56
      %v6522 = vpop.permute.xlu0 %6521
      %6523 = vrot.lane.b32.xlu0 %v6496, 56
      %v6524 = vpop.permute.xlu0 %6523
      %6525 = vrot.lane.b32.xlu0 %v6497, 56
      %v6526 = vpop.permute.xlu0 %6525
      %6527 = vrot.lane.b32.xlu0 %v6498, 56
      %v6528 = vpop.permute.xlu0 %6527
      %6529 = vrot.lane.b32.xlu0 %v6499, 56
      %v6530 = vpop.permute.xlu0 %6529
      %6531 = vrot.lane.b32.xlu0 %v6500, 56
      %v6532 = vpop.permute.xlu0 %6531
      %v6533 = vsel %vm3340, %v6502, %v6504
      %v6534 = vsel %vm3340, %v6504, %v6506
      %v6535 = vsel %vm3340, %v6506, %v6508
      %v6536 = vsel %vm3340, %v6508, %v6510
      %v6537 = vsel %vm3340, %v6510, %v6512
      %v6538 = vsel %vm3340, %v6512, %v6514
      %v6539 = vsel %vm3340, %v6514, %v6516
      %v6540 = vsel %vm3340, %v6516, %v6518
      %v6541 = vsel %vm3340, %v6518, %v6520
      %v6542 = vsel %vm3340, %v6520, %v6522
      %v6543 = vsel %vm3340, %v6522, %v6524
      %v6544 = vsel %vm3340, %v6524, %v6526
      %v6545 = vsel %vm3340, %v6526, %v6528
      %v6546 = vsel %vm3340, %v6528, %v6530
      %v6547 = vsel %vm3340, %v6530, %v6532
      %6564 = vst [vmem:[#allocation4 + $0x200] sm:$0xf] %v6533
      %6565 = vst [vmem:[#allocation4 + $0x208] sm:$0xf] %v6534
      %6566 = vst [vmem:[#allocation4 + $0x210] sm:$0xf] %v6535
      %6567 = vst [vmem:[#allocation4 + $0x218] sm:$0xf] %v6536
      %6568 = vst [vmem:[#allocation4 + $0x220] sm:$0xf] %v6537
      %6569 = vst [vmem:[#allocation4 + $0x228] sm:$0xf] %v6538
      %6570 = vst [vmem:[#allocation4 + $0x230] sm:$0xf] %v6539
      %6571 = vst [vmem:[#allocation4 + $0x238] sm:$0xf] %v6540
      %6572 = vst [vmem:[#allocation4 + $0x240] sm:$0xf] %v6541
      %6573 = vst [vmem:[#allocation4 + $0x248] sm:$0xf] %v6542
      %6574 = vst [vmem:[#allocation4 + $0x250] sm:$0xf] %v6543
      %6575 = vst [vmem:[#allocation4 + $0x258] sm:$0xf] %v6544
      %6576 = vst [vmem:[#allocation4 + $0x260] sm:$0xf] %v6545
      %6577 = vst [vmem:[#allocation4 + $0x268] sm:$0xf] %v6546
      %6578 = vst [vmem:[#allocation4 + $0x270] sm:$0xf] %v6547
      %6579 = vst.msk [vmem:[#allocation4 + $0x278] sm:$0xf] %vm5559, %v6532
      %v6580 = vld [vmem:[#allocation3 + $0x4] sm:$0xff]
      %v6581 = vld [vmem:[#allocation3 + $0xc] sm:$0xff]
      %v6582 = vld [vmem:[#allocation3 + $0x14] sm:$0xff]
      %v6583 = vld [vmem:[#allocation3 + $0x1c] sm:$0xff]
      %v6584 = vld [vmem:[#allocation3 + $0x24] sm:$0xff]
      %v6585 = vld [vmem:[#allocation3 + $0x2c] sm:$0xff]
      %v6586 = vld [vmem:[#allocation3 + $0x34] sm:$0xff]
      %v6587 = vld [vmem:[#allocation3 + $0x3c] sm:$0xff]
      %v6596 = vunpack.c.l.b16 %v6580
      %v6597 = vunpack.c.h.b16 %v6580
      %v6598 = vunpack.c.l.b16 %v6581
      %v6599 = vunpack.c.h.b16 %v6581
      %v6600 = vunpack.c.l.b16 %v6582
      %v6601 = vunpack.c.h.b16 %v6582
      %v6602 = vunpack.c.l.b16 %v6583
      %v6603 = vunpack.c.h.b16 %v6583
      %v6604 = vunpack.c.l.b16 %v6584
      %v6605 = vunpack.c.h.b16 %v6584
      %v6606 = vunpack.c.l.b16 %v6585
      %v6607 = vunpack.c.h.b16 %v6585
      %v6608 = vunpack.c.l.b16 %v6586
      %v6609 = vunpack.c.h.b16 %v6586
      %v6610 = vunpack.c.l.b16 %v6587
      %v6611 = vunpack.c.h.b16 %v6587
      %v6612 = vpack.c.b16 %v6596, %v6596
      %v6613 = vpack.c.b16 %v6597, %v6597
      %v6614 = vpack.c.b16 %v6598, %v6598
      %v6615 = vpack.c.b16 %v6599, %v6599
      %v6616 = vpack.c.b16 %v6600, %v6600
      %v6617 = vpack.c.b16 %v6601, %v6601
      %v6618 = vpack.c.b16 %v6602, %v6602
      %v6619 = vpack.c.b16 %v6603, %v6603
      %v6620 = vpack.c.b16 %v6604, %v6604
      %v6621 = vpack.c.b16 %v6605, %v6605
      %v6622 = vpack.c.b16 %v6606, %v6606
      %v6623 = vpack.c.b16 %v6607, %v6607
      %v6624 = vpack.c.b16 %v6608, %v6608
      %v6625 = vpack.c.b16 %v6609, %v6609
      %v6626 = vpack.c.b16 %v6610, %v6610
      %v6627 = vpack.c.b16 %v6611, %v6611
      %6628 = vrot.lane.b32.xlu0 %v6612, 54
      %v6629 = vpop.permute.xlu0 %6628
      %6630 = vrot.lane.b32.xlu0 %v6613, 54
      %v6631 = vpop.permute.xlu0 %6630
      %6632 = vrot.lane.b32.xlu0 %v6614, 54
      %v6633 = vpop.permute.xlu0 %6632
      %6634 = vrot.lane.b32.xlu0 %v6615, 54
      %v6635 = vpop.permute.xlu0 %6634
      %6636 = vrot.lane.b32.xlu0 %v6616, 54
      %v6637 = vpop.permute.xlu0 %6636
      %6638 = vrot.lane.b32.xlu0 %v6617, 54
      %v6639 = vpop.permute.xlu0 %6638
      %6640 = vrot.lane.b32.xlu0 %v6618, 54
      %v6641 = vpop.permute.xlu0 %6640
      %6642 = vrot.lane.b32.xlu0 %v6619, 54
      %v6643 = vpop.permute.xlu0 %6642
      %6644 = vrot.lane.b32.xlu0 %v6620, 54
      %v6645 = vpop.permute.xlu0 %6644
      %6646 = vrot.lane.b32.xlu0 %v6621, 54
      %v6647 = vpop.permute.xlu0 %6646
      %6648 = vrot.lane.b32.xlu0 %v6622, 54
      %v6649 = vpop.permute.xlu0 %6648
      %6650 = vrot.lane.b32.xlu0 %v6623, 54
      %v6651 = vpop.permute.xlu0 %6650
      %6652 = vrot.lane.b32.xlu0 %v6624, 54
      %v6653 = vpop.permute.xlu0 %6652
      %6654 = vrot.lane.b32.xlu0 %v6625, 54
      %v6655 = vpop.permute.xlu0 %6654
      %6656 = vrot.lane.b32.xlu0 %v6626, 54
      %v6657 = vpop.permute.xlu0 %6656
      %6658 = vrot.lane.b32.xlu0 %v6627, 54
      %v6659 = vpop.permute.xlu0 %6658
      %v6660 = vsel %vm3644, %v6629, %v6631
      %v6661 = vsel %vm3644, %v6631, %v6633
      %v6662 = vsel %vm3644, %v6633, %v6635
      %v6663 = vsel %vm3644, %v6635, %v6637
      %v6664 = vsel %vm3644, %v6637, %v6639
      %v6665 = vsel %vm3644, %v6639, %v6641
      %v6666 = vsel %vm3644, %v6641, %v6643
      %v6667 = vsel %vm3644, %v6643, %v6645
      %v6668 = vsel %vm3644, %v6645, %v6647
      %v6669 = vsel %vm3644, %v6647, %v6649
      %v6670 = vsel %vm3644, %v6649, %v6651
      %v6671 = vsel %vm3644, %v6651, %v6653
      %v6672 = vsel %vm3644, %v6653, %v6655
      %v6673 = vsel %vm3644, %v6655, %v6657
      %v6674 = vsel %vm3644, %v6657, %v6659
      %6691 = vst [vmem:[#allocation4 + $0x200] sm:$0xf0] %v6660
      %6692 = vst [vmem:[#allocation4 + $0x208] sm:$0xf0] %v6661
      %6693 = vst [vmem:[#allocation4 + $0x210] sm:$0xf0] %v6662
      %6694 = vst [vmem:[#allocation4 + $0x218] sm:$0xf0] %v6663
      %6695 = vst [vmem:[#allocation4 + $0x220] sm:$0xf0] %v6664
      %6696 = vst [vmem:[#allocation4 + $0x228] sm:$0xf0] %v6665
      %6697 = vst [vmem:[#allocation4 + $0x230] sm:$0xf0] %v6666
      %6698 = vst [vmem:[#allocation4 + $0x238] sm:$0xf0] %v6667
      %6699 = vst [vmem:[#allocation4 + $0x240] sm:$0xf0] %v6668
      %6700 = vst [vmem:[#allocation4 + $0x248] sm:$0xf0] %v6669
      %6701 = vst [vmem:[#allocation4 + $0x250] sm:$0xf0] %v6670
      %6702 = vst [vmem:[#allocation4 + $0x258] sm:$0xf0] %v6671
      %6703 = vst [vmem:[#allocation4 + $0x260] sm:$0xf0] %v6672
      %6704 = vst [vmem:[#allocation4 + $0x268] sm:$0xf0] %v6673
      %6705 = vst [vmem:[#allocation4 + $0x270] sm:$0xf0] %v6674
      %6706 = vst.msk [vmem:[#allocation4 + $0x278] sm:$0xf0] %vm5687, %v6659
      %v6707 = vld [vmem:[#allocation3 + $0x4] sm:$0xff]
      %v6708 = vld [vmem:[#allocation3 + $0xc] sm:$0xff]
      %v6709 = vld [vmem:[#allocation3 + $0x14] sm:$0xff]
      %v6710 = vld [vmem:[#allocation3 + $0x1c] sm:$0xff]
      %v6711 = vld [vmem:[#allocation3 + $0x24] sm:$0xff]
      %v6712 = vld [vmem:[#allocation3 + $0x2c] sm:$0xff]
      %v6713 = vld [vmem:[#allocation3 + $0x34] sm:$0xff]
      %v6714 = vld [vmem:[#allocation3 + $0x3c] sm:$0xff]
      %v6723 = vunpack.c.l.b16 %v6707
      %v6724 = vunpack.c.h.b16 %v6707
      %v6725 = vunpack.c.l.b16 %v6708
      %v6726 = vunpack.c.h.b16 %v6708
      %v6727 = vunpack.c.l.b16 %v6709
      %v6728 = vunpack.c.h.b16 %v6709
      %v6729 = vunpack.c.l.b16 %v6710
      %v6730 = vunpack.c.h.b16 %v6710
      %v6731 = vunpack.c.l.b16 %v6711
      %v6732 = vunpack.c.h.b16 %v6711
      %v6733 = vunpack.c.l.b16 %v6712
      %v6734 = vunpack.c.h.b16 %v6712
      %v6735 = vunpack.c.l.b16 %v6713
      %v6736 = vunpack.c.h.b16 %v6713
      %v6737 = vunpack.c.l.b16 %v6714
      %v6738 = vunpack.c.h.b16 %v6714
      %v6739 = vpack.c.b16 %v6723, %v6723
      %v6740 = vpack.c.b16 %v6724, %v6724
      %v6741 = vpack.c.b16 %v6725, %v6725
      %v6742 = vpack.c.b16 %v6726, %v6726
      %v6743 = vpack.c.b16 %v6727, %v6727
      %v6744 = vpack.c.b16 %v6728, %v6728
      %v6745 = vpack.c.b16 %v6729, %v6729
      %v6746 = vpack.c.b16 %v6730, %v6730
      %v6747 = vpack.c.b16 %v6731, %v6731
      %v6748 = vpack.c.b16 %v6732, %v6732
      %v6749 = vpack.c.b16 %v6733, %v6733
      %v6750 = vpack.c.b16 %v6734, %v6734
      %v6751 = vpack.c.b16 %v6735, %v6735
      %v6752 = vpack.c.b16 %v6736, %v6736
      %v6753 = vpack.c.b16 %v6737, %v6737
      %v6754 = vpack.c.b16 %v6738, %v6738
      %6755 = vrot.lane.b32.xlu0 %v6739, 52
      %v6756 = vpop.permute.xlu0 %6755
      %6757 = vrot.lane.b32.xlu0 %v6740, 52
      %v6758 = vpop.permute.xlu0 %6757
      %6759 = vrot.lane.b32.xlu0 %v6741, 52
      %v6760 = vpop.permute.xlu0 %6759
      %6761 = vrot.lane.b32.xlu0 %v6742, 52
      %v6762 = vpop.permute.xlu0 %6761
      %6763 = vrot.lane.b32.xlu0 %v6743, 52
      %v6764 = vpop.permute.xlu0 %6763
      %6765 = vrot.lane.b32.xlu0 %v6744, 52
      %v6766 = vpop.permute.xlu0 %6765
      %6767 = vrot.lane.b32.xlu0 %v6745, 52
      %v6768 = vpop.permute.xlu0 %6767
      %6769 = vrot.lane.b32.xlu0 %v6746, 52
      %v6770 = vpop.permute.xlu0 %6769
      %6771 = vrot.lane.b32.xlu0 %v6747, 52
      %v6772 = vpop.permute.xlu0 %6771
      %6773 = vrot.lane.b32.xlu0 %v6748, 52
      %v6774 = vpop.permute.xlu0 %6773
      %6775 = vrot.lane.b32.xlu0 %v6749, 52
      %v6776 = vpop.permute.xlu0 %6775
      %6777 = vrot.lane.b32.xlu0 %v6750, 52
      %v6778 = vpop.permute.xlu0 %6777
      %6779 = vrot.lane.b32.xlu0 %v6751, 52
      %v6780 = vpop.permute.xlu0 %6779
      %6781 = vrot.lane.b32.xlu0 %v6752, 52
      %v6782 = vpop.permute.xlu0 %6781
      %6783 = vrot.lane.b32.xlu0 %v6753, 52
      %v6784 = vpop.permute.xlu0 %6783
      %6785 = vrot.lane.b32.xlu0 %v6754, 52
      %v6786 = vpop.permute.xlu0 %6785
      %v6787 = vsel %vm3948, %v6756, %v6758
      %v6788 = vsel %vm3948, %v6758, %v6760
      %v6789 = vsel %vm3948, %v6760, %v6762
      %v6790 = vsel %vm3948, %v6762, %v6764
      %v6791 = vsel %vm3948, %v6764, %v6766
      %v6792 = vsel %vm3948, %v6766, %v6768
      %v6793 = vsel %vm3948, %v6768, %v6770
      %v6794 = vsel %vm3948, %v6770, %v6772
      %v6795 = vsel %vm3948, %v6772, %v6774
      %v6796 = vsel %vm3948, %v6774, %v6776
      %v6797 = vsel %vm3948, %v6776, %v6778
      %v6798 = vsel %vm3948, %v6778, %v6780
      %v6799 = vsel %vm3948, %v6780, %v6782
      %v6800 = vsel %vm3948, %v6782, %v6784
      %v6801 = vsel %vm3948, %v6784, %v6786
      %6818 = vst [vmem:[#allocation4 + $0x280] sm:$0xf] %v6787
      %6819 = vst [vmem:[#allocation4 + $0x288] sm:$0xf] %v6788
      %6820 = vst [vmem:[#allocation4 + $0x290] sm:$0xf] %v6789
      %6821 = vst [vmem:[#allocation4 + $0x298] sm:$0xf] %v6790
      %6822 = vst [vmem:[#allocation4 + $0x2a0] sm:$0xf] %v6791
      %6823 = vst [vmem:[#allocation4 + $0x2a8] sm:$0xf] %v6792
      %6824 = vst [vmem:[#allocation4 + $0x2b0] sm:$0xf] %v6793
      %6825 = vst [vmem:[#allocation4 + $0x2b8] sm:$0xf] %v6794
      %6826 = vst [vmem:[#allocation4 + $0x2c0] sm:$0xf] %v6795
      %6827 = vst [vmem:[#allocation4 + $0x2c8] sm:$0xf] %v6796
      %6828 = vst [vmem:[#allocation4 + $0x2d0] sm:$0xf] %v6797
      %6829 = vst [vmem:[#allocation4 + $0x2d8] sm:$0xf] %v6798
      %6830 = vst [vmem:[#allocation4 + $0x2e0] sm:$0xf] %v6799
      %6831 = vst [vmem:[#allocation4 + $0x2e8] sm:$0xf] %v6800
      %6832 = vst [vmem:[#allocation4 + $0x2f0] sm:$0xf] %v6801
      %6833 = vst.msk [vmem:[#allocation4 + $0x2f8] sm:$0xf] %vm5559, %v6786
      %v6834 = vld [vmem:[#allocation3 + $0x4] sm:$0xff]
      %v6835 = vld [vmem:[#allocation3 + $0xc] sm:$0xff]
      %v6836 = vld [vmem:[#allocation3 + $0x14] sm:$0xff]
      %v6837 = vld [vmem:[#allocation3 + $0x1c] sm:$0xff]
      %v6838 = vld [vmem:[#allocation3 + $0x24] sm:$0xff]
      %v6839 = vld [vmem:[#allocation3 + $0x2c] sm:$0xff]
      %v6840 = vld [vmem:[#allocation3 + $0x34] sm:$0xff]
      %v6841 = vld [vmem:[#allocation3 + $0x3c] sm:$0xff]
      %v6850 = vunpack.c.l.b16 %v6834
      %v6851 = vunpack.c.h.b16 %v6834
      %v6852 = vunpack.c.l.b16 %v6835
      %v6853 = vunpack.c.h.b16 %v6835
      %v6854 = vunpack.c.l.b16 %v6836
      %v6855 = vunpack.c.h.b16 %v6836
      %v6856 = vunpack.c.l.b16 %v6837
      %v6857 = vunpack.c.h.b16 %v6837
      %v6858 = vunpack.c.l.b16 %v6838
      %v6859 = vunpack.c.h.b16 %v6838
      %v6860 = vunpack.c.l.b16 %v6839
      %v6861 = vunpack.c.h.b16 %v6839
      %v6862 = vunpack.c.l.b16 %v6840
      %v6863 = vunpack.c.h.b16 %v6840
      %v6864 = vunpack.c.l.b16 %v6841
      %v6865 = vunpack.c.h.b16 %v6841
      %v6866 = vpack.c.b16 %v6850, %v6850
      %v6867 = vpack.c.b16 %v6851, %v6851
      %v6868 = vpack.c.b16 %v6852, %v6852
      %v6869 = vpack.c.b16 %v6853, %v6853
      %v6870 = vpack.c.b16 %v6854, %v6854
      %v6871 = vpack.c.b16 %v6855, %v6855
      %v6872 = vpack.c.b16 %v6856, %v6856
      %v6873 = vpack.c.b16 %v6857, %v6857
      %v6874 = vpack.c.b16 %v6858, %v6858
      %v6875 = vpack.c.b16 %v6859, %v6859
      %v6876 = vpack.c.b16 %v6860, %v6860
      %v6877 = vpack.c.b16 %v6861, %v6861
      %v6878 = vpack.c.b16 %v6862, %v6862
      %v6879 = vpack.c.b16 %v6863, %v6863
      %v6880 = vpack.c.b16 %v6864, %v6864
      %v6881 = vpack.c.b16 %v6865, %v6865
      %6882 = vrot.lane.b32.xlu0 %v6866, 50
      %v6883 = vpop.permute.xlu0 %6882
      %6884 = vrot.lane.b32.xlu0 %v6867, 50
      %v6885 = vpop.permute.xlu0 %6884
      %6886 = vrot.lane.b32.xlu0 %v6868, 50
      %v6887 = vpop.permute.xlu0 %6886
      %6888 = vrot.lane.b32.xlu0 %v6869, 50
      %v6889 = vpop.permute.xlu0 %6888
      %6890 = vrot.lane.b32.xlu0 %v6870, 50
      %v6891 = vpop.permute.xlu0 %6890
      %6892 = vrot.lane.b32.xlu0 %v6871, 50
      %v6893 = vpop.permute.xlu0 %6892
      %6894 = vrot.lane.b32.xlu0 %v6872, 50
      %v6895 = vpop.permute.xlu0 %6894
      %6896 = vrot.lane.b32.xlu0 %v6873, 50
      %v6897 = vpop.permute.xlu0 %6896
      %6898 = vrot.lane.b32.xlu0 %v6874, 50
      %v6899 = vpop.permute.xlu0 %6898
      %6900 = vrot.lane.b32.xlu0 %v6875, 50
      %v6901 = vpop.permute.xlu0 %6900
      %6902 = vrot.lane.b32.xlu0 %v6876, 50
      %v6903 = vpop.permute.xlu0 %6902
      %6904 = vrot.lane.b32.xlu0 %v6877, 50
      %v6905 = vpop.permute.xlu0 %6904
      %6906 = vrot.lane.b32.xlu0 %v6878, 50
      %v6907 = vpop.permute.xlu0 %6906
      %6908 = vrot.lane.b32.xlu0 %v6879, 50
      %v6909 = vpop.permute.xlu0 %6908
      %6910 = vrot.lane.b32.xlu0 %v6880, 50
      %v6911 = vpop.permute.xlu0 %6910
      %6912 = vrot.lane.b32.xlu0 %v6881, 50
      %v6913 = vpop.permute.xlu0 %6912
      %vm6914 = vcmask 408576
      %v6915 = vsel %vm6914, %v6883, %v6885
      %v6916 = vsel %vm6914, %v6885, %v6887
      %v6917 = vsel %vm6914, %v6887, %v6889
      %v6918 = vsel %vm6914, %v6889, %v6891
      %v6919 = vsel %vm6914, %v6891, %v6893
      %v6920 = vsel %vm6914, %v6893, %v6895
      %v6921 = vsel %vm6914, %v6895, %v6897
      %v6922 = vsel %vm6914, %v6897, %v6899
      %v6923 = vsel %vm6914, %v6899, %v6901
      %v6924 = vsel %vm6914, %v6901, %v6903
      %v6925 = vsel %vm6914, %v6903, %v6905
      %v6926 = vsel %vm6914, %v6905, %v6907
      %v6927 = vsel %vm6914, %v6907, %v6909
      %v6928 = vsel %vm6914, %v6909, %v6911
      %v6929 = vsel %vm6914, %v6911, %v6913
      %6946 = vst [vmem:[#allocation4 + $0x280] sm:$0xf0] %v6915
      %6947 = vst [vmem:[#allocation4 + $0x288] sm:$0xf0] %v6916
      %6948 = vst [vmem:[#allocation4 + $0x290] sm:$0xf0] %v6917
      %6949 = vst [vmem:[#allocation4 + $0x298] sm:$0xf0] %v6918
      %6950 = vst [vmem:[#allocation4 + $0x2a0] sm:$0xf0] %v6919
      %6951 = vst [vmem:[#allocation4 + $0x2a8] sm:$0xf0] %v6920
      %6952 = vst [vmem:[#allocation4 + $0x2b0] sm:$0xf0] %v6921
      %6953 = vst [vmem:[#allocation4 + $0x2b8] sm:$0xf0] %v6922
      %6954 = vst [vmem:[#allocation4 + $0x2c0] sm:$0xf0] %v6923
      %6955 = vst [vmem:[#allocation4 + $0x2c8] sm:$0xf0] %v6924
      %6956 = vst [vmem:[#allocation4 + $0x2d0] sm:$0xf0] %v6925
      %6957 = vst [vmem:[#allocation4 + $0x2d8] sm:$0xf0] %v6926
      %6958 = vst [vmem:[#allocation4 + $0x2e0] sm:$0xf0] %v6927
      %6959 = vst [vmem:[#allocation4 + $0x2e8] sm:$0xf0] %v6928
      %6960 = vst [vmem:[#allocation4 + $0x2f0] sm:$0xf0] %v6929
      %6961 = vst.msk [vmem:[#allocation4 + $0x2f8] sm:$0xf0] %vm5687, %v6913
      %v6962 = vld [vmem:[#allocation3 + $0x8] sm:$0xff]
      %v6963 = vld [vmem:[#allocation3 + $0x10] sm:$0xff]
      %v6964 = vld [vmem:[#allocation3 + $0x18] sm:$0xff]
      %v6965 = vld [vmem:[#allocation3 + $0x20] sm:$0xff]
      %v6966 = vld [vmem:[#allocation3 + $0x28] sm:$0xff]
      %v6967 = vld [vmem:[#allocation3 + $0x30] sm:$0xff]
      %v6968 = vld [vmem:[#allocation3 + $0x38] sm:$0xff]
      %v6969 = vld [vmem:[#allocation3 + $0x40] sm:$0xff]
      %v6978 = vunpack.c.l.b16 %v6962
      %v6979 = vunpack.c.h.b16 %v6962
      %v6980 = vunpack.c.l.b16 %v6963
      %v6981 = vunpack.c.h.b16 %v6963
      %v6982 = vunpack.c.l.b16 %v6964
      %v6983 = vunpack.c.h.b16 %v6964
      %v6984 = vunpack.c.l.b16 %v6965
      %v6985 = vunpack.c.h.b16 %v6965
      %v6986 = vunpack.c.l.b16 %v6966
      %v6987 = vunpack.c.h.b16 %v6966
      %v6988 = vunpack.c.l.b16 %v6967
      %v6989 = vunpack.c.h.b16 %v6967
      %v6990 = vunpack.c.l.b16 %v6968
      %v6991 = vunpack.c.h.b16 %v6968
      %v6992 = vunpack.c.l.b16 %v6969
      %v6993 = vunpack.c.h.b16 %v6969
      %v6994 = vpack.c.b16 %v6978, %v6978
      %v6995 = vpack.c.b16 %v6979, %v6979
      %v6996 = vpack.c.b16 %v6980, %v6980
      %v6997 = vpack.c.b16 %v6981, %v6981
      %v6998 = vpack.c.b16 %v6982, %v6982
      %v6999 = vpack.c.b16 %v6983, %v6983
      %v7000 = vpack.c.b16 %v6984, %v6984
      %v7001 = vpack.c.b16 %v6985, %v6985
      %v7002 = vpack.c.b16 %v6986, %v6986
      %v7003 = vpack.c.b16 %v6987, %v6987
      %v7004 = vpack.c.b16 %v6988, %v6988
      %v7005 = vpack.c.b16 %v6989, %v6989
      %v7006 = vpack.c.b16 %v6990, %v6990
      %v7007 = vpack.c.b16 %v6991, %v6991
      %v7008 = vpack.c.b16 %v6992, %v6992
      %v7009 = vpack.c.b16 %v6993, %v6993
      %7010 = vrot.lane.b32.xlu0 %v6994, 84
      %v7011 = vpop.permute.xlu0 %7010
      %7012 = vrot.lane.b32.xlu0 %v6995, 84
      %v7013 = vpop.permute.xlu0 %7012
      %7014 = vrot.lane.b32.xlu0 %v6996, 84
      %v7015 = vpop.permute.xlu0 %7014
      %7016 = vrot.lane.b32.xlu0 %v6997, 84
      %v7017 = vpop.permute.xlu0 %7016
      %7018 = vrot.lane.b32.xlu0 %v6998, 84
      %v7019 = vpop.permute.xlu0 %7018
      %7020 = vrot.lane.b32.xlu0 %v6999, 84
      %v7021 = vpop.permute.xlu0 %7020
      %7022 = vrot.lane.b32.xlu0 %v7000, 84
      %v7023 = vpop.permute.xlu0 %7022
      %7024 = vrot.lane.b32.xlu0 %v7001, 84
      %v7025 = vpop.permute.xlu0 %7024
      %7026 = vrot.lane.b32.xlu0 %v7002, 84
      %v7027 = vpop.permute.xlu0 %7026
      %7028 = vrot.lane.b32.xlu0 %v7003, 84
      %v7029 = vpop.permute.xlu0 %7028
      %7030 = vrot.lane.b32.xlu0 %v7004, 84
      %v7031 = vpop.permute.xlu0 %7030
      %7032 = vrot.lane.b32.xlu0 %v7005, 84
      %v7033 = vpop.permute.xlu0 %7032
      %7034 = vrot.lane.b32.xlu0 %v7006, 84
      %v7035 = vpop.permute.xlu0 %7034
      %7036 = vrot.lane.b32.xlu0 %v7007, 84
      %v7037 = vpop.permute.xlu0 %7036
      %7038 = vrot.lane.b32.xlu0 %v7008, 84
      %v7039 = vpop.permute.xlu0 %7038
      %7040 = vrot.lane.b32.xlu0 %v7009, 84
      %v7041 = vpop.permute.xlu0 %7040
      %vm7042 = vcmask 687104
      %v7043 = vsel %vm7042, %v7011, %v7013
      %v7044 = vsel %vm7042, %v7013, %v7015
      %v7045 = vsel %vm7042, %v7015, %v7017
      %v7046 = vsel %vm7042, %v7017, %v7019
      %v7047 = vsel %vm7042, %v7019, %v7021
      %v7048 = vsel %vm7042, %v7021, %v7023
      %v7049 = vsel %vm7042, %v7023, %v7025
      %v7050 = vsel %vm7042, %v7025, %v7027
      %v7051 = vsel %vm7042, %v7027, %v7029
      %v7052 = vsel %vm7042, %v7029, %v7031
      %v7053 = vsel %vm7042, %v7031, %v7033
      %v7054 = vsel %vm7042, %v7033, %v7035
      %v7055 = vsel %vm7042, %v7035, %v7037
      %v7056 = vsel %vm7042, %v7037, %v7039
      %v7057 = vsel %vm7042, %v7039, %v7041
      %7074 = vst [vmem:[#allocation4 + $0x300] sm:$0xf] %v7043
      %7075 = vst [vmem:[#allocation4 + $0x308] sm:$0xf] %v7044
      %7076 = vst [vmem:[#allocation4 + $0x310] sm:$0xf] %v7045
      %7077 = vst [vmem:[#allocation4 + $0x318] sm:$0xf] %v7046
      %7078 = vst [vmem:[#allocation4 + $0x320] sm:$0xf] %v7047
      %7079 = vst [vmem:[#allocation4 + $0x328] sm:$0xf] %v7048
      %7080 = vst [vmem:[#allocation4 + $0x330] sm:$0xf] %v7049
      %7081 = vst [vmem:[#allocation4 + $0x338] sm:$0xf] %v7050
      %7082 = vst [vmem:[#allocation4 + $0x340] sm:$0xf] %v7051
      %7083 = vst [vmem:[#allocation4 + $0x348] sm:$0xf] %v7052
      %7084 = vst [vmem:[#allocation4 + $0x350] sm:$0xf] %v7053
      %7085 = vst [vmem:[#allocation4 + $0x358] sm:$0xf] %v7054
      %7086 = vst [vmem:[#allocation4 + $0x360] sm:$0xf] %v7055
      %7087 = vst [vmem:[#allocation4 + $0x368] sm:$0xf] %v7056
      %7088 = vst [vmem:[#allocation4 + $0x370] sm:$0xf] %v7057
      %7089 = vst.msk [vmem:[#allocation4 + $0x378] sm:$0xf] %vm5559, %v7041
      %v7090 = vld [vmem:[#allocation3 + $0x8] sm:$0xff]
      %v7091 = vld [vmem:[#allocation3 + $0x10] sm:$0xff]
      %v7092 = vld [vmem:[#allocation3 + $0x18] sm:$0xff]
      %v7093 = vld [vmem:[#allocation3 + $0x20] sm:$0xff]
      %v7094 = vld [vmem:[#allocation3 + $0x28] sm:$0xff]
      %v7095 = vld [vmem:[#allocation3 + $0x30] sm:$0xff]
      %v7096 = vld [vmem:[#allocation3 + $0x38] sm:$0xff]
      %v7097 = vld [vmem:[#allocation3 + $0x40] sm:$0xff]
      %v7106 = vunpack.c.l.b16 %v7090
      %v7107 = vunpack.c.h.b16 %v7090
      %v7108 = vunpack.c.l.b16 %v7091
      %v7109 = vunpack.c.h.b16 %v7091
      %v7110 = vunpack.c.l.b16 %v7092
      %v7111 = vunpack.c.h.b16 %v7092
      %v7112 = vunpack.c.l.b16 %v7093
      %v7113 = vunpack.c.h.b16 %v7093
      %v7114 = vunpack.c.l.b16 %v7094
      %v7115 = vunpack.c.h.b16 %v7094
      %v7116 = vunpack.c.l.b16 %v7095
      %v7117 = vunpack.c.h.b16 %v7095
      %v7118 = vunpack.c.l.b16 %v7096
      %v7119 = vunpack.c.h.b16 %v7096
      %v7120 = vunpack.c.l.b16 %v7097
      %v7121 = vunpack.c.h.b16 %v7097
      %v7122 = vpack.c.b16 %v7106, %v7106
      %v7123 = vpack.c.b16 %v7107, %v7107
      %v7124 = vpack.c.b16 %v7108, %v7108
      %v7125 = vpack.c.b16 %v7109, %v7109
      %v7126 = vpack.c.b16 %v7110, %v7110
      %v7127 = vpack.c.b16 %v7111, %v7111
      %v7128 = vpack.c.b16 %v7112, %v7112
      %v7129 = vpack.c.b16 %v7113, %v7113
      %v7130 = vpack.c.b16 %v7114, %v7114
      %v7131 = vpack.c.b16 %v7115, %v7115
      %v7132 = vpack.c.b16 %v7116, %v7116
      %v7133 = vpack.c.b16 %v7117, %v7117
      %v7134 = vpack.c.b16 %v7118, %v7118
      %v7135 = vpack.c.b16 %v7119, %v7119
      %v7136 = vpack.c.b16 %v7120, %v7120
      %v7137 = vpack.c.b16 %v7121, %v7121
      %7138 = vrot.lane.b32.xlu0 %v7122, 82
      %v7139 = vpop.permute.xlu0 %7138
      %7140 = vrot.lane.b32.xlu0 %v7123, 82
      %v7141 = vpop.permute.xlu0 %7140
      %7142 = vrot.lane.b32.xlu0 %v7124, 82
      %v7143 = vpop.permute.xlu0 %7142
      %7144 = vrot.lane.b32.xlu0 %v7125, 82
      %v7145 = vpop.permute.xlu0 %7144
      %7146 = vrot.lane.b32.xlu0 %v7126, 82
      %v7147 = vpop.permute.xlu0 %7146
      %7148 = vrot.lane.b32.xlu0 %v7127, 82
      %v7149 = vpop.permute.xlu0 %7148
      %7150 = vrot.lane.b32.xlu0 %v7128, 82
      %v7151 = vpop.permute.xlu0 %7150
      %7152 = vrot.lane.b32.xlu0 %v7129, 82
      %v7153 = vpop.permute.xlu0 %7152
      %7154 = vrot.lane.b32.xlu0 %v7130, 82
      %v7155 = vpop.permute.xlu0 %7154
      %7156 = vrot.lane.b32.xlu0 %v7131, 82
      %v7157 = vpop.permute.xlu0 %7156
      %7158 = vrot.lane.b32.xlu0 %v7132, 82
      %v7159 = vpop.permute.xlu0 %7158
      %7160 = vrot.lane.b32.xlu0 %v7133, 82
      %v7161 = vpop.permute.xlu0 %7160
      %7162 = vrot.lane.b32.xlu0 %v7134, 82
      %v7163 = vpop.permute.xlu0 %7162
      %7164 = vrot.lane.b32.xlu0 %v7135, 82
      %v7165 = vpop.permute.xlu0 %7164
      %7166 = vrot.lane.b32.xlu0 %v7136, 82
      %v7167 = vpop.permute.xlu0 %7166
      %7168 = vrot.lane.b32.xlu0 %v7137, 82
      %v7169 = vpop.permute.xlu0 %7168
      %vm7170 = vcmask 670720
      %v7171 = vsel %vm7170, %v7139, %v7141
      %v7172 = vsel %vm7170, %v7141, %v7143
      %v7173 = vsel %vm7170, %v7143, %v7145
      %v7174 = vsel %vm7170, %v7145, %v7147
      %v7175 = vsel %vm7170, %v7147, %v7149
      %v7176 = vsel %vm7170, %v7149, %v7151
      %v7177 = vsel %vm7170, %v7151, %v7153
      %v7178 = vsel %vm7170, %v7153, %v7155
      %v7179 = vsel %vm7170, %v7155, %v7157
      %v7180 = vsel %vm7170, %v7157, %v7159
      %v7181 = vsel %vm7170, %v7159, %v7161
      %v7182 = vsel %vm7170, %v7161, %v7163
      %v7183 = vsel %vm7170, %v7163, %v7165
      %v7184 = vsel %vm7170, %v7165, %v7167
      %v7185 = vsel %vm7170, %v7167, %v7169
      %7202 = vst [vmem:[#allocation4 + $0x300] sm:$0xf0] %v7171
      %7203 = vst [vmem:[#allocation4 + $0x308] sm:$0xf0] %v7172
      %7204 = vst [vmem:[#allocation4 + $0x310] sm:$0xf0] %v7173
      %7205 = vst [vmem:[#allocation4 + $0x318] sm:$0xf0] %v7174
      %7206 = vst [vmem:[#allocation4 + $0x320] sm:$0xf0] %v7175
      %7207 = vst [vmem:[#allocation4 + $0x328] sm:$0xf0] %v7176
      %7208 = vst [vmem:[#allocation4 + $0x330] sm:$0xf0] %v7177
      %7209 = vst [vmem:[#allocation4 + $0x338] sm:$0xf0] %v7178
      %7210 = vst [vmem:[#allocation4 + $0x340] sm:$0xf0] %v7179
      %7211 = vst [vmem:[#allocation4 + $0x348] sm:$0xf0] %v7180
      %7212 = vst [vmem:[#allocation4 + $0x350] sm:$0xf0] %v7181
      %7213 = vst [vmem:[#allocation4 + $0x358] sm:$0xf0] %v7182
      %7214 = vst [vmem:[#allocation4 + $0x360] sm:$0xf0] %v7183
      %7215 = vst [vmem:[#allocation4 + $0x368] sm:$0xf0] %v7184
      %7216 = vst [vmem:[#allocation4 + $0x370] sm:$0xf0] %v7185
      %7217 = vst.msk [vmem:[#allocation4 + $0x378] sm:$0xf0] %vm5687, %v7169
      %v7218 = vld [vmem:[#allocation3 + $0x8] sm:$0xff]
      %v7219 = vld [vmem:[#allocation3 + $0x10] sm:$0xff]
      %v7220 = vld [vmem:[#allocation3 + $0x18] sm:$0xff]
      %v7221 = vld [vmem:[#allocation3 + $0x20] sm:$0xff]
      %v7222 = vld [vmem:[#allocation3 + $0x28] sm:$0xff]
      %v7223 = vld [vmem:[#allocation3 + $0x30] sm:$0xff]
      %v7224 = vld [vmem:[#allocation3 + $0x38] sm:$0xff]
      %v7225 = vld [vmem:[#allocation3 + $0x40] sm:$0xff]
      %v7234 = vunpack.c.l.b16 %v7218
      %v7235 = vunpack.c.h.b16 %v7218
      %v7236 = vunpack.c.l.b16 %v7219
      %v7237 = vunpack.c.h.b16 %v7219
      %v7238 = vunpack.c.l.b16 %v7220
      %v7239 = vunpack.c.h.b16 %v7220
      %v7240 = vunpack.c.l.b16 %v7221
      %v7241 = vunpack.c.h.b16 %v7221
      %v7242 = vunpack.c.l.b16 %v7222
      %v7243 = vunpack.c.h.b16 %v7222
      %v7244 = vunpack.c.l.b16 %v7223
      %v7245 = vunpack.c.h.b16 %v7223
      %v7246 = vunpack.c.l.b16 %v7224
      %v7247 = vunpack.c.h.b16 %v7224
      %v7248 = vunpack.c.l.b16 %v7225
      %v7249 = vunpack.c.h.b16 %v7225
      %v7250 = vpack.c.b16 %v7234, %v7234
      %v7251 = vpack.c.b16 %v7235, %v7235
      %v7252 = vpack.c.b16 %v7236, %v7236
      %v7253 = vpack.c.b16 %v7237, %v7237
      %v7254 = vpack.c.b16 %v7238, %v7238
      %v7255 = vpack.c.b16 %v7239, %v7239
      %v7256 = vpack.c.b16 %v7240, %v7240
      %v7257 = vpack.c.b16 %v7241, %v7241
      %v7258 = vpack.c.b16 %v7242, %v7242
      %v7259 = vpack.c.b16 %v7243, %v7243
      %v7260 = vpack.c.b16 %v7244, %v7244
      %v7261 = vpack.c.b16 %v7245, %v7245
      %v7262 = vpack.c.b16 %v7246, %v7246
      %v7263 = vpack.c.b16 %v7247, %v7247
      %v7264 = vpack.c.b16 %v7248, %v7248
      %v7265 = vpack.c.b16 %v7249, %v7249
      %7266 = vrot.lane.b32.xlu0 %v7250, 80
      %v7267 = vpop.permute.xlu0 %7266
      %7268 = vrot.lane.b32.xlu0 %v7251, 80
      %v7269 = vpop.permute.xlu0 %7268
      %7270 = vrot.lane.b32.xlu0 %v7252, 80
      %v7271 = vpop.permute.xlu0 %7270
      %7272 = vrot.lane.b32.xlu0 %v7253, 80
      %v7273 = vpop.permute.xlu0 %7272
      %7274 = vrot.lane.b32.xlu0 %v7254, 80
      %v7275 = vpop.permute.xlu0 %7274
      %7276 = vrot.lane.b32.xlu0 %v7255, 80
      %v7277 = vpop.permute.xlu0 %7276
      %7278 = vrot.lane.b32.xlu0 %v7256, 80
      %v7279 = vpop.permute.xlu0 %7278
      %7280 = vrot.lane.b32.xlu0 %v7257, 80
      %v7281 = vpop.permute.xlu0 %7280
      %7282 = vrot.lane.b32.xlu0 %v7258, 80
      %v7283 = vpop.permute.xlu0 %7282
      %7284 = vrot.lane.b32.xlu0 %v7259, 80
      %v7285 = vpop.permute.xlu0 %7284
      %7286 = vrot.lane.b32.xlu0 %v7260, 80
      %v7287 = vpop.permute.xlu0 %7286
      %7288 = vrot.lane.b32.xlu0 %v7261, 80
      %v7289 = vpop.permute.xlu0 %7288
      %7290 = vrot.lane.b32.xlu0 %v7262, 80
      %v7291 = vpop.permute.xlu0 %7290
      %7292 = vrot.lane.b32.xlu0 %v7263, 80
      %v7293 = vpop.permute.xlu0 %7292
      %7294 = vrot.lane.b32.xlu0 %v7264, 80
      %v7295 = vpop.permute.xlu0 %7294
      %7296 = vrot.lane.b32.xlu0 %v7265, 80
      %v7297 = vpop.permute.xlu0 %7296
      %vm7298 = vcmask 654336
      %v7299 = vsel %vm7298, %v7267, %v7269
      %v7300 = vsel %vm7298, %v7269, %v7271
      %v7301 = vsel %vm7298, %v7271, %v7273
      %v7302 = vsel %vm7298, %v7273, %v7275
      %v7303 = vsel %vm7298, %v7275, %v7277
      %v7304 = vsel %vm7298, %v7277, %v7279
      %v7305 = vsel %vm7298, %v7279, %v7281
      %v7306 = vsel %vm7298, %v7281, %v7283
      %v7307 = vsel %vm7298, %v7283, %v7285
      %v7308 = vsel %vm7298, %v7285, %v7287
      %v7309 = vsel %vm7298, %v7287, %v7289
      %v7310 = vsel %vm7298, %v7289, %v7291
      %v7311 = vsel %vm7298, %v7291, %v7293
      %v7312 = vsel %vm7298, %v7293, %v7295
      %v7313 = vsel %vm7298, %v7295, %v7297
      %7330 = vst [vmem:[#allocation4 + $0x380] sm:$0xf] %v7299
      %7331 = vst [vmem:[#allocation4 + $0x388] sm:$0xf] %v7300
      %7332 = vst [vmem:[#allocation4 + $0x390] sm:$0xf] %v7301
      %7333 = vst [vmem:[#allocation4 + $0x398] sm:$0xf] %v7302
      %7334 = vst [vmem:[#allocation4 + $0x3a0] sm:$0xf] %v7303
      %7335 = vst [vmem:[#allocation4 + $0x3a8] sm:$0xf] %v7304
      %7336 = vst [vmem:[#allocation4 + $0x3b0] sm:$0xf] %v7305
      %7337 = vst [vmem:[#allocation4 + $0x3b8] sm:$0xf] %v7306
      %7338 = vst [vmem:[#allocation4 + $0x3c0] sm:$0xf] %v7307
      %7339 = vst [vmem:[#allocation4 + $0x3c8] sm:$0xf] %v7308
      %7340 = vst [vmem:[#allocation4 + $0x3d0] sm:$0xf] %v7309
      %7341 = vst [vmem:[#allocation4 + $0x3d8] sm:$0xf] %v7310
      %7342 = vst [vmem:[#allocation4 + $0x3e0] sm:$0xf] %v7311
      %7343 = vst [vmem:[#allocation4 + $0x3e8] sm:$0xf] %v7312
      %7344 = vst [vmem:[#allocation4 + $0x3f0] sm:$0xf] %v7313
      %7345 = vst.msk [vmem:[#allocation4 + $0x3f8] sm:$0xf] %vm5559, %v7297
      %v7346 = vld [vmem:[#allocation3 + $0x8] sm:$0xff]
      %v7347 = vld [vmem:[#allocation3 + $0x10] sm:$0xff]
      %v7348 = vld [vmem:[#allocation3 + $0x18] sm:$0xff]
      %v7349 = vld [vmem:[#allocation3 + $0x20] sm:$0xff]
      %v7350 = vld [vmem:[#allocation3 + $0x28] sm:$0xff]
      %v7351 = vld [vmem:[#allocation3 + $0x30] sm:$0xff]
      %v7352 = vld [vmem:[#allocation3 + $0x38] sm:$0xff]
      %v7353 = vld [vmem:[#allocation3 + $0x40] sm:$0xff]
      %v7362 = vunpack.c.l.b16 %v7346
      %v7363 = vunpack.c.h.b16 %v7346
      %v7364 = vunpack.c.l.b16 %v7347
      %v7365 = vunpack.c.h.b16 %v7347
      %v7366 = vunpack.c.l.b16 %v7348
      %v7367 = vunpack.c.h.b16 %v7348
      %v7368 = vunpack.c.l.b16 %v7349
      %v7369 = vunpack.c.h.b16 %v7349
      %v7370 = vunpack.c.l.b16 %v7350
      %v7371 = vunpack.c.h.b16 %v7350
      %v7372 = vunpack.c.l.b16 %v7351
      %v7373 = vunpack.c.h.b16 %v7351
      %v7374 = vunpack.c.l.b16 %v7352
      %v7375 = vunpack.c.h.b16 %v7352
      %v7376 = vunpack.c.l.b16 %v7353
      %v7377 = vunpack.c.h.b16 %v7353
      %v7378 = vpack.c.b16 %v7362, %v7362
      %v7379 = vpack.c.b16 %v7363, %v7363
      %v7380 = vpack.c.b16 %v7364, %v7364
      %v7381 = vpack.c.b16 %v7365, %v7365
      %v7382 = vpack.c.b16 %v7366, %v7366
      %v7383 = vpack.c.b16 %v7367, %v7367
      %v7384 = vpack.c.b16 %v7368, %v7368
      %v7385 = vpack.c.b16 %v7369, %v7369
      %v7386 = vpack.c.b16 %v7370, %v7370
      %v7387 = vpack.c.b16 %v7371, %v7371
      %v7388 = vpack.c.b16 %v7372, %v7372
      %v7389 = vpack.c.b16 %v7373, %v7373
      %v7390 = vpack.c.b16 %v7374, %v7374
      %v7391 = vpack.c.b16 %v7375, %v7375
      %v7392 = vpack.c.b16 %v7376, %v7376
      %v7393 = vpack.c.b16 %v7377, %v7377
      %7394 = vrot.lane.b32.xlu0 %v7378, 78
      %v7395 = vpop.permute.xlu0 %7394
      %7396 = vrot.lane.b32.xlu0 %v7379, 78
      %v7397 = vpop.permute.xlu0 %7396
      %7398 = vrot.lane.b32.xlu0 %v7380, 78
      %v7399 = vpop.permute.xlu0 %7398
      %7400 = vrot.lane.b32.xlu0 %v7381, 78
      %v7401 = vpop.permute.xlu0 %7400
      %7402 = vrot.lane.b32.xlu0 %v7382, 78
      %v7403 = vpop.permute.xlu0 %7402
      %7404 = vrot.lane.b32.xlu0 %v7383, 78
      %v7405 = vpop.permute.xlu0 %7404
      %7406 = vrot.lane.b32.xlu0 %v7384, 78
      %v7407 = vpop.permute.xlu0 %7406
      %7408 = vrot.lane.b32.xlu0 %v7385, 78
      %v7409 = vpop.permute.xlu0 %7408
      %7410 = vrot.lane.b32.xlu0 %v7386, 78
      %v7411 = vpop.permute.xlu0 %7410
      %7412 = vrot.lane.b32.xlu0 %v7387, 78
      %v7413 = vpop.permute.xlu0 %7412
      %7414 = vrot.lane.b32.xlu0 %v7388, 78
      %v7415 = vpop.permute.xlu0 %7414
      %7416 = vrot.lane.b32.xlu0 %v7389, 78
      %v7417 = vpop.permute.xlu0 %7416
      %7418 = vrot.lane.b32.xlu0 %v7390, 78
      %v7419 = vpop.permute.xlu0 %7418
      %7420 = vrot.lane.b32.xlu0 %v7391, 78
      %v7421 = vpop.permute.xlu0 %7420
      %7422 = vrot.lane.b32.xlu0 %v7392, 78
      %v7423 = vpop.permute.xlu0 %7422
      %7424 = vrot.lane.b32.xlu0 %v7393, 78
      %v7425 = vpop.permute.xlu0 %7424
      %v7426 = vsel %vm1060, %v7395, %v7397
      %v7427 = vsel %vm1060, %v7397, %v7399
      %v7428 = vsel %vm1060, %v7399, %v7401
      %v7429 = vsel %vm1060, %v7401, %v7403
      %v7430 = vsel %vm1060, %v7403, %v7405
      %v7431 = vsel %vm1060, %v7405, %v7407
      %v7432 = vsel %vm1060, %v7407, %v7409
      %v7433 = vsel %vm1060, %v7409, %v7411
      %v7434 = vsel %vm1060, %v7411, %v7413
      %v7435 = vsel %vm1060, %v7413, %v7415
      %v7436 = vsel %vm1060, %v7415, %v7417
      %v7437 = vsel %vm1060, %v7417, %v7419
      %v7438 = vsel %vm1060, %v7419, %v7421
      %v7439 = vsel %vm1060, %v7421, %v7423
      %v7440 = vsel %vm1060, %v7423, %v7425
      %7457 = vst [vmem:[#allocation4 + $0x380] sm:$0xf0] %v7426
      %7458 = vst [vmem:[#allocation4 + $0x388] sm:$0xf0] %v7427
      %7459 = vst [vmem:[#allocation4 + $0x390] sm:$0xf0] %v7428
      %7460 = vst [vmem:[#allocation4 + $0x398] sm:$0xf0] %v7429
      %7461 = vst [vmem:[#allocation4 + $0x3a0] sm:$0xf0] %v7430
      %7462 = vst [vmem:[#allocation4 + $0x3a8] sm:$0xf0] %v7431
      %7463 = vst [vmem:[#allocation4 + $0x3b0] sm:$0xf0] %v7432
      %7464 = vst [vmem:[#allocation4 + $0x3b8] sm:$0xf0] %v7433
      %7465 = vst [vmem:[#allocation4 + $0x3c0] sm:$0xf0] %v7434
      %7466 = vst [vmem:[#allocation4 + $0x3c8] sm:$0xf0] %v7435
      %7467 = vst [vmem:[#allocation4 + $0x3d0] sm:$0xf0] %v7436
      %7468 = vst [vmem:[#allocation4 + $0x3d8] sm:$0xf0] %v7437
      %7469 = vst [vmem:[#allocation4 + $0x3e0] sm:$0xf0] %v7438
      %7470 = vst [vmem:[#allocation4 + $0x3e8] sm:$0xf0] %v7439
      %7471 = vst [vmem:[#allocation4 + $0x3f0] sm:$0xf0] %v7440
      %7472 = vst.msk [vmem:[#allocation4 + $0x3f8] sm:$0xf0] %vm5687, %v7425
      %v7473 = vld [vmem:[%s4] sm:$0xf]
      %v7474 = vld [vmem:[%s4 + $0x4] sm:$0xf]
      %v7475 = vld [vmem:[#allocation4] sm:$0xff]
      %v7476 = vld [vmem:[#allocation4 + $0x8] sm:$0xff]
      %v7477 = vld [vmem:[#allocation4 + $0x10] sm:$0xff]
      %v7478 = vld [vmem:[#allocation4 + $0x18] sm:$0xff]
      %v7479 = vld [vmem:[#allocation4 + $0x20] sm:$0xff]
      %v7480 = vld [vmem:[#allocation4 + $0x28] sm:$0xff]
      %v7481 = vld [vmem:[#allocation4 + $0x30] sm:$0xff]
      %v7482 = vld [vmem:[#allocation4 + $0x38] sm:$0xff]
      %v7483 = vld [vmem:[#allocation4 + $0x40] sm:$0xff]
      %v7484 = vld [vmem:[#allocation4 + $0x48] sm:$0xff]
      %v7485 = vld [vmem:[#allocation4 + $0x50] sm:$0xff]
      %v7486 = vld [vmem:[#allocation4 + $0x58] sm:$0xff]
      %v7487 = vld [vmem:[#allocation4 + $0x60] sm:$0xff]
      %v7488 = vld [vmem:[#allocation4 + $0x68] sm:$0xff]
      %v7489 = vld [vmem:[#allocation4 + $0x70] sm:$0xff]
      %v7490 = vld [vmem:[#allocation4 + $0x78] sm:$0xff]
      %v7491 = vld [vmem:[#allocation4 + $0x80] sm:$0xff]
      %v7492 = vld [vmem:[#allocation4 + $0x88] sm:$0xff]
      %v7493 = vld [vmem:[#allocation4 + $0x90] sm:$0xff]
      %v7494 = vld [vmem:[#allocation4 + $0x98] sm:$0xff]
      %v7495 = vld [vmem:[#allocation4 + $0xa0] sm:$0xff]
      %v7496 = vld [vmem:[#allocation4 + $0xa8] sm:$0xff]
      %v7497 = vld [vmem:[#allocation4 + $0xb0] sm:$0xff]
      %v7498 = vld [vmem:[#allocation4 + $0xb8] sm:$0xff]
      %v7499 = vld [vmem:[#allocation4 + $0xc0] sm:$0xff]
      %v7500 = vld [vmem:[#allocation4 + $0xc8] sm:$0xff]
      %v7501 = vld [vmem:[#allocation4 + $0xd0] sm:$0xff]
      %v7502 = vld [vmem:[#allocation4 + $0xd8] sm:$0xff]
      %v7503 = vld [vmem:[#allocation4 + $0xe0] sm:$0xff]
      %v7504 = vld [vmem:[#allocation4 + $0xe8] sm:$0xff]
      %v7505 = vld [vmem:[#allocation4 + $0xf0] sm:$0xff]
      %v7506 = vld [vmem:[#allocation4 + $0xf8] sm:$0xff]
      %v7507 = vld [vmem:[#allocation4 + $0x100] sm:$0xff]
      %v7508 = vld [vmem:[#allocation4 + $0x108] sm:$0xff]
      %v7509 = vld [vmem:[#allocation4 + $0x110] sm:$0xff]
      %v7510 = vld [vmem:[#allocation4 + $0x118] sm:$0xff]
      %v7511 = vld [vmem:[#allocation4 + $0x120] sm:$0xff]
      %v7512 = vld [vmem:[#allocation4 + $0x128] sm:$0xff]
      %v7513 = vld [vmem:[#allocation4 + $0x130] sm:$0xff]
      %v7514 = vld [vmem:[#allocation4 + $0x138] sm:$0xff]
      %v7515 = vld [vmem:[#allocation4 + $0x140] sm:$0xff]
      %v7516 = vld [vmem:[#allocation4 + $0x148] sm:$0xff]
      %v7517 = vld [vmem:[#allocation4 + $0x150] sm:$0xff]
      %v7518 = vld [vmem:[#allocation4 + $0x158] sm:$0xff]
      %v7519 = vld [vmem:[#allocation4 + $0x160] sm:$0xff]
      %v7520 = vld [vmem:[#allocation4 + $0x168] sm:$0xff]
      %v7521 = vld [vmem:[#allocation4 + $0x170] sm:$0xff]
      %v7522 = vld [vmem:[#allocation4 + $0x178] sm:$0xff]
      %v7523 = vld [vmem:[#allocation4 + $0x180] sm:$0xff]
      %v7524 = vld [vmem:[#allocation4 + $0x188] sm:$0xff]
      %v7525 = vld [vmem:[#allocation4 + $0x190] sm:$0xff]
      %v7526 = vld [vmem:[#allocation4 + $0x198] sm:$0xff]
      %v7527 = vld [vmem:[#allocation4 + $0x1a0] sm:$0xff]
      %v7528 = vld [vmem:[#allocation4 + $0x1a8] sm:$0xff]
      %v7529 = vld [vmem:[#allocation4 + $0x1b0] sm:$0xff]
      %v7530 = vld [vmem:[#allocation4 + $0x1b8] sm:$0xff]
      %v7531 = vld [vmem:[#allocation4 + $0x1c0] sm:$0xff]
      %v7532 = vld [vmem:[#allocation4 + $0x1c8] sm:$0xff]
      %v7533 = vld [vmem:[#allocation4 + $0x1d0] sm:$0xff]
      %v7534 = vld [vmem:[#allocation4 + $0x1d8] sm:$0xff]
      %v7535 = vld [vmem:[#allocation4 + $0x1e0] sm:$0xff]
      %v7536 = vld [vmem:[#allocation4 + $0x1e8] sm:$0xff]
      %v7537 = vld [vmem:[#allocation4 + $0x1f0] sm:$0xff]
      %v7538 = vld [vmem:[#allocation4 + $0x1f8] sm:$0xff]
      %v7539 = vld [vmem:[#allocation4 + $0x200] sm:$0xff]
      %v7540 = vld [vmem:[#allocation4 + $0x208] sm:$0xff]
      %v7541 = vld [vmem:[#allocation4 + $0x210] sm:$0xff]
      %v7542 = vld [vmem:[#allocation4 + $0x218] sm:$0xff]
      %v7543 = vld [vmem:[#allocation4 + $0x220] sm:$0xff]
      %v7544 = vld [vmem:[#allocation4 + $0x228] sm:$0xff]
      %v7545 = vld [vmem:[#allocation4 + $0x230] sm:$0xff]
      %v7546 = vld [vmem:[#allocation4 + $0x238] sm:$0xff]
      %v7547 = vld [vmem:[#allocation4 + $0x240] sm:$0xff]
      %v7548 = vld [vmem:[#allocation4 + $0x248] sm:$0xff]
      %v7549 = vld [vmem:[#allocation4 + $0x250] sm:$0xff]
      %v7550 = vld [vmem:[#allocation4 + $0x258] sm:$0xff]
      %v7551 = vld [vmem:[#allocation4 + $0x260] sm:$0xff]
      %v7552 = vld [vmem:[#allocation4 + $0x268] sm:$0xff]
      %v7553 = vld [vmem:[#allocation4 + $0x270] sm:$0xff]
      %v7554 = vld [vmem:[#allocation4 + $0x278] sm:$0xff]
      %v7555 = vld [vmem:[#allocation4 + $0x280] sm:$0xff]
      %v7556 = vld [vmem:[#allocation4 + $0x288] sm:$0xff]
      %v7557 = vld [vmem:[#allocation4 + $0x290] sm:$0xff]
      %v7558 = vld [vmem:[#allocation4 + $0x298] sm:$0xff]
      %v7559 = vld [vmem:[#allocation4 + $0x2a0] sm:$0xff]
      %v7560 = vld [vmem:[#allocation4 + $0x2a8] sm:$0xff]
      %v7561 = vld [vmem:[#allocation4 + $0x2b0] sm:$0xff]
      %v7562 = vld [vmem:[#allocation4 + $0x2b8] sm:$0xff]
      %v7563 = vld [vmem:[#allocation4 + $0x2c0] sm:$0xff]
      %v7564 = vld [vmem:[#allocation4 + $0x2c8] sm:$0xff]
      %v7565 = vld [vmem:[#allocation4 + $0x2d0] sm:$0xff]
      %v7566 = vld [vmem:[#allocation4 + $0x2d8] sm:$0xff]
      %v7567 = vld [vmem:[#allocation4 + $0x2e0] sm:$0xff]
      %v7568 = vld [vmem:[#allocation4 + $0x2e8] sm:$0xff]
      %v7569 = vld [vmem:[#allocation4 + $0x2f0] sm:$0xff]
      %v7570 = vld [vmem:[#allocation4 + $0x2f8] sm:$0xff]
      %v7571 = vld [vmem:[#allocation4 + $0x300] sm:$0xff]
      %v7572 = vld [vmem:[#allocation4 + $0x308] sm:$0xff]
      %v7573 = vld [vmem:[#allocation4 + $0x310] sm:$0xff]
      %v7574 = vld [vmem:[#allocation4 + $0x318] sm:$0xff]
      %v7575 = vld [vmem:[#allocation4 + $0x320] sm:$0xff]
      %v7576 = vld [vmem:[#allocation4 + $0x328] sm:$0xff]
      %v7577 = vld [vmem:[#allocation4 + $0x330] sm:$0xff]
      %v7578 = vld [vmem:[#allocation4 + $0x338] sm:$0xff]
      %v7579 = vld [vmem:[#allocation4 + $0x340] sm:$0xff]
      %v7580 = vld [vmem:[#allocation4 + $0x348] sm:$0xff]
      %v7581 = vld [vmem:[#allocation4 + $0x350] sm:$0xff]
      %v7582 = vld [vmem:[#allocation4 + $0x358] sm:$0xff]
      %v7583 = vld [vmem:[#allocation4 + $0x360] sm:$0xff]
      %v7584 = vld [vmem:[#allocation4 + $0x368] sm:$0xff]
      %v7585 = vld [vmem:[#allocation4 + $0x370] sm:$0xff]
      %v7586 = vld [vmem:[#allocation4 + $0x378] sm:$0xff]
      %v7587 = vld [vmem:[#allocation4 + $0x380] sm:$0xff]
      %v7588 = vld [vmem:[#allocation4 + $0x388] sm:$0xff]
      %v7589 = vld [vmem:[#allocation4 + $0x390] sm:$0xff]
      %v7590 = vld [vmem:[#allocation4 + $0x398] sm:$0xff]
      %v7591 = vld [vmem:[#allocation4 + $0x3a0] sm:$0xff]
      %v7592 = vld [vmem:[#allocation4 + $0x3a8] sm:$0xff]
      %v7593 = vld [vmem:[#allocation4 + $0x3b0] sm:$0xff]
      %v7594 = vld [vmem:[#allocation4 + $0x3b8] sm:$0xff]
      %v7595 = vld [vmem:[#allocation4 + $0x3c0] sm:$0xff]
      %v7596 = vld [vmem:[#allocation4 + $0x3c8] sm:$0xff]
      %v7597 = vld [vmem:[#allocation4 + $0x3d0] sm:$0xff]
      %v7598 = vld [vmem:[#allocation4 + $0x3d8] sm:$0xff]
      %v7599 = vld [vmem:[#allocation4 + $0x3e0] sm:$0xff]
      %v7600 = vld [vmem:[#allocation4 + $0x3e8] sm:$0xff]
      %v7601 = vld [vmem:[#allocation4 + $0x3f0] sm:$0xff]
      %v7602 = vld [vmem:[#allocation4 + $0x3f8] sm:$0xff]
      %v7603 = vld [vmem:[%s5] sm:$0xff]
      %v7604 = vld [vmem:[%s5 + $0x8] sm:$0xff]
      %7606 = vset.pattern.permute.xlu0 0
      %7607 = vperm.xlu0 %7606, %v7603
      %v7608 = vpop.permute.xlu0 %7607
      %7611 = vset.pattern.permute.xlu0 0
      %7612 = vperm.xlu0 %7611, %v7604
      %v7613 = vpop.permute.xlu0 %7612
      %v7617 = vunpack.c.l.b16 %v7473
      %v7618 = vunpack.c.l.b16 %v7474
      %v7619 = vpack.c.b16 %v7618, %v7617
      %7621 = vmatprep.subr.bf16.mxu0 %v7476
      %7622 = vmatpush1.bf16.msra.mxu0 %v7475
      %7623 = vmatprep.subr.bf16.mxu0 %v7492
      %7624 = vmatpush1.bf16.msra.mxu0 %v7491
      %7625 = vmatprep.subr.bf16.mxu0 %v7508
      %7626 = vmatpush1.bf16.msra.mxu0 %v7507
      %7627 = vmatprep.subr.bf16.mxu0 %v7524
      %7628 = vmatpush1.bf16.msra.mxu0 %v7523
      %7629 = vmatprep.subr.bf16.mxu0 %v7540
      %7630 = vmatpush1.bf16.msra.mxu0 %v7539
      %7631 = vmatprep.subr.bf16.mxu0 %v7556
      %7632 = vmatpush1.bf16.msra.mxu0 %v7555
      %7633 = vmatprep.subr.bf16.mxu0 %v7572
      %7634 = vmatpush1.bf16.msra.mxu0 %v7571
      %7635 = vmatprep.subr.bf16.mxu0 %v7588
      %7636 = vmatpush1.bf16.msra.mxu0 %v7587
      %7637 = vmatprep.subr.bf16.mxu0 0
      %7638 = vmatpush1.bf16.msra.mxu0 0
      %7639 = vmatprep.subr.bf16.mxu0 0
      %7640 = vmatpush1.bf16.msra.mxu0 0
      %7641 = vmatprep.subr.bf16.mxu0 0
      %7642 = vmatpush1.bf16.msra.mxu0 0
      %7643 = vmatprep.subr.bf16.mxu0 0
      %7644 = vmatpush1.bf16.msra.mxu0 0
      %7645 = vmatprep.subr.bf16.mxu0 0
      %7646 = vmatpush1.bf16.msra.mxu0 0
      %7647 = vmatprep.subr.bf16.mxu0 0
      %7648 = vmatpush1.bf16.msra.mxu0 0
      %7649 = vmatprep.subr.bf16.mxu0 0
      %7650 = vmatpush1.bf16.msra.mxu0 0
      %7651 = vmatprep.subr.bf16.mxu0 0
      %7652 = vmatpush1.bf16.msra.mxu0 0
      %7653 = vmatprep.mubr.bf16.mxu0 0
      %7654 = vmatmul.mubr.bf16.gmra.mrb[0].mxu0 %v7619
      %v7655 = vpop.f32.mrb[0].mxu0
      %v7656 = vadd.f32 %v7608, %v7655
      %v7657 = vpop.f32.mrb[0].mxu0
      %v7658 = vadd.f32 %v7608, %v7657
      %v7659 = vpop.f32.mrb[0].mxu0
      %v7660 = vadd.f32 %v7613, %v7659
      %v7661 = vpop.f32.mrb[0].mxu0
      %v7662 = vadd.f32 %v7613, %v7661
      %7663 = vdwg.mxu0
      %7664 = vmatprep.subr.bf16.mxu0 %v7478
      %7665 = vmatpush1.bf16.msra.mxu0 %v7477
      %7666 = vmatprep.subr.bf16.mxu0 %v7494
      %7667 = vmatpush1.bf16.msra.mxu0 %v7493
      %7668 = vmatprep.subr.bf16.mxu0 %v7510
      %7669 = vmatpush1.bf16.msra.mxu0 %v7509
      %7670 = vmatprep.subr.bf16.mxu0 %v7526
      %7671 = vmatpush1.bf16.msra.mxu0 %v7525
      %7672 = vmatprep.subr.bf16.mxu0 %v7542
      %7673 = vmatpush1.bf16.msra.mxu0 %v7541
      %7674 = vmatprep.subr.bf16.mxu0 %v7558
      %7675 = vmatpush1.bf16.msra.mxu0 %v7557
      %7676 = vmatprep.subr.bf16.mxu0 %v7574
      %7677 = vmatpush1.bf16.msra.mxu0 %v7573
      %7678 = vmatprep.subr.bf16.mxu0 %v7590
      %7679 = vmatpush1.bf16.msra.mxu0 %v7589
      %7680 = vmatprep.subr.bf16.mxu0 0
      %7681 = vmatpush1.bf16.msra.mxu0 0
      %7682 = vmatprep.subr.bf16.mxu0 0
      %7683 = vmatpush1.bf16.msra.mxu0 0
      %7684 = vmatprep.subr.bf16.mxu0 0
      %7685 = vmatpush1.bf16.msra.mxu0 0
      %7686 = vmatprep.subr.bf16.mxu0 0
      %7687 = vmatpush1.bf16.msra.mxu0 0
      %7688 = vmatprep.subr.bf16.mxu0 0
      %7689 = vmatpush1.bf16.msra.mxu0 0
      %7690 = vmatprep.subr.bf16.mxu0 0
      %7691 = vmatpush1.bf16.msra.mxu0 0
      %7692 = vmatprep.subr.bf16.mxu0 0
      %7693 = vmatpush1.bf16.msra.mxu0 0
      %7694 = vmatprep.subr.bf16.mxu0 0
      %7695 = vmatpush1.bf16.msra.mxu0 0
      %7696 = vmatprep.mubr.bf16.mxu0 0
      %7697 = vmatmul.mubr.bf16.gmra.mrb[0].mxu0 %v7619
      %v7698 = vpop.f32.mrb[0].mxu0
      %v7699 = vadd.f32 %v7608, %v7698
      %v7700 = vpop.f32.mrb[0].mxu0
      %v7701 = vadd.f32 %v7608, %v7700
      %v7702 = vpop.f32.mrb[0].mxu0
      %v7703 = vadd.f32 %v7613, %v7702
      %v7704 = vpop.f32.mrb[0].mxu0
      %v7705 = vadd.f32 %v7613, %v7704
      %7706 = vdwg.mxu0
      %7707 = vmatprep.subr.bf16.mxu0 %v7480
      %7708 = vmatpush1.bf16.msra.mxu0 %v7479
      %7709 = vmatprep.subr.bf16.mxu0 %v7496
      %7710 = vmatpush1.bf16.msra.mxu0 %v7495
      %7711 = vmatprep.subr.bf16.mxu0 %v7512
      %7712 = vmatpush1.bf16.msra.mxu0 %v7511
      %7713 = vmatprep.subr.bf16.mxu0 %v7528
      %7714 = vmatpush1.bf16.msra.mxu0 %v7527
      %7715 = vmatprep.subr.bf16.mxu0 %v7544
      %7716 = vmatpush1.bf16.msra.mxu0 %v7543
      %7717 = vmatprep.subr.bf16.mxu0 %v7560
      %7718 = vmatpush1.bf16.msra.mxu0 %v7559
      %7719 = vmatprep.subr.bf16.mxu0 %v7576
      %7720 = vmatpush1.bf16.msra.mxu0 %v7575
      %7721 = vmatprep.subr.bf16.mxu0 %v7592
      %7722 = vmatpush1.bf16.msra.mxu0 %v7591
      %7723 = vmatprep.subr.bf16.mxu0 0
      %7724 = vmatpush1.bf16.msra.mxu0 0
      %7725 = vmatprep.subr.bf16.mxu0 0
      %7726 = vmatpush1.bf16.msra.mxu0 0
      %7727 = vmatprep.subr.bf16.mxu0 0
      %7728 = vmatpush1.bf16.msra.mxu0 0
      %7729 = vmatprep.subr.bf16.mxu0 0
      %7730 = vmatpush1.bf16.msra.mxu0 0
      %7731 = vmatprep.subr.bf16.mxu0 0
      %7732 = vmatpush1.bf16.msra.mxu0 0
      %7733 = vmatprep.subr.bf16.mxu0 0
      %7734 = vmatpush1.bf16.msra.mxu0 0
      %7735 = vmatprep.subr.bf16.mxu0 0
      %7736 = vmatpush1.bf16.msra.mxu0 0
      %7737 = vmatprep.subr.bf16.mxu0 0
      %7738 = vmatpush1.bf16.msra.mxu0 0
      %7739 = vmatprep.mubr.bf16.mxu0 0
      %7740 = vmatmul.mubr.bf16.gmra.mrb[0].mxu0 %v7619
      %v7741 = vpop.f32.mrb[0].mxu0
      %v7742 = vadd.f32 %v7608, %v7741
      %v7743 = vpop.f32.mrb[0].mxu0
      %v7744 = vadd.f32 %v7608, %v7743
      %v7745 = vpop.f32.mrb[0].mxu0
      %v7746 = vadd.f32 %v7613, %v7745
      %v7747 = vpop.f32.mrb[0].mxu0
      %v7748 = vadd.f32 %v7613, %v7747
      %7749 = vdwg.mxu0
      %7750 = vmatprep.subr.bf16.mxu0 %v7482
      %7751 = vmatpush1.bf16.msra.mxu0 %v7481
      %7752 = vmatprep.subr.bf16.mxu0 %v7498
      %7753 = vmatpush1.bf16.msra.mxu0 %v7497
      %7754 = vmatprep.subr.bf16.mxu0 %v7514
      %7755 = vmatpush1.bf16.msra.mxu0 %v7513
      %7756 = vmatprep.subr.bf16.mxu0 %v7530
      %7757 = vmatpush1.bf16.msra.mxu0 %v7529
      %7758 = vmatprep.subr.bf16.mxu0 %v7546
      %7759 = vmatpush1.bf16.msra.mxu0 %v7545
      %7760 = vmatprep.subr.bf16.mxu0 %v7562
      %7761 = vmatpush1.bf16.msra.mxu0 %v7561
      %7762 = vmatprep.subr.bf16.mxu0 %v7578
      %7763 = vmatpush1.bf16.msra.mxu0 %v7577
      %7764 = vmatprep.subr.bf16.mxu0 %v7594
      %7765 = vmatpush1.bf16.msra.mxu0 %v7593
      %7766 = vmatprep.subr.bf16.mxu0 0
      %7767 = vmatpush1.bf16.msra.mxu0 0
      %7768 = vmatprep.subr.bf16.mxu0 0
      %7769 = vmatpush1.bf16.msra.mxu0 0
      %7770 = vmatprep.subr.bf16.mxu0 0
      %7771 = vmatpush1.bf16.msra.mxu0 0
      %7772 = vmatprep.subr.bf16.mxu0 0
      %7773 = vmatpush1.bf16.msra.mxu0 0
      %7774 = vmatprep.subr.bf16.mxu0 0
      %7775 = vmatpush1.bf16.msra.mxu0 0
      %7776 = vmatprep.subr.bf16.mxu0 0
      %7777 = vmatpush1.bf16.msra.mxu0 0
      %7778 = vmatprep.subr.bf16.mxu0 0
      %7779 = vmatpush1.bf16.msra.mxu0 0
      %7780 = vmatprep.subr.bf16.mxu0 0
      %7781 = vmatpush1.bf16.msra.mxu0 0
      %7782 = vmatprep.mubr.bf16.mxu0 0
      %7783 = vmatmul.mubr.bf16.gmra.mrb[0].mxu0 %v7619
      %v7784 = vpop.f32.mrb[0].mxu0
      %v7785 = vadd.f32 %v7608, %v7784
      %v7786 = vpop.f32.mrb[0].mxu0
      %v7787 = vadd.f32 %v7608, %v7786
      %v7788 = vpop.f32.mrb[0].mxu0
      %v7789 = vadd.f32 %v7613, %v7788
      %v7790 = vpop.f32.mrb[0].mxu0
      %v7791 = vadd.f32 %v7613, %v7790
      %7792 = vdwg.mxu0
      %7793 = vmatprep.subr.bf16.mxu0 %v7484
      %7794 = vmatpush1.bf16.msra.mxu0 %v7483
      %7795 = vmatprep.subr.bf16.mxu0 %v7500
      %7796 = vmatpush1.bf16.msra.mxu0 %v7499
      %7797 = vmatprep.subr.bf16.mxu0 %v7516
      %7798 = vmatpush1.bf16.msra.mxu0 %v7515
      %7799 = vmatprep.subr.bf16.mxu0 %v7532
      %7800 = vmatpush1.bf16.msra.mxu0 %v7531
      %7801 = vmatprep.subr.bf16.mxu0 %v7548
      %7802 = vmatpush1.bf16.msra.mxu0 %v7547
      %7803 = vmatprep.subr.bf16.mxu0 %v7564
      %7804 = vmatpush1.bf16.msra.mxu0 %v7563
      %7805 = vmatprep.subr.bf16.mxu0 %v7580
      %7806 = vmatpush1.bf16.msra.mxu0 %v7579
      %7807 = vmatprep.subr.bf16.mxu0 %v7596
      %7808 = vmatpush1.bf16.msra.mxu0 %v7595
      %7809 = vmatprep.subr.bf16.mxu0 0
      %7810 = vmatpush1.bf16.msra.mxu0 0
      %7811 = vmatprep.subr.bf16.mxu0 0
      %7812 = vmatpush1.bf16.msra.mxu0 0
      %7813 = vmatprep.subr.bf16.mxu0 0
      %7814 = vmatpush1.bf16.msra.mxu0 0
      %7815 = vmatprep.subr.bf16.mxu0 0
      %7816 = vmatpush1.bf16.msra.mxu0 0
      %7817 = vmatprep.subr.bf16.mxu0 0
      %7818 = vmatpush1.bf16.msra.mxu0 0
      %7819 = vmatprep.subr.bf16.mxu0 0
      %7820 = vmatpush1.bf16.msra.mxu0 0
      %7821 = vmatprep.subr.bf16.mxu0 0
      %7822 = vmatpush1.bf16.msra.mxu0 0
      %7823 = vmatprep.subr.bf16.mxu0 0
      %7824 = vmatpush1.bf16.msra.mxu0 0
      %7825 = vmatprep.mubr.bf16.mxu0 0
      %7826 = vmatmul.mubr.bf16.gmra.mrb[0].mxu0 %v7619
      %v7827 = vpop.f32.mrb[0].mxu0
      %v7828 = vadd.f32 %v7608, %v7827
      %v7829 = vpop.f32.mrb[0].mxu0
      %v7830 = vadd.f32 %v7608, %v7829
      %v7831 = vpop.f32.mrb[0].mxu0
      %v7832 = vadd.f32 %v7613, %v7831
      %v7833 = vpop.f32.mrb[0].mxu0
      %v7834 = vadd.f32 %v7613, %v7833
      %7835 = vdwg.mxu0
      %7836 = vmatprep.subr.bf16.mxu0 %v7486
      %7837 = vmatpush1.bf16.msra.mxu0 %v7485
      %7838 = vmatprep.subr.bf16.mxu0 %v7502
      %7839 = vmatpush1.bf16.msra.mxu0 %v7501
      %7840 = vmatprep.subr.bf16.mxu0 %v7518
      %7841 = vmatpush1.bf16.msra.mxu0 %v7517
      %7842 = vmatprep.subr.bf16.mxu0 %v7534
      %7843 = vmatpush1.bf16.msra.mxu0 %v7533
      %7844 = vmatprep.subr.bf16.mxu0 %v7550
      %7845 = vmatpush1.bf16.msra.mxu0 %v7549
      %7846 = vmatprep.subr.bf16.mxu0 %v7566
      %7847 = vmatpush1.bf16.msra.mxu0 %v7565
      %7848 = vmatprep.subr.bf16.mxu0 %v7582
      %7849 = vmatpush1.bf16.msra.mxu0 %v7581
      %7850 = vmatprep.subr.bf16.mxu0 %v7598
      %7851 = vmatpush1.bf16.msra.mxu0 %v7597
      %7852 = vmatprep.subr.bf16.mxu0 0
      %7853 = vmatpush1.bf16.msra.mxu0 0
      %7854 = vmatprep.subr.bf16.mxu0 0
      %7855 = vmatpush1.bf16.msra.mxu0 0
      %7856 = vmatprep.subr.bf16.mxu0 0
      %7857 = vmatpush1.bf16.msra.mxu0 0
      %7858 = vmatprep.subr.bf16.mxu0 0
      %7859 = vmatpush1.bf16.msra.mxu0 0
      %7860 = vmatprep.subr.bf16.mxu0 0
      %7861 = vmatpush1.bf16.msra.mxu0 0
      %7862 = vmatprep.subr.bf16.mxu0 0
      %7863 = vmatpush1.bf16.msra.mxu0 0
      %7864 = vmatprep.subr.bf16.mxu0 0
      %7865 = vmatpush1.bf16.msra.mxu0 0
      %7866 = vmatprep.subr.bf16.mxu0 0
      %7867 = vmatpush1.bf16.msra.mxu0 0
      %7868 = vmatprep.mubr.bf16.mxu0 0
      %7869 = vmatmul.mubr.bf16.gmra.mrb[0].mxu0 %v7619
      %v7870 = vpop.f32.mrb[0].mxu0
      %v7871 = vadd.f32 %v7608, %v7870
      %v7872 = vpop.f32.mrb[0].mxu0
      %v7873 = vadd.f32 %v7608, %v7872
      %v7874 = vpop.f32.mrb[0].mxu0
      %v7875 = vadd.f32 %v7613, %v7874
      %v7876 = vpop.f32.mrb[0].mxu0
      %v7877 = vadd.f32 %v7613, %v7876
      %7878 = vdwg.mxu0
      %7879 = vmatprep.subr.bf16.mxu0 %v7488
      %7880 = vmatpush1.bf16.msra.mxu0 %v7487
      %7881 = vmatprep.subr.bf16.mxu0 %v7504
      %7882 = vmatpush1.bf16.msra.mxu0 %v7503
      %7883 = vmatprep.subr.bf16.mxu0 %v7520
      %7884 = vmatpush1.bf16.msra.mxu0 %v7519
      %7885 = vmatprep.subr.bf16.mxu0 %v7536
      %7886 = vmatpush1.bf16.msra.mxu0 %v7535
      %7887 = vmatprep.subr.bf16.mxu0 %v7552
      %7888 = vmatpush1.bf16.msra.mxu0 %v7551
      %7889 = vmatprep.subr.bf16.mxu0 %v7568
      %7890 = vmatpush1.bf16.msra.mxu0 %v7567
      %7891 = vmatprep.subr.bf16.mxu0 %v7584
      %7892 = vmatpush1.bf16.msra.mxu0 %v7583
      %7893 = vmatprep.subr.bf16.mxu0 %v7600
      %7894 = vmatpush1.bf16.msra.mxu0 %v7599
      %7895 = vmatprep.subr.bf16.mxu0 0
      %7896 = vmatpush1.bf16.msra.mxu0 0
      %7897 = vmatprep.subr.bf16.mxu0 0
      %7898 = vmatpush1.bf16.msra.mxu0 0
      %7899 = vmatprep.subr.bf16.mxu0 0
      %7900 = vmatpush1.bf16.msra.mxu0 0
      %7901 = vmatprep.subr.bf16.mxu0 0
      %7902 = vmatpush1.bf16.msra.mxu0 0
      %7903 = vmatprep.subr.bf16.mxu0 0
      %7904 = vmatpush1.bf16.msra.mxu0 0
      %7905 = vmatprep.subr.bf16.mxu0 0
      %7906 = vmatpush1.bf16.msra.mxu0 0
      %7907 = vmatprep.subr.bf16.mxu0 0
      %7908 = vmatpush1.bf16.msra.mxu0 0
      %7909 = vmatprep.subr.bf16.mxu0 0
      %7910 = vmatpush1.bf16.msra.mxu0 0
      %7911 = vmatprep.mubr.bf16.mxu0 0
      %7912 = vmatmul.mubr.bf16.gmra.mrb[0].mxu0 %v7619
      %v7913 = vpop.f32.mrb[0].mxu0
      %v7914 = vadd.f32 %v7608, %v7913
      %v7915 = vpop.f32.mrb[0].mxu0
      %v7916 = vadd.f32 %v7608, %v7915
      %v7917 = vpop.f32.mrb[0].mxu0
      %v7918 = vadd.f32 %v7613, %v7917
      %v7919 = vpop.f32.mrb[0].mxu0
      %v7920 = vadd.f32 %v7613, %v7919
      %7921 = vdwg.mxu0
      %7922 = vmatprep.subr.bf16.mxu0 %v7490
      %7923 = vmatpush1.bf16.msra.mxu0 %v7489
      %7924 = vmatprep.subr.bf16.mxu0 %v7506
      %7925 = vmatpush1.bf16.msra.mxu0 %v7505
      %7926 = vmatprep.subr.bf16.mxu0 %v7522
      %7927 = vmatpush1.bf16.msra.mxu0 %v7521
      %7928 = vmatprep.subr.bf16.mxu0 %v7538
      %7929 = vmatpush1.bf16.msra.mxu0 %v7537
      %7930 = vmatprep.subr.bf16.mxu0 %v7554
      %7931 = vmatpush1.bf16.msra.mxu0 %v7553
      %7932 = vmatprep.subr.bf16.mxu0 %v7570
      %7933 = vmatpush1.bf16.msra.mxu0 %v7569
      %7934 = vmatprep.subr.bf16.mxu0 %v7586
      %7935 = vmatpush1.bf16.msra.mxu0 %v7585
      %7936 = vmatprep.subr.bf16.mxu0 %v7602
      %7937 = vmatpush1.bf16.msra.mxu0 %v7601
      %7938 = vmatprep.subr.bf16.mxu0 0
      %7939 = vmatpush1.bf16.msra.mxu0 0
      %7940 = vmatprep.subr.bf16.mxu0 0
      %7941 = vmatpush1.bf16.msra.mxu0 0
      %7942 = vmatprep.subr.bf16.mxu0 0
      %7943 = vmatpush1.bf16.msra.mxu0 0
      %7944 = vmatprep.subr.bf16.mxu0 0
      %7945 = vmatpush1.bf16.msra.mxu0 0
      %7946 = vmatprep.subr.bf16.mxu0 0
      %7947 = vmatpush1.bf16.msra.mxu0 0
      %7948 = vmatprep.subr.bf16.mxu0 0
      %7949 = vmatpush1.bf16.msra.mxu0 0
      %7950 = vmatprep.subr.bf16.mxu0 0
      %7951 = vmatpush1.bf16.msra.mxu0 0
      %7952 = vmatprep.subr.bf16.mxu0 0
      %7953 = vmatpush1.bf16.msra.mxu0 0
      %7954 = vmatprep.mubr.bf16.mxu0 0
      %7955 = vmatmul.mubr.bf16.gmra.mrb[0].mxu0 %v7619
      %v7956 = vpop.f32.mrb[0].mxu0
      %v7957 = vadd.f32 %v7608, %v7956
      %v7958 = vpop.f32.mrb[0].mxu0
      %v7959 = vadd.f32 %v7608, %v7958
      %v7960 = vpop.f32.mrb[0].mxu0
      %v7961 = vadd.f32 %v7613, %v7960
      %v7962 = vpop.f32.mrb[0].mxu0
      %v7963 = vadd.f32 %v7613, %v7962
      %7964 = vdwg.mxu0
      %v7965 = vmax.f32 %v7656, 0.0
      %v7966 = vmax.f32 %v7658, 0.0
      %v7967 = vmax.f32 %v7699, 0.0
      %v7968 = vmax.f32 %v7701, 0.0
      %v7969 = vmax.f32 %v7742, 0.0
      %v7970 = vmax.f32 %v7744, 0.0
      %v7971 = vmax.f32 %v7785, 0.0
      %v7972 = vmax.f32 %v7787, 0.0
      %v7973 = vmax.f32 %v7828, 0.0
      %v7974 = vmax.f32 %v7830, 0.0
      %v7975 = vmax.f32 %v7871, 0.0
      %v7976 = vmax.f32 %v7873, 0.0
      %v7977 = vmax.f32 %v7914, 0.0
      %v7978 = vmax.f32 %v7916, 0.0
      %v7979 = vmax.f32 %v7957, 0.0
      %v7980 = vmax.f32 %v7959, 0.0
      %v7981 = vmax.f32 %v7660, 0.0
      %v7982 = vmax.f32 %v7662, 0.0
      %v7983 = vmax.f32 %v7703, 0.0
      %v7984 = vmax.f32 %v7705, 0.0
      %v7985 = vmax.f32 %v7746, 0.0
      %v7986 = vmax.f32 %v7748, 0.0
      %v7987 = vmax.f32 %v7789, 0.0
      %v7988 = vmax.f32 %v7791, 0.0
      %v7989 = vmax.f32 %v7832, 0.0
      %v7990 = vmax.f32 %v7834, 0.0
      %v7991 = vmax.f32 %v7875, 0.0
      %v7992 = vmax.f32 %v7877, 0.0
      %v7993 = vmax.f32 %v7918, 0.0
      %v7994 = vmax.f32 %v7920, 0.0
      %v7995 = vmax.f32 %v7961, 0.0
      %v7996 = vmax.f32 %v7963, 0.0
      %8027 = vrot.lane.b32.xlu0 %v7965, 126
      %v8028 = vpop.permute.xlu0 %8027
      %8029 = vrot.lane.b32.xlu0 %v7966, 126
      %v8030 = vpop.permute.xlu0 %8029
      %8031 = vrot.lane.b32.xlu0 %v7967, 126
      %v8032 = vpop.permute.xlu0 %8031
      %8033 = vrot.lane.b32.xlu0 %v7968, 126
      %v8034 = vpop.permute.xlu0 %8033
      %8035 = vrot.lane.b32.xlu0 %v7969, 126
      %v8036 = vpop.permute.xlu0 %8035
      %8037 = vrot.lane.b32.xlu0 %v7970, 126
      %v8038 = vpop.permute.xlu0 %8037
      %8039 = vrot.lane.b32.xlu0 %v7971, 126
      %v8040 = vpop.permute.xlu0 %8039
      %8041 = vrot.lane.b32.xlu0 %v7972, 126
      %v8042 = vpop.permute.xlu0 %8041
      %8043 = vrot.lane.b32.xlu0 %v7973, 126
      %v8044 = vpop.permute.xlu0 %8043
      %8045 = vrot.lane.b32.xlu0 %v7974, 126
      %v8046 = vpop.permute.xlu0 %8045
      %8047 = vrot.lane.b32.xlu0 %v7975, 126
      %v8048 = vpop.permute.xlu0 %8047
      %8049 = vrot.lane.b32.xlu0 %v7976, 126
      %v8050 = vpop.permute.xlu0 %8049
      %8051 = vrot.lane.b32.xlu0 %v7977, 126
      %v8052 = vpop.permute.xlu0 %8051
      %8053 = vrot.lane.b32.xlu0 %v7978, 126
      %v8054 = vpop.permute.xlu0 %8053
      %8055 = vrot.lane.b32.xlu0 %v7979, 126
      %v8056 = vpop.permute.xlu0 %8055
      %8057 = vrot.lane.b32.xlu0 %v7981, 126
      %v8058 = vpop.permute.xlu0 %8057
      %8059 = vrot.lane.b32.xlu0 %v7982, 126
      %v8060 = vpop.permute.xlu0 %8059
      %8061 = vrot.lane.b32.xlu0 %v7983, 126
      %v8062 = vpop.permute.xlu0 %8061
      %8063 = vrot.lane.b32.xlu0 %v7984, 126
      %v8064 = vpop.permute.xlu0 %8063
      %8065 = vrot.lane.b32.xlu0 %v7985, 126
      %v8066 = vpop.permute.xlu0 %8065
      %8067 = vrot.lane.b32.xlu0 %v7986, 126
      %v8068 = vpop.permute.xlu0 %8067
      %8069 = vrot.lane.b32.xlu0 %v7987, 126
      %v8070 = vpop.permute.xlu0 %8069
      %8071 = vrot.lane.b32.xlu0 %v7988, 126
      %v8072 = vpop.permute.xlu0 %8071
      %8073 = vrot.lane.b32.xlu0 %v7989, 126
      %v8074 = vpop.permute.xlu0 %8073
      %8075 = vrot.lane.b32.xlu0 %v7990, 126
      %v8076 = vpop.permute.xlu0 %8075
      %8077 = vrot.lane.b32.xlu0 %v7991, 126
      %v8078 = vpop.permute.xlu0 %8077
      %8079 = vrot.lane.b32.xlu0 %v7992, 126
      %v8080 = vpop.permute.xlu0 %8079
      %8081 = vrot.lane.b32.xlu0 %v7993, 126
      %v8082 = vpop.permute.xlu0 %8081
      %8083 = vrot.lane.b32.xlu0 %v7994, 126
      %v8084 = vpop.permute.xlu0 %8083
      %8085 = vrot.lane.b32.xlu0 %v7995, 126
      %v8086 = vpop.permute.xlu0 %8085
      %vm8087 = vcmask 1031168
      %v8088 = vsel %vm8087, %v8028, %v8030
      %v8089 = vsel %vm8087, %v8030, %v8032
      %v8090 = vsel %vm8087, %v8032, %v8034
      %v8091 = vsel %vm8087, %v8034, %v8036
      %v8092 = vsel %vm8087, %v8036, %v8038
      %v8093 = vsel %vm8087, %v8038, %v8040
      %v8094 = vsel %vm8087, %v8040, %v8042
      %v8095 = vsel %vm8087, %v8042, %v8044
      %v8096 = vsel %vm8087, %v8044, %v8046
      %v8097 = vsel %vm8087, %v8046, %v8048
      %v8098 = vsel %vm8087, %v8048, %v8050
      %v8099 = vsel %vm8087, %v8050, %v8052
      %v8100 = vsel %vm8087, %v8052, %v8054
      %v8101 = vsel %vm8087, %v8054, %v8056
      %v8102 = vsel %vm8087, %v8058, %v8060
      %v8103 = vsel %vm8087, %v8060, %v8062
      %v8104 = vsel %vm8087, %v8062, %v8064
      %v8105 = vsel %vm8087, %v8064, %v8066
      %v8106 = vsel %vm8087, %v8066, %v8068
      %v8107 = vsel %vm8087, %v8068, %v8070
      %v8108 = vsel %vm8087, %v8070, %v8072
      %v8109 = vsel %vm8087, %v8072, %v8074
      %v8110 = vsel %vm8087, %v8074, %v8076
      %v8111 = vsel %vm8087, %v8076, %v8078
      %v8112 = vsel %vm8087, %v8078, %v8080
      %v8113 = vsel %vm8087, %v8080, %v8082
      %v8114 = vsel %vm8087, %v8082, %v8084
      %v8115 = vsel %vm8087, %v8084, %v8086
      %v8146 = vmax.f32 %v7965, %v8088
      %v8147 = vmax.f32 %v7966, %v8089
      %v8148 = vmax.f32 %v7967, %v8090
      %v8149 = vmax.f32 %v7968, %v8091
      %v8150 = vmax.f32 %v7969, %v8092
      %v8151 = vmax.f32 %v7970, %v8093
      %v8152 = vmax.f32 %v7971, %v8094
      %v8153 = vmax.f32 %v7972, %v8095
      %v8154 = vmax.f32 %v7973, %v8096
      %v8155 = vmax.f32 %v7974, %v8097
      %v8156 = vmax.f32 %v7975, %v8098
      %v8157 = vmax.f32 %v7976, %v8099
      %v8158 = vmax.f32 %v7977, %v8100
      %v8159 = vmax.f32 %v7978, %v8101
      %v8160 = vmax.f32 %v7979, %v8056
      %v8161 = vmax.f32 %v7981, %v8102
      %v8162 = vmax.f32 %v7982, %v8103
      %v8163 = vmax.f32 %v7983, %v8104
      %v8164 = vmax.f32 %v7984, %v8105
      %v8165 = vmax.f32 %v7985, %v8106
      %v8166 = vmax.f32 %v7986, %v8107
      %v8167 = vmax.f32 %v7987, %v8108
      %v8168 = vmax.f32 %v7988, %v8109
      %v8169 = vmax.f32 %v7989, %v8110
      %v8170 = vmax.f32 %v7990, %v8111
      %v8171 = vmax.f32 %v7991, %v8112
      %v8172 = vmax.f32 %v7992, %v8113
      %v8173 = vmax.f32 %v7993, %v8114
      %v8174 = vmax.f32 %v7994, %v8115
      %v8175 = vmax.f32 %v7995, %v8086
      %8178 = vrot.lane.b32.xlu0 %v7980, 126
      %v8179 = vpop.permute.xlu0 %8178
      %8180 = vrot.lane.b32.xlu0 %v7996, 126
      %v8181 = vpop.permute.xlu0 %8180
      %v8182 = vsel %vm8087, %v8056, %v8179
      %v8183 = vsel %vm8087, %v8086, %v8181
      %v8188 = vmax.f32 %v7979, %v8182
      %v8189 = vmax.f32 %v7980, %v8179
      %v8190 = vmax.f32 %v7995, %v8183
      %v8191 = vmax.f32 %v7996, %v8181
      %8224 = vrot.lane.b32.xlu0 %v8146, 28
      %v8225 = vpop.permute.xlu0 %8224
      %8226 = vrot.lane.b32.xlu0 %v8147, 28
      %v8227 = vpop.permute.xlu0 %8226
      %8228 = vrot.lane.b32.xlu0 %v8148, 28
      %v8229 = vpop.permute.xlu0 %8228
      %8230 = vrot.lane.b32.xlu0 %v8149, 28
      %v8231 = vpop.permute.xlu0 %8230
      %8232 = vrot.lane.b32.xlu0 %v8150, 28
      %v8233 = vpop.permute.xlu0 %8232
      %8234 = vrot.lane.b32.xlu0 %v8151, 28
      %v8235 = vpop.permute.xlu0 %8234
      %8236 = vrot.lane.b32.xlu0 %v8152, 28
      %v8237 = vpop.permute.xlu0 %8236
      %8238 = vrot.lane.b32.xlu0 %v8153, 28
      %v8239 = vpop.permute.xlu0 %8238
      %8240 = vrot.lane.b32.xlu0 %v8154, 28
      %v8241 = vpop.permute.xlu0 %8240
      %8242 = vrot.lane.b32.xlu0 %v8155, 28
      %v8243 = vpop.permute.xlu0 %8242
      %8244 = vrot.lane.b32.xlu0 %v8156, 28
      %v8245 = vpop.permute.xlu0 %8244
      %8246 = vrot.lane.b32.xlu0 %v8157, 28
      %v8247 = vpop.permute.xlu0 %8246
      %8248 = vrot.lane.b32.xlu0 %v8158, 28
      %v8249 = vpop.permute.xlu0 %8248
      %8250 = vrot.lane.b32.xlu0 %v8159, 28
      %v8251 = vpop.permute.xlu0 %8250
      %8252 = vrot.lane.b32.xlu0 %v8188, 28
      %v8253 = vpop.permute.xlu0 %8252
      %8254 = vrot.lane.b32.xlu0 %v8189, 28
      %v8255 = vpop.permute.xlu0 %8254
      %8256 = vrot.lane.b32.xlu0 %v8161, 28
      %v8257 = vpop.permute.xlu0 %8256
      %8258 = vrot.lane.b32.xlu0 %v8162, 28
      %v8259 = vpop.permute.xlu0 %8258
      %8260 = vrot.lane.b32.xlu0 %v8163, 28
      %v8261 = vpop.permute.xlu0 %8260
      %8262 = vrot.lane.b32.xlu0 %v8164, 28
      %v8263 = vpop.permute.xlu0 %8262
      %8264 = vrot.lane.b32.xlu0 %v8165, 28
      %v8265 = vpop.permute.xlu0 %8264
      %8266 = vrot.lane.b32.xlu0 %v8166, 28
      %v8267 = vpop.permute.xlu0 %8266
      %8268 = vrot.lane.b32.xlu0 %v8167, 28
      %v8269 = vpop.permute.xlu0 %8268
      %8270 = vrot.lane.b32.xlu0 %v8168, 28
      %v8271 = vpop.permute.xlu0 %8270
      %8272 = vrot.lane.b32.xlu0 %v8169, 28
      %v8273 = vpop.permute.xlu0 %8272
      %8274 = vrot.lane.b32.xlu0 %v8170, 28
      %v8275 = vpop.permute.xlu0 %8274
      %8276 = vrot.lane.b32.xlu0 %v8171, 28
      %v8277 = vpop.permute.xlu0 %8276
      %8278 = vrot.lane.b32.xlu0 %v8172, 28
      %v8279 = vpop.permute.xlu0 %8278
      %8280 = vrot.lane.b32.xlu0 %v8173, 28
      %v8281 = vpop.permute.xlu0 %8280
      %8282 = vrot.lane.b32.xlu0 %v8174, 28
      %v8283 = vpop.permute.xlu0 %8282
      %8284 = vrot.lane.b32.xlu0 %v8190, 28
      %v8285 = vpop.permute.xlu0 %8284
      %8286 = vrot.lane.b32.xlu0 %v8191, 28
      %v8287 = vpop.permute.xlu0 %8286
      %vm8288 = vcmask 228352
      %v8289 = vsel %vm8288, %v8225, %v8227
      %v8290 = vsel %vm8288, %v8227, %v8229
      %v8291 = vsel %vm8288, %v8229, %v8231
      %v8292 = vsel %vm8288, %v8231, %v8233
      %v8293 = vsel %vm8288, %v8233, %v8235
      %v8294 = vsel %vm8288, %v8235, %v8237
      %v8295 = vsel %vm8288, %v8237, %v8239
      %v8296 = vsel %vm8288, %v8239, %v8241
      %v8297 = vsel %vm8288, %v8241, %v8243
      %v8298 = vsel %vm8288, %v8243, %v8245
      %v8299 = vsel %vm8288, %v8245, %v8247
      %v8300 = vsel %vm8288, %v8247, %v8249
      %v8301 = vsel %vm8288, %v8249, %v8251
      %v8302 = vsel %vm8288, %v8251, %v8253
      %v8303 = vsel %vm8288, %v8253, %v8255
      %v8304 = vsel %vm8288, %v8257, %v8259
      %v8305 = vsel %vm8288, %v8259, %v8261
      %v8306 = vsel %vm8288, %v8261, %v8263
      %v8307 = vsel %vm8288, %v8263, %v8265
      %v8308 = vsel %vm8288, %v8265, %v8267
      %v8309 = vsel %vm8288, %v8267, %v8269
      %v8310 = vsel %vm8288, %v8269, %v8271
      %v8311 = vsel %vm8288, %v8271, %v8273
      %v8312 = vsel %vm8288, %v8273, %v8275
      %v8313 = vsel %vm8288, %v8275, %v8277
      %v8314 = vsel %vm8288, %v8277, %v8279
      %v8315 = vsel %vm8288, %v8279, %v8281
      %v8316 = vsel %vm8288, %v8281, %v8283
      %v8317 = vsel %vm8288, %v8283, %v8285
      %v8318 = vsel %vm8288, %v8285, %v8287
      %v8349 = vmax.f32 %v8146, %v8289
      %v8350 = vmax.f32 %v8147, %v8290
      %v8351 = vmax.f32 %v8148, %v8291
      %v8352 = vmax.f32 %v8149, %v8292
      %v8353 = vmax.f32 %v8150, %v8293
      %v8354 = vmax.f32 %v8151, %v8294
      %v8355 = vmax.f32 %v8152, %v8295
      %v8356 = vmax.f32 %v8153, %v8296
      %v8357 = vmax.f32 %v8154, %v8297
      %v8358 = vmax.f32 %v8155, %v8298
      %v8359 = vmax.f32 %v8156, %v8299
      %v8360 = vmax.f32 %v8157, %v8300
      %v8361 = vmax.f32 %v8158, %v8301
      %v8362 = vmax.f32 %v8159, %v8302
      %v8363 = vmax.f32 %v8160, %v8303
      %v8364 = vmax.f32 %v8161, %v8304
      %v8365 = vmax.f32 %v8162, %v8305
      %v8366 = vmax.f32 %v8163, %v8306
      %v8367 = vmax.f32 %v8164, %v8307
      %v8368 = vmax.f32 %v8165, %v8308
      %v8369 = vmax.f32 %v8166, %v8309
      %v8370 = vmax.f32 %v8167, %v8310
      %v8371 = vmax.f32 %v8168, %v8311
      %v8372 = vmax.f32 %v8169, %v8312
      %v8373 = vmax.f32 %v8170, %v8313
      %v8374 = vmax.f32 %v8171, %v8314
      %v8375 = vmax.f32 %v8172, %v8315
      %v8376 = vmax.f32 %v8173, %v8316
      %v8377 = vmax.f32 %v8174, %v8317
      %v8378 = vmax.f32 %v8175, %v8318
      %v8379 = vpack.c.bf16 %v8364, %v8349
      %v8380 = vpack.c.bf16 %v8365, %v8350
      %v8381 = vpack.c.bf16 %v8366, %v8351
      %v8382 = vpack.c.bf16 %v8367, %v8352
      %v8383 = vpack.c.bf16 %v8368, %v8353
      %v8384 = vpack.c.bf16 %v8369, %v8354
      %v8385 = vpack.c.bf16 %v8370, %v8355
      %v8386 = vpack.c.bf16 %v8371, %v8356
      %v8387 = vpack.c.bf16 %v8372, %v8357
      %v8388 = vpack.c.bf16 %v8373, %v8358
      %v8389 = vpack.c.bf16 %v8374, %v8359
      %v8390 = vpack.c.bf16 %v8375, %v8360
      %v8391 = vpack.c.bf16 %v8376, %v8361
      %v8392 = vpack.c.bf16 %v8377, %v8362
      %v8393 = vpack.c.bf16 %v8378, %v8363
      %v8394 = vld [vmem:[%s6] sm:$0xf]
      %v8395 = vld [vmem:[%s6 + $0x4] sm:$0xf]
      %v8396 = vld [vmem:[%s6 + $0x8] sm:$0xf]
      %v8397 = vld [vmem:[%s6 + $0xc] sm:$0xf]
      %v8398 = vld [vmem:[%s6 + $0x10] sm:$0xf]
      %v8399 = vld [vmem:[%s6 + $0x14] sm:$0xf]
      %v8400 = vld [vmem:[%s6 + $0x18] sm:$0xf]
      %v8401 = vld [vmem:[%s6 + $0x1c] sm:$0xf]
      %v8402 = vld [vmem:[%s6 + $0x20] sm:$0xf]
      %v8403 = vld [vmem:[%s6 + $0x24] sm:$0xf]
      %v8404 = vld [vmem:[%s6 + $0x28] sm:$0xf]
      %v8405 = vld [vmem:[%s6 + $0x2c] sm:$0xf]
      %v8406 = vld [vmem:[%s6 + $0x30] sm:$0xf]
      %v8407 = vld [vmem:[%s6 + $0x34] sm:$0xf]
      %v8408 = vld [vmem:[%s6 + $0x38] sm:$0xf]
      %v8409 = vld [vmem:[%s6 + $0x3c] sm:$0xf]
      %v8410 = vld [vmem:[%s6 + $0x40] sm:$0xf]
      %v8411 = vld [vmem:[%s6 + $0x44] sm:$0xf]
      %v8412 = vld [vmem:[%s6 + $0x48] sm:$0xf]
      %v8413 = vld [vmem:[%s6 + $0x4c] sm:$0xf]
      %v8414 = vld [vmem:[%s6 + $0x50] sm:$0xf]
      %v8415 = vld [vmem:[%s6 + $0x54] sm:$0xf]
      %v8416 = vld [vmem:[%s6 + $0x58] sm:$0xf]
      %v8417 = vld [vmem:[%s6 + $0x5c] sm:$0xf]
      %v8418 = vld [vmem:[%s6 + $0x60] sm:$0xf]
      %v8419 = vld [vmem:[%s6 + $0x64] sm:$0xf]
      %v8420 = vld [vmem:[%s6 + $0x68] sm:$0xf]
      %v8421 = vld [vmem:[%s6 + $0x6c] sm:$0xf]
      %v8422 = vld [vmem:[%s6 + $0x70] sm:$0xf]
      %v8423 = vld [vmem:[%s6 + $0x74] sm:$0xf]
      %v8424 = vld [vmem:[%s6 + $0x78] sm:$0xf]
      %v8425 = vld [vmem:[%s6 + $0x7c] sm:$0xf]
      %v8426 = vld [vmem:[%s6 + $0x80] sm:$0xf]
      %v8427 = vld [vmem:[%s6 + $0x84] sm:$0xf]
      %v8428 = vld [vmem:[%s6 + $0x88] sm:$0xf]
      %v8429 = vld [vmem:[%s6 + $0x8c] sm:$0xf]
      %v8430 = vld [vmem:[%s6 + $0x90] sm:$0xf]
      %v8431 = vld [vmem:[%s6 + $0x94] sm:$0xf]
      %v8432 = vld [vmem:[%s6 + $0x98] sm:$0xf]
      %v8433 = vld [vmem:[%s6 + $0x9c] sm:$0xf]
      %v8434 = vld [vmem:[%s6 + $0xa0] sm:$0xf]
      %v8435 = vld [vmem:[%s6 + $0xa4] sm:$0xf]
      %v8436 = vld [vmem:[%s6 + $0xa8] sm:$0xf]
      %v8437 = vld [vmem:[%s6 + $0xac] sm:$0xf]
      %v8438 = vld [vmem:[%s6 + $0xb0] sm:$0xf]
      %v8439 = vld [vmem:[%s6 + $0xb4] sm:$0xf]
      %v8440 = vld [vmem:[%s6 + $0xb8] sm:$0xf]
      %v8441 = vld [vmem:[%s6 + $0xbc] sm:$0xf]
      %v8442 = vld [vmem:[%s6 + $0xc0] sm:$0xf]
      %v8443 = vld [vmem:[%s6 + $0xc4] sm:$0xf]
      %v8444 = vld [vmem:[%s6 + $0xc8] sm:$0xf]
      %v8445 = vld [vmem:[%s6 + $0xcc] sm:$0xf]
      %v8446 = vld [vmem:[%s6 + $0xd0] sm:$0xf]
      %v8447 = vld [vmem:[%s6 + $0xd4] sm:$0xf]
      %v8448 = vld [vmem:[%s6 + $0xd8] sm:$0xf]
      %v8449 = vld [vmem:[%s6 + $0xdc] sm:$0xf]
      %v8450 = vld [vmem:[%s6 + $0xe0] sm:$0xf]
      %v8451 = vld [vmem:[%s6 + $0xe4] sm:$0xf]
      %v8452 = vld [vmem:[%s6 + $0xe8] sm:$0xf]
      %v8453 = vld [vmem:[%s6 + $0xec] sm:$0xf]
      %v8454 = vld [vmem:[%s6 + $0xf0] sm:$0xf]
      %v8455 = vld [vmem:[%s6 + $0xf4] sm:$0xf]
      %v8456 = vld [vmem:[%s6 + $0xf8] sm:$0xf]
      %v8457 = vld [vmem:[%s6 + $0xfc] sm:$0xf]
      %v8458 = vld [vmem:[%s6 + $0x100] sm:$0xf]
      %v8459 = vld [vmem:[%s6 + $0x104] sm:$0xf]
      %v8460 = vld [vmem:[%s6 + $0x108] sm:$0xf]
      %v8461 = vld [vmem:[%s6 + $0x10c] sm:$0xf]
      %v8462 = vld [vmem:[%s6 + $0x110] sm:$0xf]
      %v8463 = vld [vmem:[%s6 + $0x114] sm:$0xf]
      %v8464 = vld [vmem:[%s6 + $0x118] sm:$0xf]
      %v8465 = vld [vmem:[%s6 + $0x11c] sm:$0xf]
      %v8466 = vld [vmem:[%s6 + $0x120] sm:$0xf]
      %v8467 = vld [vmem:[%s6 + $0x124] sm:$0xf]
      %v8468 = vld [vmem:[%s6 + $0x128] sm:$0xf]
      %v8469 = vld [vmem:[%s6 + $0x12c] sm:$0xf]
      %v8470 = vld [vmem:[%s6 + $0x130] sm:$0xf]
      %v8471 = vld [vmem:[%s6 + $0x134] sm:$0xf]
      %v8472 = vld [vmem:[%s6 + $0x138] sm:$0xf]
      %v8473 = vld [vmem:[%s6 + $0x13c] sm:$0xf]
      %v8474 = vld [vmem:[%s6 + $0x140] sm:$0xf]
      %v8475 = vld [vmem:[%s6 + $0x144] sm:$0xf]
      %v8476 = vld [vmem:[%s6 + $0x148] sm:$0xf]
      %v8477 = vld [vmem:[%s6 + $0x14c] sm:$0xf]
      %v8478 = vld [vmem:[%s6 + $0x150] sm:$0xf]
      %v8479 = vld [vmem:[%s6 + $0x154] sm:$0xf]
      %v8480 = vld [vmem:[%s6 + $0x158] sm:$0xf]
      %v8481 = vld [vmem:[%s6 + $0x15c] sm:$0xf]
      %v8482 = vld [vmem:[%s6 + $0x160] sm:$0xf]
      %v8483 = vld [vmem:[%s6 + $0x164] sm:$0xf]
      %v8484 = vld [vmem:[%s6 + $0x168] sm:$0xf]
      %v8485 = vld [vmem:[%s6 + $0x16c] sm:$0xf]
      %v8486 = vld [vmem:[%s6 + $0x170] sm:$0xf]
      %v8487 = vld [vmem:[%s6 + $0x174] sm:$0xf]
      %v8488 = vld [vmem:[%s6 + $0x178] sm:$0xf]
      %v8489 = vld [vmem:[%s6 + $0x17c] sm:$0xf]
      %v8490 = vld [vmem:[%s6 + $0x180] sm:$0xf]
      %v8491 = vld [vmem:[%s6 + $0x184] sm:$0xf]
      %v8492 = vld [vmem:[%s6 + $0x188] sm:$0xf]
      %v8493 = vld [vmem:[%s6 + $0x18c] sm:$0xf]
      %v8494 = vld [vmem:[%s6 + $0x190] sm:$0xf]
      %v8495 = vld [vmem:[%s6 + $0x194] sm:$0xf]
      %v8496 = vld [vmem:[%s6 + $0x198] sm:$0xf]
      %v8497 = vld [vmem:[%s6 + $0x19c] sm:$0xf]
      %v8498 = vld [vmem:[%s6 + $0x1a0] sm:$0xf]
      %v8499 = vld [vmem:[%s6 + $0x1a4] sm:$0xf]
      %v8500 = vld [vmem:[%s6 + $0x1a8] sm:$0xf]
      %v8501 = vld [vmem:[%s6 + $0x1ac] sm:$0xf]
      %v8502 = vld [vmem:[%s6 + $0x1b0] sm:$0xf]
      %v8503 = vld [vmem:[%s6 + $0x1b4] sm:$0xf]
      %v8504 = vld [vmem:[%s6 + $0x1b8] sm:$0xf]
      %v8505 = vld [vmem:[%s6 + $0x1bc] sm:$0xf]
      %v8506 = vld [vmem:[%s6 + $0x1c0] sm:$0xf]
      %v8507 = vld [vmem:[%s6 + $0x1c4] sm:$0xf]
      %v8508 = vld [vmem:[%s6 + $0x1c8] sm:$0xf]
      %v8509 = vld [vmem:[%s6 + $0x1cc] sm:$0xf]
      %v8510 = vld [vmem:[%s6 + $0x1d0] sm:$0xf]
      %v8511 = vld [vmem:[%s6 + $0x1d4] sm:$0xf]
      %v8512 = vld [vmem:[%s6 + $0x1d8] sm:$0xf]
      %v8513 = vld [vmem:[%s6 + $0x1dc] sm:$0xf]
      %v8514 = vld [vmem:[%s6 + $0x1e0] sm:$0xf]
      %v8515 = vld [vmem:[%s6 + $0x1e4] sm:$0xf]
      %v8516 = vld [vmem:[%s6 + $0x1e8] sm:$0xf]
      %v8517 = vld [vmem:[%s6 + $0x1ec] sm:$0xf]
      %v8518 = vld [vmem:[%s6 + $0x1f0] sm:$0xf]
      %v8519 = vld [vmem:[%s6 + $0x1f4] sm:$0xf]
      %v8520 = vld [vmem:[%s6 + $0x1f8] sm:$0xf]
      %v8521 = vld [vmem:[%s6 + $0x1fc] sm:$0xf]
      %v8522 = vld [vmem:[%s6 + $0x200] sm:$0xf]
      %v8523 = vld [vmem:[%s6 + $0x204] sm:$0xf]
      %v8524 = vld [vmem:[%s6 + $0x208] sm:$0xf]
      %v8525 = vld [vmem:[%s6 + $0x20c] sm:$0xf]
      %v8526 = vld [vmem:[%s6 + $0x210] sm:$0xf]
      %v8527 = vld [vmem:[%s6 + $0x214] sm:$0xf]
      %v8528 = vld [vmem:[%s6 + $0x218] sm:$0xf]
      %v8529 = vld [vmem:[%s6 + $0x21c] sm:$0xf]
      %v8530 = vld [vmem:[%s6 + $0x220] sm:$0xf]
      %v8531 = vld [vmem:[%s6 + $0x224] sm:$0xf]
      %v8532 = vld [vmem:[%s6 + $0x228] sm:$0xf]
      %v8533 = vld [vmem:[%s6 + $0x22c] sm:$0xf]
      %v8534 = vld [vmem:[%s6 + $0x230] sm:$0xf]
      %v8535 = vld [vmem:[%s6 + $0x234] sm:$0xf]
      %v8536 = vld [vmem:[%s6 + $0x238] sm:$0xf]
      %v8537 = vld [vmem:[%s6 + $0x23c] sm:$0xf]
      %v8538 = vld [vmem:[%s6 + $0x240] sm:$0xf]
      %v8539 = vld [vmem:[%s6 + $0x244] sm:$0xf]
      %v8540 = vld [vmem:[%s6 + $0x248] sm:$0xf]
      %v8541 = vld [vmem:[%s6 + $0x24c] sm:$0xf]
      %v8542 = vld [vmem:[%s6 + $0x250] sm:$0xf]
      %v8543 = vld [vmem:[%s6 + $0x254] sm:$0xf]
      %v8544 = vld [vmem:[%s6 + $0x258] sm:$0xf]
      %v8545 = vld [vmem:[%s6 + $0x25c] sm:$0xf]
      %v8546 = vld [vmem:[%s6 + $0x260] sm:$0xf]
      %v8547 = vld [vmem:[%s6 + $0x264] sm:$0xf]
      %v8548 = vld [vmem:[%s6 + $0x268] sm:$0xf]
      %v8549 = vld [vmem:[%s6 + $0x26c] sm:$0xf]
      %v8550 = vld [vmem:[%s6 + $0x270] sm:$0xf]
      %v8551 = vld [vmem:[%s6 + $0x274] sm:$0xf]
      %v8552 = vld [vmem:[%s6 + $0x278] sm:$0xf]
      %v8553 = vld [vmem:[%s6 + $0x27c] sm:$0xf]
      %v8554 = vld [vmem:[%s6 + $0x280] sm:$0xf]
      %v8555 = vld [vmem:[%s6 + $0x284] sm:$0xf]
      %v8556 = vld [vmem:[%s6 + $0x288] sm:$0xf]
      %v8557 = vld [vmem:[%s6 + $0x28c] sm:$0xf]
      %v8558 = vld [vmem:[%s6 + $0x290] sm:$0xf]
      %v8559 = vld [vmem:[%s6 + $0x294] sm:$0xf]
      %v8560 = vld [vmem:[%s6 + $0x298] sm:$0xf]
      %v8561 = vld [vmem:[%s6 + $0x29c] sm:$0xf]
      %v8562 = vld [vmem:[%s6 + $0x2a0] sm:$0xf]
      %v8563 = vld [vmem:[%s6 + $0x2a4] sm:$0xf]
      %v8564 = vld [vmem:[%s6 + $0x2a8] sm:$0xf]
      %v8565 = vld [vmem:[%s6 + $0x2ac] sm:$0xf]
      %v8566 = vld [vmem:[%s6 + $0x2b0] sm:$0xf]
      %v8567 = vld [vmem:[%s6 + $0x2b4] sm:$0xf]
      %v8568 = vld [vmem:[%s6 + $0x2b8] sm:$0xf]
      %v8569 = vld [vmem:[%s6 + $0x2bc] sm:$0xf]
      %v8570 = vld [vmem:[%s6 + $0x2c0] sm:$0xf]
      %v8571 = vld [vmem:[%s6 + $0x2c4] sm:$0xf]
      %v8572 = vld [vmem:[%s6 + $0x2c8] sm:$0xf]
      %v8573 = vld [vmem:[%s6 + $0x2cc] sm:$0xf]
      %v8574 = vld [vmem:[%s6 + $0x2d0] sm:$0xf]
      %v8575 = vld [vmem:[%s6 + $0x2d4] sm:$0xf]
      %v8576 = vld [vmem:[%s6 + $0x2d8] sm:$0xf]
      %v8577 = vld [vmem:[%s6 + $0x2dc] sm:$0xf]
      %v8578 = vld [vmem:[%s6 + $0x2e0] sm:$0xf]
      %v8579 = vld [vmem:[%s6 + $0x2e4] sm:$0xf]
      %v8580 = vld [vmem:[%s6 + $0x2e8] sm:$0xf]
      %v8581 = vld [vmem:[%s6 + $0x2ec] sm:$0xf]
      %v8582 = vld [vmem:[%s6 + $0x2f0] sm:$0xf]
      %v8583 = vld [vmem:[%s6 + $0x2f4] sm:$0xf]
      %v8584 = vld [vmem:[%s6 + $0x2f8] sm:$0xf]
      %v8585 = vld [vmem:[%s6 + $0x2fc] sm:$0xf]
      %v8586 = vld [vmem:[%s6 + $0x300] sm:$0xf]
      %v8587 = vld [vmem:[%s6 + $0x304] sm:$0xf]
      %v8588 = vld [vmem:[%s6 + $0x308] sm:$0xf]
      %v8589 = vld [vmem:[%s6 + $0x30c] sm:$0xf]
      %v8590 = vld [vmem:[%s6 + $0x310] sm:$0xf]
      %v8591 = vld [vmem:[%s6 + $0x314] sm:$0xf]
      %v8592 = vld [vmem:[%s6 + $0x318] sm:$0xf]
      %v8593 = vld [vmem:[%s6 + $0x31c] sm:$0xf]
      %v8594 = vld [vmem:[%s6 + $0x320] sm:$0xf]
      %v8595 = vld [vmem:[%s6 + $0x324] sm:$0xf]
      %v8596 = vld [vmem:[%s6 + $0x328] sm:$0xf]
      %v8597 = vld [vmem:[%s6 + $0x32c] sm:$0xf]
      %v8598 = vld [vmem:[%s6 + $0x330] sm:$0xf]
      %v8599 = vld [vmem:[%s6 + $0x334] sm:$0xf]
      %v8600 = vld [vmem:[%s6 + $0x338] sm:$0xf]
      %v8601 = vld [vmem:[%s6 + $0x33c] sm:$0xf]
      %v8602 = vld [vmem:[%s6 + $0x340] sm:$0xf]
      %v8603 = vld [vmem:[%s6 + $0x344] sm:$0xf]
      %v8604 = vld [vmem:[%s6 + $0x348] sm:$0xf]
      %v8605 = vld [vmem:[%s6 + $0x34c] sm:$0xf]
      %v8606 = vld [vmem:[%s6 + $0x350] sm:$0xf]
      %v8607 = vld [vmem:[%s6 + $0x354] sm:$0xf]
      %v8608 = vld [vmem:[%s6 + $0x358] sm:$0xf]
      %v8609 = vld [vmem:[%s6 + $0x35c] sm:$0xf]
      %v8610 = vld [vmem:[%s6 + $0x360] sm:$0xf]
      %v8611 = vld [vmem:[%s6 + $0x364] sm:$0xf]
      %v8612 = vld [vmem:[%s6 + $0x368] sm:$0xf]
      %v8613 = vld [vmem:[%s6 + $0x36c] sm:$0xf]
      %v8614 = vld [vmem:[%s6 + $0x370] sm:$0xf]
      %v8615 = vld [vmem:[%s6 + $0x374] sm:$0xf]
      %v8616 = vld [vmem:[%s6 + $0x378] sm:$0xf]
      %v8617 = vld [vmem:[%s6 + $0x37c] sm:$0xf]
      %v8618 = vld [vmem:[%s6 + $0x380] sm:$0xf]
      %v8619 = vld [vmem:[%s6 + $0x384] sm:$0xf]
      %v8620 = vld [vmem:[%s6 + $0x388] sm:$0xf]
      %v8621 = vld [vmem:[%s6 + $0x38c] sm:$0xf]
      %v8622 = vld [vmem:[%s6 + $0x390] sm:$0xf]
      %v8623 = vld [vmem:[%s6 + $0x394] sm:$0x7]
      %v8854 = vunpack.c.l.b16 %v8394
      %v8855 = vunpack.c.l.b16 %v8395
      %v8856 = vunpack.c.l.b16 %v8396
      %v8857 = vunpack.c.l.b16 %v8397
      %v8858 = vunpack.c.l.b16 %v8398
      %v8859 = vunpack.c.l.b16 %v8399
      %v8860 = vunpack.c.l.b16 %v8400
      %v8861 = vunpack.c.l.b16 %v8401
      %v8862 = vunpack.c.l.b16 %v8402
      %v8863 = vunpack.c.l.b16 %v8403
      %v8864 = vunpack.c.l.b16 %v8404
      %v8865 = vunpack.c.l.b16 %v8405
      %v8866 = vunpack.c.l.b16 %v8406
      %v8867 = vunpack.c.l.b16 %v8407
      %v8868 = vunpack.c.l.b16 %v8408
      %v8869 = vunpack.c.l.b16 %v8409
      %v8870 = vunpack.c.l.b16 %v8410
      %v8871 = vunpack.c.l.b16 %v8411
      %v8872 = vunpack.c.l.b16 %v8412
      %v8873 = vunpack.c.l.b16 %v8413
      %v8874 = vunpack.c.l.b16 %v8414
      %v8875 = vunpack.c.l.b16 %v8415
      %v8876 = vunpack.c.l.b16 %v8416
      %v8877 = vunpack.c.l.b16 %v8417
      %v8878 = vunpack.c.l.b16 %v8418
      %v8879 = vunpack.c.l.b16 %v8419
      %v8880 = vunpack.c.l.b16 %v8420
      %v8881 = vunpack.c.l.b16 %v8421
      %v8882 = vunpack.c.l.b16 %v8422
      %v8883 = vunpack.c.l.b16 %v8423
      %v8884 = vunpack.c.l.b16 %v8424
      %v8885 = vunpack.c.l.b16 %v8425
      %v8886 = vunpack.c.l.b16 %v8426
      %v8887 = vunpack.c.l.b16 %v8427
      %v8888 = vunpack.c.l.b16 %v8428
      %v8889 = vunpack.c.l.b16 %v8429
      %v8890 = vunpack.c.l.b16 %v8430
      %v8891 = vunpack.c.l.b16 %v8431
      %v8892 = vunpack.c.l.b16 %v8432
      %v8893 = vunpack.c.l.b16 %v8433
      %v8894 = vunpack.c.l.b16 %v8434
      %v8895 = vunpack.c.l.b16 %v8435
      %v8896 = vunpack.c.l.b16 %v8436
      %v8897 = vunpack.c.l.b16 %v8437
      %v8898 = vunpack.c.l.b16 %v8438
      %v8899 = vunpack.c.l.b16 %v8439
      %v8900 = vunpack.c.l.b16 %v8440
      %v8901 = vunpack.c.l.b16 %v8441
      %v8902 = vunpack.c.l.b16 %v8442
      %v8903 = vunpack.c.l.b16 %v8443
      %v8904 = vunpack.c.l.b16 %v8444
      %v8905 = vunpack.c.l.b16 %v8445
      %v8906 = vunpack.c.l.b16 %v8446
      %v8907 = vunpack.c.l.b16 %v8447
      %v8908 = vunpack.c.l.b16 %v8448
      %v8909 = vunpack.c.l.b16 %v8449
      %v8910 = vunpack.c.l.b16 %v8450
      %v8911 = vunpack.c.l.b16 %v8451
      %v8912 = vunpack.c.l.b16 %v8452
      %v8913 = vunpack.c.l.b16 %v8453
      %v8914 = vunpack.c.l.b16 %v8454
      %v8915 = vunpack.c.l.b16 %v8455
      %v8916 = vunpack.c.l.b16 %v8456
      %v8917 = vunpack.c.l.b16 %v8457
      %v8918 = vunpack.c.l.b16 %v8458
      %v8919 = vunpack.c.l.b16 %v8459
      %v8920 = vunpack.c.l.b16 %v8460
      %v8921 = vunpack.c.l.b16 %v8461
      %v8922 = vunpack.c.l.b16 %v8462
      %v8923 = vunpack.c.l.b16 %v8463
      %v8924 = vunpack.c.l.b16 %v8464
      %v8925 = vunpack.c.l.b16 %v8465
      %v8926 = vunpack.c.l.b16 %v8466
      %v8927 = vunpack.c.l.b16 %v8467
      %v8928 = vunpack.c.l.b16 %v8468
      %v8929 = vunpack.c.l.b16 %v8469
      %v8930 = vunpack.c.l.b16 %v8470
      %v8931 = vunpack.c.l.b16 %v8471
      %v8932 = vunpack.c.l.b16 %v8472
      %v8933 = vunpack.c.l.b16 %v8473
      %v8934 = vunpack.c.l.b16 %v8474
      %v8935 = vunpack.c.l.b16 %v8475
      %v8936 = vunpack.c.l.b16 %v8476
      %v8937 = vunpack.c.l.b16 %v8477
      %v8938 = vunpack.c.l.b16 %v8478
      %v8939 = vunpack.c.l.b16 %v8479
      %v8940 = vunpack.c.l.b16 %v8480
      %v8941 = vunpack.c.l.b16 %v8481
      %v8942 = vunpack.c.l.b16 %v8482
      %v8943 = vunpack.c.l.b16 %v8483
      %v8944 = vunpack.c.l.b16 %v8484
      %v8945 = vunpack.c.l.b16 %v8485
      %v8946 = vunpack.c.l.b16 %v8486
      %v8947 = vunpack.c.l.b16 %v8487
      %v8948 = vunpack.c.l.b16 %v8488
      %v8949 = vunpack.c.l.b16 %v8489
      %v8950 = vunpack.c.l.b16 %v8490
      %v8951 = vunpack.c.l.b16 %v8491
      %v8952 = vunpack.c.l.b16 %v8492
      %v8953 = vunpack.c.l.b16 %v8493
      %v8954 = vunpack.c.l.b16 %v8494
      %v8955 = vunpack.c.l.b16 %v8495
      %v8956 = vunpack.c.l.b16 %v8496
      %v8957 = vunpack.c.l.b16 %v8497
      %v8958 = vunpack.c.l.b16 %v8498
      %v8959 = vunpack.c.l.b16 %v8499
      %v8960 = vunpack.c.l.b16 %v8500
      %v8961 = vunpack.c.l.b16 %v8501
      %v8962 = vunpack.c.l.b16 %v8502
      %v8963 = vunpack.c.l.b16 %v8503
      %v8964 = vunpack.c.l.b16 %v8504
      %v8965 = vunpack.c.l.b16 %v8505
      %v8966 = vunpack.c.l.b16 %v8506
      %v8967 = vunpack.c.l.b16 %v8507
      %v8968 = vunpack.c.l.b16 %v8508
      %v8969 = vunpack.c.l.b16 %v8509
      %v8970 = vunpack.c.l.b16 %v8510
      %v8971 = vunpack.c.l.b16 %v8511
      %v8972 = vunpack.c.l.b16 %v8512
      %v8973 = vunpack.c.l.b16 %v8513
      %v8974 = vunpack.c.l.b16 %v8514
      %v8975 = vunpack.c.l.b16 %v8515
      %v8976 = vunpack.c.l.b16 %v8516
      %v8977 = vunpack.c.l.b16 %v8517
      %v8978 = vunpack.c.l.b16 %v8518
      %v8979 = vunpack.c.l.b16 %v8519
      %v8980 = vunpack.c.l.b16 %v8520
      %v8981 = vunpack.c.l.b16 %v8521
      %v8982 = vunpack.c.l.b16 %v8522
      %v8983 = vunpack.c.l.b16 %v8523
      %v8984 = vunpack.c.l.b16 %v8524
      %v8985 = vunpack.c.l.b16 %v8525
      %v8986 = vunpack.c.l.b16 %v8526
      %v8987 = vunpack.c.l.b16 %v8527
      %v8988 = vunpack.c.l.b16 %v8528
      %v8989 = vunpack.c.l.b16 %v8529
      %v8990 = vunpack.c.l.b16 %v8530
      %v8991 = vunpack.c.l.b16 %v8531
      %v8992 = vunpack.c.l.b16 %v8532
      %v8993 = vunpack.c.l.b16 %v8533
      %v8994 = vunpack.c.l.b16 %v8534
      %v8995 = vunpack.c.l.b16 %v8535
      %v8996 = vunpack.c.l.b16 %v8536
      %v8997 = vunpack.c.l.b16 %v8537
      %v8998 = vunpack.c.l.b16 %v8538
      %v8999 = vunpack.c.l.b16 %v8539
      %v9000 = vunpack.c.l.b16 %v8540
      %v9001 = vunpack.c.l.b16 %v8541
      %v9002 = vunpack.c.l.b16 %v8542
      %v9003 = vunpack.c.l.b16 %v8543
      %v9004 = vunpack.c.l.b16 %v8544
      %v9005 = vunpack.c.l.b16 %v8545
      %v9006 = vunpack.c.l.b16 %v8546
      %v9007 = vunpack.c.l.b16 %v8547
      %v9008 = vunpack.c.l.b16 %v8548
      %v9009 = vunpack.c.l.b16 %v8549
      %v9010 = vunpack.c.l.b16 %v8550
      %v9011 = vunpack.c.l.b16 %v8551
      %v9012 = vunpack.c.l.b16 %v8552
      %v9013 = vunpack.c.l.b16 %v8553
      %v9014 = vunpack.c.l.b16 %v8554
      %v9015 = vunpack.c.l.b16 %v8555
      %v9016 = vunpack.c.l.b16 %v8556
      %v9017 = vunpack.c.l.b16 %v8557
      %v9018 = vunpack.c.l.b16 %v8558
      %v9019 = vunpack.c.l.b16 %v8559
      %v9020 = vunpack.c.l.b16 %v8560
      %v9021 = vunpack.c.l.b16 %v8561
      %v9022 = vunpack.c.l.b16 %v8562
      %v9023 = vunpack.c.l.b16 %v8563
      %v9024 = vunpack.c.l.b16 %v8564
      %v9025 = vunpack.c.l.b16 %v8565
      %v9026 = vunpack.c.l.b16 %v8566
      %v9027 = vunpack.c.l.b16 %v8567
      %v9028 = vunpack.c.l.b16 %v8568
      %v9029 = vunpack.c.l.b16 %v8569
      %v9030 = vunpack.c.l.b16 %v8570
      %v9031 = vunpack.c.l.b16 %v8571
      %v9032 = vunpack.c.l.b16 %v8572
      %v9033 = vunpack.c.l.b16 %v8573
      %v9034 = vunpack.c.l.b16 %v8574
      %v9035 = vunpack.c.l.b16 %v8575
      %v9036 = vunpack.c.l.b16 %v8576
      %v9037 = vunpack.c.l.b16 %v8577
      %v9038 = vunpack.c.l.b16 %v8578
      %v9039 = vunpack.c.l.b16 %v8579
      %v9040 = vunpack.c.l.b16 %v8580
      %v9041 = vunpack.c.l.b16 %v8581
      %v9042 = vunpack.c.l.b16 %v8582
      %v9043 = vunpack.c.l.b16 %v8583
      %v9044 = vunpack.c.l.b16 %v8584
      %v9045 = vunpack.c.l.b16 %v8585
      %v9046 = vunpack.c.l.b16 %v8586
      %v9047 = vunpack.c.l.b16 %v8587
      %v9048 = vunpack.c.l.b16 %v8588
      %v9049 = vunpack.c.l.b16 %v8589
      %v9050 = vunpack.c.l.b16 %v8590
      %v9051 = vunpack.c.l.b16 %v8591
      %v9052 = vunpack.c.l.b16 %v8592
      %v9053 = vunpack.c.l.b16 %v8593
      %v9054 = vunpack.c.l.b16 %v8594
      %v9055 = vunpack.c.l.b16 %v8595
      %v9056 = vunpack.c.l.b16 %v8596
      %v9057 = vunpack.c.l.b16 %v8597
      %v9058 = vunpack.c.l.b16 %v8598
      %v9059 = vunpack.c.l.b16 %v8599
      %v9060 = vunpack.c.l.b16 %v8600
      %v9061 = vunpack.c.l.b16 %v8601
      %v9062 = vunpack.c.l.b16 %v8602
      %v9063 = vunpack.c.l.b16 %v8603
      %v9064 = vunpack.c.l.b16 %v8604
      %v9065 = vunpack.c.l.b16 %v8605
      %v9066 = vunpack.c.l.b16 %v8606
      %v9067 = vunpack.c.l.b16 %v8607
      %v9068 = vunpack.c.l.b16 %v8608
      %v9069 = vunpack.c.l.b16 %v8609
      %v9070 = vunpack.c.l.b16 %v8610
      %v9071 = vunpack.c.l.b16 %v8611
      %v9072 = vunpack.c.l.b16 %v8612
      %v9073 = vunpack.c.l.b16 %v8613
      %v9074 = vunpack.c.l.b16 %v8614
      %v9075 = vunpack.c.l.b16 %v8615
      %v9076 = vunpack.c.l.b16 %v8616
      %v9077 = vunpack.c.l.b16 %v8617
      %v9078 = vunpack.c.l.b16 %v8618
      %v9079 = vunpack.c.l.b16 %v8619
      %v9080 = vunpack.c.l.b16 %v8620
      %v9081 = vunpack.c.l.b16 %v8621
      %v9082 = vunpack.c.l.b16 %v8622
      %v9083 = vunpack.c.l.b16 %v8623
      %v9084 = vpack.c.b16 %v8855, %v8854
      %v9085 = vpack.c.b16 %v8857, %v8856
      %v9086 = vpack.c.b16 %v8859, %v8858
      %v9087 = vpack.c.b16 %v8861, %v8860
      %v9088 = vpack.c.b16 %v8863, %v8862
      %v9089 = vpack.c.b16 %v8865, %v8864
      %v9090 = vpack.c.b16 %v8867, %v8866
      %v9091 = vpack.c.b16 %v8869, %v8868
      %v9092 = vpack.c.b16 %v8871, %v8870
      %v9093 = vpack.c.b16 %v8873, %v8872
      %v9094 = vpack.c.b16 %v8875, %v8874
      %v9095 = vpack.c.b16 %v8877, %v8876
      %v9096 = vpack.c.b16 %v8879, %v8878
      %v9097 = vpack.c.b16 %v8881, %v8880
      %v9098 = vpack.c.b16 %v8883, %v8882
      %v9099 = vpack.c.b16 %v8885, %v8884
      %v9100 = vpack.c.b16 %v8887, %v8886
      %v9101 = vpack.c.b16 %v8889, %v8888
      %v9102 = vpack.c.b16 %v8891, %v8890
      %v9103 = vpack.c.b16 %v8893, %v8892
      %v9104 = vpack.c.b16 %v8895, %v8894
      %v9105 = vpack.c.b16 %v8897, %v8896
      %v9106 = vpack.c.b16 %v8899, %v8898
      %v9107 = vpack.c.b16 %v8901, %v8900
      %v9108 = vpack.c.b16 %v8903, %v8902
      %v9109 = vpack.c.b16 %v8905, %v8904
      %v9110 = vpack.c.b16 %v8907, %v8906
      %v9111 = vpack.c.b16 %v8909, %v8908
      %v9112 = vpack.c.b16 %v8911, %v8910
      %v9113 = vpack.c.b16 %v8913, %v8912
      %v9114 = vpack.c.b16 %v8915, %v8914
      %v9115 = vpack.c.b16 %v8917, %v8916
      %v9116 = vpack.c.b16 %v8919, %v8918
      %v9117 = vpack.c.b16 %v8921, %v8920
      %v9118 = vpack.c.b16 %v8923, %v8922
      %v9119 = vpack.c.b16 %v8925, %v8924
      %v9120 = vpack.c.b16 %v8927, %v8926
      %v9121 = vpack.c.b16 %v8929, %v8928
      %v9122 = vpack.c.b16 %v8931, %v8930
      %v9123 = vpack.c.b16 %v8933, %v8932
      %v9124 = vpack.c.b16 %v8935, %v8934
      %v9125 = vpack.c.b16 %v8937, %v8936
      %v9126 = vpack.c.b16 %v8939, %v8938
      %v9127 = vpack.c.b16 %v8941, %v8940
      %v9128 = vpack.c.b16 %v8943, %v8942
      %v9129 = vpack.c.b16 %v8945, %v8944
      %v9130 = vpack.c.b16 %v8947, %v8946
      %v9131 = vpack.c.b16 %v8949, %v8948
      %v9132 = vpack.c.b16 %v8951, %v8950
      %v9133 = vpack.c.b16 %v8953, %v8952
      %v9134 = vpack.c.b16 %v8955, %v8954
      %v9135 = vpack.c.b16 %v8957, %v8956
      %v9136 = vpack.c.b16 %v8959, %v8958
      %v9137 = vpack.c.b16 %v8961, %v8960
      %v9138 = vpack.c.b16 %v8963, %v8962
      %v9139 = vpack.c.b16 %v8965, %v8964
      %v9140 = vpack.c.b16 %v8967, %v8966
      %v9141 = vpack.c.b16 %v8969, %v8968
      %v9142 = vpack.c.b16 %v8971, %v8970
      %v9143 = vpack.c.b16 %v8973, %v8972
      %v9144 = vpack.c.b16 %v8975, %v8974
      %v9145 = vpack.c.b16 %v8977, %v8976
      %v9146 = vpack.c.b16 %v8979, %v8978
      %v9147 = vpack.c.b16 %v8981, %v8980
      %v9148 = vpack.c.b16 %v8983, %v8982
      %v9149 = vpack.c.b16 %v8985, %v8984
      %v9150 = vpack.c.b16 %v8987, %v8986
      %v9151 = vpack.c.b16 %v8989, %v8988
      %v9152 = vpack.c.b16 %v8991, %v8990
      %v9153 = vpack.c.b16 %v8993, %v8992
      %v9154 = vpack.c.b16 %v8995, %v8994
      %v9155 = vpack.c.b16 %v8997, %v8996
      %v9156 = vpack.c.b16 %v8999, %v8998
      %v9157 = vpack.c.b16 %v9001, %v9000
      %v9158 = vpack.c.b16 %v9003, %v9002
      %v9159 = vpack.c.b16 %v9005, %v9004
      %v9160 = vpack.c.b16 %v9007, %v9006
      %v9161 = vpack.c.b16 %v9009, %v9008
      %v9162 = vpack.c.b16 %v9011, %v9010
      %v9163 = vpack.c.b16 %v9013, %v9012
      %v9164 = vpack.c.b16 %v9015, %v9014
      %v9165 = vpack.c.b16 %v9017, %v9016
      %v9166 = vpack.c.b16 %v9019, %v9018
      %v9167 = vpack.c.b16 %v9021, %v9020
      %v9168 = vpack.c.b16 %v9023, %v9022
      %v9169 = vpack.c.b16 %v9025, %v9024
      %v9170 = vpack.c.b16 %v9027, %v9026
      %v9171 = vpack.c.b16 %v9029, %v9028
      %v9172 = vpack.c.b16 %v9031, %v9030
      %v9173 = vpack.c.b16 %v9033, %v9032
      %v9174 = vpack.c.b16 %v9035, %v9034
      %v9175 = vpack.c.b16 %v9037, %v9036
      %v9176 = vpack.c.b16 %v9039, %v9038
      %v9177 = vpack.c.b16 %v9041, %v9040
      %v9178 = vpack.c.b16 %v9043, %v9042
      %v9179 = vpack.c.b16 %v9045, %v9044
      %v9180 = vpack.c.b16 %v9047, %v9046
      %v9181 = vpack.c.b16 %v9049, %v9048
      %v9182 = vpack.c.b16 %v9051, %v9050
      %v9183 = vpack.c.b16 %v9053, %v9052
      %v9184 = vpack.c.b16 %v9055, %v9054
      %v9185 = vpack.c.b16 %v9057, %v9056
      %v9186 = vpack.c.b16 %v9059, %v9058
      %v9187 = vpack.c.b16 %v9061, %v9060
      %v9188 = vpack.c.b16 %v9063, %v9062
      %v9189 = vpack.c.b16 %v9065, %v9064
      %v9190 = vpack.c.b16 %v9067, %v9066
      %v9191 = vpack.c.b16 %v9069, %v9068
      %v9192 = vpack.c.b16 %v9071, %v9070
      %v9193 = vpack.c.b16 %v9073, %v9072
      %v9194 = vpack.c.b16 %v9075, %v9074
      %v9195 = vpack.c.b16 %v9077, %v9076
      %v9196 = vpack.c.b16 %v9079, %v9078
      %v9197 = vpack.c.b16 %v9081, %v9080
      %v9198 = vpack.c.b16 %v9083, %v9082
      %vm9313 = vcmask 367616
      %v9315 = vsel %vm9313, %v8393, 0
      %vm9317 = vcmask 1045504
      %vm9318 = vcmask 1046528
      %v9319 = vsel %vm9317, 4294967295, 65535
      %v9320 = vsel %vm9318, %v9319, 0
      %v9322 = vand.u32 %v9198, %v9320
      %9324 = vmatprep.subr.bf16.mxu0 0
      %9325 = vmatpush1.bf16.msra.mxu0 %v9084
      %9326 = vmatprep.subr.bf16.mxu0 0
      %9327 = vmatpush1.bf16.msra.mxu0 %v9085
      %9328 = vmatprep.subr.bf16.mxu0 0
      %9329 = vmatpush1.bf16.msra.mxu0 %v9086
      %9330 = vmatprep.subr.bf16.mxu0 0
      %9331 = vmatpush1.bf16.msra.mxu0 %v9087
      %9332 = vmatprep.subr.bf16.mxu0 0
      %9333 = vmatpush1.bf16.msra.mxu0 %v9088
      %9334 = vmatprep.subr.bf16.mxu0 0
      %9335 = vmatpush1.bf16.msra.mxu0 %v9089
      %9336 = vmatprep.subr.bf16.mxu0 0
      %9337 = vmatpush1.bf16.msra.mxu0 %v9090
      %9338 = vmatprep.subr.bf16.mxu0 0
      %9339 = vmatpush1.bf16.msra.mxu0 %v9091
      %9340 = vmatprep.subr.bf16.mxu0 0
      %9341 = vmatpush1.bf16.msra.mxu0 %v9092
      %9342 = vmatprep.subr.bf16.mxu0 0
      %9343 = vmatpush1.bf16.msra.mxu0 %v9093
      %9344 = vmatprep.subr.bf16.mxu0 0
      %9345 = vmatpush1.bf16.msra.mxu0 %v9094
      %9346 = vmatprep.subr.bf16.mxu0 0
      %9347 = vmatpush1.bf16.msra.mxu0 %v9095
      %9348 = vmatprep.subr.bf16.mxu0 0
      %9349 = vmatpush1.bf16.msra.mxu0 %v9096
      %9350 = vmatprep.subr.bf16.mxu0 0
      %9351 = vmatpush1.bf16.msra.mxu0 %v9097
      %9352 = vmatprep.subr.bf16.mxu0 0
      %9353 = vmatpush1.bf16.msra.mxu0 %v9098
      %9354 = vmatprep.subr.bf16.mxu0 0
      %9355 = vmatpush1.bf16.msra.mxu0 %v9099
      %9356 = vmatprep.mubr.bf16.mxu0 %v8380
      %9357 = vmatmul.mubr.bf16.gmra.mrb[0].mxu0 %v8379
      %v9358 = vpop.f32.mrb[0].mxu0
      %v9359 = vadd.f32 0.0, %v9358
      %v9360 = vpop.f32.mrb[0].mxu0
      %v9361 = vpop.f32.mrb[0].mxu0
      %v9362 = vadd.f32 0.0, %v9361
      %v9363 = vpop.f32.mrb[0].mxu0
      %9364 = vdwg.mxu0
      %9365 = vmatprep.subr.bf16.mxu0 0
      %9366 = vmatpush1.bf16.msra.mxu0 %v9100
      %9367 = vmatprep.subr.bf16.mxu0 0
      %9368 = vmatpush1.bf16.msra.mxu0 %v9101
      %9369 = vmatprep.subr.bf16.mxu0 0
      %9370 = vmatpush1.bf16.msra.mxu0 %v9102
      %9371 = vmatprep.subr.bf16.mxu0 0
      %9372 = vmatpush1.bf16.msra.mxu0 %v9103
      %9373 = vmatprep.subr.bf16.mxu0 0
      %9374 = vmatpush1.bf16.msra.mxu0 %v9104
      %9375 = vmatprep.subr.bf16.mxu0 0
      %9376 = vmatpush1.bf16.msra.mxu0 %v9105
      %9377 = vmatprep.subr.bf16.mxu0 0
      %9378 = vmatpush1.bf16.msra.mxu0 %v9106
      %9379 = vmatprep.subr.bf16.mxu0 0
      %9380 = vmatpush1.bf16.msra.mxu0 %v9107
      %9381 = vmatprep.subr.bf16.mxu0 0
      %9382 = vmatpush1.bf16.msra.mxu0 %v9108
      %9383 = vmatprep.subr.bf16.mxu0 0
      %9384 = vmatpush1.bf16.msra.mxu0 %v9109
      %9385 = vmatprep.subr.bf16.mxu0 0
      %9386 = vmatpush1.bf16.msra.mxu0 %v9110
      %9387 = vmatprep.subr.bf16.mxu0 0
      %9388 = vmatpush1.bf16.msra.mxu0 %v9111
      %9389 = vmatprep.subr.bf16.mxu0 0
      %9390 = vmatpush1.bf16.msra.mxu0 %v9112
      %9391 = vmatprep.subr.bf16.mxu0 0
      %9392 = vmatpush1.bf16.msra.mxu0 %v9113
      %9393 = vmatprep.subr.bf16.mxu0 0
      %9394 = vmatpush1.bf16.msra.mxu0 %v9114
      %9395 = vmatprep.subr.bf16.mxu0 0
      %9396 = vmatpush1.bf16.msra.mxu0 %v9115
      %9397 = vmatprep.mubr.bf16.mxu0 %v8382
      %9398 = vmatmul.mubr.bf16.gmra.mrb[0].mxu0 %v8381
      %v9399 = vpop.f32.mrb[0].mxu0
      %v9400 = vadd.f32 %v9359, %v9399
      %v9401 = vpop.f32.mrb[0].mxu0
      %v9402 = vpop.f32.mrb[0].mxu0
      %v9403 = vadd.f32 %v9362, %v9402
      %v9404 = vpop.f32.mrb[0].mxu0
      %9405 = vdwg.mxu0
      %9406 = vmatprep.subr.bf16.mxu0 0
      %9407 = vmatpush1.bf16.msra.mxu0 %v9116
      %9408 = vmatprep.subr.bf16.mxu0 0
      %9409 = vmatpush1.bf16.msra.mxu0 %v9117
      %9410 = vmatprep.subr.bf16.mxu0 0
      %9411 = vmatpush1.bf16.msra.mxu0 %v9118
      %9412 = vmatprep.subr.bf16.mxu0 0
      %9413 = vmatpush1.bf16.msra.mxu0 %v9119
      %9414 = vmatprep.subr.bf16.mxu0 0
      %9415 = vmatpush1.bf16.msra.mxu0 %v9120
      %9416 = vmatprep.subr.bf16.mxu0 0
      %9417 = vmatpush1.bf16.msra.mxu0 %v9121
      %9418 = vmatprep.subr.bf16.mxu0 0
      %9419 = vmatpush1.bf16.msra.mxu0 %v9122
      %9420 = vmatprep.subr.bf16.mxu0 0
      %9421 = vmatpush1.bf16.msra.mxu0 %v9123
      %9422 = vmatprep.subr.bf16.mxu0 0
      %9423 = vmatpush1.bf16.msra.mxu0 %v9124
      %9424 = vmatprep.subr.bf16.mxu0 0
      %9425 = vmatpush1.bf16.msra.mxu0 %v9125
      %9426 = vmatprep.subr.bf16.mxu0 0
      %9427 = vmatpush1.bf16.msra.mxu0 %v9126
      %9428 = vmatprep.subr.bf16.mxu0 0
      %9429 = vmatpush1.bf16.msra.mxu0 %v9127
      %9430 = vmatprep.subr.bf16.mxu0 0
      %9431 = vmatpush1.bf16.msra.mxu0 %v9128
      %9432 = vmatprep.subr.bf16.mxu0 0
      %9433 = vmatpush1.bf16.msra.mxu0 %v9129
      %9434 = vmatprep.subr.bf16.mxu0 0
      %9435 = vmatpush1.bf16.msra.mxu0 %v9130
      %9436 = vmatprep.subr.bf16.mxu0 0
      %9437 = vmatpush1.bf16.msra.mxu0 %v9131
      %9438 = vmatprep.mubr.bf16.mxu0 %v8384
      %9439 = vmatmul.mubr.bf16.gmra.mrb[0].mxu0 %v8383
      %v9440 = vpop.f32.mrb[0].mxu0
      %v9441 = vadd.f32 %v9400, %v9440
      %v9442 = vpop.f32.mrb[0].mxu0
      %v9443 = vpop.f32.mrb[0].mxu0
      %v9444 = vadd.f32 %v9403, %v9443
      %v9445 = vpop.f32.mrb[0].mxu0
      %9446 = vdwg.mxu0
      %9447 = vmatprep.subr.bf16.mxu0 0
      %9448 = vmatpush1.bf16.msra.mxu0 %v9132
      %9449 = vmatprep.subr.bf16.mxu0 0
      %9450 = vmatpush1.bf16.msra.mxu0 %v9133
      %9451 = vmatprep.subr.bf16.mxu0 0
      %9452 = vmatpush1.bf16.msra.mxu0 %v9134
      %9453 = vmatprep.subr.bf16.mxu0 0
      %9454 = vmatpush1.bf16.msra.mxu0 %v9135
      %9455 = vmatprep.subr.bf16.mxu0 0
      %9456 = vmatpush1.bf16.msra.mxu0 %v9136
      %9457 = vmatprep.subr.bf16.mxu0 0
      %9458 = vmatpush1.bf16.msra.mxu0 %v9137
      %9459 = vmatprep.subr.bf16.mxu0 0
      %9460 = vmatpush1.bf16.msra.mxu0 %v9138
      %9461 = vmatprep.subr.bf16.mxu0 0
      %9462 = vmatpush1.bf16.msra.mxu0 %v9139
      %9463 = vmatprep.subr.bf16.mxu0 0
      %9464 = vmatpush1.bf16.msra.mxu0 %v9140
      %9465 = vmatprep.subr.bf16.mxu0 0
      %9466 = vmatpush1.bf16.msra.mxu0 %v9141
      %9467 = vmatprep.subr.bf16.mxu0 0
      %9468 = vmatpush1.bf16.msra.mxu0 %v9142
      %9469 = vmatprep.subr.bf16.mxu0 0
      %9470 = vmatpush1.bf16.msra.mxu0 %v9143
      %9471 = vmatprep.subr.bf16.mxu0 0
      %9472 = vmatpush1.bf16.msra.mxu0 %v9144
      %9473 = vmatprep.subr.bf16.mxu0 0
      %9474 = vmatpush1.bf16.msra.mxu0 %v9145
      %9475 = vmatprep.subr.bf16.mxu0 0
      %9476 = vmatpush1.bf16.msra.mxu0 %v9146
      %9477 = vmatprep.subr.bf16.mxu0 0
      %9478 = vmatpush1.bf16.msra.mxu0 %v9147
      %9479 = vmatprep.mubr.bf16.mxu0 %v8386
      %9480 = vmatmul.mubr.bf16.gmra.mrb[0].mxu0 %v8385
      %v9481 = vpop.f32.mrb[0].mxu0
      %v9482 = vadd.f32 %v9441, %v9481
      %v9483 = vpop.f32.mrb[0].mxu0
      %v9484 = vpop.f32.mrb[0].mxu0
      %v9485 = vadd.f32 %v9444, %v9484
      %v9486 = vpop.f32.mrb[0].mxu0
      %9487 = vdwg.mxu0
      %9488 = vmatprep.subr.bf16.mxu0 0
      %9489 = vmatpush1.bf16.msra.mxu0 %v9148
      %9490 = vmatprep.subr.bf16.mxu0 0
      %9491 = vmatpush1.bf16.msra.mxu0 %v9149
      %9492 = vmatprep.subr.bf16.mxu0 0
      %9493 = vmatpush1.bf16.msra.mxu0 %v9150
      %9494 = vmatprep.subr.bf16.mxu0 0
      %9495 = vmatpush1.bf16.msra.mxu0 %v9151
      %9496 = vmatprep.subr.bf16.mxu0 0
      %9497 = vmatpush1.bf16.msra.mxu0 %v9152
      %9498 = vmatprep.subr.bf16.mxu0 0
      %9499 = vmatpush1.bf16.msra.mxu0 %v9153
      %9500 = vmatprep.subr.bf16.mxu0 0
      %9501 = vmatpush1.bf16.msra.mxu0 %v9154
      %9502 = vmatprep.subr.bf16.mxu0 0
      %9503 = vmatpush1.bf16.msra.mxu0 %v9155
      %9504 = vmatprep.subr.bf16.mxu0 0
      %9505 = vmatpush1.bf16.msra.mxu0 %v9156
      %9506 = vmatprep.subr.bf16.mxu0 0
      %9507 = vmatpush1.bf16.msra.mxu0 %v9157
      %9508 = vmatprep.subr.bf16.mxu0 0
      %9509 = vmatpush1.bf16.msra.mxu0 %v9158
      %9510 = vmatprep.subr.bf16.mxu0 0
      %9511 = vmatpush1.bf16.msra.mxu0 %v9159
      %9512 = vmatprep.subr.bf16.mxu0 0
      %9513 = vmatpush1.bf16.msra.mxu0 %v9160
      %9514 = vmatprep.subr.bf16.mxu0 0
      %9515 = vmatpush1.bf16.msra.mxu0 %v9161
      %9516 = vmatprep.subr.bf16.mxu0 0
      %9517 = vmatpush1.bf16.msra.mxu0 %v9162
      %9518 = vmatprep.subr.bf16.mxu0 0
      %9519 = vmatpush1.bf16.msra.mxu0 %v9163
      %9520 = vmatprep.mubr.bf16.mxu0 %v8388
      %9521 = vmatmul.mubr.bf16.gmra.mrb[0].mxu0 %v8387
      %v9522 = vpop.f32.mrb[0].mxu0
      %v9523 = vadd.f32 %v9482, %v9522
      %v9524 = vpop.f32.mrb[0].mxu0
      %v9525 = vpop.f32.mrb[0].mxu0
      %v9526 = vadd.f32 %v9485, %v9525
      %v9527 = vpop.f32.mrb[0].mxu0
      %9528 = vdwg.mxu0
      %9529 = vmatprep.subr.bf16.mxu0 0
      %9530 = vmatpush1.bf16.msra.mxu0 %v9164
      %9531 = vmatprep.subr.bf16.mxu0 0
      %9532 = vmatpush1.bf16.msra.mxu0 %v9165
      %9533 = vmatprep.subr.bf16.mxu0 0
      %9534 = vmatpush1.bf16.msra.mxu0 %v9166
      %9535 = vmatprep.subr.bf16.mxu0 0
      %9536 = vmatpush1.bf16.msra.mxu0 %v9167
      %9537 = vmatprep.subr.bf16.mxu0 0
      %9538 = vmatpush1.bf16.msra.mxu0 %v9168
      %9539 = vmatprep.subr.bf16.mxu0 0
      %9540 = vmatpush1.bf16.msra.mxu0 %v9169
      %9541 = vmatprep.subr.bf16.mxu0 0
      %9542 = vmatpush1.bf16.msra.mxu0 %v9170
      %9543 = vmatprep.subr.bf16.mxu0 0
      %9544 = vmatpush1.bf16.msra.mxu0 %v9171
      %9545 = vmatprep.subr.bf16.mxu0 0
      %9546 = vmatpush1.bf16.msra.mxu0 %v9172
      %9547 = vmatprep.subr.bf16.mxu0 0
      %9548 = vmatpush1.bf16.msra.mxu0 %v9173
      %9549 = vmatprep.subr.bf16.mxu0 0
      %9550 = vmatpush1.bf16.msra.mxu0 %v9174
      %9551 = vmatprep.subr.bf16.mxu0 0
      %9552 = vmatpush1.bf16.msra.mxu0 %v9175
      %9553 = vmatprep.subr.bf16.mxu0 0
      %9554 = vmatpush1.bf16.msra.mxu0 %v9176
      %9555 = vmatprep.subr.bf16.mxu0 0
      %9556 = vmatpush1.bf16.msra.mxu0 %v9177
      %9557 = vmatprep.subr.bf16.mxu0 0
      %9558 = vmatpush1.bf16.msra.mxu0 %v9178
      %9559 = vmatprep.subr.bf16.mxu0 0
      %9560 = vmatpush1.bf16.msra.mxu0 %v9179
      %9561 = vmatprep.mubr.bf16.mxu0 %v8390
      %9562 = vmatmul.mubr.bf16.gmra.mrb[0].mxu0 %v8389
      %v9563 = vpop.f32.mrb[0].mxu0
      %v9564 = vadd.f32 %v9523, %v9563
      %v9565 = vpop.f32.mrb[0].mxu0
      %v9566 = vpop.f32.mrb[0].mxu0
      %v9567 = vadd.f32 %v9526, %v9566
      %v9568 = vpop.f32.mrb[0].mxu0
      %9569 = vdwg.mxu0
      %9570 = vmatprep.subr.bf16.mxu0 0
      %9571 = vmatpush1.bf16.msra.mxu0 %v9180
      %9572 = vmatprep.subr.bf16.mxu0 0
      %9573 = vmatpush1.bf16.msra.mxu0 %v9181
      %9574 = vmatprep.subr.bf16.mxu0 0
      %9575 = vmatpush1.bf16.msra.mxu0 %v9182
      %9576 = vmatprep.subr.bf16.mxu0 0
      %9577 = vmatpush1.bf16.msra.mxu0 %v9183
      %9578 = vmatprep.subr.bf16.mxu0 0
      %9579 = vmatpush1.bf16.msra.mxu0 %v9184
      %9580 = vmatprep.subr.bf16.mxu0 0
      %9581 = vmatpush1.bf16.msra.mxu0 %v9185
      %9582 = vmatprep.subr.bf16.mxu0 0
      %9583 = vmatpush1.bf16.msra.mxu0 %v9186
      %9584 = vmatprep.subr.bf16.mxu0 0
      %9585 = vmatpush1.bf16.msra.mxu0 %v9187
      %9586 = vmatprep.subr.bf16.mxu0 0
      %9587 = vmatpush1.bf16.msra.mxu0 %v9188
      %9588 = vmatprep.subr.bf16.mxu0 0
      %9589 = vmatpush1.bf16.msra.mxu0 %v9189
      %9590 = vmatprep.subr.bf16.mxu0 0
      %9591 = vmatpush1.bf16.msra.mxu0 %v9190
      %9592 = vmatprep.subr.bf16.mxu0 0
      %9593 = vmatpush1.bf16.msra.mxu0 %v9191
      %9594 = vmatprep.subr.bf16.mxu0 0
      %9595 = vmatpush1.bf16.msra.mxu0 %v9192
      %9596 = vmatprep.subr.bf16.mxu0 0
      %9597 = vmatpush1.bf16.msra.mxu0 %v9193
      %9598 = vmatprep.subr.bf16.mxu0 0
      %9599 = vmatpush1.bf16.msra.mxu0 %v9194
      %9600 = vmatprep.subr.bf16.mxu0 0
      %9601 = vmatpush1.bf16.msra.mxu0 %v9195
      %9602 = vmatprep.mubr.bf16.mxu0 %v8392
      %9603 = vmatmul.mubr.bf16.gmra.mrb[0].mxu0 %v8391
      %v9604 = vpop.f32.mrb[0].mxu0
      %v9605 = vadd.f32 %v9564, %v9604
      %v9606 = vpop.f32.mrb[0].mxu0
      %v9607 = vpop.f32.mrb[0].mxu0
      %v9608 = vadd.f32 %v9567, %v9607
      %v9609 = vpop.f32.mrb[0].mxu0
      %9610 = vdwg.mxu0
      %9611 = vmatprep.subr.bf16.mxu0 0
      %9612 = vmatpush1.bf16.msra.mxu0 %v9196
      %9613 = vmatprep.subr.bf16.mxu0 0
      %9614 = vmatpush1.bf16.msra.mxu0 %v9197
      %9615 = vmatprep.subr.bf16.mxu0 0
      %9616 = vmatpush1.bf16.msra.mxu0 %v9322
      %9617 = vmatprep.subr.bf16.mxu0 0
      %9618 = vmatpush1.bf16.msra.mxu0 0
      %9619 = vmatprep.subr.bf16.mxu0 0
      %9620 = vmatpush1.bf16.msra.mxu0 0
      %9621 = vmatprep.subr.bf16.mxu0 0
      %9622 = vmatpush1.bf16.msra.mxu0 0
      %9623 = vmatprep.subr.bf16.mxu0 0
      %9624 = vmatpush1.bf16.msra.mxu0 0
      %9625 = vmatprep.subr.bf16.mxu0 0
      %9626 = vmatpush1.bf16.msra.mxu0 0
      %9627 = vmatprep.subr.bf16.mxu0 0
      %9628 = vmatpush1.bf16.msra.mxu0 0
      %9629 = vmatprep.subr.bf16.mxu0 0
      %9630 = vmatpush1.bf16.msra.mxu0 0
      %9631 = vmatprep.subr.bf16.mxu0 0
      %9632 = vmatpush1.bf16.msra.mxu0 0
      %9633 = vmatprep.subr.bf16.mxu0 0
      %9634 = vmatpush1.bf16.msra.mxu0 0
      %9635 = vmatprep.subr.bf16.mxu0 0
      %9636 = vmatpush1.bf16.msra.mxu0 0
      %9637 = vmatprep.subr.bf16.mxu0 0
      %9638 = vmatpush1.bf16.msra.mxu0 0
      %9639 = vmatprep.subr.bf16.mxu0 0
      %9640 = vmatpush1.bf16.msra.mxu0 0
      %9641 = vmatprep.subr.bf16.mxu0 0
      %9642 = vmatpush1.bf16.msra.mxu0 0
      %9643 = vmatprep.mubr.bf16.mxu0 0
      %9644 = vmatmul.mubr.bf16.gmra.mrb[0].mxu0 %v9315
      %v9645 = vpop.f32.mrb[0].mxu0
      %v9646 = vadd.f32 %v9605, %v9645
      %v9647 = vpop.f32.mrb[0].mxu0
      %v9648 = vpop.f32.mrb[0].mxu0
      %v9649 = vadd.f32 %v9608, %v9648
      %v9650 = vpop.f32.mrb[0].mxu0
      %9651 = vdwg.mxu0
      %v9652 = vpack.c.bf16 %v9649, %v9646
      %v9654 = vunpack.c.l.b16 %v9652
      %v9655 = vunpack.c.h.b16 %v9652
      %v9656 = vpack.c.b16 %v9654, %v9654
      %v9657 = vpack.c.b16 %v9655, %v9655
      %vm9660 = vcmask 814080
      %9661 = vst.msk [vmem:[%s278] sm:$0xf] %vm9660, %v9656
      %9662 = vst.msk [vmem:[%s278 + $0x4] sm:$0xf] %vm9660, %v9657
      %p9663 = scmp.lt.s32.totalorder %s18, 1
      %s9664 = scalar_select %p9663, %s18, 1
      %s9665 = smul.addr %s9664, 2
      %s9666 = smul.addr %s9665, 4
      %s9667 = scalar_lea.vmem %s7, %s9666
      // Predicated region
      $region49: #{net_forward.2} parent=47 // pred_check
        %p9668 = pneg %p188
      $region50: #{net_forward.2} parent=47 // pred_check_branch
        %9670 = sbr.rel (%p9668) target = $region52
      $region51: #{net_forward.2} parent=47 // pred_region
        _
      $region52: #{net_forward.2} parent=47 // pred_fallthru
        _
    $region48: #{net_forward.2} parent=5 // pred_fallthru
      _
    %p9671 = scmp.le.s32.totalorder 2, %s13
    // Predicated region
    $region53: #{net_forward.2} parent=5 // pred_check
      %p9672 = pneg %p9671
    $region54: #{net_forward.2} parent=5 // pred_check_branch
      %9674 = sbr.rel (%p9672) target = $region56
    $region55: #{net_forward.2} parent=5 // pred_region
      %s9675 = ssub.s32 %s13, 2
      // Predicated region
      $region57: #{net_forward.2} parent=55 // pred_check
        %p9676 = pneg %p194
      $region58: #{net_forward.2} parent=55 // pred_check_branch
        %9678 = sbr.rel (%p9676) target = $region60
      $region59: #{net_forward.2} parent=55 // pred_region
        %p9679 = scmp.lt.s32.totalorder %s19, 1
        %s9680 = scalar_select %p9679, %s19, 1
        %s9681 = smul.addr %s9680, 2
        %s9682 = smul.addr %s9681, 4
        %s9683 = scalar_lea.vmem %s7, %s9682
      $region60: #{net_forward.2} parent=55 // pred_fallthru
        _
    $region56: #{net_forward.2} parent=5 // pred_fallthru
      _
  $region6: #{net_forward.2} parent=0 // loop_footer
    %s17 = sadd.s32 1, %s13
  $region7: #{net_forward.2} parent=0 // loop_footer_branch
    %12 = sbr.rel target = $region3
  $region8: #{net_forward.2} parent=0 // loop_exit
    _

</llo_original>
